<compile_context>
chip_gen: v7x
topology: tpu7x:2x2x1
jax: 0.10.0
libtpu: 0.0.40
codegen_flags: <defaults>
</compile_context>

<pallas_src>
import numpy as np
import jax
import jax.numpy as jnp
from jax.experimental import pallas as pl
from jax.experimental.pallas import tpu as pltpu

PRIMITIVES = ['identity', 'conv_3x3', 'max_pool_2x2', 'conv_5x5']

inputsize = 32   # module-level global, mirroring the PyTorch code

# Matmul operand dtype. float32 keeps bit-for-bit parity with the PyTorch
# reference at these tiny channel counts; flip to jnp.bfloat16 on v6e/v7x for
# large C to feed the 256x256 MXU (accumulation stays in float32 either way).
MATMUL_DTYPE = jnp.float32


# ----------------------------------------------------------------------------
# Fused cell builder: one pallas_call for the whole edge chain.
# ----------------------------------------------------------------------------
def _build_fused_cell(ops, x_shape, x_dtype):
    """Build the fused forward for a fixed op chain and input shape.

    ops: list of ('conv', (w_hwio, bias)) | ('max_pool_2x2', None)
         | ('identity', None)   -- strict chain, op j consumes op j-1's output.
    x_shape: NCHW input shape.
    Returns (jitted forward(x_nchw, *flat_params) -> NCHW, flat_params).
    """
    N, C0, H0, W0 = x_shape

    # ---- static plan: per-stage shapes + prepared conv parameters ----------
    plan = []            # ('conv', info) | ('pool', None) | ('identity', None)
    flat_params = []     # interleaved [w_taps (k*k,Cin,Cout), bias (1,Cout)]
    scratch_shapes = []  # one zero-padded-input VMEM scratch per conv
    H, W, C = H0, W0, C0
    for kind, params in ops:
        if kind == 'conv':
            w_hwio, b = params
            k, _, cin, cout = w_hwio.shape
            assert cin == C, (cin, C)
            p = k // 2
            plan.append(('conv', dict(k=k)))
            # per-tap (Cin, Cout) weight slabs; HWIO -> (k*k, Cin, Cout)
            flat_params.append(
                jnp.asarray(w_hwio, jnp.float32).reshape(k * k, cin, cout))
            flat_params.append(jnp.asarray(b, jnp.float32).reshape(1, cout))
            scratch_shapes.append(
                pltpu.VMEM((H + 2 * p, W + 2 * p, cin), jnp.float32))
            C = cout
        elif kind == 'max_pool_2x2':
            plan.append(('pool', None))
            H, W = H // 2, W // 2
        else:
            plan.append(('identity', None))
    Hf, Wf, Cf = H, W, C
    n_convs = len(scratch_shapes)

    # ---- kernel body: one grid step == one batch sample, all stages fused --
    def kernel(*refs):
        x_ref = refs[0]
        param_refs = refs[1:1 + 2 * n_convs]
        o_ref = refs[1 + 2 * n_convs]
        pad_refs = refs[2 + 2 * n_convs:]

        def conv_same(cur, w_ref, b_ref, pad_ref, k):
            h, w, cin = cur.shape
            cout = w_ref.shape[-1]
            p = k // 2
            # zero-padded copy of the input, VMEM-resident
            pad_ref[...] = jnp.zeros(pad_ref.shape, pad_ref.dtype)
            pad_ref[p:p + h, p:p + w, :] = cur
            m = h * w
            # bias folded into the f32 accumulator init (hoisted, no per-tap
            # re-broadcast)
            acc = jnp.broadcast_to(b_ref[...], (m, cout)).astype(jnp.float32)
            t = 0
            for di in range(k):           # accumulation of shifted matmuls
                for dj in range(k):       # (no im2col materialization)
                    xs = pad_ref[di:di + h, dj:dj + w, :].reshape(m, cin)
                    acc = acc + jnp.dot(xs.astype(MATMUL_DTYPE),
                                        w_ref[t].astype(MATMUL_DTYPE),
                                        preferred_element_type=jnp.float32)
                    t += 1
            return acc.reshape(h, w, cout)

        def pool2x2(cur):
            h, w, c = cur.shape
            h2, w2 = h // 2, w // 2
            v = cur[:2 * h2, :2 * w2, :]                    # floor mode
            v = v.reshape(2 * h2, w2, 2, c)
            v = jnp.maximum(v[:, :, 0, :], v[:, :, 1, :])   # pool along W
            v = v.reshape(h2, 2, w2, c)
            v = jnp.maximum(v[:, 0, :, :], v[:, 1, :, :])   # pool along H
            return v

        cur = x_ref[...].astype(jnp.float32)   # (H0, W0, C0), channels on lanes
        ci = 0
        for kind, info in plan:
            if kind == 'conv':
                cur = conv_same(cur, param_refs[2 * ci], param_refs[2 * ci + 1],
                                pad_refs[ci], info['k'])
                ci += 1
            elif kind == 'pool':
                cur = pool2x2(cur)
            # 'identity': a no-op -- no copy, no kernel launch, no HBM traffic

        # lane-dense output store: (Cf, Hf*Wf) puts the long spatial axis on
        # lanes; the wrapper's reshape turns this directly into NCHW.
        flat = cur.reshape(Hf * Wf, Cf)
        o_ref[...] = jnp.transpose(flat, (1, 0)).astype(o_ref.dtype)

    # ---- specs --------------------------------------------------------------
    in_specs = [pl.BlockSpec((None, H0, W0, C0), lambda n: (n, 0, 0, 0))]
    for fp in flat_params:
        in_specs.append(
            pl.BlockSpec(fp.shape, lambda n, _nd=fp.ndim: (0,) * _nd))
    out_specs = pl.BlockSpec((None, Cf, Hf * Wf), lambda n: (n, 0, 0))

    fused = pl.pallas_call(
        kernel,
        out_shape=jax.ShapeDtypeStruct((N, Cf, Hf * Wf), x_dtype),
        grid=(N,),                       # batch axis; >=2 lets megacore split
        in_specs=in_specs,
        out_specs=out_specs,
        scratch_shapes=scratch_shapes,
        compiler_params=pltpu.CompilerParams(
            dimension_semantics=("parallel",)),
    )

    def forward(x_nchw, *params):
        x_nhwc = jnp.transpose(x_nchw, (0, 2, 3, 1))   # channels -> TPU lanes
        out = fused(x_nhwc, *params)                   # (N, Cf, Hf*Wf)
        return out.reshape(N, Cf, Hf, Wf)              # NCHW, no extra transpose

    return jax.jit(forward), flat_params


# ----------------------------------------------------------------------------
# Pure-JAX reference (for in-script validation of the fused kernel).
# ----------------------------------------------------------------------------
def _reference_cell(ops, x_nchw):
    x = jnp.transpose(x_nchw, (0, 2, 3, 1))            # NHWC
    for kind, params in ops:
        if kind == 'conv':
            w, b = params
            x = jax.lax.conv_general_dilated(
                x, w, window_strides=(1, 1), padding='SAME',
                dimension_numbers=('NHWC', 'HWIO', 'NHWC')) + b
        elif kind == 'max_pool_2x2':
            x = jax.lax.reduce_window(x, -jnp.inf, jax.lax.max,
                                      (1, 2, 2, 1), (1, 2, 2, 1), 'VALID')
        # identity: pass through
    return jnp.transpose(x, (0, 3, 1, 2))              # NCHW


# ----------------------------------------------------------------------------
# Cell (JAX/Pallas port of the PyTorch module)
# ----------------------------------------------------------------------------
class PallasCell:
    def __init__(self, steps, multiplier, C_prev, C, weight, key):
        self.C = C
        self.incrflag = False
        self.C_prev = C_prev
        self.steps = steps
        self.multiplier = multiplier
        self.arch = self._parse_arch(weight)
        self._compile(self.arch, key)
        self._fwd_cache = {}

    def _parse_arch(self, weight):
        arch = []
        for i_b in range(self.steps):
            for i_n in range(2):
                W = 1 * weight[i_b * 2 + i_n].copy()
                i_op_best = np.argmax(W)
                op_chosen = PRIMITIVES[i_op_best]
                arch.append((op_chosen, i_b * 2 + i_n))
        return arch

    def _make_conv_params(self, key, k, c_in, c_out):
        # PyTorch Conv2d default init; weights kept in HWIO layout.
        # TODO(synk): transpose OIHW->HWIO if loading real PyTorch weights.
        kw, kb = jax.random.split(key)
        fan_in = k * k * c_in
        scale = 1.0 / np.sqrt(fan_in)
        w = jax.random.uniform(kw, (k, k, c_in, c_out), jnp.float32,
                               minval=-scale, maxval=scale)
        b = jax.random.uniform(kb, (c_out,), jnp.float32,
                               minval=-scale, maxval=scale)
        return w, b

    def _compile(self, arch, key):
        global inputsize
        self._ops = []
        c_1, c_2 = (self.C_prev, self.C)
        keys = jax.random.split(key, len(arch))
        for (op_name, i_n), k in zip(arch, keys):
            if 'max_pool_2x2' in op_name:
                if inputsize >= 2:
                    inputsize = int(inputsize / 2)
                else:
                    self._ops.append(('identity', None))
                    continue
            if op_name == 'conv_3x3':
                self._ops.append(('conv', self._make_conv_params(k, 3, c_1, c_2)))
            elif op_name == 'conv_5x5':
                self._ops.append(('conv', self._make_conv_params(k, 5, c_1, c_2)))
            elif op_name == 'max_pool_2x2':
                self._ops.append(('max_pool_2x2', None))
            else:
                self._ops.append(('identity', None))
            if 'conv' in op_name:
                c_1 = c_2
                self.incrflag = True

    def __call__(self, s0_nchw):
        # layout: NCHW in/out; fused Pallas kernel internally uses NHWC-valued
        # VMEM intermediates and a lane-dense (C, H*W) output store.
        cache_key = (tuple(s0_nchw.shape), jnp.dtype(s0_nchw.dtype))
        if cache_key not in self._fwd_cache:
            self._fwd_cache[cache_key] = _build_fused_cell(
                self._ops, s0_nchw.shape, s0_nchw.dtype)
        fwd, params = self._fwd_cache[cache_key]
        return fwd(s0_nchw, *params)


# ----------------------------------------------------------------------------
if __name__ == "__main__":
    key = jax.random.PRNGKey(0)
    k_params, k_x = jax.random.split(key)

    steps, multiplier = 2, 2
    C_prev, C = 4, 8

    # Deterministic architecture weights (steps*2 edges x 4 primitives):
    # edge0 -> conv_3x3, edge1 -> max_pool_2x2, edge2 -> identity, edge3 -> conv_5x5
    weight = np.zeros((steps * 2, len(PRIMITIVES)), dtype=np.float32)
    weight[0, PRIMITIVES.index('conv_3x3')] = 1.0
    weight[1, PRIMITIVES.index('max_pool_2x2')] = 1.0
    weight[2, PRIMITIVES.index('identity')] = 1.0
    weight[3, PRIMITIVES.index('conv_5x5')] = 1.0

    cell = PallasCell(steps, multiplier, C_prev, C, weight, k_params)

    x = jax.random.normal(k_x, (2, C_prev, 16, 16), dtype=jnp.float32)
    y = cell(x)
    jax.block_until_ready(y)
    assert y.shape == (2, C, 8, 8), y.shape

    # Validate the fused kernel against a pure-JAX reference of the same chain.
    y_ref = _reference_cell(cell._ops, x)
    np.testing.assert_allclose(np.asarray(y), np.asarray(y_ref),
                               rtol=1e-4, atol=1e-4)
    print("KERNEL_OK")
</pallas_src>

<mosaic_0001>
module attributes {stable_mosaic.version = 11 : i64} {
  func.func @kernel(%arg0: i32, %arg1: memref<1x16x16x4xf32, #tpu.memory_space<vmem>>, %arg2: memref<9x4x8xf32, #tpu.memory_space<vmem>>, %arg3: memref<1x8xf32, #tpu.memory_space<vmem>>, %arg4: memref<25x8x8xf32, #tpu.memory_space<vmem>>, %arg5: memref<1x8xf32, #tpu.memory_space<vmem>>, %arg6: memref<1x8x64xf32, #tpu.memory_space<vmem>>, %arg7: memref<18x18x4xf32, #tpu.memory_space<vmem>>, %arg8: memref<12x12x8xf32, #tpu.memory_space<vmem>>) attributes {dimension_semantics = [#tpu.dimension_semantics<parallel>], iteration_bounds = array<i64: 2>, scalar_prefetch = 0 : i64, scratch_operands = 2 : i64, tpu.core_type = #tpu.core_type<tc>, window_params = [{transform_indices = @transform_0, window_bounds = array<i64: 1, 16, 16, 4>}, {pipeline_mode = #tpu.pipeline_mode<synchronous>, transform_indices = @transform_1, window_bounds = array<i64: 9, 4, 8>}, {pipeline_mode = #tpu.pipeline_mode<synchronous>, transform_indices = @transform_2, window_bounds = array<i64: 1, 8>}, {pipeline_mode = #tpu.pipeline_mode<synchronous>, transform_indices = @transform_3, window_bounds = array<i64: 25, 8, 8>}, {pipeline_mode = #tpu.pipeline_mode<synchronous>, transform_indices = @transform_4, window_bounds = array<i64: 1, 8>}, {transform_indices = @transform_5, window_bounds = array<i64: 1, 8, 64>}]} {
    %c0 = arith.constant 0 : index
    %c0_0 = arith.constant 0 : index
    %c0_1 = arith.constant 0 : index
    %c0_2 = arith.constant 0 : index
    %0 = vector.load %arg1[%c0, %c0_0, %c0_1, %c0_2] : memref<1x16x16x4xf32, #tpu.memory_space<vmem>>, vector<1x16x16x4xf32>
    %1 = vector.shape_cast %0 : vector<1x16x16x4xf32> to vector<16x16x4xf32>
    %cst = arith.constant 0.000000e+00 : f32
    %2 = vector.broadcast %cst : f32 to vector<18x18x4xf32>
    %c0_3 = arith.constant 0 : index
    %c0_4 = arith.constant 0 : index
    %c0_5 = arith.constant 0 : index
    %3 = vector.load %arg7[%c0_3, %c0_4, %c0_5] : memref<18x18x4xf32, #tpu.memory_space<vmem>>, vector<18x18x4xf32>
    tpu.vector_store %arg7[%c0_3, %c0_4, %c0_5], %2 {strides = array<i32>} : memref<18x18x4xf32, #tpu.memory_space<vmem>>, vector<18x18x4xf32>,
    %c1 = arith.constant 1 : index
    %c1_6 = arith.constant 1 : index
    %c0_7 = arith.constant 0 : index
    %4 = vector.load %arg7[%c1, %c1_6, %c0_7] : memref<18x18x4xf32, #tpu.memory_space<vmem>>, vector<16x16x4xf32>
    tpu.vector_store %arg7[%c1, %c1_6, %c0_7], %1 {strides = array<i32>} : memref<18x18x4xf32, #tpu.memory_space<vmem>>, vector<16x16x4xf32>,
    %c0_8 = arith.constant 0 : index
    %c0_9 = arith.constant 0 : index
    %5 = vector.load %arg3[%c0_8, %c0_9] : memref<1x8xf32, #tpu.memory_space<vmem>>, vector<1x8xf32>
    %6 = vector.shape_cast %5 : vector<1x8xf32> to vector<1x8xf32>
    %7 = vector.broadcast %6 : vector<1x8xf32> to vector<256x8xf32>
    %c0_10 = arith.constant 0 : index
    %c0_11 = arith.constant 0 : index
    %c0_12 = arith.constant 0 : index
    %8 = vector.load %arg7[%c0_10, %c0_11, %c0_12] : memref<18x18x4xf32, #tpu.memory_space<vmem>>, vector<16x16x4xf32>
    %9 = vector.shape_cast %8 : vector<16x16x4xf32> to vector<256x4xf32>
    %c0_13 = arith.constant 0 : index
    %c0_14 = arith.constant 0 : index
    %c0_15 = arith.constant 0 : index
    %10 = vector.load %arg2[%c0_13, %c0_14, %c0_15] : memref<9x4x8xf32, #tpu.memory_space<vmem>>, vector<1x4x8xf32>
    %11 = vector.shape_cast %10 : vector<1x4x8xf32> to vector<4x8xf32>
    %cst_16 = arith.constant dense<0.000000e+00> : vector<256x8xf32>
    %12 = tpu.matmul %9, %11, %cst_16 {dimension_numbers = #tpu.dot_dimension_numbers<[1], [0], [0], [1], [0, 0, 1, 1], [], []>} : vector<256x4xf32>, vector<4x8xf32>, vector<256x8xf32> -> vector<256x8xf32>
    %13 = arith.addf %7, %12 : vector<256x8xf32>
    %c0_17 = arith.constant 0 : index
    %c1_18 = arith.constant 1 : index
    %c0_19 = arith.constant 0 : index
    %14 = vector.load %arg7[%c0_17, %c1_18, %c0_19] : memref<18x18x4xf32, #tpu.memory_space<vmem>>, vector<16x16x4xf32>
    %15 = vector.shape_cast %14 : vector<16x16x4xf32> to vector<256x4xf32>
    %c1_20 = arith.constant 1 : index
    %c0_21 = arith.constant 0 : index
    %c0_22 = arith.constant 0 : index
    %16 = vector.load %arg2[%c1_20, %c0_21, %c0_22] : memref<9x4x8xf32, #tpu.memory_space<vmem>>, vector<1x4x8xf32>
    %17 = vector.shape_cast %16 : vector<1x4x8xf32> to vector<4x8xf32>
    %cst_23 = arith.constant dense<0.000000e+00> : vector<256x8xf32>
    %18 = tpu.matmul %15, %17, %cst_23 {dimension_numbers = #tpu.dot_dimension_numbers<[1], [0], [0], [1], [0, 0, 1, 1], [], []>} : vector<256x4xf32>, vector<4x8xf32>, vector<256x8xf32> -> vector<256x8xf32>
    %19 = arith.addf %13, %18 : vector<256x8xf32>
    %c0_24 = arith.constant 0 : index
    %c2 = arith.constant 2 : index
    %c0_25 = arith.constant 0 : index
    %20 = vector.load %arg7[%c0_24, %c2, %c0_25] : memref<18x18x4xf32, #tpu.memory_space<vmem>>, vector<16x16x4xf32>
    %21 = vector.shape_cast %20 : vector<16x16x4xf32> to vector<256x4xf32>
    %c2_26 = arith.constant 2 : index
    %c0_27 = arith.constant 0 : index
    %c0_28 = arith.constant 0 : index
    %22 = vector.load %arg2[%c2_26, %c0_27, %c0_28] : memref<9x4x8xf32, #tpu.memory_space<vmem>>, vector<1x4x8xf32>
    %23 = vector.shape_cast %22 : vector<1x4x8xf32> to vector<4x8xf32>
    %cst_29 = arith.constant dense<0.000000e+00> : vector<256x8xf32>
    %24 = tpu.matmul %21, %23, %cst_29 {dimension_numbers = #tpu.dot_dimension_numbers<[1], [0], [0], [1], [0, 0, 1, 1], [], []>} : vector<256x4xf32>, vector<4x8xf32>, vector<256x8xf32> -> vector<256x8xf32>
    %25 = arith.addf %19, %24 : vector<256x8xf32>
    %c1_30 = arith.constant 1 : index
    %c0_31 = arith.constant 0 : index
    %c0_32 = arith.constant 0 : index
    %26 = vector.load %arg7[%c1_30, %c0_31, %c0_32] : memref<18x18x4xf32, #tpu.memory_space<vmem>>, vector<16x16x4xf32>
    %27 = vector.shape_cast %26 : vector<16x16x4xf32> to vector<256x4xf32>
    %c3 = arith.constant 3 : index
    %c0_33 = arith.constant 0 : index
    %c0_34 = arith.constant 0 : index
    %28 = vector.load %arg2[%c3, %c0_33, %c0_34] : memref<9x4x8xf32, #tpu.memory_space<vmem>>, vector<1x4x8xf32>
    %29 = vector.shape_cast %28 : vector<1x4x8xf32> to vector<4x8xf32>
    %cst_35 = arith.constant dense<0.000000e+00> : vector<256x8xf32>
    %30 = tpu.matmul %27, %29, %cst_35 {dimension_numbers = #tpu.dot_dimension_numbers<[1], [0], [0], [1], [0, 0, 1, 1], [], []>} : vector<256x4xf32>, vector<4x8xf32>, vector<256x8xf32> -> vector<256x8xf32>
    %31 = arith.addf %25, %30 : vector<256x8xf32>
    %c1_36 = arith.constant 1 : index
    %c1_37 = arith.constant 1 : index
    %c0_38 = arith.constant 0 : index
    %32 = vector.load %arg7[%c1_36, %c1_37, %c0_38] : memref<18x18x4xf32, #tpu.memory_space<vmem>>, vector<16x16x4xf32>
    %33 = vector.shape_cast %32 : vector<16x16x4xf32> to vector<256x4xf32>
    %c4 = arith.constant 4 : index
    %c0_39 = arith.constant 0 : index
    %c0_40 = arith.constant 0 : index
    %34 = vector.load %arg2[%c4, %c0_39, %c0_40] : memref<9x4x8xf32, #tpu.memory_space<vmem>>, vector<1x4x8xf32>
    %35 = vector.shape_cast %34 : vector<1x4x8xf32> to vector<4x8xf32>
    %cst_41 = arith.constant dense<0.000000e+00> : vector<256x8xf32>
    %36 = tpu.matmul %33, %35, %cst_41 {dimension_numbers = #tpu.dot_dimension_numbers<[1], [0], [0], [1], [0, 0, 1, 1], [], []>} : vector<256x4xf32>, vector<4x8xf32>, vector<256x8xf32> -> vector<256x8xf32>
    %37 = arith.addf %31, %36 : vector<256x8xf32>
    %c1_42 = arith.constant 1 : index
    %c2_43 = arith.constant 2 : index
    %c0_44 = arith.constant 0 : index
    %38 = vector.load %arg7[%c1_42, %c2_43, %c0_44] : memref<18x18x4xf32, #tpu.memory_space<vmem>>, vector<16x16x4xf32>
    %39 = vector.shape_cast %38 : vector<16x16x4xf32> to vector<256x4xf32>
    %c5 = arith.constant 5 : index
    %c0_45 = arith.constant 0 : index
    %c0_46 = arith.constant 0 : index
    %40 = vector.load %arg2[%c5, %c0_45, %c0_46] : memref<9x4x8xf32, #tpu.memory_space<vmem>>, vector<1x4x8xf32>
    %41 = vector.shape_cast %40 : vector<1x4x8xf32> to vector<4x8xf32>
    %cst_47 = arith.constant dense<0.000000e+00> : vector<256x8xf32>
    %42 = tpu.matmul %39, %41, %cst_47 {dimension_numbers = #tpu.dot_dimension_numbers<[1], [0], [0], [1], [0, 0, 1, 1], [], []>} : vector<256x4xf32>, vector<4x8xf32>, vector<256x8xf32> -> vector<256x8xf32>
    %43 = arith.addf %37, %42 : vector<256x8xf32>
    %c2_48 = arith.constant 2 : index
    %c0_49 = arith.constant 0 : index
    %c0_50 = arith.constant 0 : index
    %44 = vector.load %arg7[%c2_48, %c0_49, %c0_50] : memref<18x18x4xf32, #tpu.memory_space<vmem>>, vector<16x16x4xf32>
    %45 = vector.shape_cast %44 : vector<16x16x4xf32> to vector<256x4xf32>
    %c6 = arith.constant 6 : index
    %c0_51 = arith.constant 0 : index
    %c0_52 = arith.constant 0 : index
    %46 = vector.load %arg2[%c6, %c0_51, %c0_52] : memref<9x4x8xf32, #tpu.memory_space<vmem>>, vector<1x4x8xf32>
    %47 = vector.shape_cast %46 : vector<1x4x8xf32> to vector<4x8xf32>
    %cst_53 = arith.constant dense<0.000000e+00> : vector<256x8xf32>
    %48 = tpu.matmul %45, %47, %cst_53 {dimension_numbers = #tpu.dot_dimension_numbers<[1], [0], [0], [1], [0, 0, 1, 1], [], []>} : vector<256x4xf32>, vector<4x8xf32>, vector<256x8xf32> -> vector<256x8xf32>
    %49 = arith.addf %43, %48 : vector<256x8xf32>
    %c2_54 = arith.constant 2 : index
    %c1_55 = arith.constant 1 : index
    %c0_56 = arith.constant 0 : index
    %50 = vector.load %arg7[%c2_54, %c1_55, %c0_56] : memref<18x18x4xf32, #tpu.memory_space<vmem>>, vector<16x16x4xf32>
    %51 = vector.shape_cast %50 : vector<16x16x4xf32> to vector<256x4xf32>
    %c7 = arith.constant 7 : index
    %c0_57 = arith.constant 0 : index
    %c0_58 = arith.constant 0 : index
    %52 = vector.load %arg2[%c7, %c0_57, %c0_58] : memref<9x4x8xf32, #tpu.memory_space<vmem>>, vector<1x4x8xf32>
    %53 = vector.shape_cast %52 : vector<1x4x8xf32> to vector<4x8xf32>
    %cst_59 = arith.constant dense<0.000000e+00> : vector<256x8xf32>
    %54 = tpu.matmul %51, %53, %cst_59 {dimension_numbers = #tpu.dot_dimension_numbers<[1], [0], [0], [1], [0, 0, 1, 1], [], []>} : vector<256x4xf32>, vector<4x8xf32>, vector<256x8xf32> -> vector<256x8xf32>
    %55 = arith.addf %49, %54 : vector<256x8xf32>
    %c2_60 = arith.constant 2 : index
    %c2_61 = arith.constant 2 : index
    %c0_62 = arith.constant 0 : index
    %56 = vector.load %arg7[%c2_60, %c2_61, %c0_62] : memref<18x18x4xf32, #tpu.memory_space<vmem>>, vector<16x16x4xf32>
    %57 = vector.shape_cast %56 : vector<16x16x4xf32> to vector<256x4xf32>
    %c8 = arith.constant 8 : index
    %c0_63 = arith.constant 0 : index
    %c0_64 = arith.constant 0 : index
    %58 = vector.load %arg2[%c8, %c0_63, %c0_64] : memref<9x4x8xf32, #tpu.memory_space<vmem>>, vector<1x4x8xf32>
    %59 = vector.shape_cast %58 : vector<1x4x8xf32> to vector<4x8xf32>
    %cst_65 = arith.constant dense<0.000000e+00> : vector<256x8xf32>
    %60 = tpu.matmul %57, %59, %cst_65 {dimension_numbers = #tpu.dot_dimension_numbers<[1], [0], [0], [1], [0, 0, 1, 1], [], []>} : vector<256x4xf32>, vector<4x8xf32>, vector<256x8xf32> -> vector<256x8xf32>
    %61 = arith.addf %55, %60 : vector<256x8xf32>
    %62 = vector.shape_cast %61 : vector<256x8xf32> to vector<16x16x8xf32>
    %63 = vector.shape_cast %62 : vector<16x16x8xf32> to vector<16x8x2x8xf32>
    %64 = vector.extract_strided_slice %63 {offsets = [0, 0, 0, 0], sizes = [16, 8, 1, 8], strides = [1, 1, 1, 1]} : vector<16x8x2x8xf32> to vector<16x8x1x8xf32>
    %65 = vector.shape_cast %64 : vector<16x8x1x8xf32> to vector<16x8x8xf32>
    %66 = vector.extract_strided_slice %63 {offsets = [0, 0, 1, 0], sizes = [16, 8, 1, 8], strides = [1, 1, 1, 1]} : vector<16x8x2x8xf32> to vector<16x8x1x8xf32>
    %67 = vector.shape_cast %66 : vector<16x8x1x8xf32> to vector<16x8x8xf32>
    %68 = arith.maximumf %65, %67 : vector<16x8x8xf32>
    %69 = vector.shape_cast %68 : vector<16x8x8xf32> to vector<8x2x8x8xf32>
    %70 = vector.extract_strided_slice %69 {offsets = [0, 0, 0, 0], sizes = [8, 1, 8, 8], strides = [1, 1, 1, 1]} : vector<8x2x8x8xf32> to vector<8x1x8x8xf32>
    %71 = vector.shape_cast %70 : vector<8x1x8x8xf32> to vector<8x8x8xf32>
    %72 = vector.extract_strided_slice %69 {offsets = [0, 1, 0, 0], sizes = [8, 1, 8, 8], strides = [1, 1, 1, 1]} : vector<8x2x8x8xf32> to vector<8x1x8x8xf32>
    %73 = vector.shape_cast %72 : vector<8x1x8x8xf32> to vector<8x8x8xf32>
    %74 = arith.maximumf %71, %73 : vector<8x8x8xf32>
    %cst_66 = arith.constant 0.000000e+00 : f32
    %75 = vector.broadcast %cst_66 : f32 to vector<12x12x8xf32>
    %c0_67 = arith.constant 0 : index
    %c0_68 = arith.constant 0 : index
    %c0_69 = arith.constant 0 : index
    %76 = vector.load %arg8[%c0_67, %c0_68, %c0_69] : memref<12x12x8xf32, #tpu.memory_space<vmem>>, vector<12x12x8xf32>
    tpu.vector_store %arg8[%c0_67, %c0_68, %c0_69], %75 {strides = array<i32>} : memref<12x12x8xf32, #tpu.memory_space<vmem>>, vector<12x12x8xf32>,
    %c2_70 = arith.constant 2 : index
    %c2_71 = arith.constant 2 : index
    %c0_72 = arith.constant 0 : index
    %77 = vector.load %arg8[%c2_70, %c2_71, %c0_72] : memref<12x12x8xf32, #tpu.memory_space<vmem>>, vector<8x8x8xf32>
    tpu.vector_store %arg8[%c2_70, %c2_71, %c0_72], %74 {strides = array<i32>} : memref<12x12x8xf32, #tpu.memory_space<vmem>>, vector<8x8x8xf32>,
    %c0_73 = arith.constant 0 : index
    %c0_74 = arith.constant 0 : index
    %78 = vector.load %arg5[%c0_73, %c0_74] : memref<1x8xf32, #tpu.memory_space<vmem>>, vector<1x8xf32>
    %79 = vector.shape_cast %78 : vector<1x8xf32> to vector<1x8xf32>
    %80 = vector.broadcast %79 : vector<1x8xf32> to vector<64x8xf32>
    %c0_75 = arith.constant 0 : index
    %c0_76 = arith.constant 0 : index
    %c0_77 = arith.constant 0 : index
    %81 = vector.load %arg8[%c0_75, %c0_76, %c0_77] : memref<12x12x8xf32, #tpu.memory_space<vmem>>, vector<8x8x8xf32>
    %82 = vector.shape_cast %81 : vector<8x8x8xf32> to vector<64x8xf32>
    %c0_78 = arith.constant 0 : index
    %c0_79 = arith.constant 0 : index
    %c0_80 = arith.constant 0 : index
    %83 = vector.load %arg4[%c0_78, %c0_79, %c0_80] : memref<25x8x8xf32, #tpu.memory_space<vmem>>, vector<1x8x8xf32>
    %84 = vector.shape_cast %83 : vector<1x8x8xf32> to vector<8x8xf32>
    %cst_81 = arith.constant dense<0.000000e+00> : vector<64x8xf32>
    %85 = tpu.matmul %82, %84, %cst_81 {dimension_numbers = #tpu.dot_dimension_numbers<[1], [0], [0], [1], [0, 0, 1, 1], [], []>} : vector<64x8xf32>, vector<8x8xf32>, vector<64x8xf32> -> vector<64x8xf32>
    %86 = arith.addf %80, %85 : vector<64x8xf32>
    %c0_82 = arith.constant 0 : index
    %c1_83 = arith.constant 1 : index
    %c0_84 = arith.constant 0 : index
    %87 = vector.load %arg8[%c0_82, %c1_83, %c0_84] : memref<12x12x8xf32, #tpu.memory_space<vmem>>, vector<8x8x8xf32>
    %88 = vector.shape_cast %87 : vector<8x8x8xf32> to vector<64x8xf32>
    %c1_85 = arith.constant 1 : index
    %c0_86 = arith.constant 0 : index
    %c0_87 = arith.constant 0 : index
    %89 = vector.load %arg4[%c1_85, %c0_86, %c0_87] : memref<25x8x8xf32, #tpu.memory_space<vmem>>, vector<1x8x8xf32>
    %90 = vector.shape_cast %89 : vector<1x8x8xf32> to vector<8x8xf32>
    %cst_88 = arith.constant dense<0.000000e+00> : vector<64x8xf32>
    %91 = tpu.matmul %88, %90, %cst_88 {dimension_numbers = #tpu.dot_dimension_numbers<[1], [0], [0], [1], [0, 0, 1, 1], [], []>} : vector<64x8xf32>, vector<8x8xf32>, vector<64x8xf32> -> vector<64x8xf32>
    %92 = arith.addf %86, %91 : vector<64x8xf32>
    %c0_89 = arith.constant 0 : index
    %c2_90 = arith.constant 2 : index
    %c0_91 = arith.constant 0 : index
    %93 = vector.load %arg8[%c0_89, %c2_90, %c0_91] : memref<12x12x8xf32, #tpu.memory_space<vmem>>, vector<8x8x8xf32>
    %94 = vector.shape_cast %93 : vector<8x8x8xf32> to vector<64x8xf32>
    %c2_92 = arith.constant 2 : index
    %c0_93 = arith.constant 0 : index
    %c0_94 = arith.constant 0 : index
    %95 = vector.load %arg4[%c2_92, %c0_93, %c0_94] : memref<25x8x8xf32, #tpu.memory_space<vmem>>, vector<1x8x8xf32>
    %96 = vector.shape_cast %95 : vector<1x8x8xf32> to vector<8x8xf32>
    %cst_95 = arith.constant dense<0.000000e+00> : vector<64x8xf32>
    %97 = tpu.matmul %94, %96, %cst_95 {dimension_numbers = #tpu.dot_dimension_numbers<[1], [0], [0], [1], [0, 0, 1, 1], [], []>} : vector<64x8xf32>, vector<8x8xf32>, vector<64x8xf32> -> vector<64x8xf32>
    %98 = arith.addf %92, %97 : vector<64x8xf32>
    %c0_96 = arith.constant 0 : index
    %c3_97 = arith.constant 3 : index
    %c0_98 = arith.constant 0 : index
    %99 = vector.load %arg8[%c0_96, %c3_97, %c0_98] : memref<12x12x8xf32, #tpu.memory_space<vmem>>, vector<8x8x8xf32>
    %100 = vector.shape_cast %99 : vector<8x8x8xf32> to vector<64x8xf32>
    %c3_99 = arith.constant 3 : index
    %c0_100 = arith.constant 0 : index
    %c0_101 = arith.constant 0 : index
    %101 = vector.load %arg4[%c3_99, %c0_100, %c0_101] : memref<25x8x8xf32, #tpu.memory_space<vmem>>, vector<1x8x8xf32>
    %102 = vector.shape_cast %101 : vector<1x8x8xf32> to vector<8x8xf32>
    %cst_102 = arith.constant dense<0.000000e+00> : vector<64x8xf32>
    %103 = tpu.matmul %100, %102, %cst_102 {dimension_numbers = #tpu.dot_dimension_numbers<[1], [0], [0], [1], [0, 0, 1, 1], [], []>} : vector<64x8xf32>, vector<8x8xf32>, vector<64x8xf32> -> vector<64x8xf32>
    %104 = arith.addf %98, %103 : vector<64x8xf32>
    %c0_103 = arith.constant 0 : index
    %c4_104 = arith.constant 4 : index
    %c0_105 = arith.constant 0 : index
    %105 = vector.load %arg8[%c0_103, %c4_104, %c0_105] : memref<12x12x8xf32, #tpu.memory_space<vmem>>, vector<8x8x8xf32>
    %106 = vector.shape_cast %105 : vector<8x8x8xf32> to vector<64x8xf32>
    %c4_106 = arith.constant 4 : index
    %c0_107 = arith.constant 0 : index
    %c0_108 = arith.constant 0 : index
    %107 = vector.load %arg4[%c4_106, %c0_107, %c0_108] : memref<25x8x8xf32, #tpu.memory_space<vmem>>, vector<1x8x8xf32>
    %108 = vector.shape_cast %107 : vector<1x8x8xf32> to vector<8x8xf32>
    %cst_109 = arith.constant dense<0.000000e+00> : vector<64x8xf32>
    %109 = tpu.matmul %106, %108, %cst_109 {dimension_numbers = #tpu.dot_dimension_numbers<[1], [0], [0], [1], [0, 0, 1, 1], [], []>} : vector<64x8xf32>, vector<8x8xf32>, vector<64x8xf32> -> vector<64x8xf32>
    %110 = arith.addf %104, %109 : vector<64x8xf32>
    %c1_110 = arith.constant 1 : index
    %c0_111 = arith.constant 0 : index
    %c0_112 = arith.constant 0 : index
    %111 = vector.load %arg8[%c1_110, %c0_111, %c0_112] : memref<12x12x8xf32, #tpu.memory_space<vmem>>, vector<8x8x8xf32>
    %112 = vector.shape_cast %111 : vector<8x8x8xf32> to vector<64x8xf32>
    %c5_113 = arith.constant 5 : index
    %c0_114 = arith.constant 0 : index
    %c0_115 = arith.constant 0 : index
    %113 = vector.load %arg4[%c5_113, %c0_114, %c0_115] : memref<25x8x8xf32, #tpu.memory_space<vmem>>, vector<1x8x8xf32>
    %114 = vector.shape_cast %113 : vector<1x8x8xf32> to vector<8x8xf32>
    %cst_116 = arith.constant dense<0.000000e+00> : vector<64x8xf32>
    %115 = tpu.matmul %112, %114, %cst_116 {dimension_numbers = #tpu.dot_dimension_numbers<[1], [0], [0], [1], [0, 0, 1, 1], [], []>} : vector<64x8xf32>, vector<8x8xf32>, vector<64x8xf32> -> vector<64x8xf32>
    %116 = arith.addf %110, %115 : vector<64x8xf32>
    %c1_117 = arith.constant 1 : index
    %c1_118 = arith.constant 1 : index
    %c0_119 = arith.constant 0 : index
    %117 = vector.load %arg8[%c1_117, %c1_118, %c0_119] : memref<12x12x8xf32, #tpu.memory_space<vmem>>, vector<8x8x8xf32>
    %118 = vector.shape_cast %117 : vector<8x8x8xf32> to vector<64x8xf32>
    %c6_120 = arith.constant 6 : index
    %c0_121 = arith.constant 0 : index
    %c0_122 = arith.constant 0 : index
    %119 = vector.load %arg4[%c6_120, %c0_121, %c0_122] : memref<25x8x8xf32, #tpu.memory_space<vmem>>, vector<1x8x8xf32>
    %120 = vector.shape_cast %119 : vector<1x8x8xf32> to vector<8x8xf32>
    %cst_123 = arith.constant dense<0.000000e+00> : vector<64x8xf32>
    %121 = tpu.matmul %118, %120, %cst_123 {dimension_numbers = #tpu.dot_dimension_numbers<[1], [0], [0], [1], [0, 0, 1, 1], [], []>} : vector<64x8xf32>, vector<8x8xf32>, vector<64x8xf32> -> vector<64x8xf32>
    %122 = arith.addf %116, %121 : vector<64x8xf32>
    %c1_124 = arith.constant 1 : index
    %c2_125 = arith.constant 2 : index
    %c0_126 = arith.constant 0 : index
    %123 = vector.load %arg8[%c1_124, %c2_125, %c0_126] : memref<12x12x8xf32, #tpu.memory_space<vmem>>, vector<8x8x8xf32>
    %124 = vector.shape_cast %123 : vector<8x8x8xf32> to vector<64x8xf32>
    %c7_127 = arith.constant 7 : index
    %c0_128 = arith.constant 0 : index
    %c0_129 = arith.constant 0 : index
    %125 = vector.load %arg4[%c7_127, %c0_128, %c0_129] : memref<25x8x8xf32, #tpu.memory_space<vmem>>, vector<1x8x8xf32>
    %126 = vector.shape_cast %125 : vector<1x8x8xf32> to vector<8x8xf32>
    %cst_130 = arith.constant dense<0.000000e+00> : vector<64x8xf32>
    %127 = tpu.matmul %124, %126, %cst_130 {dimension_numbers = #tpu.dot_dimension_numbers<[1], [0], [0], [1], [0, 0, 1, 1], [], []>} : vector<64x8xf32>, vector<8x8xf32>, vector<64x8xf32> -> vector<64x8xf32>
    %128 = arith.addf %122, %127 : vector<64x8xf32>
    %c1_131 = arith.constant 1 : index
    %c3_132 = arith.constant 3 : index
    %c0_133 = arith.constant 0 : index
    %129 = vector.load %arg8[%c1_131, %c3_132, %c0_133] : memref<12x12x8xf32, #tpu.memory_space<vmem>>, vector<8x8x8xf32>
    %130 = vector.shape_cast %129 : vector<8x8x8xf32> to vector<64x8xf32>
    %c8_134 = arith.constant 8 : index
    %c0_135 = arith.constant 0 : index
    %c0_136 = arith.constant 0 : index
    %131 = vector.load %arg4[%c8_134, %c0_135, %c0_136] : memref<25x8x8xf32, #tpu.memory_space<vmem>>, vector<1x8x8xf32>
    %132 = vector.shape_cast %131 : vector<1x8x8xf32> to vector<8x8xf32>
    %cst_137 = arith.constant dense<0.000000e+00> : vector<64x8xf32>
    %133 = tpu.matmul %130, %132, %cst_137 {dimension_numbers = #tpu.dot_dimension_numbers<[1], [0], [0], [1], [0, 0, 1, 1], [], []>} : vector<64x8xf32>, vector<8x8xf32>, vector<64x8xf32> -> vector<64x8xf32>
    %134 = arith.addf %128, %133 : vector<64x8xf32>
    %c1_138 = arith.constant 1 : index
    %c4_139 = arith.constant 4 : index
    %c0_140 = arith.constant 0 : index
    %135 = vector.load %arg8[%c1_138, %c4_139, %c0_140] : memref<12x12x8xf32, #tpu.memory_space<vmem>>, vector<8x8x8xf32>
    %136 = vector.shape_cast %135 : vector<8x8x8xf32> to vector<64x8xf32>
    %c9 = arith.constant 9 : index
    %c0_141 = arith.constant 0 : index
    %c0_142 = arith.constant 0 : index
    %137 = vector.load %arg4[%c9, %c0_141, %c0_142] : memref<25x8x8xf32, #tpu.memory_space<vmem>>, vector<1x8x8xf32>
    %138 = vector.shape_cast %137 : vector<1x8x8xf32> to vector<8x8xf32>
    %cst_143 = arith.constant dense<0.000000e+00> : vector<64x8xf32>
    %139 = tpu.matmul %136, %138, %cst_143 {dimension_numbers = #tpu.dot_dimension_numbers<[1], [0], [0], [1], [0, 0, 1, 1], [], []>} : vector<64x8xf32>, vector<8x8xf32>, vector<64x8xf32> -> vector<64x8xf32>
    %140 = arith.addf %134, %139 : vector<64x8xf32>
    %c2_144 = arith.constant 2 : index
    %c0_145 = arith.constant 0 : index
    %c0_146 = arith.constant 0 : index
    %141 = vector.load %arg8[%c2_144, %c0_145, %c0_146] : memref<12x12x8xf32, #tpu.memory_space<vmem>>, vector<8x8x8xf32>
    %142 = vector.shape_cast %141 : vector<8x8x8xf32> to vector<64x8xf32>
    %c10 = arith.constant 10 : index
    %c0_147 = arith.constant 0 : index
    %c0_148 = arith.constant 0 : index
    %143 = vector.load %arg4[%c10, %c0_147, %c0_148] : memref<25x8x8xf32, #tpu.memory_space<vmem>>, vector<1x8x8xf32>
    %144 = vector.shape_cast %143 : vector<1x8x8xf32> to vector<8x8xf32>
    %cst_149 = arith.constant dense<0.000000e+00> : vector<64x8xf32>
    %145 = tpu.matmul %142, %144, %cst_149 {dimension_numbers = #tpu.dot_dimension_numbers<[1], [0], [0], [1], [0, 0, 1, 1], [], []>} : vector<64x8xf32>, vector<8x8xf32>, vector<64x8xf32> -> vector<64x8xf32>
    %146 = arith.addf %140, %145 : vector<64x8xf32>
    %c2_150 = arith.constant 2 : index
    %c1_151 = arith.constant 1 : index
    %c0_152 = arith.constant 0 : index
    %147 = vector.load %arg8[%c2_150, %c1_151, %c0_152] : memref<12x12x8xf32, #tpu.memory_space<vmem>>, vector<8x8x8xf32>
    %148 = vector.shape_cast %147 : vector<8x8x8xf32> to vector<64x8xf32>
    %c11 = arith.constant 11 : index
    %c0_153 = arith.constant 0 : index
    %c0_154 = arith.constant 0 : index
    %149 = vector.load %arg4[%c11, %c0_153, %c0_154] : memref<25x8x8xf32, #tpu.memory_space<vmem>>, vector<1x8x8xf32>
    %150 = vector.shape_cast %149 : vector<1x8x8xf32> to vector<8x8xf32>
    %cst_155 = arith.constant dense<0.000000e+00> : vector<64x8xf32>
    %151 = tpu.matmul %148, %150, %cst_155 {dimension_numbers = #tpu.dot_dimension_numbers<[1], [0], [0], [1], [0, 0, 1, 1], [], []>} : vector<64x8xf32>, vector<8x8xf32>, vector<64x8xf32> -> vector<64x8xf32>
    %152 = arith.addf %146, %151 : vector<64x8xf32>
    %c2_156 = arith.constant 2 : index
    %c2_157 = arith.constant 2 : index
    %c0_158 = arith.constant 0 : index
    %153 = vector.load %arg8[%c2_156, %c2_157, %c0_158] : memref<12x12x8xf32, #tpu.memory_space<vmem>>, vector<8x8x8xf32>
    %154 = vector.shape_cast %153 : vector<8x8x8xf32> to vector<64x8xf32>
    %c12 = arith.constant 12 : index
    %c0_159 = arith.constant 0 : index
    %c0_160 = arith.constant 0 : index
    %155 = vector.load %arg4[%c12, %c0_159, %c0_160] : memref<25x8x8xf32, #tpu.memory_space<vmem>>, vector<1x8x8xf32>
    %156 = vector.shape_cast %155 : vector<1x8x8xf32> to vector<8x8xf32>
    %cst_161 = arith.constant dense<0.000000e+00> : vector<64x8xf32>
    %157 = tpu.matmul %154, %156, %cst_161 {dimension_numbers = #tpu.dot_dimension_numbers<[1], [0], [0], [1], [0, 0, 1, 1], [], []>} : vector<64x8xf32>, vector<8x8xf32>, vector<64x8xf32> -> vector<64x8xf32>
    %158 = arith.addf %152, %157 : vector<64x8xf32>
    %c2_162 = arith.constant 2 : index
    %c3_163 = arith.constant 3 : index
    %c0_164 = arith.constant 0 : index
    %159 = vector.load %arg8[%c2_162, %c3_163, %c0_164] : memref<12x12x8xf32, #tpu.memory_space<vmem>>, vector<8x8x8xf32>
    %160 = vector.shape_cast %159 : vector<8x8x8xf32> to vector<64x8xf32>
    %c13 = arith.constant 13 : index
    %c0_165 = arith.constant 0 : index
    %c0_166 = arith.constant 0 : index
    %161 = vector.load %arg4[%c13, %c0_165, %c0_166] : memref<25x8x8xf32, #tpu.memory_space<vmem>>, vector<1x8x8xf32>
    %162 = vector.shape_cast %161 : vector<1x8x8xf32> to vector<8x8xf32>
    %cst_167 = arith.constant dense<0.000000e+00> : vector<64x8xf32>
    %163 = tpu.matmul %160, %162, %cst_167 {dimension_numbers = #tpu.dot_dimension_numbers<[1], [0], [0], [1], [0, 0, 1, 1], [], []>} : vector<64x8xf32>, vector<8x8xf32>, vector<64x8xf32> -> vector<64x8xf32>
    %164 = arith.addf %158, %163 : vector<64x8xf32>
    %c2_168 = arith.constant 2 : index
    %c4_169 = arith.constant 4 : index
    %c0_170 = arith.constant 0 : index
    %165 = vector.load %arg8[%c2_168, %c4_169, %c0_170] : memref<12x12x8xf32, #tpu.memory_space<vmem>>, vector<8x8x8xf32>
    %166 = vector.shape_cast %165 : vector<8x8x8xf32> to vector<64x8xf32>
    %c14 = arith.constant 14 : index
    %c0_171 = arith.constant 0 : index
    %c0_172 = arith.constant 0 : index
    %167 = vector.load %arg4[%c14, %c0_171, %c0_172] : memref<25x8x8xf32, #tpu.memory_space<vmem>>, vector<1x8x8xf32>
    %168 = vector.shape_cast %167 : vector<1x8x8xf32> to vector<8x8xf32>
    %cst_173 = arith.constant dense<0.000000e+00> : vector<64x8xf32>
    %169 = tpu.matmul %166, %168, %cst_173 {dimension_numbers = #tpu.dot_dimension_numbers<[1], [0], [0], [1], [0, 0, 1, 1], [], []>} : vector<64x8xf32>, vector<8x8xf32>, vector<64x8xf32> -> vector<64x8xf32>
    %170 = arith.addf %164, %169 : vector<64x8xf32>
    %c3_174 = arith.constant 3 : index
    %c0_175 = arith.constant 0 : index
    %c0_176 = arith.constant 0 : index
    %171 = vector.load %arg8[%c3_174, %c0_175, %c0_176] : memref<12x12x8xf32, #tpu.memory_space<vmem>>, vector<8x8x8xf32>
    %172 = vector.shape_cast %171 : vector<8x8x8xf32> to vector<64x8xf32>
    %c15 = arith.constant 15 : index
    %c0_177 = arith.constant 0 : index
    %c0_178 = arith.constant 0 : index
    %173 = vector.load %arg4[%c15, %c0_177, %c0_178] : memref<25x8x8xf32, #tpu.memory_space<vmem>>, vector<1x8x8xf32>
    %174 = vector.shape_cast %173 : vector<1x8x8xf32> to vector<8x8xf32>
    %cst_179 = arith.constant dense<0.000000e+00> : vector<64x8xf32>
    %175 = tpu.matmul %172, %174, %cst_179 {dimension_numbers = #tpu.dot_dimension_numbers<[1], [0], [0], [1], [0, 0, 1, 1], [], []>} : vector<64x8xf32>, vector<8x8xf32>, vector<64x8xf32> -> vector<64x8xf32>
    %176 = arith.addf %170, %175 : vector<64x8xf32>
    %c3_180 = arith.constant 3 : index
    %c1_181 = arith.constant 1 : index
    %c0_182 = arith.constant 0 : index
    %177 = vector.load %arg8[%c3_180, %c1_181, %c0_182] : memref<12x12x8xf32, #tpu.memory_space<vmem>>, vector<8x8x8xf32>
    %178 = vector.shape_cast %177 : vector<8x8x8xf32> to vector<64x8xf32>
    %c16 = arith.constant 16 : index
    %c0_183 = arith.constant 0 : index
    %c0_184 = arith.constant 0 : index
    %179 = vector.load %arg4[%c16, %c0_183, %c0_184] : memref<25x8x8xf32, #tpu.memory_space<vmem>>, vector<1x8x8xf32>
    %180 = vector.shape_cast %179 : vector<1x8x8xf32> to vector<8x8xf32>
    %cst_185 = arith.constant dense<0.000000e+00> : vector<64x8xf32>
    %181 = tpu.matmul %178, %180, %cst_185 {dimension_numbers = #tpu.dot_dimension_numbers<[1], [0], [0], [1], [0, 0, 1, 1], [], []>} : vector<64x8xf32>, vector<8x8xf32>, vector<64x8xf32> -> vector<64x8xf32>
    %182 = arith.addf %176, %181 : vector<64x8xf32>
    %c3_186 = arith.constant 3 : index
    %c2_187 = arith.constant 2 : index
    %c0_188 = arith.constant 0 : index
    %183 = vector.load %arg8[%c3_186, %c2_187, %c0_188] : memref<12x12x8xf32, #tpu.memory_space<vmem>>, vector<8x8x8xf32>
    %184 = vector.shape_cast %183 : vector<8x8x8xf32> to vector<64x8xf32>
    %c17 = arith.constant 17 : index
    %c0_189 = arith.constant 0 : index
    %c0_190 = arith.constant 0 : index
    %185 = vector.load %arg4[%c17, %c0_189, %c0_190] : memref<25x8x8xf32, #tpu.memory_space<vmem>>, vector<1x8x8xf32>
    %186 = vector.shape_cast %185 : vector<1x8x8xf32> to vector<8x8xf32>
    %cst_191 = arith.constant dense<0.000000e+00> : vector<64x8xf32>
    %187 = tpu.matmul %184, %186, %cst_191 {dimension_numbers = #tpu.dot_dimension_numbers<[1], [0], [0], [1], [0, 0, 1, 1], [], []>} : vector<64x8xf32>, vector<8x8xf32>, vector<64x8xf32> -> vector<64x8xf32>
    %188 = arith.addf %182, %187 : vector<64x8xf32>
    %c3_192 = arith.constant 3 : index
    %c3_193 = arith.constant 3 : index
    %c0_194 = arith.constant 0 : index
    %189 = vector.load %arg8[%c3_192, %c3_193, %c0_194] : memref<12x12x8xf32, #tpu.memory_space<vmem>>, vector<8x8x8xf32>
    %190 = vector.shape_cast %189 : vector<8x8x8xf32> to vector<64x8xf32>
    %c18 = arith.constant 18 : index
    %c0_195 = arith.constant 0 : index
    %c0_196 = arith.constant 0 : index
    %191 = vector.load %arg4[%c18, %c0_195, %c0_196] : memref<25x8x8xf32, #tpu.memory_space<vmem>>, vector<1x8x8xf32>
    %192 = vector.shape_cast %191 : vector<1x8x8xf32> to vector<8x8xf32>
    %cst_197 = arith.constant dense<0.000000e+00> : vector<64x8xf32>
    %193 = tpu.matmul %190, %192, %cst_197 {dimension_numbers = #tpu.dot_dimension_numbers<[1], [0], [0], [1], [0, 0, 1, 1], [], []>} : vector<64x8xf32>, vector<8x8xf32>, vector<64x8xf32> -> vector<64x8xf32>
    %194 = arith.addf %188, %193 : vector<64x8xf32>
    %c3_198 = arith.constant 3 : index
    %c4_199 = arith.constant 4 : index
    %c0_200 = arith.constant 0 : index
    %195 = vector.load %arg8[%c3_198, %c4_199, %c0_200] : memref<12x12x8xf32, #tpu.memory_space<vmem>>, vector<8x8x8xf32>
    %196 = vector.shape_cast %195 : vector<8x8x8xf32> to vector<64x8xf32>
    %c19 = arith.constant 19 : index
    %c0_201 = arith.constant 0 : index
    %c0_202 = arith.constant 0 : index
    %197 = vector.load %arg4[%c19, %c0_201, %c0_202] : memref<25x8x8xf32, #tpu.memory_space<vmem>>, vector<1x8x8xf32>
    %198 = vector.shape_cast %197 : vector<1x8x8xf32> to vector<8x8xf32>
    %cst_203 = arith.constant dense<0.000000e+00> : vector<64x8xf32>
    %199 = tpu.matmul %196, %198, %cst_203 {dimension_numbers = #tpu.dot_dimension_numbers<[1], [0], [0], [1], [0, 0, 1, 1], [], []>} : vector<64x8xf32>, vector<8x8xf32>, vector<64x8xf32> -> vector<64x8xf32>
    %200 = arith.addf %194, %199 : vector<64x8xf32>
    %c4_204 = arith.constant 4 : index
    %c0_205 = arith.constant 0 : index
    %c0_206 = arith.constant 0 : index
    %201 = vector.load %arg8[%c4_204, %c0_205, %c0_206] : memref<12x12x8xf32, #tpu.memory_space<vmem>>, vector<8x8x8xf32>
    %202 = vector.shape_cast %201 : vector<8x8x8xf32> to vector<64x8xf32>
    %c20 = arith.constant 20 : index
    %c0_207 = arith.constant 0 : index
    %c0_208 = arith.constant 0 : index
    %203 = vector.load %arg4[%c20, %c0_207, %c0_208] : memref<25x8x8xf32, #tpu.memory_space<vmem>>, vector<1x8x8xf32>
    %204 = vector.shape_cast %203 : vector<1x8x8xf32> to vector<8x8xf32>
    %cst_209 = arith.constant dense<0.000000e+00> : vector<64x8xf32>
    %205 = tpu.matmul %202, %204, %cst_209 {dimension_numbers = #tpu.dot_dimension_numbers<[1], [0], [0], [1], [0, 0, 1, 1], [], []>} : vector<64x8xf32>, vector<8x8xf32>, vector<64x8xf32> -> vector<64x8xf32>
    %206 = arith.addf %200, %205 : vector<64x8xf32>
    %c4_210 = arith.constant 4 : index
    %c1_211 = arith.constant 1 : index
    %c0_212 = arith.constant 0 : index
    %207 = vector.load %arg8[%c4_210, %c1_211, %c0_212] : memref<12x12x8xf32, #tpu.memory_space<vmem>>, vector<8x8x8xf32>
    %208 = vector.shape_cast %207 : vector<8x8x8xf32> to vector<64x8xf32>
    %c21 = arith.constant 21 : index
    %c0_213 = arith.constant 0 : index
    %c0_214 = arith.constant 0 : index
    %209 = vector.load %arg4[%c21, %c0_213, %c0_214] : memref<25x8x8xf32, #tpu.memory_space<vmem>>, vector<1x8x8xf32>
    %210 = vector.shape_cast %209 : vector<1x8x8xf32> to vector<8x8xf32>
    %cst_215 = arith.constant dense<0.000000e+00> : vector<64x8xf32>
    %211 = tpu.matmul %208, %210, %cst_215 {dimension_numbers = #tpu.dot_dimension_numbers<[1], [0], [0], [1], [0, 0, 1, 1], [], []>} : vector<64x8xf32>, vector<8x8xf32>, vector<64x8xf32> -> vector<64x8xf32>
    %212 = arith.addf %206, %211 : vector<64x8xf32>
    %c4_216 = arith.constant 4 : index
    %c2_217 = arith.constant 2 : index
    %c0_218 = arith.constant 0 : index
    %213 = vector.load %arg8[%c4_216, %c2_217, %c0_218] : memref<12x12x8xf32, #tpu.memory_space<vmem>>, vector<8x8x8xf32>
    %214 = vector.shape_cast %213 : vector<8x8x8xf32> to vector<64x8xf32>
    %c22 = arith.constant 22 : index
    %c0_219 = arith.constant 0 : index
    %c0_220 = arith.constant 0 : index
    %215 = vector.load %arg4[%c22, %c0_219, %c0_220] : memref<25x8x8xf32, #tpu.memory_space<vmem>>, vector<1x8x8xf32>
    %216 = vector.shape_cast %215 : vector<1x8x8xf32> to vector<8x8xf32>
    %cst_221 = arith.constant dense<0.000000e+00> : vector<64x8xf32>
    %217 = tpu.matmul %214, %216, %cst_221 {dimension_numbers = #tpu.dot_dimension_numbers<[1], [0], [0], [1], [0, 0, 1, 1], [], []>} : vector<64x8xf32>, vector<8x8xf32>, vector<64x8xf32> -> vector<64x8xf32>
    %218 = arith.addf %212, %217 : vector<64x8xf32>
    %c4_222 = arith.constant 4 : index
    %c3_223 = arith.constant 3 : index
    %c0_224 = arith.constant 0 : index
    %219 = vector.load %arg8[%c4_222, %c3_223, %c0_224] : memref<12x12x8xf32, #tpu.memory_space<vmem>>, vector<8x8x8xf32>
    %220 = vector.shape_cast %219 : vector<8x8x8xf32> to vector<64x8xf32>
    %c23 = arith.constant 23 : index
    %c0_225 = arith.constant 0 : index
    %c0_226 = arith.constant 0 : index
    %221 = vector.load %arg4[%c23, %c0_225, %c0_226] : memref<25x8x8xf32, #tpu.memory_space<vmem>>, vector<1x8x8xf32>
    %222 = vector.shape_cast %221 : vector<1x8x8xf32> to vector<8x8xf32>
    %cst_227 = arith.constant dense<0.000000e+00> : vector<64x8xf32>
    %223 = tpu.matmul %220, %222, %cst_227 {dimension_numbers = #tpu.dot_dimension_numbers<[1], [0], [0], [1], [0, 0, 1, 1], [], []>} : vector<64x8xf32>, vector<8x8xf32>, vector<64x8xf32> -> vector<64x8xf32>
    %224 = arith.addf %218, %223 : vector<64x8xf32>
    %c4_228 = arith.constant 4 : index
    %c4_229 = arith.constant 4 : index
    %c0_230 = arith.constant 0 : index
    %225 = vector.load %arg8[%c4_228, %c4_229, %c0_230] : memref<12x12x8xf32, #tpu.memory_space<vmem>>, vector<8x8x8xf32>
    %226 = vector.shape_cast %225 : vector<8x8x8xf32> to vector<64x8xf32>
    %c24 = arith.constant 24 : index
    %c0_231 = arith.constant 0 : index
    %c0_232 = arith.constant 0 : index
    %227 = vector.load %arg4[%c24, %c0_231, %c0_232] : memref<25x8x8xf32, #tpu.memory_space<vmem>>, vector<1x8x8xf32>
    %228 = vector.shape_cast %227 : vector<1x8x8xf32> to vector<8x8xf32>
    %cst_233 = arith.constant dense<0.000000e+00> : vector<64x8xf32>
    %229 = tpu.matmul %226, %228, %cst_233 {dimension_numbers = #tpu.dot_dimension_numbers<[1], [0], [0], [1], [0, 0, 1, 1], [], []>} : vector<64x8xf32>, vector<8x8xf32>, vector<64x8xf32> -> vector<64x8xf32>
    %230 = arith.addf %224, %229 : vector<64x8xf32>
    %231 = vector.shape_cast %230 : vector<64x8xf32> to vector<8x8x8xf32>
    %232 = vector.shape_cast %231 : vector<8x8x8xf32> to vector<64x8xf32>
    %233 = tpu.transpose %232, [1, 0] : vector<64x8xf32> -> vector<8x64xf32>
    %c0_234 = arith.constant 0 : index
    %c0_235 = arith.constant 0 : index
    %c0_236 = arith.constant 0 : index
    %234 = vector.load %arg6[%c0_234, %c0_235, %c0_236] : memref<1x8x64xf32, #tpu.memory_space<vmem>>, vector<1x8x64xf32>
    %235 = vector.shape_cast %234 : vector<1x8x64xf32> to vector<8x64xf32>
    %236 = vector.shape_cast %233 : vector<8x64xf32> to vector<1x8x64xf32>
    tpu.vector_store %arg6[%c0_234, %c0_235, %c0_236], %236 {strides = array<i32>} : memref<1x8x64xf32, #tpu.memory_space<vmem>>, vector<1x8x64xf32>,
    return
  }
  func.func @transform_0(%arg0: i32) -> (i32, i32, i32, i32) {
    %c0_i32 = arith.constant 0 : i32
    %c0_i32_0 = arith.constant 0 : i32
    %c0_i32_1 = arith.constant 0 : i32
    %c0_i32_2 = arith.constant 0 : i32
    return %arg0, %c0_i32, %c0_i32_0, %c0_i32_1 : i32, i32, i32, i32
  }
  func.func @transform_1(%arg0: i32) -> (i32, i32, i32) {
    %c0_i32 = arith.constant 0 : i32
    %c0_i32_0 = arith.constant 0 : i32
    %c0_i32_1 = arith.constant 0 : i32
    %c0_i32_2 = arith.constant 0 : i32
    return %c0_i32, %c0_i32_0, %c0_i32_1 : i32, i32, i32
  }
  func.func @transform_2(%arg0: i32) -> (i32, i32) {
    %c0_i32 = arith.constant 0 : i32
    %c0_i32_0 = arith.constant 0 : i32
    %c0_i32_1 = arith.constant 0 : i32
    return %c0_i32, %c0_i32_0 : i32, i32
  }
  func.func @transform_3(%arg0: i32) -> (i32, i32, i32) {
    %c0_i32 = arith.constant 0 : i32
    %c0_i32_0 = arith.constant 0 : i32
    %c0_i32_1 = arith.constant 0 : i32
    %c0_i32_2 = arith.constant 0 : i32
    return %c0_i32, %c0_i32_0, %c0_i32_1 : i32, i32, i32
  }
  func.func @transform_4(%arg0: i32) -> (i32, i32) {
    %c0_i32 = arith.constant 0 : i32
    %c0_i32_0 = arith.constant 0 : i32
    %c0_i32_1 = arith.constant 0 : i32
    return %c0_i32, %c0_i32_0 : i32, i32
  }
  func.func @transform_5(%arg0: i32) -> (i32, i32, i32) {
    %c0_i32 = arith.constant 0 : i32
    %c0_i32_0 = arith.constant 0 : i32
    %c0_i32_1 = arith.constant 0 : i32
    return %arg0, %c0_i32, %c0_i32_0 : i32, i32, i32
  }
}

</mosaic_0001>

<llo_original>
// kernel: forward.1
$region0: #{forward.1}
  #allocation0 [shape = 'u32[]', space=smem, size = 0x4, offset = 0x4, fixed_abs, tag = 'smem constant byte address 0x4 - core index']
  #allocation1 [shape = 'u32[144,128]{1,0:T(1,128)}', space=vmem, size = 0x12000, scoped, tag = 'internal scratch']
  #allocation2 [shape = 'f32[18,18,4]{2,1,0:T(8,128)}', space=vmem, size = 0x36000, scoped, tag = 'scratch operand']
  #allocation3 [shape = 'f32[12,12,8]{2,1,0:T(8,128)}', space=vmem, size = 0x18000, scoped, tag = 'scratch operand']
  %s0 = inlined_call_operand.vmem [shape: f32[2,16,16,4], index: 0, kind: input, shape index: {}]
  %s1 = inlined_call_operand.vmem [shape: f32[9,4,8], index: 1, kind: input, shape index: {}]
  %s2 = inlined_call_operand.vmem [shape: f32[1,8], index: 2, kind: input, shape index: {}]
  %s3 = inlined_call_operand.vmem [shape: f32[25,8,8], index: 3, kind: input, shape index: {}]
  %s4 = inlined_call_operand.vmem [shape: f32[1,8], index: 4, kind: input, shape index: {}]
  %s5 = inlined_call_operand.vmem [shape: f32[2,8,64], index: 5, kind: output, shape index: {}]
  %s6 = sld [smem:[#allocation0]]
  $region53: #{forward.1} parent=0
    _
  %s8 = ssub.s32 1, %s6
  %s9 = scalar_select 0, %s8, %s6
  loop: start=0, step=1, limit=4
  $region2: #{forward.1} parent=0 // loop_pre_header
    _
  $region3: #{forward.1} parent=0 // loop_header
    %s11 = sphi 0, %s15
    %p12 = scmp.ge.s32.totalorder %s11, 4
    %s21 = sphi 0, %s23
    %s24 = sphi 0, %s21
    %s25 = sphi 0, %s24
    %s41 = sphi 0, %s25
    %s45 = sphi 0, %s45
    %s47 = sphi 0, %s45
    %s48 = sphi 0, %s47
    %s62 = sphi 0, %s48
    %s66 = sphi 0, %s66
    %s68 = sphi 0, %s66
    %s69 = sphi 0, %s68
    %s83 = sphi 0, %s69
    %s87 = sphi 0, %s87
    %s89 = sphi 0, %s87
    %s90 = sphi 0, %s89
    %s104 = sphi 0, %s90
    %s108 = sphi 0, %s108
    %s110 = sphi 0, %s108
    %s111 = sphi 0, %s110
    %s125 = sphi 0, %s111
    %s131 = sphi 0, %s133
    %s134 = sphi 0, %s131
    %s135 = sphi 0, %s134
    %s151 = sphi 0, %s135
  $region4: #{forward.1} parent=0 // loop_header_branch
    %14 = sbr.rel (%p12) target = $region8
  $region5: #{forward.1} parent=0 // loop_body
    %s16 = ssub.s32 %s11, 1
    %s17 = ssub.s32 %s11, 2
    %s18 = sadd.s32 %s11, 1
    %s19 = ssub.s32 %s11, %s18
    %p20 = scmp.eq.s32.totalorder %s19, 0
    %s22 = sadd.s32 %s21, 1
    %s23 = scalar_select %p20, %s21, %s22
    %p26 = pneg %p20
    %p27 = scmp.eq.s32.totalorder %s11, 1
    %p28 = por %p26, %p27
    %p29 = scmp.ne.s32.totalorder %s21, %s24
    %p30 = scmp.eq.s32.totalorder %s11, 0
    %p31 = por %p29, %p30
    %p32 = scmp.ne.s32.totalorder %s21, %s24
    %p33 = scmp.eq.s32.totalorder %s16, 1
    %p34 = por %p32, %p33
    %p35 = scmp.ne.s32.totalorder %s24, %s25
    %p36 = scmp.eq.s32.totalorder %s16, 0
    %p37 = por %p35, %p36
    %p38 = scmp.ne.s32.totalorder %s24, %s25
    %p39 = scmp.eq.s32.totalorder %s17, 1
    %p40 = por %p38, %p39
    %p42 = scmp.ne.s32.totalorder %s25, %s41
    %p43 = scmp.eq.s32.totalorder %s17, 0
    %p44 = por %p42, %p43
    %s46 = sadd.s32 %s45, 1
    %p49 = scmp.eq.s32.totalorder %s11, 1
    %p50 = scmp.ne.s32.totalorder %s45, %s47
    %p51 = scmp.eq.s32.totalorder %s11, 0
    %p52 = por %p50, %p51
    %p53 = scmp.ne.s32.totalorder %s45, %s47
    %p54 = scmp.eq.s32.totalorder %s16, 1
    %p55 = por %p53, %p54
    %p56 = scmp.ne.s32.totalorder %s47, %s48
    %p57 = scmp.eq.s32.totalorder %s16, 0
    %p58 = por %p56, %p57
    %p59 = scmp.ne.s32.totalorder %s47, %s48
    %p60 = scmp.eq.s32.totalorder %s17, 1
    %p61 = por %p59, %p60
    %p63 = scmp.ne.s32.totalorder %s48, %s62
    %p64 = scmp.eq.s32.totalorder %s17, 0
    %p65 = por %p63, %p64
    %s67 = sadd.s32 %s66, 1
    %p70 = scmp.eq.s32.totalorder %s11, 1
    %p71 = scmp.ne.s32.totalorder %s66, %s68
    %p72 = scmp.eq.s32.totalorder %s11, 0
    %p73 = por %p71, %p72
    %p74 = scmp.ne.s32.totalorder %s66, %s68
    %p75 = scmp.eq.s32.totalorder %s16, 1
    %p76 = por %p74, %p75
    %p77 = scmp.ne.s32.totalorder %s68, %s69
    %p78 = scmp.eq.s32.totalorder %s16, 0
    %p79 = por %p77, %p78
    %p80 = scmp.ne.s32.totalorder %s68, %s69
    %p81 = scmp.eq.s32.totalorder %s17, 1
    %p82 = por %p80, %p81
    %p84 = scmp.ne.s32.totalorder %s69, %s83
    %p85 = scmp.eq.s32.totalorder %s17, 0
    %p86 = por %p84, %p85
    %s88 = sadd.s32 %s87, 1
    %p91 = scmp.eq.s32.totalorder %s11, 1
    %p92 = scmp.ne.s32.totalorder %s87, %s89
    %p93 = scmp.eq.s32.totalorder %s11, 0
    %p94 = por %p92, %p93
    %p95 = scmp.ne.s32.totalorder %s87, %s89
    %p96 = scmp.eq.s32.totalorder %s16, 1
    %p97 = por %p95, %p96
    %p98 = scmp.ne.s32.totalorder %s89, %s90
    %p99 = scmp.eq.s32.totalorder %s16, 0
    %p100 = por %p98, %p99
    %p101 = scmp.ne.s32.totalorder %s89, %s90
    %p102 = scmp.eq.s32.totalorder %s17, 1
    %p103 = por %p101, %p102
    %p105 = scmp.ne.s32.totalorder %s90, %s104
    %p106 = scmp.eq.s32.totalorder %s17, 0
    %p107 = por %p105, %p106
    %s109 = sadd.s32 %s108, 1
    %p112 = scmp.eq.s32.totalorder %s11, 1
    %p113 = scmp.ne.s32.totalorder %s108, %s110
    %p114 = scmp.eq.s32.totalorder %s11, 0
    %p115 = por %p113, %p114
    %p116 = scmp.ne.s32.totalorder %s108, %s110
    %p117 = scmp.eq.s32.totalorder %s16, 1
    %p118 = por %p116, %p117
    %p119 = scmp.ne.s32.totalorder %s110, %s111
    %p120 = scmp.eq.s32.totalorder %s16, 0
    %p121 = por %p119, %p120
    %p122 = scmp.ne.s32.totalorder %s110, %s111
    %p123 = scmp.eq.s32.totalorder %s17, 1
    %p124 = por %p122, %p123
    %p126 = scmp.ne.s32.totalorder %s111, %s125
    %p127 = scmp.eq.s32.totalorder %s17, 0
    %p128 = por %p126, %p127
    %s129 = ssub.s32 %s11, %s18
    %p130 = scmp.eq.s32.totalorder %s129, 0
    %s132 = sadd.s32 %s131, 1
    %s133 = scalar_select %p130, %s131, %s132
    %p136 = pneg %p130
    %p137 = scmp.eq.s32.totalorder %s11, 1
    %p138 = por %p136, %p137
    %p139 = scmp.ne.s32.totalorder %s131, %s134
    %p140 = scmp.eq.s32.totalorder %s11, 0
    %p141 = por %p139, %p140
    %p142 = scmp.ne.s32.totalorder %s131, %s134
    %p143 = scmp.eq.s32.totalorder %s16, 1
    %p144 = por %p142, %p143
    %p145 = scmp.ne.s32.totalorder %s134, %s135
    %p146 = scmp.eq.s32.totalorder %s16, 0
    %p147 = por %p145, %p146
    %p148 = scmp.ne.s32.totalorder %s134, %s135
    %p149 = scmp.eq.s32.totalorder %s17, 1
    %p150 = por %p148, %p149
    %p152 = scmp.ne.s32.totalorder %s135, %s151
    %p153 = scmp.eq.s32.totalorder %s17, 0
    %p154 = por %p152, %p153
    %p155 = scmp.le.s32.totalorder 1, %s11
    %p156 = scmp.lt.s32.totalorder %s11, 3
    %p157 = pnand %p155, %p156
    %p158 = pneg %p157
    // Predicated region
    $region9: #{forward.1} parent=5 // pred_check
      _
    $region10: #{forward.1} parent=5 // pred_check_branch
      %160 = sbr.rel (%p157) target = $region12
    $region11: #{forward.1} parent=5 // pred_region
      %s161 = ssub.s32 %s11, 1
      // Predicated region
      $region13: #{forward.1} parent=11 // pred_check
        %p162 = pneg %p58
      $region14: #{forward.1} parent=11 // pred_check_branch
        %164 = sbr.rel (%p162) target = $region16
      $region15: #{forward.1} parent=11 // pred_region
        _
      $region16: #{forward.1} parent=11 // pred_fallthru
        _
      // Predicated region
      $region17: #{forward.1} parent=11 // pred_check
        %p165 = pneg %p79
      $region18: #{forward.1} parent=11 // pred_check_branch
        %167 = sbr.rel (%p165) target = $region20
      $region19: #{forward.1} parent=11 // pred_region
        _
      $region20: #{forward.1} parent=11 // pred_fallthru
        _
      // Predicated region
      $region21: #{forward.1} parent=11 // pred_check
        %p168 = pneg %p100
      $region22: #{forward.1} parent=11 // pred_check_branch
        %170 = sbr.rel (%p168) target = $region24
      $region23: #{forward.1} parent=11 // pred_region
        _
      $region24: #{forward.1} parent=11 // pred_fallthru
        _
      // Predicated region
      $region25: #{forward.1} parent=11 // pred_check
        %p171 = pneg %p121
      $region26: #{forward.1} parent=11 // pred_check_branch
        %173 = sbr.rel (%p171) target = $region28
      $region27: #{forward.1} parent=11 // pred_region
        _
      $region28: #{forward.1} parent=11 // pred_fallthru
        _
    $region12: #{forward.1} parent=5 // pred_fallthru
      _
    %p174 = scmp.lt.s32.totalorder %s11, 2
    // Predicated region
    $region29: #{forward.1} parent=5 // pred_check
      %p175 = pneg %p174
    $region30: #{forward.1} parent=5 // pred_check_branch
      %177 = sbr.rel (%p175) target = $region32
    $region31: #{forward.1} parent=5 // pred_region
      // Predicated region
      $region33: #{forward.1} parent=31 // pred_check
        %p178 = pneg %p31
      $region34: #{forward.1} parent=31 // pred_check_branch
        %180 = sbr.rel (%p178) target = $region36
      $region35: #{forward.1} parent=31 // pred_region
        %p181 = scmp.lt.s32.totalorder %s11, 1
        %s182 = scalar_select %p181, %s11, 1
        %s183 = smul.addr %s182, 32
        %s184 = smul.addr %s183, 8
        %s185 = scalar_lea.vmem %s0, %s184
      $region36: #{forward.1} parent=31 // pred_fallthru
        _
    $region32: #{forward.1} parent=5 // pred_fallthru
      _
    %p186 = scmp.le.s32.totalorder 1, %s11
    %p187 = scmp.lt.s32.totalorder %s11, 3
    %p188 = pnand %p186, %p187
    %p189 = pneg %p188
    // Predicated region
    $region37: #{forward.1} parent=5 // pred_check
      _
    $region38: #{forward.1} parent=5 // pred_check_branch
      %191 = sbr.rel (%p188) target = $region40
    $region39: #{forward.1} parent=5 // pred_region
      %s192 = ssub.s32 %s11, 1
      %p193 = scmp.lt.s32.totalorder %s16, 1
      %s194 = scalar_select %p193, %s16, 1
      %s195 = smul.addr %s194, 32
      %s196 = smul.addr %s195, 8
      %s197 = scalar_lea.vmem %s0, %s196
      %p198 = pneg %p37
      %p199 = pneg %p34
      %p200 = pneg %p58
      %p201 = pneg %p55
      %p202 = pneg %p79
      %p203 = pneg %p76
      %p204 = pneg %p100
      %p205 = pneg %p97
      %p206 = pneg %p121
      %p207 = pneg %p118
      %p208 = pneg %p147
      %p209 = pneg %p144
      %p210 = scmp.lt.s32.totalorder %s16, 1
      %s211 = scalar_select %p210, %s16, 1
      %s212 = smul.addr %s211, 8
      %s213 = scalar_lea.vmem %s5, %s212
      %p214 = scmp.lt.s32.totalorder %s16, 1
      %s215 = scalar_select %p214, %s16, 1
      %s216 = smul.addr %s215, 32
      %s217 = smul.addr %s216, 8
      %s218 = scalar_lea.vmem %s0, %s217
      %p219 = scmp.lt.s32.totalorder %s16, 1
      %s220 = scalar_select %p219, %s16, 1
      %s221 = smul.addr %s220, 8
      %s222 = scalar_lea.vmem %s5, %s221
      %v223 = vld [vmem:[%s218] sm:$0xff]
      %v224 = vld [vmem:[%s218 + $0x8] sm:$0xff]
      %v225 = vld [vmem:[%s218 + $0x10] sm:$0xff]
      %v226 = vld [vmem:[%s218 + $0x18] sm:$0xff]
      %v227 = vld [vmem:[%s218 + $0x20] sm:$0xff]
      %v228 = vld [vmem:[%s218 + $0x28] sm:$0xff]
      %v229 = vld [vmem:[%s218 + $0x30] sm:$0xff]
      %v230 = vld [vmem:[%s218 + $0x38] sm:$0xff]
      %v231 = vld [vmem:[%s218 + $0x40] sm:$0xff]
      %v232 = vld [vmem:[%s218 + $0x48] sm:$0xff]
      %v233 = vld [vmem:[%s218 + $0x50] sm:$0xff]
      %v234 = vld [vmem:[%s218 + $0x58] sm:$0xff]
      %v235 = vld [vmem:[%s218 + $0x60] sm:$0xff]
      %v236 = vld [vmem:[%s218 + $0x68] sm:$0xff]
      %v237 = vld [vmem:[%s218 + $0x70] sm:$0xff]
      %v238 = vld [vmem:[%s218 + $0x78] sm:$0xff]
      %v239 = vld [vmem:[%s218 + $0x80] sm:$0xff]
      %v240 = vld [vmem:[%s218 + $0x88] sm:$0xff]
      %v241 = vld [vmem:[%s218 + $0x90] sm:$0xff]
      %v242 = vld [vmem:[%s218 + $0x98] sm:$0xff]
      %v243 = vld [vmem:[%s218 + $0xa0] sm:$0xff]
      %v244 = vld [vmem:[%s218 + $0xa8] sm:$0xff]
      %v245 = vld [vmem:[%s218 + $0xb0] sm:$0xff]
      %v246 = vld [vmem:[%s218 + $0xb8] sm:$0xff]
      %v247 = vld [vmem:[%s218 + $0xc0] sm:$0xff]
      %v248 = vld [vmem:[%s218 + $0xc8] sm:$0xff]
      %v249 = vld [vmem:[%s218 + $0xd0] sm:$0xff]
      %v250 = vld [vmem:[%s218 + $0xd8] sm:$0xff]
      %v251 = vld [vmem:[%s218 + $0xe0] sm:$0xff]
      %v252 = vld [vmem:[%s218 + $0xe8] sm:$0xff]
      %v253 = vld [vmem:[%s218 + $0xf0] sm:$0xff]
      %v254 = vld [vmem:[%s218 + $0xf8] sm:$0xff]
      %vm255 = vcmask 31744
      %256 = vst.msk [vmem:[#allocation2] sm:$0xff] %vm255, 0.0
      %257 = vst.msk [vmem:[#allocation2 + $0x8] sm:$0xff] %vm255, 0.0
      %vm258 = vcmask 25600
      %259 = vst.msk [vmem:[#allocation2 + $0x10] sm:$0x3] %vm258, 0.0
      %260 = vst.msk [vmem:[#allocation2 + $0x18] sm:$0xff] %vm255, 0.0
      %261 = vst.msk [vmem:[#allocation2 + $0x20] sm:$0xff] %vm255, 0.0
      %262 = vst.msk [vmem:[#allocation2 + $0x28] sm:$0x3] %vm258, 0.0
      %263 = vst.msk [vmem:[#allocation2 + $0x30] sm:$0xff] %vm255, 0.0
      %264 = vst.msk [vmem:[#allocation2 + $0x38] sm:$0xff] %vm255, 0.0
      %265 = vst.msk [vmem:[#allocation2 + $0x40] sm:$0x3] %vm258, 0.0
      %266 = vst.msk [vmem:[#allocation2 + $0x48] sm:$0xff] %vm255, 0.0
      %267 = vst.msk [vmem:[#allocation2 + $0x50] sm:$0xff] %vm255, 0.0
      %268 = vst.msk [vmem:[#allocation2 + $0x58] sm:$0x3] %vm258, 0.0
      %269 = vst.msk [vmem:[#allocation2 + $0x60] sm:$0xff] %vm255, 0.0
      %270 = vst.msk [vmem:[#allocation2 + $0x68] sm:$0xff] %vm255, 0.0
      %271 = vst.msk [vmem:[#allocation2 + $0x70] sm:$0x3] %vm258, 0.0
      %272 = vst.msk [vmem:[#allocation2 + $0x78] sm:$0xff] %vm255, 0.0
      %273 = vst.msk [vmem:[#allocation2 + $0x80] sm:$0xff] %vm255, 0.0
      %274 = vst.msk [vmem:[#allocation2 + $0x88] sm:$0x3] %vm258, 0.0
      %275 = vst.msk [vmem:[#allocation2 + $0x90] sm:$0xff] %vm255, 0.0
      %276 = vst.msk [vmem:[#allocation2 + $0x98] sm:$0xff] %vm255, 0.0
      %277 = vst.msk [vmem:[#allocation2 + $0xa0] sm:$0x3] %vm258, 0.0
      %278 = vst.msk [vmem:[#allocation2 + $0xa8] sm:$0xff] %vm255, 0.0
      %279 = vst.msk [vmem:[#allocation2 + $0xb0] sm:$0xff] %vm255, 0.0
      %280 = vst.msk [vmem:[#allocation2 + $0xb8] sm:$0x3] %vm258, 0.0
      %281 = vst.msk [vmem:[#allocation2 + $0xc0] sm:$0xff] %vm255, 0.0
      %282 = vst.msk [vmem:[#allocation2 + $0xc8] sm:$0xff] %vm255, 0.0
      %283 = vst.msk [vmem:[#allocation2 + $0xd0] sm:$0x3] %vm258, 0.0
      %284 = vst.msk [vmem:[#allocation2 + $0xd8] sm:$0xff] %vm255, 0.0
      %285 = vst.msk [vmem:[#allocation2 + $0xe0] sm:$0xff] %vm255, 0.0
      %286 = vst.msk [vmem:[#allocation2 + $0xe8] sm:$0x3] %vm258, 0.0
      %287 = vst.msk [vmem:[#allocation2 + $0xf0] sm:$0xff] %vm255, 0.0
      %288 = vst.msk [vmem:[#allocation2 + $0xf8] sm:$0xff] %vm255, 0.0
      %289 = vst.msk [vmem:[#allocation2 + $0x100] sm:$0x3] %vm258, 0.0
      %290 = vst.msk [vmem:[#allocation2 + $0x108] sm:$0xff] %vm255, 0.0
      %291 = vst.msk [vmem:[#allocation2 + $0x110] sm:$0xff] %vm255, 0.0
      %292 = vst.msk [vmem:[#allocation2 + $0x118] sm:$0x3] %vm258, 0.0
      %293 = vst.msk [vmem:[#allocation2 + $0x120] sm:$0xff] %vm255, 0.0
      %294 = vst.msk [vmem:[#allocation2 + $0x128] sm:$0xff] %vm255, 0.0
      %295 = vst.msk [vmem:[#allocation2 + $0x130] sm:$0x3] %vm258, 0.0
      %296 = vst.msk [vmem:[#allocation2 + $0x138] sm:$0xff] %vm255, 0.0
      %297 = vst.msk [vmem:[#allocation2 + $0x140] sm:$0xff] %vm255, 0.0
      %298 = vst.msk [vmem:[#allocation2 + $0x148] sm:$0x3] %vm258, 0.0
      %299 = vst.msk [vmem:[#allocation2 + $0x150] sm:$0xff] %vm255, 0.0
      %300 = vst.msk [vmem:[#allocation2 + $0x158] sm:$0xff] %vm255, 0.0
      %301 = vst.msk [vmem:[#allocation2 + $0x160] sm:$0x3] %vm258, 0.0
      %302 = vst.msk [vmem:[#allocation2 + $0x168] sm:$0xff] %vm255, 0.0
      %303 = vst.msk [vmem:[#allocation2 + $0x170] sm:$0xff] %vm255, 0.0
      %304 = vst.msk [vmem:[#allocation2 + $0x178] sm:$0x3] %vm258, 0.0
      %305 = vst.msk [vmem:[#allocation2 + $0x180] sm:$0xff] %vm255, 0.0
      %306 = vst.msk [vmem:[#allocation2 + $0x188] sm:$0xff] %vm255, 0.0
      %307 = vst.msk [vmem:[#allocation2 + $0x190] sm:$0x3] %vm258, 0.0
      %308 = vst.msk [vmem:[#allocation2 + $0x198] sm:$0xff] %vm255, 0.0
      %309 = vst.msk [vmem:[#allocation2 + $0x1a0] sm:$0xff] %vm255, 0.0
      %310 = vst.msk [vmem:[#allocation2 + $0x1a8] sm:$0x3] %vm258, 0.0
      %s311 = scalar_lea.vmem [#allocation2], 24
      %312 = vst.msk [vmem:[%s311 + $0x1] sm:$0xff] %vm255, %v223
      %313 = vst.msk [vmem:[%s311 + $0x9] sm:$0xff] %vm255, %v224
      %314 = vst.msk [vmem:[%s311 + $0x19] sm:$0xff] %vm255, %v225
      %315 = vst.msk [vmem:[%s311 + $0x21] sm:$0xff] %vm255, %v226
      %316 = vst.msk [vmem:[%s311 + $0x31] sm:$0xff] %vm255, %v227
      %317 = vst.msk [vmem:[%s311 + $0x39] sm:$0xff] %vm255, %v228
      %318 = vst.msk [vmem:[%s311 + $0x49] sm:$0xff] %vm255, %v229
      %319 = vst.msk [vmem:[%s311 + $0x51] sm:$0xff] %vm255, %v230
      %320 = vst.msk [vmem:[%s311 + $0x61] sm:$0xff] %vm255, %v231
      %321 = vst.msk [vmem:[%s311 + $0x69] sm:$0xff] %vm255, %v232
      %322 = vst.msk [vmem:[%s311 + $0x79] sm:$0xff] %vm255, %v233
      %323 = vst.msk [vmem:[%s311 + $0x81] sm:$0xff] %vm255, %v234
      %324 = vst.msk [vmem:[%s311 + $0x91] sm:$0xff] %vm255, %v235
      %325 = vst.msk [vmem:[%s311 + $0x99] sm:$0xff] %vm255, %v236
      %326 = vst.msk [vmem:[%s311 + $0xa9] sm:$0xff] %vm255, %v237
      %327 = vst.msk [vmem:[%s311 + $0xb1] sm:$0xff] %vm255, %v238
      %328 = vst.msk [vmem:[%s311 + $0xc1] sm:$0xff] %vm255, %v239
      %329 = vst.msk [vmem:[%s311 + $0xc9] sm:$0xff] %vm255, %v240
      %330 = vst.msk [vmem:[%s311 + $0xd9] sm:$0xff] %vm255, %v241
      %331 = vst.msk [vmem:[%s311 + $0xe1] sm:$0xff] %vm255, %v242
      %332 = vst.msk [vmem:[%s311 + $0xf1] sm:$0xff] %vm255, %v243
      %333 = vst.msk [vmem:[%s311 + $0xf9] sm:$0xff] %vm255, %v244
      %334 = vst.msk [vmem:[%s311 + $0x109] sm:$0xff] %vm255, %v245
      %335 = vst.msk [vmem:[%s311 + $0x111] sm:$0xff] %vm255, %v246
      %336 = vst.msk [vmem:[%s311 + $0x121] sm:$0xff] %vm255, %v247
      %337 = vst.msk [vmem:[%s311 + $0x129] sm:$0xff] %vm255, %v248
      %338 = vst.msk [vmem:[%s311 + $0x139] sm:$0xff] %vm255, %v249
      %339 = vst.msk [vmem:[%s311 + $0x141] sm:$0xff] %vm255, %v250
      %340 = vst.msk [vmem:[%s311 + $0x151] sm:$0xff] %vm255, %v251
      %341 = vst.msk [vmem:[%s311 + $0x159] sm:$0xff] %vm255, %v252
      %342 = vst.msk [vmem:[%s311 + $0x169] sm:$0xff] %vm255, %v253
      %343 = vst.msk [vmem:[%s311 + $0x171] sm:$0xff] %vm255, %v254
      %v344 = vld [vmem:[%s2] sm:$0x1]
      %v346 = vlaneseq
      %v347 = vshrl.u32 %v346, 7
      %v348 = vsub.s32 0, %v347
      %v349 = vrot.slane %v344, %v348
      %v351 = vld [vmem:[#allocation2] sm:$0xff]
      %v352 = vld [vmem:[#allocation2 + $0x8] sm:$0xff]
      %v353 = vld [vmem:[#allocation2 + $0x18] sm:$0xff]
      %v354 = vld [vmem:[#allocation2 + $0x20] sm:$0xff]
      %v355 = vld [vmem:[#allocation2 + $0x30] sm:$0xff]
      %v356 = vld [vmem:[#allocation2 + $0x38] sm:$0xff]
      %v357 = vld [vmem:[#allocation2 + $0x48] sm:$0xff]
      %v358 = vld [vmem:[#allocation2 + $0x50] sm:$0xff]
      %v359 = vld [vmem:[#allocation2 + $0x60] sm:$0xff]
      %v360 = vld [vmem:[#allocation2 + $0x68] sm:$0xff]
      %v361 = vld [vmem:[#allocation2 + $0x78] sm:$0xff]
      %v362 = vld [vmem:[#allocation2 + $0x80] sm:$0xff]
      %v363 = vld [vmem:[#allocation2 + $0x90] sm:$0xff]
      %v364 = vld [vmem:[#allocation2 + $0x98] sm:$0xff]
      %v365 = vld [vmem:[#allocation2 + $0xa8] sm:$0xff]
      %v366 = vld [vmem:[#allocation2 + $0xb0] sm:$0xff]
      %v367 = vld [vmem:[#allocation2 + $0xc0] sm:$0xff]
      %v368 = vld [vmem:[#allocation2 + $0xc8] sm:$0xff]
      %v369 = vld [vmem:[#allocation2 + $0xd8] sm:$0xff]
      %v370 = vld [vmem:[#allocation2 + $0xe0] sm:$0xff]
      %v371 = vld [vmem:[#allocation2 + $0xf0] sm:$0xff]
      %v372 = vld [vmem:[#allocation2 + $0xf8] sm:$0xff]
      %v373 = vld [vmem:[#allocation2 + $0x108] sm:$0xff]
      %v374 = vld [vmem:[#allocation2 + $0x110] sm:$0xff]
      %v375 = vld [vmem:[#allocation2 + $0x120] sm:$0xff]
      %v376 = vld [vmem:[#allocation2 + $0x128] sm:$0xff]
      %v377 = vld [vmem:[#allocation2 + $0x138] sm:$0xff]
      %v378 = vld [vmem:[#allocation2 + $0x140] sm:$0xff]
      %v379 = vld [vmem:[#allocation2 + $0x150] sm:$0xff]
      %v380 = vld [vmem:[#allocation2 + $0x158] sm:$0xff]
      %v381 = vld [vmem:[#allocation2 + $0x168] sm:$0xff]
      %v382 = vld [vmem:[#allocation2 + $0x170] sm:$0xff]
      %v383 = vld [vmem:[%s1] sm:$0xf]
      %v385 = vsel %vm255, %v351, 0
      %v388 = vsel %vm255, %v352, 0
      %v391 = vsel %vm255, %v353, 0
      %v394 = vsel %vm255, %v354, 0
      %v397 = vsel %vm255, %v355, 0
      %v400 = vsel %vm255, %v356, 0
      %v403 = vsel %vm255, %v357, 0
      %v406 = vsel %vm255, %v358, 0
      %v409 = vsel %vm255, %v359, 0
      %v412 = vsel %vm255, %v360, 0
      %v415 = vsel %vm255, %v361, 0
      %v418 = vsel %vm255, %v362, 0
      %v421 = vsel %vm255, %v363, 0
      %v424 = vsel %vm255, %v364, 0
      %v427 = vsel %vm255, %v365, 0
      %v430 = vsel %vm255, %v366, 0
      %v433 = vsel %vm255, %v367, 0
      %v436 = vsel %vm255, %v368, 0
      %v439 = vsel %vm255, %v369, 0
      %v442 = vsel %vm255, %v370, 0
      %v445 = vsel %vm255, %v371, 0
      %v448 = vsel %vm255, %v372, 0
      %v451 = vsel %vm255, %v373, 0
      %v454 = vsel %vm255, %v374, 0
      %v457 = vsel %vm255, %v375, 0
      %v460 = vsel %vm255, %v376, 0
      %v463 = vsel %vm255, %v377, 0
      %v466 = vsel %vm255, %v378, 0
      %v469 = vsel %vm255, %v379, 0
      %v472 = vsel %vm255, %v380, 0
      %v475 = vsel %vm255, %v381, 0
      %v478 = vsel %vm255, %v382, 0
      %vm480 = vcmask 1043456
      %v482 = vsel %vm480, %v383, 0
      %484 = vmatprep.subr.mxu0 0.0
      %485 = vmatpush1.msra.mxu0 %v482
      %486 = vmatprep.subr.mxu0 0.0
      %487 = vmatpush1.msra.mxu0 0.0
      %488 = vmatprep.subr.mxu0 0.0
      %489 = vmatpush1.msra.mxu0 0.0
      %490 = vmatprep.subr.mxu0 0.0
      %491 = vmatpush1.msra.mxu0 0.0
      %492 = vmatprep.subr.mxu0 0.0
      %493 = vmatpush1.msra.mxu0 0.0
      %494 = vmatprep.subr.mxu0 0.0
      %495 = vmatpush1.msra.mxu0 0.0
      %496 = vmatprep.subr.mxu0 0.0
      %497 = vmatpush1.msra.mxu0 0.0
      %498 = vmatprep.subr.mxu0 0.0
      %499 = vmatpush1.msra.mxu0 0.0
      %500 = vmatprep.subr.mxu0 0.0
      %501 = vmatpush1.msra.mxu0 0.0
      %502 = vmatprep.subr.mxu0 0.0
      %503 = vmatpush1.msra.mxu0 0.0
      %504 = vmatprep.subr.mxu0 0.0
      %505 = vmatpush1.msra.mxu0 0.0
      %506 = vmatprep.subr.mxu0 0.0
      %507 = vmatpush1.msra.mxu0 0.0
      %508 = vmatprep.subr.mxu0 0.0
      %509 = vmatpush1.msra.mxu0 0.0
      %510 = vmatprep.subr.mxu0 0.0
      %511 = vmatpush1.msra.mxu0 0.0
      %512 = vmatprep.subr.mxu0 0.0
      %513 = vmatpush1.msra.mxu0 0.0
      %514 = vmatprep.subr.mxu0 0.0
      %515 = vmatpush1.msra.mxu0 0.0
      %516 = vmatprep.subr.mxu0 0.0
      %517 = vmatpush1.msra.mxu0 0.0
      %518 = vmatprep.subr.mxu0 0.0
      %519 = vmatpush1.msra.mxu0 0.0
      %520 = vmatprep.subr.mxu0 0.0
      %521 = vmatpush1.msra.mxu0 0.0
      %522 = vmatprep.subr.mxu0 0.0
      %523 = vmatpush1.msra.mxu0 0.0
      %524 = vmatprep.subr.mxu0 0.0
      %525 = vmatpush1.msra.mxu0 0.0
      %526 = vmatprep.subr.mxu0 0.0
      %527 = vmatpush1.msra.mxu0 0.0
      %528 = vmatprep.subr.mxu0 0.0
      %529 = vmatpush1.msra.mxu0 0.0
      %530 = vmatprep.subr.mxu0 0.0
      %531 = vmatpush1.msra.mxu0 0.0
      %532 = vmatprep.subr.mxu0 0.0
      %533 = vmatpush1.msra.mxu0 0.0
      %534 = vmatprep.subr.mxu0 0.0
      %535 = vmatpush1.msra.mxu0 0.0
      %536 = vmatprep.subr.mxu0 0.0
      %537 = vmatpush1.msra.mxu0 0.0
      %538 = vmatprep.subr.mxu0 0.0
      %539 = vmatpush1.msra.mxu0 0.0
      %540 = vmatprep.subr.mxu0 0.0
      %541 = vmatpush1.msra.mxu0 0.0
      %542 = vmatprep.subr.mxu0 0.0
      %543 = vmatpush1.msra.mxu0 0.0
      %544 = vmatprep.subr.mxu0 0.0
      %545 = vmatpush1.msra.mxu0 0.0
      %546 = vmatprep.subr.mxu0 0.0
      %547 = vmatpush1.msra.mxu0 0.0
      %548 = vmatprep.mubr.f32.mxu0 0.0
      %549 = vmatmul.mubr.f32.gmra.mrb[0].mxu0 %v385
      %v550 = vpop.f32.mrb[0].mxu0
      %v551 = vadd.f32 0.0, %v550
      %v552 = vpop.f32.mrb[0].mxu0
      %553 = vmatprep.mubr.f32.mxu0 0.0
      %554 = vmatmul.mubr.f32.gmra.mrb[0].mxu0 %v388
      %v555 = vpop.f32.mrb[0].mxu0
      %v556 = vadd.f32 0.0, %v555
      %v557 = vpop.f32.mrb[0].mxu0
      %558 = vmatprep.mubr.f32.mxu0 0.0
      %559 = vmatmul.mubr.f32.gmra.mrb[0].mxu0 %v391
      %v560 = vpop.f32.mrb[0].mxu0
      %v561 = vadd.f32 0.0, %v560
      %v562 = vpop.f32.mrb[0].mxu0
      %563 = vmatprep.mubr.f32.mxu0 0.0
      %564 = vmatmul.mubr.f32.gmra.mrb[0].mxu0 %v394
      %v565 = vpop.f32.mrb[0].mxu0
      %v566 = vadd.f32 0.0, %v565
      %v567 = vpop.f32.mrb[0].mxu0
      %568 = vmatprep.mubr.f32.mxu0 0.0
      %569 = vmatmul.mubr.f32.gmra.mrb[0].mxu0 %v397
      %v570 = vpop.f32.mrb[0].mxu0
      %v571 = vadd.f32 0.0, %v570
      %v572 = vpop.f32.mrb[0].mxu0
      %573 = vmatprep.mubr.f32.mxu0 0.0
      %574 = vmatmul.mubr.f32.gmra.mrb[0].mxu0 %v400
      %v575 = vpop.f32.mrb[0].mxu0
      %v576 = vadd.f32 0.0, %v575
      %v577 = vpop.f32.mrb[0].mxu0
      %578 = vmatprep.mubr.f32.mxu0 0.0
      %579 = vmatmul.mubr.f32.gmra.mrb[0].mxu0 %v403
      %v580 = vpop.f32.mrb[0].mxu0
      %v581 = vadd.f32 0.0, %v580
      %v582 = vpop.f32.mrb[0].mxu0
      %583 = vmatprep.mubr.f32.mxu0 0.0
      %584 = vmatmul.mubr.f32.gmra.mrb[0].mxu0 %v406
      %v585 = vpop.f32.mrb[0].mxu0
      %v586 = vadd.f32 0.0, %v585
      %v587 = vpop.f32.mrb[0].mxu0
      %588 = vmatprep.mubr.f32.mxu0 0.0
      %589 = vmatmul.mubr.f32.gmra.mrb[0].mxu0 %v409
      %v590 = vpop.f32.mrb[0].mxu0
      %v591 = vadd.f32 0.0, %v590
      %v592 = vpop.f32.mrb[0].mxu0
      %593 = vmatprep.mubr.f32.mxu0 0.0
      %594 = vmatmul.mubr.f32.gmra.mrb[0].mxu0 %v412
      %v595 = vpop.f32.mrb[0].mxu0
      %v596 = vadd.f32 0.0, %v595
      %v597 = vpop.f32.mrb[0].mxu0
      %598 = vmatprep.mubr.f32.mxu0 0.0
      %599 = vmatmul.mubr.f32.gmra.mrb[0].mxu0 %v415
      %v600 = vpop.f32.mrb[0].mxu0
      %v601 = vadd.f32 0.0, %v600
      %v602 = vpop.f32.mrb[0].mxu0
      %603 = vmatprep.mubr.f32.mxu0 0.0
      %604 = vmatmul.mubr.f32.gmra.mrb[0].mxu0 %v418
      %v605 = vpop.f32.mrb[0].mxu0
      %v606 = vadd.f32 0.0, %v605
      %v607 = vpop.f32.mrb[0].mxu0
      %608 = vmatprep.mubr.f32.mxu0 0.0
      %609 = vmatmul.mubr.f32.gmra.mrb[0].mxu0 %v421
      %v610 = vpop.f32.mrb[0].mxu0
      %v611 = vadd.f32 0.0, %v610
      %v612 = vpop.f32.mrb[0].mxu0
      %613 = vmatprep.mubr.f32.mxu0 0.0
      %614 = vmatmul.mubr.f32.gmra.mrb[0].mxu0 %v424
      %v615 = vpop.f32.mrb[0].mxu0
      %v616 = vadd.f32 0.0, %v615
      %v617 = vpop.f32.mrb[0].mxu0
      %618 = vmatprep.mubr.f32.mxu0 0.0
      %619 = vmatmul.mubr.f32.gmra.mrb[0].mxu0 %v427
      %v620 = vpop.f32.mrb[0].mxu0
      %v621 = vadd.f32 0.0, %v620
      %v622 = vpop.f32.mrb[0].mxu0
      %623 = vmatprep.mubr.f32.mxu0 0.0
      %624 = vmatmul.mubr.f32.gmra.mrb[0].mxu0 %v430
      %v625 = vpop.f32.mrb[0].mxu0
      %v626 = vadd.f32 0.0, %v625
      %v627 = vpop.f32.mrb[0].mxu0
      %628 = vmatprep.mubr.f32.mxu0 0.0
      %629 = vmatmul.mubr.f32.gmra.mrb[0].mxu0 %v433
      %v630 = vpop.f32.mrb[0].mxu0
      %v631 = vadd.f32 0.0, %v630
      %v632 = vpop.f32.mrb[0].mxu0
      %633 = vmatprep.mubr.f32.mxu0 0.0
      %634 = vmatmul.mubr.f32.gmra.mrb[0].mxu0 %v436
      %v635 = vpop.f32.mrb[0].mxu0
      %v636 = vadd.f32 0.0, %v635
      %v637 = vpop.f32.mrb[0].mxu0
      %638 = vmatprep.mubr.f32.mxu0 0.0
      %639 = vmatmul.mubr.f32.gmra.mrb[0].mxu0 %v439
      %v640 = vpop.f32.mrb[0].mxu0
      %v641 = vadd.f32 0.0, %v640
      %v642 = vpop.f32.mrb[0].mxu0
      %643 = vmatprep.mubr.f32.mxu0 0.0
      %644 = vmatmul.mubr.f32.gmra.mrb[0].mxu0 %v442
      %v645 = vpop.f32.mrb[0].mxu0
      %v646 = vadd.f32 0.0, %v645
      %v647 = vpop.f32.mrb[0].mxu0
      %648 = vmatprep.mubr.f32.mxu0 0.0
      %649 = vmatmul.mubr.f32.gmra.mrb[0].mxu0 %v445
      %v650 = vpop.f32.mrb[0].mxu0
      %v651 = vadd.f32 0.0, %v650
      %v652 = vpop.f32.mrb[0].mxu0
      %653 = vmatprep.mubr.f32.mxu0 0.0
      %654 = vmatmul.mubr.f32.gmra.mrb[0].mxu0 %v448
      %v655 = vpop.f32.mrb[0].mxu0
      %v656 = vadd.f32 0.0, %v655
      %v657 = vpop.f32.mrb[0].mxu0
      %658 = vmatprep.mubr.f32.mxu0 0.0
      %659 = vmatmul.mubr.f32.gmra.mrb[0].mxu0 %v451
      %v660 = vpop.f32.mrb[0].mxu0
      %v661 = vadd.f32 0.0, %v660
      %v662 = vpop.f32.mrb[0].mxu0
      %663 = vmatprep.mubr.f32.mxu0 0.0
      %664 = vmatmul.mubr.f32.gmra.mrb[0].mxu0 %v454
      %v665 = vpop.f32.mrb[0].mxu0
      %v666 = vadd.f32 0.0, %v665
      %v667 = vpop.f32.mrb[0].mxu0
      %668 = vmatprep.mubr.f32.mxu0 0.0
      %669 = vmatmul.mubr.f32.gmra.mrb[0].mxu0 %v457
      %v670 = vpop.f32.mrb[0].mxu0
      %v671 = vadd.f32 0.0, %v670
      %v672 = vpop.f32.mrb[0].mxu0
      %673 = vmatprep.mubr.f32.mxu0 0.0
      %674 = vmatmul.mubr.f32.gmra.mrb[0].mxu0 %v460
      %v675 = vpop.f32.mrb[0].mxu0
      %v676 = vadd.f32 0.0, %v675
      %v677 = vpop.f32.mrb[0].mxu0
      %678 = vmatprep.mubr.f32.mxu0 0.0
      %679 = vmatmul.mubr.f32.gmra.mrb[0].mxu0 %v463
      %v680 = vpop.f32.mrb[0].mxu0
      %v681 = vadd.f32 0.0, %v680
      %v682 = vpop.f32.mrb[0].mxu0
      %683 = vmatprep.mubr.f32.mxu0 0.0
      %684 = vmatmul.mubr.f32.gmra.mrb[0].mxu0 %v466
      %v685 = vpop.f32.mrb[0].mxu0
      %v686 = vadd.f32 0.0, %v685
      %v687 = vpop.f32.mrb[0].mxu0
      %688 = vmatprep.mubr.f32.mxu0 0.0
      %689 = vmatmul.mubr.f32.gmra.mrb[0].mxu0 %v469
      %v690 = vpop.f32.mrb[0].mxu0
      %v691 = vadd.f32 0.0, %v690
      %v692 = vpop.f32.mrb[0].mxu0
      %693 = vmatprep.mubr.f32.mxu0 0.0
      %694 = vmatmul.mubr.f32.gmra.mrb[0].mxu0 %v472
      %v695 = vpop.f32.mrb[0].mxu0
      %v696 = vadd.f32 0.0, %v695
      %v697 = vpop.f32.mrb[0].mxu0
      %698 = vmatprep.mubr.f32.mxu0 0.0
      %699 = vmatmul.mubr.f32.gmra.mrb[0].mxu0 %v475
      %v700 = vpop.f32.mrb[0].mxu0
      %v701 = vadd.f32 0.0, %v700
      %v702 = vpop.f32.mrb[0].mxu0
      %703 = vmatprep.mubr.f32.mxu0 0.0
      %704 = vmatmul.mubr.f32.gmra.mrb[0].mxu0 %v478
      %v705 = vpop.f32.mrb[0].mxu0
      %v706 = vadd.f32 0.0, %v705
      %v707 = vpop.f32.mrb[0].mxu0
      %708 = vdwg.mxu0
      %v709 = vadd.f32 %v349, %v551
      %v710 = vadd.f32 %v349, %v556
      %v711 = vadd.f32 %v349, %v561
      %v712 = vadd.f32 %v349, %v566
      %v713 = vadd.f32 %v349, %v571
      %v714 = vadd.f32 %v349, %v576
      %v715 = vadd.f32 %v349, %v581
      %v716 = vadd.f32 %v349, %v586
      %v717 = vadd.f32 %v349, %v591
      %v718 = vadd.f32 %v349, %v596
      %v719 = vadd.f32 %v349, %v601
      %v720 = vadd.f32 %v349, %v606
      %v721 = vadd.f32 %v349, %v611
      %v722 = vadd.f32 %v349, %v616
      %v723 = vadd.f32 %v349, %v621
      %v724 = vadd.f32 %v349, %v626
      %v725 = vadd.f32 %v349, %v631
      %v726 = vadd.f32 %v349, %v636
      %v727 = vadd.f32 %v349, %v641
      %v728 = vadd.f32 %v349, %v646
      %v729 = vadd.f32 %v349, %v651
      %v730 = vadd.f32 %v349, %v656
      %v731 = vadd.f32 %v349, %v661
      %v732 = vadd.f32 %v349, %v666
      %v733 = vadd.f32 %v349, %v671
      %v734 = vadd.f32 %v349, %v676
      %v735 = vadd.f32 %v349, %v681
      %v736 = vadd.f32 %v349, %v686
      %v737 = vadd.f32 %v349, %v691
      %v738 = vadd.f32 %v349, %v696
      %v739 = vadd.f32 %v349, %v701
      %v740 = vadd.f32 %v349, %v706
      %v741 = vld [vmem:[#allocation2 + $0x1] sm:$0xff]
      %v742 = vld [vmem:[#allocation2 + $0x9] sm:$0xff]
      %v743 = vld [vmem:[#allocation2 + $0x19] sm:$0xff]
      %v744 = vld [vmem:[#allocation2 + $0x21] sm:$0xff]
      %v745 = vld [vmem:[#allocation2 + $0x31] sm:$0xff]
      %v746 = vld [vmem:[#allocation2 + $0x39] sm:$0xff]
      %v747 = vld [vmem:[#allocation2 + $0x49] sm:$0xff]
      %v748 = vld [vmem:[#allocation2 + $0x51] sm:$0xff]
      %v749 = vld [vmem:[#allocation2 + $0x61] sm:$0xff]
      %v750 = vld [vmem:[#allocation2 + $0x69] sm:$0xff]
      %v751 = vld [vmem:[#allocation2 + $0x79] sm:$0xff]
      %v752 = vld [vmem:[#allocation2 + $0x81] sm:$0xff]
      %v753 = vld [vmem:[#allocation2 + $0x91] sm:$0xff]
      %v754 = vld [vmem:[#allocation2 + $0x99] sm:$0xff]
      %v755 = vld [vmem:[#allocation2 + $0xa9] sm:$0xff]
      %v756 = vld [vmem:[#allocation2 + $0xb1] sm:$0xff]
      %v757 = vld [vmem:[#allocation2 + $0xc1] sm:$0xff]
      %v758 = vld [vmem:[#allocation2 + $0xc9] sm:$0xff]
      %v759 = vld [vmem:[#allocation2 + $0xd9] sm:$0xff]
      %v760 = vld [vmem:[#allocation2 + $0xe1] sm:$0xff]
      %v761 = vld [vmem:[#allocation2 + $0xf1] sm:$0xff]
      %v762 = vld [vmem:[#allocation2 + $0xf9] sm:$0xff]
      %v763 = vld [vmem:[#allocation2 + $0x109] sm:$0xff]
      %v764 = vld [vmem:[#allocation2 + $0x111] sm:$0xff]
      %v765 = vld [vmem:[#allocation2 + $0x121] sm:$0xff]
      %v766 = vld [vmem:[#allocation2 + $0x129] sm:$0xff]
      %v767 = vld [vmem:[#allocation2 + $0x139] sm:$0xff]
      %v768 = vld [vmem:[#allocation2 + $0x141] sm:$0xff]
      %v769 = vld [vmem:[#allocation2 + $0x151] sm:$0xff]
      %v770 = vld [vmem:[#allocation2 + $0x159] sm:$0xff]
      %v771 = vld [vmem:[#allocation2 + $0x169] sm:$0xff]
      %v772 = vld [vmem:[#allocation2 + $0x171] sm:$0xff]
      %s773 = scalar_lea.vmem %s1, 4
      %v774 = vld [vmem:[%s773] sm:$0xf]
      %v776 = vsel %vm255, %v741, 0
      %v779 = vsel %vm255, %v742, 0
      %v782 = vsel %vm255, %v743, 0
      %v785 = vsel %vm255, %v744, 0
      %v788 = vsel %vm255, %v745, 0
      %v791 = vsel %vm255, %v746, 0
      %v794 = vsel %vm255, %v747, 0
      %v797 = vsel %vm255, %v748, 0
      %v800 = vsel %vm255, %v749, 0
      %v803 = vsel %vm255, %v750, 0
      %v806 = vsel %vm255, %v751, 0
      %v809 = vsel %vm255, %v752, 0
      %v812 = vsel %vm255, %v753, 0
      %v815 = vsel %vm255, %v754, 0
      %v818 = vsel %vm255, %v755, 0
      %v821 = vsel %vm255, %v756, 0
      %v824 = vsel %vm255, %v757, 0
      %v827 = vsel %vm255, %v758, 0
      %v830 = vsel %vm255, %v759, 0
      %v833 = vsel %vm255, %v760, 0
      %v836 = vsel %vm255, %v761, 0
      %v839 = vsel %vm255, %v762, 0
      %v842 = vsel %vm255, %v763, 0
      %v845 = vsel %vm255, %v764, 0
      %v848 = vsel %vm255, %v765, 0
      %v851 = vsel %vm255, %v766, 0
      %v854 = vsel %vm255, %v767, 0
      %v857 = vsel %vm255, %v768, 0
      %v860 = vsel %vm255, %v769, 0
      %v863 = vsel %vm255, %v770, 0
      %v866 = vsel %vm255, %v771, 0
      %v869 = vsel %vm255, %v772, 0
      %v872 = vsel %vm480, %v774, 0
      %874 = vmatprep.subr.mxu0 0.0
      %875 = vmatpush1.msra.mxu0 %v872
      %876 = vmatprep.subr.mxu0 0.0
      %877 = vmatpush1.msra.mxu0 0.0
      %878 = vmatprep.subr.mxu0 0.0
      %879 = vmatpush1.msra.mxu0 0.0
      %880 = vmatprep.subr.mxu0 0.0
      %881 = vmatpush1.msra.mxu0 0.0
      %882 = vmatprep.subr.mxu0 0.0
      %883 = vmatpush1.msra.mxu0 0.0
      %884 = vmatprep.subr.mxu0 0.0
      %885 = vmatpush1.msra.mxu0 0.0
      %886 = vmatprep.subr.mxu0 0.0
      %887 = vmatpush1.msra.mxu0 0.0
      %888 = vmatprep.subr.mxu0 0.0
      %889 = vmatpush1.msra.mxu0 0.0
      %890 = vmatprep.subr.mxu0 0.0
      %891 = vmatpush1.msra.mxu0 0.0
      %892 = vmatprep.subr.mxu0 0.0
      %893 = vmatpush1.msra.mxu0 0.0
      %894 = vmatprep.subr.mxu0 0.0
      %895 = vmatpush1.msra.mxu0 0.0
      %896 = vmatprep.subr.mxu0 0.0
      %897 = vmatpush1.msra.mxu0 0.0
      %898 = vmatprep.subr.mxu0 0.0
      %899 = vmatpush1.msra.mxu0 0.0
      %900 = vmatprep.subr.mxu0 0.0
      %901 = vmatpush1.msra.mxu0 0.0
      %902 = vmatprep.subr.mxu0 0.0
      %903 = vmatpush1.msra.mxu0 0.0
      %904 = vmatprep.subr.mxu0 0.0
      %905 = vmatpush1.msra.mxu0 0.0
      %906 = vmatprep.subr.mxu0 0.0
      %907 = vmatpush1.msra.mxu0 0.0
      %908 = vmatprep.subr.mxu0 0.0
      %909 = vmatpush1.msra.mxu0 0.0
      %910 = vmatprep.subr.mxu0 0.0
      %911 = vmatpush1.msra.mxu0 0.0
      %912 = vmatprep.subr.mxu0 0.0
      %913 = vmatpush1.msra.mxu0 0.0
      %914 = vmatprep.subr.mxu0 0.0
      %915 = vmatpush1.msra.mxu0 0.0
      %916 = vmatprep.subr.mxu0 0.0
      %917 = vmatpush1.msra.mxu0 0.0
      %918 = vmatprep.subr.mxu0 0.0
      %919 = vmatpush1.msra.mxu0 0.0
      %920 = vmatprep.subr.mxu0 0.0
      %921 = vmatpush1.msra.mxu0 0.0
      %922 = vmatprep.subr.mxu0 0.0
      %923 = vmatpush1.msra.mxu0 0.0
      %924 = vmatprep.subr.mxu0 0.0
      %925 = vmatpush1.msra.mxu0 0.0
      %926 = vmatprep.subr.mxu0 0.0
      %927 = vmatpush1.msra.mxu0 0.0
      %928 = vmatprep.subr.mxu0 0.0
      %929 = vmatpush1.msra.mxu0 0.0
      %930 = vmatprep.subr.mxu0 0.0
      %931 = vmatpush1.msra.mxu0 0.0
      %932 = vmatprep.subr.mxu0 0.0
      %933 = vmatpush1.msra.mxu0 0.0
      %934 = vmatprep.subr.mxu0 0.0
      %935 = vmatpush1.msra.mxu0 0.0
      %936 = vmatprep.subr.mxu0 0.0
      %937 = vmatpush1.msra.mxu0 0.0
      %938 = vmatprep.mubr.f32.mxu0 0.0
      %939 = vmatmul.mubr.f32.gmra.mrb[0].mxu0 %v776
      %v940 = vpop.f32.mrb[0].mxu0
      %v941 = vadd.f32 0.0, %v940
      %v942 = vpop.f32.mrb[0].mxu0
      %943 = vmatprep.mubr.f32.mxu0 0.0
      %944 = vmatmul.mubr.f32.gmra.mrb[0].mxu0 %v779
      %v945 = vpop.f32.mrb[0].mxu0
      %v946 = vadd.f32 0.0, %v945
      %v947 = vpop.f32.mrb[0].mxu0
      %948 = vmatprep.mubr.f32.mxu0 0.0
      %949 = vmatmul.mubr.f32.gmra.mrb[0].mxu0 %v782
      %v950 = vpop.f32.mrb[0].mxu0
      %v951 = vadd.f32 0.0, %v950
      %v952 = vpop.f32.mrb[0].mxu0
      %953 = vmatprep.mubr.f32.mxu0 0.0
      %954 = vmatmul.mubr.f32.gmra.mrb[0].mxu0 %v785
      %v955 = vpop.f32.mrb[0].mxu0
      %v956 = vadd.f32 0.0, %v955
      %v957 = vpop.f32.mrb[0].mxu0
      %958 = vmatprep.mubr.f32.mxu0 0.0
      %959 = vmatmul.mubr.f32.gmra.mrb[0].mxu0 %v788
      %v960 = vpop.f32.mrb[0].mxu0
      %v961 = vadd.f32 0.0, %v960
      %v962 = vpop.f32.mrb[0].mxu0
      %963 = vmatprep.mubr.f32.mxu0 0.0
      %964 = vmatmul.mubr.f32.gmra.mrb[0].mxu0 %v791
      %v965 = vpop.f32.mrb[0].mxu0
      %v966 = vadd.f32 0.0, %v965
      %v967 = vpop.f32.mrb[0].mxu0
      %968 = vmatprep.mubr.f32.mxu0 0.0
      %969 = vmatmul.mubr.f32.gmra.mrb[0].mxu0 %v794
      %v970 = vpop.f32.mrb[0].mxu0
      %v971 = vadd.f32 0.0, %v970
      %v972 = vpop.f32.mrb[0].mxu0
      %973 = vmatprep.mubr.f32.mxu0 0.0
      %974 = vmatmul.mubr.f32.gmra.mrb[0].mxu0 %v797
      %v975 = vpop.f32.mrb[0].mxu0
      %v976 = vadd.f32 0.0, %v975
      %v977 = vpop.f32.mrb[0].mxu0
      %978 = vmatprep.mubr.f32.mxu0 0.0
      %979 = vmatmul.mubr.f32.gmra.mrb[0].mxu0 %v800
      %v980 = vpop.f32.mrb[0].mxu0
      %v981 = vadd.f32 0.0, %v980
      %v982 = vpop.f32.mrb[0].mxu0
      %983 = vmatprep.mubr.f32.mxu0 0.0
      %984 = vmatmul.mubr.f32.gmra.mrb[0].mxu0 %v803
      %v985 = vpop.f32.mrb[0].mxu0
      %v986 = vadd.f32 0.0, %v985
      %v987 = vpop.f32.mrb[0].mxu0
      %988 = vmatprep.mubr.f32.mxu0 0.0
      %989 = vmatmul.mubr.f32.gmra.mrb[0].mxu0 %v806
      %v990 = vpop.f32.mrb[0].mxu0
      %v991 = vadd.f32 0.0, %v990
      %v992 = vpop.f32.mrb[0].mxu0
      %993 = vmatprep.mubr.f32.mxu0 0.0
      %994 = vmatmul.mubr.f32.gmra.mrb[0].mxu0 %v809
      %v995 = vpop.f32.mrb[0].mxu0
      %v996 = vadd.f32 0.0, %v995
      %v997 = vpop.f32.mrb[0].mxu0
      %998 = vmatprep.mubr.f32.mxu0 0.0
      %999 = vmatmul.mubr.f32.gmra.mrb[0].mxu0 %v812
      %v1000 = vpop.f32.mrb[0].mxu0
      %v1001 = vadd.f32 0.0, %v1000
      %v1002 = vpop.f32.mrb[0].mxu0
      %1003 = vmatprep.mubr.f32.mxu0 0.0
      %1004 = vmatmul.mubr.f32.gmra.mrb[0].mxu0 %v815
      %v1005 = vpop.f32.mrb[0].mxu0
      %v1006 = vadd.f32 0.0, %v1005
      %v1007 = vpop.f32.mrb[0].mxu0
      %1008 = vmatprep.mubr.f32.mxu0 0.0
      %1009 = vmatmul.mubr.f32.gmra.mrb[0].mxu0 %v818
      %v1010 = vpop.f32.mrb[0].mxu0
      %v1011 = vadd.f32 0.0, %v1010
      %v1012 = vpop.f32.mrb[0].mxu0
      %1013 = vmatprep.mubr.f32.mxu0 0.0
      %1014 = vmatmul.mubr.f32.gmra.mrb[0].mxu0 %v821
      %v1015 = vpop.f32.mrb[0].mxu0
      %v1016 = vadd.f32 0.0, %v1015
      %v1017 = vpop.f32.mrb[0].mxu0
      %1018 = vmatprep.mubr.f32.mxu0 0.0
      %1019 = vmatmul.mubr.f32.gmra.mrb[0].mxu0 %v824
      %v1020 = vpop.f32.mrb[0].mxu0
      %v1021 = vadd.f32 0.0, %v1020
      %v1022 = vpop.f32.mrb[0].mxu0
      %1023 = vmatprep.mubr.f32.mxu0 0.0
      %1024 = vmatmul.mubr.f32.gmra.mrb[0].mxu0 %v827
      %v1025 = vpop.f32.mrb[0].mxu0
      %v1026 = vadd.f32 0.0, %v1025
      %v1027 = vpop.f32.mrb[0].mxu0
      %1028 = vmatprep.mubr.f32.mxu0 0.0
      %1029 = vmatmul.mubr.f32.gmra.mrb[0].mxu0 %v830
      %v1030 = vpop.f32.mrb[0].mxu0
      %v1031 = vadd.f32 0.0, %v1030
      %v1032 = vpop.f32.mrb[0].mxu0
      %1033 = vmatprep.mubr.f32.mxu0 0.0
      %1034 = vmatmul.mubr.f32.gmra.mrb[0].mxu0 %v833
      %v1035 = vpop.f32.mrb[0].mxu0
      %v1036 = vadd.f32 0.0, %v1035
      %v1037 = vpop.f32.mrb[0].mxu0
      %1038 = vmatprep.mubr.f32.mxu0 0.0
      %1039 = vmatmul.mubr.f32.gmra.mrb[0].mxu0 %v836
      %v1040 = vpop.f32.mrb[0].mxu0
      %v1041 = vadd.f32 0.0, %v1040
      %v1042 = vpop.f32.mrb[0].mxu0
      %1043 = vmatprep.mubr.f32.mxu0 0.0
      %1044 = vmatmul.mubr.f32.gmra.mrb[0].mxu0 %v839
      %v1045 = vpop.f32.mrb[0].mxu0
      %v1046 = vadd.f32 0.0, %v1045
      %v1047 = vpop.f32.mrb[0].mxu0
      %1048 = vmatprep.mubr.f32.mxu0 0.0
      %1049 = vmatmul.mubr.f32.gmra.mrb[0].mxu0 %v842
      %v1050 = vpop.f32.mrb[0].mxu0
      %v1051 = vadd.f32 0.0, %v1050
      %v1052 = vpop.f32.mrb[0].mxu0
      %1053 = vmatprep.mubr.f32.mxu0 0.0
      %1054 = vmatmul.mubr.f32.gmra.mrb[0].mxu0 %v845
      %v1055 = vpop.f32.mrb[0].mxu0
      %v1056 = vadd.f32 0.0, %v1055
      %v1057 = vpop.f32.mrb[0].mxu0
      %1058 = vmatprep.mubr.f32.mxu0 0.0
      %1059 = vmatmul.mubr.f32.gmra.mrb[0].mxu0 %v848
      %v1060 = vpop.f32.mrb[0].mxu0
      %v1061 = vadd.f32 0.0, %v1060
      %v1062 = vpop.f32.mrb[0].mxu0
      %1063 = vmatprep.mubr.f32.mxu0 0.0
      %1064 = vmatmul.mubr.f32.gmra.mrb[0].mxu0 %v851
      %v1065 = vpop.f32.mrb[0].mxu0
      %v1066 = vadd.f32 0.0, %v1065
      %v1067 = vpop.f32.mrb[0].mxu0
      %1068 = vmatprep.mubr.f32.mxu0 0.0
      %1069 = vmatmul.mubr.f32.gmra.mrb[0].mxu0 %v854
      %v1070 = vpop.f32.mrb[0].mxu0
      %v1071 = vadd.f32 0.0, %v1070
      %v1072 = vpop.f32.mrb[0].mxu0
      %1073 = vmatprep.mubr.f32.mxu0 0.0
      %1074 = vmatmul.mubr.f32.gmra.mrb[0].mxu0 %v857
      %v1075 = vpop.f32.mrb[0].mxu0
      %v1076 = vadd.f32 0.0, %v1075
      %v1077 = vpop.f32.mrb[0].mxu0
      %1078 = vmatprep.mubr.f32.mxu0 0.0
      %1079 = vmatmul.mubr.f32.gmra.mrb[0].mxu0 %v860
      %v1080 = vpop.f32.mrb[0].mxu0
      %v1081 = vadd.f32 0.0, %v1080
      %v1082 = vpop.f32.mrb[0].mxu0
      %1083 = vmatprep.mubr.f32.mxu0 0.0
      %1084 = vmatmul.mubr.f32.gmra.mrb[0].mxu0 %v863
      %v1085 = vpop.f32.mrb[0].mxu0
      %v1086 = vadd.f32 0.0, %v1085
      %v1087 = vpop.f32.mrb[0].mxu0
      %1088 = vmatprep.mubr.f32.mxu0 0.0
      %1089 = vmatmul.mubr.f32.gmra.mrb[0].mxu0 %v866
      %v1090 = vpop.f32.mrb[0].mxu0
      %v1091 = vadd.f32 0.0, %v1090
      %v1092 = vpop.f32.mrb[0].mxu0
      %1093 = vmatprep.mubr.f32.mxu0 0.0
      %1094 = vmatmul.mubr.f32.gmra.mrb[0].mxu0 %v869
      %v1095 = vpop.f32.mrb[0].mxu0
      %v1096 = vadd.f32 0.0, %v1095
      %v1097 = vpop.f32.mrb[0].mxu0
      %1098 = vdwg.mxu0
      %v1099 = vadd.f32 %v709, %v941
      %v1100 = vadd.f32 %v710, %v946
      %v1101 = vadd.f32 %v711, %v951
      %v1102 = vadd.f32 %v712, %v956
      %v1103 = vadd.f32 %v713, %v961
      %v1104 = vadd.f32 %v714, %v966
      %v1105 = vadd.f32 %v715, %v971
      %v1106 = vadd.f32 %v716, %v976
      %v1107 = vadd.f32 %v717, %v981
      %v1108 = vadd.f32 %v718, %v986
      %v1109 = vadd.f32 %v719, %v991
      %v1110 = vadd.f32 %v720, %v996
      %v1111 = vadd.f32 %v721, %v1001
      %v1112 = vadd.f32 %v722, %v1006
      %v1113 = vadd.f32 %v723, %v1011
      %v1114 = vadd.f32 %v724, %v1016
      %v1115 = vadd.f32 %v725, %v1021
      %v1116 = vadd.f32 %v726, %v1026
      %v1117 = vadd.f32 %v727, %v1031
      %v1118 = vadd.f32 %v728, %v1036
      %v1119 = vadd.f32 %v729, %v1041
      %v1120 = vadd.f32 %v730, %v1046
      %v1121 = vadd.f32 %v731, %v1051
      %v1122 = vadd.f32 %v732, %v1056
      %v1123 = vadd.f32 %v733, %v1061
      %v1124 = vadd.f32 %v734, %v1066
      %v1125 = vadd.f32 %v735, %v1071
      %v1126 = vadd.f32 %v736, %v1076
      %v1127 = vadd.f32 %v737, %v1081
      %v1128 = vadd.f32 %v738, %v1086
      %v1129 = vadd.f32 %v739, %v1091
      %v1130 = vadd.f32 %v740, %v1096
      %v1131 = vld [vmem:[#allocation2 + $0x2] sm:$0xff]
      %v1132 = vld [vmem:[#allocation2 + $0xa] sm:$0xff]
      %v1133 = vld [vmem:[#allocation2 + $0x1a] sm:$0xff]
      %v1134 = vld [vmem:[#allocation2 + $0x22] sm:$0xff]
      %v1135 = vld [vmem:[#allocation2 + $0x32] sm:$0xff]
      %v1136 = vld [vmem:[#allocation2 + $0x3a] sm:$0xff]
      %v1137 = vld [vmem:[#allocation2 + $0x4a] sm:$0xff]
      %v1138 = vld [vmem:[#allocation2 + $0x52] sm:$0xff]
      %v1139 = vld [vmem:[#allocation2 + $0x62] sm:$0xff]
      %v1140 = vld [vmem:[#allocation2 + $0x6a] sm:$0xff]
      %v1141 = vld [vmem:[#allocation2 + $0x7a] sm:$0xff]
      %v1142 = vld [vmem:[#allocation2 + $0x82] sm:$0xff]
      %v1143 = vld [vmem:[#allocation2 + $0x92] sm:$0xff]
      %v1144 = vld [vmem:[#allocation2 + $0x9a] sm:$0xff]
      %v1145 = vld [vmem:[#allocation2 + $0xaa] sm:$0xff]
      %v1146 = vld [vmem:[#allocation2 + $0xb2] sm:$0xff]
      %v1147 = vld [vmem:[#allocation2 + $0xc2] sm:$0xff]
      %v1148 = vld [vmem:[#allocation2 + $0xca] sm:$0xff]
      %v1149 = vld [vmem:[#allocation2 + $0xda] sm:$0xff]
      %v1150 = vld [vmem:[#allocation2 + $0xe2] sm:$0xff]
      %v1151 = vld [vmem:[#allocation2 + $0xf2] sm:$0xff]
      %v1152 = vld [vmem:[#allocation2 + $0xfa] sm:$0xff]
      %v1153 = vld [vmem:[#allocation2 + $0x10a] sm:$0xff]
      %v1154 = vld [vmem:[#allocation2 + $0x112] sm:$0xff]
      %v1155 = vld [vmem:[#allocation2 + $0x122] sm:$0xff]
      %v1156 = vld [vmem:[#allocation2 + $0x12a] sm:$0xff]
      %v1157 = vld [vmem:[#allocation2 + $0x13a] sm:$0xff]
      %v1158 = vld [vmem:[#allocation2 + $0x142] sm:$0xff]
      %v1159 = vld [vmem:[#allocation2 + $0x152] sm:$0xff]
      %v1160 = vld [vmem:[#allocation2 + $0x15a] sm:$0xff]
      %v1161 = vld [vmem:[#allocation2 + $0x16a] sm:$0xff]
      %v1162 = vld [vmem:[#allocation2 + $0x172] sm:$0xff]
      %s1163 = scalar_lea.vmem %s1, 8
      %v1164 = vld [vmem:[%s1163] sm:$0xf]
      %v1166 = vsel %vm255, %v1131, 0
      %v1169 = vsel %vm255, %v1132, 0
      %v1172 = vsel %vm255, %v1133, 0
      %v1175 = vsel %vm255, %v1134, 0
      %v1178 = vsel %vm255, %v1135, 0
      %v1181 = vsel %vm255, %v1136, 0
      %v1184 = vsel %vm255, %v1137, 0
      %v1187 = vsel %vm255, %v1138, 0
      %v1190 = vsel %vm255, %v1139, 0
      %v1193 = vsel %vm255, %v1140, 0
      %v1196 = vsel %vm255, %v1141, 0
      %v1199 = vsel %vm255, %v1142, 0
      %v1202 = vsel %vm255, %v1143, 0
      %v1205 = vsel %vm255, %v1144, 0
      %v1208 = vsel %vm255, %v1145, 0
      %v1211 = vsel %vm255, %v1146, 0
      %v1214 = vsel %vm255, %v1147, 0
      %v1217 = vsel %vm255, %v1148, 0
      %v1220 = vsel %vm255, %v1149, 0
      %v1223 = vsel %vm255, %v1150, 0
      %v1226 = vsel %vm255, %v1151, 0
      %v1229 = vsel %vm255, %v1152, 0
      %v1232 = vsel %vm255, %v1153, 0
      %v1235 = vsel %vm255, %v1154, 0
      %v1238 = vsel %vm255, %v1155, 0
      %v1241 = vsel %vm255, %v1156, 0
      %v1244 = vsel %vm255, %v1157, 0
      %v1247 = vsel %vm255, %v1158, 0
      %v1250 = vsel %vm255, %v1159, 0
      %v1253 = vsel %vm255, %v1160, 0
      %v1256 = vsel %vm255, %v1161, 0
      %v1259 = vsel %vm255, %v1162, 0
      %v1262 = vsel %vm480, %v1164, 0
      %1264 = vmatprep.subr.mxu0 0.0
      %1265 = vmatpush1.msra.mxu0 %v1262
      %1266 = vmatprep.subr.mxu0 0.0
      %1267 = vmatpush1.msra.mxu0 0.0
      %1268 = vmatprep.subr.mxu0 0.0
      %1269 = vmatpush1.msra.mxu0 0.0
      %1270 = vmatprep.subr.mxu0 0.0
      %1271 = vmatpush1.msra.mxu0 0.0
      %1272 = vmatprep.subr.mxu0 0.0
      %1273 = vmatpush1.msra.mxu0 0.0
      %1274 = vmatprep.subr.mxu0 0.0
      %1275 = vmatpush1.msra.mxu0 0.0
      %1276 = vmatprep.subr.mxu0 0.0
      %1277 = vmatpush1.msra.mxu0 0.0
      %1278 = vmatprep.subr.mxu0 0.0
      %1279 = vmatpush1.msra.mxu0 0.0
      %1280 = vmatprep.subr.mxu0 0.0
      %1281 = vmatpush1.msra.mxu0 0.0
      %1282 = vmatprep.subr.mxu0 0.0
      %1283 = vmatpush1.msra.mxu0 0.0
      %1284 = vmatprep.subr.mxu0 0.0
      %1285 = vmatpush1.msra.mxu0 0.0
      %1286 = vmatprep.subr.mxu0 0.0
      %1287 = vmatpush1.msra.mxu0 0.0
      %1288 = vmatprep.subr.mxu0 0.0
      %1289 = vmatpush1.msra.mxu0 0.0
      %1290 = vmatprep.subr.mxu0 0.0
      %1291 = vmatpush1.msra.mxu0 0.0
      %1292 = vmatprep.subr.mxu0 0.0
      %1293 = vmatpush1.msra.mxu0 0.0
      %1294 = vmatprep.subr.mxu0 0.0
      %1295 = vmatpush1.msra.mxu0 0.0
      %1296 = vmatprep.subr.mxu0 0.0
      %1297 = vmatpush1.msra.mxu0 0.0
      %1298 = vmatprep.subr.mxu0 0.0
      %1299 = vmatpush1.msra.mxu0 0.0
      %1300 = vmatprep.subr.mxu0 0.0
      %1301 = vmatpush1.msra.mxu0 0.0
      %1302 = vmatprep.subr.mxu0 0.0
      %1303 = vmatpush1.msra.mxu0 0.0
      %1304 = vmatprep.subr.mxu0 0.0
      %1305 = vmatpush1.msra.mxu0 0.0
      %1306 = vmatprep.subr.mxu0 0.0
      %1307 = vmatpush1.msra.mxu0 0.0
      %1308 = vmatprep.subr.mxu0 0.0
      %1309 = vmatpush1.msra.mxu0 0.0
      %1310 = vmatprep.subr.mxu0 0.0
      %1311 = vmatpush1.msra.mxu0 0.0
      %1312 = vmatprep.subr.mxu0 0.0
      %1313 = vmatpush1.msra.mxu0 0.0
      %1314 = vmatprep.subr.mxu0 0.0
      %1315 = vmatpush1.msra.mxu0 0.0
      %1316 = vmatprep.subr.mxu0 0.0
      %1317 = vmatpush1.msra.mxu0 0.0
      %1318 = vmatprep.subr.mxu0 0.0
      %1319 = vmatpush1.msra.mxu0 0.0
      %1320 = vmatprep.subr.mxu0 0.0
      %1321 = vmatpush1.msra.mxu0 0.0
      %1322 = vmatprep.subr.mxu0 0.0
      %1323 = vmatpush1.msra.mxu0 0.0
      %1324 = vmatprep.subr.mxu0 0.0
      %1325 = vmatpush1.msra.mxu0 0.0
      %1326 = vmatprep.subr.mxu0 0.0
      %1327 = vmatpush1.msra.mxu0 0.0
      %1328 = vmatprep.mubr.f32.mxu0 0.0
      %1329 = vmatmul.mubr.f32.gmra.mrb[0].mxu0 %v1166
      %v1330 = vpop.f32.mrb[0].mxu0
      %v1331 = vadd.f32 0.0, %v1330
      %v1332 = vpop.f32.mrb[0].mxu0
      %1333 = vmatprep.mubr.f32.mxu0 0.0
      %1334 = vmatmul.mubr.f32.gmra.mrb[0].mxu0 %v1169
      %v1335 = vpop.f32.mrb[0].mxu0
      %v1336 = vadd.f32 0.0, %v1335
      %v1337 = vpop.f32.mrb[0].mxu0
      %1338 = vmatprep.mubr.f32.mxu0 0.0
      %1339 = vmatmul.mubr.f32.gmra.mrb[0].mxu0 %v1172
      %v1340 = vpop.f32.mrb[0].mxu0
      %v1341 = vadd.f32 0.0, %v1340
      %v1342 = vpop.f32.mrb[0].mxu0
      %1343 = vmatprep.mubr.f32.mxu0 0.0
      %1344 = vmatmul.mubr.f32.gmra.mrb[0].mxu0 %v1175
      %v1345 = vpop.f32.mrb[0].mxu0
      %v1346 = vadd.f32 0.0, %v1345
      %v1347 = vpop.f32.mrb[0].mxu0
      %1348 = vmatprep.mubr.f32.mxu0 0.0
      %1349 = vmatmul.mubr.f32.gmra.mrb[0].mxu0 %v1178
      %v1350 = vpop.f32.mrb[0].mxu0
      %v1351 = vadd.f32 0.0, %v1350
      %v1352 = vpop.f32.mrb[0].mxu0
      %1353 = vmatprep.mubr.f32.mxu0 0.0
      %1354 = vmatmul.mubr.f32.gmra.mrb[0].mxu0 %v1181
      %v1355 = vpop.f32.mrb[0].mxu0
      %v1356 = vadd.f32 0.0, %v1355
      %v1357 = vpop.f32.mrb[0].mxu0
      %1358 = vmatprep.mubr.f32.mxu0 0.0
      %1359 = vmatmul.mubr.f32.gmra.mrb[0].mxu0 %v1184
      %v1360 = vpop.f32.mrb[0].mxu0
      %v1361 = vadd.f32 0.0, %v1360
      %v1362 = vpop.f32.mrb[0].mxu0
      %1363 = vmatprep.mubr.f32.mxu0 0.0
      %1364 = vmatmul.mubr.f32.gmra.mrb[0].mxu0 %v1187
      %v1365 = vpop.f32.mrb[0].mxu0
      %v1366 = vadd.f32 0.0, %v1365
      %v1367 = vpop.f32.mrb[0].mxu0
      %1368 = vmatprep.mubr.f32.mxu0 0.0
      %1369 = vmatmul.mubr.f32.gmra.mrb[0].mxu0 %v1190
      %v1370 = vpop.f32.mrb[0].mxu0
      %v1371 = vadd.f32 0.0, %v1370
      %v1372 = vpop.f32.mrb[0].mxu0
      %1373 = vmatprep.mubr.f32.mxu0 0.0
      %1374 = vmatmul.mubr.f32.gmra.mrb[0].mxu0 %v1193
      %v1375 = vpop.f32.mrb[0].mxu0
      %v1376 = vadd.f32 0.0, %v1375
      %v1377 = vpop.f32.mrb[0].mxu0
      %1378 = vmatprep.mubr.f32.mxu0 0.0
      %1379 = vmatmul.mubr.f32.gmra.mrb[0].mxu0 %v1196
      %v1380 = vpop.f32.mrb[0].mxu0
      %v1381 = vadd.f32 0.0, %v1380
      %v1382 = vpop.f32.mrb[0].mxu0
      %1383 = vmatprep.mubr.f32.mxu0 0.0
      %1384 = vmatmul.mubr.f32.gmra.mrb[0].mxu0 %v1199
      %v1385 = vpop.f32.mrb[0].mxu0
      %v1386 = vadd.f32 0.0, %v1385
      %v1387 = vpop.f32.mrb[0].mxu0
      %1388 = vmatprep.mubr.f32.mxu0 0.0
      %1389 = vmatmul.mubr.f32.gmra.mrb[0].mxu0 %v1202
      %v1390 = vpop.f32.mrb[0].mxu0
      %v1391 = vadd.f32 0.0, %v1390
      %v1392 = vpop.f32.mrb[0].mxu0
      %1393 = vmatprep.mubr.f32.mxu0 0.0
      %1394 = vmatmul.mubr.f32.gmra.mrb[0].mxu0 %v1205
      %v1395 = vpop.f32.mrb[0].mxu0
      %v1396 = vadd.f32 0.0, %v1395
      %v1397 = vpop.f32.mrb[0].mxu0
      %1398 = vmatprep.mubr.f32.mxu0 0.0
      %1399 = vmatmul.mubr.f32.gmra.mrb[0].mxu0 %v1208
      %v1400 = vpop.f32.mrb[0].mxu0
      %v1401 = vadd.f32 0.0, %v1400
      %v1402 = vpop.f32.mrb[0].mxu0
      %1403 = vmatprep.mubr.f32.mxu0 0.0
      %1404 = vmatmul.mubr.f32.gmra.mrb[0].mxu0 %v1211
      %v1405 = vpop.f32.mrb[0].mxu0
      %v1406 = vadd.f32 0.0, %v1405
      %v1407 = vpop.f32.mrb[0].mxu0
      %1408 = vmatprep.mubr.f32.mxu0 0.0
      %1409 = vmatmul.mubr.f32.gmra.mrb[0].mxu0 %v1214
      %v1410 = vpop.f32.mrb[0].mxu0
      %v1411 = vadd.f32 0.0, %v1410
      %v1412 = vpop.f32.mrb[0].mxu0
      %1413 = vmatprep.mubr.f32.mxu0 0.0
      %1414 = vmatmul.mubr.f32.gmra.mrb[0].mxu0 %v1217
      %v1415 = vpop.f32.mrb[0].mxu0
      %v1416 = vadd.f32 0.0, %v1415
      %v1417 = vpop.f32.mrb[0].mxu0
      %1418 = vmatprep.mubr.f32.mxu0 0.0
      %1419 = vmatmul.mubr.f32.gmra.mrb[0].mxu0 %v1220
      %v1420 = vpop.f32.mrb[0].mxu0
      %v1421 = vadd.f32 0.0, %v1420
      %v1422 = vpop.f32.mrb[0].mxu0
      %1423 = vmatprep.mubr.f32.mxu0 0.0
      %1424 = vmatmul.mubr.f32.gmra.mrb[0].mxu0 %v1223
      %v1425 = vpop.f32.mrb[0].mxu0
      %v1426 = vadd.f32 0.0, %v1425
      %v1427 = vpop.f32.mrb[0].mxu0
      %1428 = vmatprep.mubr.f32.mxu0 0.0
      %1429 = vmatmul.mubr.f32.gmra.mrb[0].mxu0 %v1226
      %v1430 = vpop.f32.mrb[0].mxu0
      %v1431 = vadd.f32 0.0, %v1430
      %v1432 = vpop.f32.mrb[0].mxu0
      %1433 = vmatprep.mubr.f32.mxu0 0.0
      %1434 = vmatmul.mubr.f32.gmra.mrb[0].mxu0 %v1229
      %v1435 = vpop.f32.mrb[0].mxu0
      %v1436 = vadd.f32 0.0, %v1435
      %v1437 = vpop.f32.mrb[0].mxu0
      %1438 = vmatprep.mubr.f32.mxu0 0.0
      %1439 = vmatmul.mubr.f32.gmra.mrb[0].mxu0 %v1232
      %v1440 = vpop.f32.mrb[0].mxu0
      %v1441 = vadd.f32 0.0, %v1440
      %v1442 = vpop.f32.mrb[0].mxu0
      %1443 = vmatprep.mubr.f32.mxu0 0.0
      %1444 = vmatmul.mubr.f32.gmra.mrb[0].mxu0 %v1235
      %v1445 = vpop.f32.mrb[0].mxu0
      %v1446 = vadd.f32 0.0, %v1445
      %v1447 = vpop.f32.mrb[0].mxu0
      %1448 = vmatprep.mubr.f32.mxu0 0.0
      %1449 = vmatmul.mubr.f32.gmra.mrb[0].mxu0 %v1238
      %v1450 = vpop.f32.mrb[0].mxu0
      %v1451 = vadd.f32 0.0, %v1450
      %v1452 = vpop.f32.mrb[0].mxu0
      %1453 = vmatprep.mubr.f32.mxu0 0.0
      %1454 = vmatmul.mubr.f32.gmra.mrb[0].mxu0 %v1241
      %v1455 = vpop.f32.mrb[0].mxu0
      %v1456 = vadd.f32 0.0, %v1455
      %v1457 = vpop.f32.mrb[0].mxu0
      %1458 = vmatprep.mubr.f32.mxu0 0.0
      %1459 = vmatmul.mubr.f32.gmra.mrb[0].mxu0 %v1244
      %v1460 = vpop.f32.mrb[0].mxu0
      %v1461 = vadd.f32 0.0, %v1460
      %v1462 = vpop.f32.mrb[0].mxu0
      %1463 = vmatprep.mubr.f32.mxu0 0.0
      %1464 = vmatmul.mubr.f32.gmra.mrb[0].mxu0 %v1247
      %v1465 = vpop.f32.mrb[0].mxu0
      %v1466 = vadd.f32 0.0, %v1465
      %v1467 = vpop.f32.mrb[0].mxu0
      %1468 = vmatprep.mubr.f32.mxu0 0.0
      %1469 = vmatmul.mubr.f32.gmra.mrb[0].mxu0 %v1250
      %v1470 = vpop.f32.mrb[0].mxu0
      %v1471 = vadd.f32 0.0, %v1470
      %v1472 = vpop.f32.mrb[0].mxu0
      %1473 = vmatprep.mubr.f32.mxu0 0.0
      %1474 = vmatmul.mubr.f32.gmra.mrb[0].mxu0 %v1253
      %v1475 = vpop.f32.mrb[0].mxu0
      %v1476 = vadd.f32 0.0, %v1475
      %v1477 = vpop.f32.mrb[0].mxu0
      %1478 = vmatprep.mubr.f32.mxu0 0.0
      %1479 = vmatmul.mubr.f32.gmra.mrb[0].mxu0 %v1256
      %v1480 = vpop.f32.mrb[0].mxu0
      %v1481 = vadd.f32 0.0, %v1480
      %v1482 = vpop.f32.mrb[0].mxu0
      %1483 = vmatprep.mubr.f32.mxu0 0.0
      %1484 = vmatmul.mubr.f32.gmra.mrb[0].mxu0 %v1259
      %v1485 = vpop.f32.mrb[0].mxu0
      %v1486 = vadd.f32 0.0, %v1485
      %v1487 = vpop.f32.mrb[0].mxu0
      %1488 = vdwg.mxu0
      %v1489 = vadd.f32 %v1099, %v1331
      %v1490 = vadd.f32 %v1100, %v1336
      %v1491 = vadd.f32 %v1101, %v1341
      %v1492 = vadd.f32 %v1102, %v1346
      %v1493 = vadd.f32 %v1103, %v1351
      %v1494 = vadd.f32 %v1104, %v1356
      %v1495 = vadd.f32 %v1105, %v1361
      %v1496 = vadd.f32 %v1106, %v1366
      %v1497 = vadd.f32 %v1107, %v1371
      %v1498 = vadd.f32 %v1108, %v1376
      %v1499 = vadd.f32 %v1109, %v1381
      %v1500 = vadd.f32 %v1110, %v1386
      %v1501 = vadd.f32 %v1111, %v1391
      %v1502 = vadd.f32 %v1112, %v1396
      %v1503 = vadd.f32 %v1113, %v1401
      %v1504 = vadd.f32 %v1114, %v1406
      %v1505 = vadd.f32 %v1115, %v1411
      %v1506 = vadd.f32 %v1116, %v1416
      %v1507 = vadd.f32 %v1117, %v1421
      %v1508 = vadd.f32 %v1118, %v1426
      %v1509 = vadd.f32 %v1119, %v1431
      %v1510 = vadd.f32 %v1120, %v1436
      %v1511 = vadd.f32 %v1121, %v1441
      %v1512 = vadd.f32 %v1122, %v1446
      %v1513 = vadd.f32 %v1123, %v1451
      %v1514 = vadd.f32 %v1124, %v1456
      %v1515 = vadd.f32 %v1125, %v1461
      %v1516 = vadd.f32 %v1126, %v1466
      %v1517 = vadd.f32 %v1127, %v1471
      %v1518 = vadd.f32 %v1128, %v1476
      %v1519 = vadd.f32 %v1129, %v1481
      %v1520 = vadd.f32 %v1130, %v1486
      %v1521 = vld [vmem:[%s311] sm:$0xff]
      %v1522 = vld [vmem:[%s311 + $0x8] sm:$0xff]
      %v1523 = vld [vmem:[%s311 + $0x18] sm:$0xff]
      %v1524 = vld [vmem:[%s311 + $0x20] sm:$0xff]
      %v1525 = vld [vmem:[%s311 + $0x30] sm:$0xff]
      %v1526 = vld [vmem:[%s311 + $0x38] sm:$0xff]
      %v1527 = vld [vmem:[%s311 + $0x48] sm:$0xff]
      %v1528 = vld [vmem:[%s311 + $0x50] sm:$0xff]
      %v1529 = vld [vmem:[%s311 + $0x60] sm:$0xff]
      %v1530 = vld [vmem:[%s311 + $0x68] sm:$0xff]
      %v1531 = vld [vmem:[%s311 + $0x78] sm:$0xff]
      %v1532 = vld [vmem:[%s311 + $0x80] sm:$0xff]
      %v1533 = vld [vmem:[%s311 + $0x90] sm:$0xff]
      %v1534 = vld [vmem:[%s311 + $0x98] sm:$0xff]
      %v1535 = vld [vmem:[%s311 + $0xa8] sm:$0xff]
      %v1536 = vld [vmem:[%s311 + $0xb0] sm:$0xff]
      %v1537 = vld [vmem:[%s311 + $0xc0] sm:$0xff]
      %v1538 = vld [vmem:[%s311 + $0xc8] sm:$0xff]
      %v1539 = vld [vmem:[%s311 + $0xd8] sm:$0xff]
      %v1540 = vld [vmem:[%s311 + $0xe0] sm:$0xff]
      %v1541 = vld [vmem:[%s311 + $0xf0] sm:$0xff]
      %v1542 = vld [vmem:[%s311 + $0xf8] sm:$0xff]
      %v1543 = vld [vmem:[%s311 + $0x108] sm:$0xff]
      %v1544 = vld [vmem:[%s311 + $0x110] sm:$0xff]
      %v1545 = vld [vmem:[%s311 + $0x120] sm:$0xff]
      %v1546 = vld [vmem:[%s311 + $0x128] sm:$0xff]
      %v1547 = vld [vmem:[%s311 + $0x138] sm:$0xff]
      %v1548 = vld [vmem:[%s311 + $0x140] sm:$0xff]
      %v1549 = vld [vmem:[%s311 + $0x150] sm:$0xff]
      %v1550 = vld [vmem:[%s311 + $0x158] sm:$0xff]
      %v1551 = vld [vmem:[%s311 + $0x168] sm:$0xff]
      %v1552 = vld [vmem:[%s311 + $0x170] sm:$0xff]
      %s1553 = scalar_lea.vmem %s1, 12
      %v1554 = vld [vmem:[%s1553] sm:$0xf]
      %v1556 = vsel %vm255, %v1521, 0
      %v1559 = vsel %vm255, %v1522, 0
      %v1562 = vsel %vm255, %v1523, 0
      %v1565 = vsel %vm255, %v1524, 0
      %v1568 = vsel %vm255, %v1525, 0
      %v1571 = vsel %vm255, %v1526, 0
      %v1574 = vsel %vm255, %v1527, 0
      %v1577 = vsel %vm255, %v1528, 0
      %v1580 = vsel %vm255, %v1529, 0
      %v1583 = vsel %vm255, %v1530, 0
      %v1586 = vsel %vm255, %v1531, 0
      %v1589 = vsel %vm255, %v1532, 0
      %v1592 = vsel %vm255, %v1533, 0
      %v1595 = vsel %vm255, %v1534, 0
      %v1598 = vsel %vm255, %v1535, 0
      %v1601 = vsel %vm255, %v1536, 0
      %v1604 = vsel %vm255, %v1537, 0
      %v1607 = vsel %vm255, %v1538, 0
      %v1610 = vsel %vm255, %v1539, 0
      %v1613 = vsel %vm255, %v1540, 0
      %v1616 = vsel %vm255, %v1541, 0
      %v1619 = vsel %vm255, %v1542, 0
      %v1622 = vsel %vm255, %v1543, 0
      %v1625 = vsel %vm255, %v1544, 0
      %v1628 = vsel %vm255, %v1545, 0
      %v1631 = vsel %vm255, %v1546, 0
      %v1634 = vsel %vm255, %v1547, 0
      %v1637 = vsel %vm255, %v1548, 0
      %v1640 = vsel %vm255, %v1549, 0
      %v1643 = vsel %vm255, %v1550, 0
      %v1646 = vsel %vm255, %v1551, 0
      %v1649 = vsel %vm255, %v1552, 0
      %v1652 = vsel %vm480, %v1554, 0
      %1654 = vmatprep.subr.mxu0 0.0
      %1655 = vmatpush1.msra.mxu0 %v1652
      %1656 = vmatprep.subr.mxu0 0.0
      %1657 = vmatpush1.msra.mxu0 0.0
      %1658 = vmatprep.subr.mxu0 0.0
      %1659 = vmatpush1.msra.mxu0 0.0
      %1660 = vmatprep.subr.mxu0 0.0
      %1661 = vmatpush1.msra.mxu0 0.0
      %1662 = vmatprep.subr.mxu0 0.0
      %1663 = vmatpush1.msra.mxu0 0.0
      %1664 = vmatprep.subr.mxu0 0.0
      %1665 = vmatpush1.msra.mxu0 0.0
      %1666 = vmatprep.subr.mxu0 0.0
      %1667 = vmatpush1.msra.mxu0 0.0
      %1668 = vmatprep.subr.mxu0 0.0
      %1669 = vmatpush1.msra.mxu0 0.0
      %1670 = vmatprep.subr.mxu0 0.0
      %1671 = vmatpush1.msra.mxu0 0.0
      %1672 = vmatprep.subr.mxu0 0.0
      %1673 = vmatpush1.msra.mxu0 0.0
      %1674 = vmatprep.subr.mxu0 0.0
      %1675 = vmatpush1.msra.mxu0 0.0
      %1676 = vmatprep.subr.mxu0 0.0
      %1677 = vmatpush1.msra.mxu0 0.0
      %1678 = vmatprep.subr.mxu0 0.0
      %1679 = vmatpush1.msra.mxu0 0.0
      %1680 = vmatprep.subr.mxu0 0.0
      %1681 = vmatpush1.msra.mxu0 0.0
      %1682 = vmatprep.subr.mxu0 0.0
      %1683 = vmatpush1.msra.mxu0 0.0
      %1684 = vmatprep.subr.mxu0 0.0
      %1685 = vmatpush1.msra.mxu0 0.0
      %1686 = vmatprep.subr.mxu0 0.0
      %1687 = vmatpush1.msra.mxu0 0.0
      %1688 = vmatprep.subr.mxu0 0.0
      %1689 = vmatpush1.msra.mxu0 0.0
      %1690 = vmatprep.subr.mxu0 0.0
      %1691 = vmatpush1.msra.mxu0 0.0
      %1692 = vmatprep.subr.mxu0 0.0
      %1693 = vmatpush1.msra.mxu0 0.0
      %1694 = vmatprep.subr.mxu0 0.0
      %1695 = vmatpush1.msra.mxu0 0.0
      %1696 = vmatprep.subr.mxu0 0.0
      %1697 = vmatpush1.msra.mxu0 0.0
      %1698 = vmatprep.subr.mxu0 0.0
      %1699 = vmatpush1.msra.mxu0 0.0
      %1700 = vmatprep.subr.mxu0 0.0
      %1701 = vmatpush1.msra.mxu0 0.0
      %1702 = vmatprep.subr.mxu0 0.0
      %1703 = vmatpush1.msra.mxu0 0.0
      %1704 = vmatprep.subr.mxu0 0.0
      %1705 = vmatpush1.msra.mxu0 0.0
      %1706 = vmatprep.subr.mxu0 0.0
      %1707 = vmatpush1.msra.mxu0 0.0
      %1708 = vmatprep.subr.mxu0 0.0
      %1709 = vmatpush1.msra.mxu0 0.0
      %1710 = vmatprep.subr.mxu0 0.0
      %1711 = vmatpush1.msra.mxu0 0.0
      %1712 = vmatprep.subr.mxu0 0.0
      %1713 = vmatpush1.msra.mxu0 0.0
      %1714 = vmatprep.subr.mxu0 0.0
      %1715 = vmatpush1.msra.mxu0 0.0
      %1716 = vmatprep.subr.mxu0 0.0
      %1717 = vmatpush1.msra.mxu0 0.0
      %1718 = vmatprep.mubr.f32.mxu0 0.0
      %1719 = vmatmul.mubr.f32.gmra.mrb[0].mxu0 %v1556
      %v1720 = vpop.f32.mrb[0].mxu0
      %v1721 = vadd.f32 0.0, %v1720
      %v1722 = vpop.f32.mrb[0].mxu0
      %1723 = vmatprep.mubr.f32.mxu0 0.0
      %1724 = vmatmul.mubr.f32.gmra.mrb[0].mxu0 %v1559
      %v1725 = vpop.f32.mrb[0].mxu0
      %v1726 = vadd.f32 0.0, %v1725
      %v1727 = vpop.f32.mrb[0].mxu0
      %1728 = vmatprep.mubr.f32.mxu0 0.0
      %1729 = vmatmul.mubr.f32.gmra.mrb[0].mxu0 %v1562
      %v1730 = vpop.f32.mrb[0].mxu0
      %v1731 = vadd.f32 0.0, %v1730
      %v1732 = vpop.f32.mrb[0].mxu0
      %1733 = vmatprep.mubr.f32.mxu0 0.0
      %1734 = vmatmul.mubr.f32.gmra.mrb[0].mxu0 %v1565
      %v1735 = vpop.f32.mrb[0].mxu0
      %v1736 = vadd.f32 0.0, %v1735
      %v1737 = vpop.f32.mrb[0].mxu0
      %1738 = vmatprep.mubr.f32.mxu0 0.0
      %1739 = vmatmul.mubr.f32.gmra.mrb[0].mxu0 %v1568
      %v1740 = vpop.f32.mrb[0].mxu0
      %v1741 = vadd.f32 0.0, %v1740
      %v1742 = vpop.f32.mrb[0].mxu0
      %1743 = vmatprep.mubr.f32.mxu0 0.0
      %1744 = vmatmul.mubr.f32.gmra.mrb[0].mxu0 %v1571
      %v1745 = vpop.f32.mrb[0].mxu0
      %v1746 = vadd.f32 0.0, %v1745
      %v1747 = vpop.f32.mrb[0].mxu0
      %1748 = vmatprep.mubr.f32.mxu0 0.0
      %1749 = vmatmul.mubr.f32.gmra.mrb[0].mxu0 %v1574
      %v1750 = vpop.f32.mrb[0].mxu0
      %v1751 = vadd.f32 0.0, %v1750
      %v1752 = vpop.f32.mrb[0].mxu0
      %1753 = vmatprep.mubr.f32.mxu0 0.0
      %1754 = vmatmul.mubr.f32.gmra.mrb[0].mxu0 %v1577
      %v1755 = vpop.f32.mrb[0].mxu0
      %v1756 = vadd.f32 0.0, %v1755
      %v1757 = vpop.f32.mrb[0].mxu0
      %1758 = vmatprep.mubr.f32.mxu0 0.0
      %1759 = vmatmul.mubr.f32.gmra.mrb[0].mxu0 %v1580
      %v1760 = vpop.f32.mrb[0].mxu0
      %v1761 = vadd.f32 0.0, %v1760
      %v1762 = vpop.f32.mrb[0].mxu0
      %1763 = vmatprep.mubr.f32.mxu0 0.0
      %1764 = vmatmul.mubr.f32.gmra.mrb[0].mxu0 %v1583
      %v1765 = vpop.f32.mrb[0].mxu0
      %v1766 = vadd.f32 0.0, %v1765
      %v1767 = vpop.f32.mrb[0].mxu0
      %1768 = vmatprep.mubr.f32.mxu0 0.0
      %1769 = vmatmul.mubr.f32.gmra.mrb[0].mxu0 %v1586
      %v1770 = vpop.f32.mrb[0].mxu0
      %v1771 = vadd.f32 0.0, %v1770
      %v1772 = vpop.f32.mrb[0].mxu0
      %1773 = vmatprep.mubr.f32.mxu0 0.0
      %1774 = vmatmul.mubr.f32.gmra.mrb[0].mxu0 %v1589
      %v1775 = vpop.f32.mrb[0].mxu0
      %v1776 = vadd.f32 0.0, %v1775
      %v1777 = vpop.f32.mrb[0].mxu0
      %1778 = vmatprep.mubr.f32.mxu0 0.0
      %1779 = vmatmul.mubr.f32.gmra.mrb[0].mxu0 %v1592
      %v1780 = vpop.f32.mrb[0].mxu0
      %v1781 = vadd.f32 0.0, %v1780
      %v1782 = vpop.f32.mrb[0].mxu0
      %1783 = vmatprep.mubr.f32.mxu0 0.0
      %1784 = vmatmul.mubr.f32.gmra.mrb[0].mxu0 %v1595
      %v1785 = vpop.f32.mrb[0].mxu0
      %v1786 = vadd.f32 0.0, %v1785
      %v1787 = vpop.f32.mrb[0].mxu0
      %1788 = vmatprep.mubr.f32.mxu0 0.0
      %1789 = vmatmul.mubr.f32.gmra.mrb[0].mxu0 %v1598
      %v1790 = vpop.f32.mrb[0].mxu0
      %v1791 = vadd.f32 0.0, %v1790
      %v1792 = vpop.f32.mrb[0].mxu0
      %1793 = vmatprep.mubr.f32.mxu0 0.0
      %1794 = vmatmul.mubr.f32.gmra.mrb[0].mxu0 %v1601
      %v1795 = vpop.f32.mrb[0].mxu0
      %v1796 = vadd.f32 0.0, %v1795
      %v1797 = vpop.f32.mrb[0].mxu0
      %1798 = vmatprep.mubr.f32.mxu0 0.0
      %1799 = vmatmul.mubr.f32.gmra.mrb[0].mxu0 %v1604
      %v1800 = vpop.f32.mrb[0].mxu0
      %v1801 = vadd.f32 0.0, %v1800
      %v1802 = vpop.f32.mrb[0].mxu0
      %1803 = vmatprep.mubr.f32.mxu0 0.0
      %1804 = vmatmul.mubr.f32.gmra.mrb[0].mxu0 %v1607
      %v1805 = vpop.f32.mrb[0].mxu0
      %v1806 = vadd.f32 0.0, %v1805
      %v1807 = vpop.f32.mrb[0].mxu0
      %1808 = vmatprep.mubr.f32.mxu0 0.0
      %1809 = vmatmul.mubr.f32.gmra.mrb[0].mxu0 %v1610
      %v1810 = vpop.f32.mrb[0].mxu0
      %v1811 = vadd.f32 0.0, %v1810
      %v1812 = vpop.f32.mrb[0].mxu0
      %1813 = vmatprep.mubr.f32.mxu0 0.0
      %1814 = vmatmul.mubr.f32.gmra.mrb[0].mxu0 %v1613
      %v1815 = vpop.f32.mrb[0].mxu0
      %v1816 = vadd.f32 0.0, %v1815
      %v1817 = vpop.f32.mrb[0].mxu0
      %1818 = vmatprep.mubr.f32.mxu0 0.0
      %1819 = vmatmul.mubr.f32.gmra.mrb[0].mxu0 %v1616
      %v1820 = vpop.f32.mrb[0].mxu0
      %v1821 = vadd.f32 0.0, %v1820
      %v1822 = vpop.f32.mrb[0].mxu0
      %1823 = vmatprep.mubr.f32.mxu0 0.0
      %1824 = vmatmul.mubr.f32.gmra.mrb[0].mxu0 %v1619
      %v1825 = vpop.f32.mrb[0].mxu0
      %v1826 = vadd.f32 0.0, %v1825
      %v1827 = vpop.f32.mrb[0].mxu0
      %1828 = vmatprep.mubr.f32.mxu0 0.0
      %1829 = vmatmul.mubr.f32.gmra.mrb[0].mxu0 %v1622
      %v1830 = vpop.f32.mrb[0].mxu0
      %v1831 = vadd.f32 0.0, %v1830
      %v1832 = vpop.f32.mrb[0].mxu0
      %1833 = vmatprep.mubr.f32.mxu0 0.0
      %1834 = vmatmul.mubr.f32.gmra.mrb[0].mxu0 %v1625
      %v1835 = vpop.f32.mrb[0].mxu0
      %v1836 = vadd.f32 0.0, %v1835
      %v1837 = vpop.f32.mrb[0].mxu0
      %1838 = vmatprep.mubr.f32.mxu0 0.0
      %1839 = vmatmul.mubr.f32.gmra.mrb[0].mxu0 %v1628
      %v1840 = vpop.f32.mrb[0].mxu0
      %v1841 = vadd.f32 0.0, %v1840
      %v1842 = vpop.f32.mrb[0].mxu0
      %1843 = vmatprep.mubr.f32.mxu0 0.0
      %1844 = vmatmul.mubr.f32.gmra.mrb[0].mxu0 %v1631
      %v1845 = vpop.f32.mrb[0].mxu0
      %v1846 = vadd.f32 0.0, %v1845
      %v1847 = vpop.f32.mrb[0].mxu0
      %1848 = vmatprep.mubr.f32.mxu0 0.0
      %1849 = vmatmul.mubr.f32.gmra.mrb[0].mxu0 %v1634
      %v1850 = vpop.f32.mrb[0].mxu0
      %v1851 = vadd.f32 0.0, %v1850
      %v1852 = vpop.f32.mrb[0].mxu0
      %1853 = vmatprep.mubr.f32.mxu0 0.0
      %1854 = vmatmul.mubr.f32.gmra.mrb[0].mxu0 %v1637
      %v1855 = vpop.f32.mrb[0].mxu0
      %v1856 = vadd.f32 0.0, %v1855
      %v1857 = vpop.f32.mrb[0].mxu0
      %1858 = vmatprep.mubr.f32.mxu0 0.0
      %1859 = vmatmul.mubr.f32.gmra.mrb[0].mxu0 %v1640
      %v1860 = vpop.f32.mrb[0].mxu0
      %v1861 = vadd.f32 0.0, %v1860
      %v1862 = vpop.f32.mrb[0].mxu0
      %1863 = vmatprep.mubr.f32.mxu0 0.0
      %1864 = vmatmul.mubr.f32.gmra.mrb[0].mxu0 %v1643
      %v1865 = vpop.f32.mrb[0].mxu0
      %v1866 = vadd.f32 0.0, %v1865
      %v1867 = vpop.f32.mrb[0].mxu0
      %1868 = vmatprep.mubr.f32.mxu0 0.0
      %1869 = vmatmul.mubr.f32.gmra.mrb[0].mxu0 %v1646
      %v1870 = vpop.f32.mrb[0].mxu0
      %v1871 = vadd.f32 0.0, %v1870
      %v1872 = vpop.f32.mrb[0].mxu0
      %1873 = vmatprep.mubr.f32.mxu0 0.0
      %1874 = vmatmul.mubr.f32.gmra.mrb[0].mxu0 %v1649
      %v1875 = vpop.f32.mrb[0].mxu0
      %v1876 = vadd.f32 0.0, %v1875
      %v1877 = vpop.f32.mrb[0].mxu0
      %1878 = vdwg.mxu0
      %v1879 = vadd.f32 %v1489, %v1721
      %v1880 = vadd.f32 %v1490, %v1726
      %v1881 = vadd.f32 %v1491, %v1731
      %v1882 = vadd.f32 %v1492, %v1736
      %v1883 = vadd.f32 %v1493, %v1741
      %v1884 = vadd.f32 %v1494, %v1746
      %v1885 = vadd.f32 %v1495, %v1751
      %v1886 = vadd.f32 %v1496, %v1756
      %v1887 = vadd.f32 %v1497, %v1761
      %v1888 = vadd.f32 %v1498, %v1766
      %v1889 = vadd.f32 %v1499, %v1771
      %v1890 = vadd.f32 %v1500, %v1776
      %v1891 = vadd.f32 %v1501, %v1781
      %v1892 = vadd.f32 %v1502, %v1786
      %v1893 = vadd.f32 %v1503, %v1791
      %v1894 = vadd.f32 %v1504, %v1796
      %v1895 = vadd.f32 %v1505, %v1801
      %v1896 = vadd.f32 %v1506, %v1806
      %v1897 = vadd.f32 %v1507, %v1811
      %v1898 = vadd.f32 %v1508, %v1816
      %v1899 = vadd.f32 %v1509, %v1821
      %v1900 = vadd.f32 %v1510, %v1826
      %v1901 = vadd.f32 %v1511, %v1831
      %v1902 = vadd.f32 %v1512, %v1836
      %v1903 = vadd.f32 %v1513, %v1841
      %v1904 = vadd.f32 %v1514, %v1846
      %v1905 = vadd.f32 %v1515, %v1851
      %v1906 = vadd.f32 %v1516, %v1856
      %v1907 = vadd.f32 %v1517, %v1861
      %v1908 = vadd.f32 %v1518, %v1866
      %v1909 = vadd.f32 %v1519, %v1871
      %v1910 = vadd.f32 %v1520, %v1876
      %v1911 = vld [vmem:[%s311 + $0x1] sm:$0xff]
      %v1912 = vld [vmem:[%s311 + $0x9] sm:$0xff]
      %v1913 = vld [vmem:[%s311 + $0x19] sm:$0xff]
      %v1914 = vld [vmem:[%s311 + $0x21] sm:$0xff]
      %v1915 = vld [vmem:[%s311 + $0x31] sm:$0xff]
      %v1916 = vld [vmem:[%s311 + $0x39] sm:$0xff]
      %v1917 = vld [vmem:[%s311 + $0x49] sm:$0xff]
      %v1918 = vld [vmem:[%s311 + $0x51] sm:$0xff]
      %v1919 = vld [vmem:[%s311 + $0x61] sm:$0xff]
      %v1920 = vld [vmem:[%s311 + $0x69] sm:$0xff]
      %v1921 = vld [vmem:[%s311 + $0x79] sm:$0xff]
      %v1922 = vld [vmem:[%s311 + $0x81] sm:$0xff]
      %v1923 = vld [vmem:[%s311 + $0x91] sm:$0xff]
      %v1924 = vld [vmem:[%s311 + $0x99] sm:$0xff]
      %v1925 = vld [vmem:[%s311 + $0xa9] sm:$0xff]
      %v1926 = vld [vmem:[%s311 + $0xb1] sm:$0xff]
      %v1927 = vld [vmem:[%s311 + $0xc1] sm:$0xff]
      %v1928 = vld [vmem:[%s311 + $0xc9] sm:$0xff]
      %v1929 = vld [vmem:[%s311 + $0xd9] sm:$0xff]
      %v1930 = vld [vmem:[%s311 + $0xe1] sm:$0xff]
      %v1931 = vld [vmem:[%s311 + $0xf1] sm:$0xff]
      %v1932 = vld [vmem:[%s311 + $0xf9] sm:$0xff]
      %v1933 = vld [vmem:[%s311 + $0x109] sm:$0xff]
      %v1934 = vld [vmem:[%s311 + $0x111] sm:$0xff]
      %v1935 = vld [vmem:[%s311 + $0x121] sm:$0xff]
      %v1936 = vld [vmem:[%s311 + $0x129] sm:$0xff]
      %v1937 = vld [vmem:[%s311 + $0x139] sm:$0xff]
      %v1938 = vld [vmem:[%s311 + $0x141] sm:$0xff]
      %v1939 = vld [vmem:[%s311 + $0x151] sm:$0xff]
      %v1940 = vld [vmem:[%s311 + $0x159] sm:$0xff]
      %v1941 = vld [vmem:[%s311 + $0x169] sm:$0xff]
      %v1942 = vld [vmem:[%s311 + $0x171] sm:$0xff]
      %s1943 = scalar_lea.vmem %s1, 16
      %v1944 = vld [vmem:[%s1943] sm:$0xf]
      %v1946 = vsel %vm255, %v1911, 0
      %v1949 = vsel %vm255, %v1912, 0
      %v1952 = vsel %vm255, %v1913, 0
      %v1955 = vsel %vm255, %v1914, 0
      %v1958 = vsel %vm255, %v1915, 0
      %v1961 = vsel %vm255, %v1916, 0
      %v1964 = vsel %vm255, %v1917, 0
      %v1967 = vsel %vm255, %v1918, 0
      %v1970 = vsel %vm255, %v1919, 0
      %v1973 = vsel %vm255, %v1920, 0
      %v1976 = vsel %vm255, %v1921, 0
      %v1979 = vsel %vm255, %v1922, 0
      %v1982 = vsel %vm255, %v1923, 0
      %v1985 = vsel %vm255, %v1924, 0
      %v1988 = vsel %vm255, %v1925, 0
      %v1991 = vsel %vm255, %v1926, 0
      %v1994 = vsel %vm255, %v1927, 0
      %v1997 = vsel %vm255, %v1928, 0
      %v2000 = vsel %vm255, %v1929, 0
      %v2003 = vsel %vm255, %v1930, 0
      %v2006 = vsel %vm255, %v1931, 0
      %v2009 = vsel %vm255, %v1932, 0
      %v2012 = vsel %vm255, %v1933, 0
      %v2015 = vsel %vm255, %v1934, 0
      %v2018 = vsel %vm255, %v1935, 0
      %v2021 = vsel %vm255, %v1936, 0
      %v2024 = vsel %vm255, %v1937, 0
      %v2027 = vsel %vm255, %v1938, 0
      %v2030 = vsel %vm255, %v1939, 0
      %v2033 = vsel %vm255, %v1940, 0
      %v2036 = vsel %vm255, %v1941, 0
      %v2039 = vsel %vm255, %v1942, 0
      %v2042 = vsel %vm480, %v1944, 0
      %2044 = vmatprep.subr.mxu0 0.0
      %2045 = vmatpush1.msra.mxu0 %v2042
      %2046 = vmatprep.subr.mxu0 0.0
      %2047 = vmatpush1.msra.mxu0 0.0
      %2048 = vmatprep.subr.mxu0 0.0
      %2049 = vmatpush1.msra.mxu0 0.0
      %2050 = vmatprep.subr.mxu0 0.0
      %2051 = vmatpush1.msra.mxu0 0.0
      %2052 = vmatprep.subr.mxu0 0.0
      %2053 = vmatpush1.msra.mxu0 0.0
      %2054 = vmatprep.subr.mxu0 0.0
      %2055 = vmatpush1.msra.mxu0 0.0
      %2056 = vmatprep.subr.mxu0 0.0
      %2057 = vmatpush1.msra.mxu0 0.0
      %2058 = vmatprep.subr.mxu0 0.0
      %2059 = vmatpush1.msra.mxu0 0.0
      %2060 = vmatprep.subr.mxu0 0.0
      %2061 = vmatpush1.msra.mxu0 0.0
      %2062 = vmatprep.subr.mxu0 0.0
      %2063 = vmatpush1.msra.mxu0 0.0
      %2064 = vmatprep.subr.mxu0 0.0
      %2065 = vmatpush1.msra.mxu0 0.0
      %2066 = vmatprep.subr.mxu0 0.0
      %2067 = vmatpush1.msra.mxu0 0.0
      %2068 = vmatprep.subr.mxu0 0.0
      %2069 = vmatpush1.msra.mxu0 0.0
      %2070 = vmatprep.subr.mxu0 0.0
      %2071 = vmatpush1.msra.mxu0 0.0
      %2072 = vmatprep.subr.mxu0 0.0
      %2073 = vmatpush1.msra.mxu0 0.0
      %2074 = vmatprep.subr.mxu0 0.0
      %2075 = vmatpush1.msra.mxu0 0.0
      %2076 = vmatprep.subr.mxu0 0.0
      %2077 = vmatpush1.msra.mxu0 0.0
      %2078 = vmatprep.subr.mxu0 0.0
      %2079 = vmatpush1.msra.mxu0 0.0
      %2080 = vmatprep.subr.mxu0 0.0
      %2081 = vmatpush1.msra.mxu0 0.0
      %2082 = vmatprep.subr.mxu0 0.0
      %2083 = vmatpush1.msra.mxu0 0.0
      %2084 = vmatprep.subr.mxu0 0.0
      %2085 = vmatpush1.msra.mxu0 0.0
      %2086 = vmatprep.subr.mxu0 0.0
      %2087 = vmatpush1.msra.mxu0 0.0
      %2088 = vmatprep.subr.mxu0 0.0
      %2089 = vmatpush1.msra.mxu0 0.0
      %2090 = vmatprep.subr.mxu0 0.0
      %2091 = vmatpush1.msra.mxu0 0.0
      %2092 = vmatprep.subr.mxu0 0.0
      %2093 = vmatpush1.msra.mxu0 0.0
      %2094 = vmatprep.subr.mxu0 0.0
      %2095 = vmatpush1.msra.mxu0 0.0
      %2096 = vmatprep.subr.mxu0 0.0
      %2097 = vmatpush1.msra.mxu0 0.0
      %2098 = vmatprep.subr.mxu0 0.0
      %2099 = vmatpush1.msra.mxu0 0.0
      %2100 = vmatprep.subr.mxu0 0.0
      %2101 = vmatpush1.msra.mxu0 0.0
      %2102 = vmatprep.subr.mxu0 0.0
      %2103 = vmatpush1.msra.mxu0 0.0
      %2104 = vmatprep.subr.mxu0 0.0
      %2105 = vmatpush1.msra.mxu0 0.0
      %2106 = vmatprep.subr.mxu0 0.0
      %2107 = vmatpush1.msra.mxu0 0.0
      %2108 = vmatprep.mubr.f32.mxu0 0.0
      %2109 = vmatmul.mubr.f32.gmra.mrb[0].mxu0 %v1946
      %v2110 = vpop.f32.mrb[0].mxu0
      %v2111 = vadd.f32 0.0, %v2110
      %v2112 = vpop.f32.mrb[0].mxu0
      %2113 = vmatprep.mubr.f32.mxu0 0.0
      %2114 = vmatmul.mubr.f32.gmra.mrb[0].mxu0 %v1949
      %v2115 = vpop.f32.mrb[0].mxu0
      %v2116 = vadd.f32 0.0, %v2115
      %v2117 = vpop.f32.mrb[0].mxu0
      %2118 = vmatprep.mubr.f32.mxu0 0.0
      %2119 = vmatmul.mubr.f32.gmra.mrb[0].mxu0 %v1952
      %v2120 = vpop.f32.mrb[0].mxu0
      %v2121 = vadd.f32 0.0, %v2120
      %v2122 = vpop.f32.mrb[0].mxu0
      %2123 = vmatprep.mubr.f32.mxu0 0.0
      %2124 = vmatmul.mubr.f32.gmra.mrb[0].mxu0 %v1955
      %v2125 = vpop.f32.mrb[0].mxu0
      %v2126 = vadd.f32 0.0, %v2125
      %v2127 = vpop.f32.mrb[0].mxu0
      %2128 = vmatprep.mubr.f32.mxu0 0.0
      %2129 = vmatmul.mubr.f32.gmra.mrb[0].mxu0 %v1958
      %v2130 = vpop.f32.mrb[0].mxu0
      %v2131 = vadd.f32 0.0, %v2130
      %v2132 = vpop.f32.mrb[0].mxu0
      %2133 = vmatprep.mubr.f32.mxu0 0.0
      %2134 = vmatmul.mubr.f32.gmra.mrb[0].mxu0 %v1961
      %v2135 = vpop.f32.mrb[0].mxu0
      %v2136 = vadd.f32 0.0, %v2135
      %v2137 = vpop.f32.mrb[0].mxu0
      %2138 = vmatprep.mubr.f32.mxu0 0.0
      %2139 = vmatmul.mubr.f32.gmra.mrb[0].mxu0 %v1964
      %v2140 = vpop.f32.mrb[0].mxu0
      %v2141 = vadd.f32 0.0, %v2140
      %v2142 = vpop.f32.mrb[0].mxu0
      %2143 = vmatprep.mubr.f32.mxu0 0.0
      %2144 = vmatmul.mubr.f32.gmra.mrb[0].mxu0 %v1967
      %v2145 = vpop.f32.mrb[0].mxu0
      %v2146 = vadd.f32 0.0, %v2145
      %v2147 = vpop.f32.mrb[0].mxu0
      %2148 = vmatprep.mubr.f32.mxu0 0.0
      %2149 = vmatmul.mubr.f32.gmra.mrb[0].mxu0 %v1970
      %v2150 = vpop.f32.mrb[0].mxu0
      %v2151 = vadd.f32 0.0, %v2150
      %v2152 = vpop.f32.mrb[0].mxu0
      %2153 = vmatprep.mubr.f32.mxu0 0.0
      %2154 = vmatmul.mubr.f32.gmra.mrb[0].mxu0 %v1973
      %v2155 = vpop.f32.mrb[0].mxu0
      %v2156 = vadd.f32 0.0, %v2155
      %v2157 = vpop.f32.mrb[0].mxu0
      %2158 = vmatprep.mubr.f32.mxu0 0.0
      %2159 = vmatmul.mubr.f32.gmra.mrb[0].mxu0 %v1976
      %v2160 = vpop.f32.mrb[0].mxu0
      %v2161 = vadd.f32 0.0, %v2160
      %v2162 = vpop.f32.mrb[0].mxu0
      %2163 = vmatprep.mubr.f32.mxu0 0.0
      %2164 = vmatmul.mubr.f32.gmra.mrb[0].mxu0 %v1979
      %v2165 = vpop.f32.mrb[0].mxu0
      %v2166 = vadd.f32 0.0, %v2165
      %v2167 = vpop.f32.mrb[0].mxu0
      %2168 = vmatprep.mubr.f32.mxu0 0.0
      %2169 = vmatmul.mubr.f32.gmra.mrb[0].mxu0 %v1982
      %v2170 = vpop.f32.mrb[0].mxu0
      %v2171 = vadd.f32 0.0, %v2170
      %v2172 = vpop.f32.mrb[0].mxu0
      %2173 = vmatprep.mubr.f32.mxu0 0.0
      %2174 = vmatmul.mubr.f32.gmra.mrb[0].mxu0 %v1985
      %v2175 = vpop.f32.mrb[0].mxu0
      %v2176 = vadd.f32 0.0, %v2175
      %v2177 = vpop.f32.mrb[0].mxu0
      %2178 = vmatprep.mubr.f32.mxu0 0.0
      %2179 = vmatmul.mubr.f32.gmra.mrb[0].mxu0 %v1988
      %v2180 = vpop.f32.mrb[0].mxu0
      %v2181 = vadd.f32 0.0, %v2180
      %v2182 = vpop.f32.mrb[0].mxu0
      %2183 = vmatprep.mubr.f32.mxu0 0.0
      %2184 = vmatmul.mubr.f32.gmra.mrb[0].mxu0 %v1991
      %v2185 = vpop.f32.mrb[0].mxu0
      %v2186 = vadd.f32 0.0, %v2185
      %v2187 = vpop.f32.mrb[0].mxu0
      %2188 = vmatprep.mubr.f32.mxu0 0.0
      %2189 = vmatmul.mubr.f32.gmra.mrb[0].mxu0 %v1994
      %v2190 = vpop.f32.mrb[0].mxu0
      %v2191 = vadd.f32 0.0, %v2190
      %v2192 = vpop.f32.mrb[0].mxu0
      %2193 = vmatprep.mubr.f32.mxu0 0.0
      %2194 = vmatmul.mubr.f32.gmra.mrb[0].mxu0 %v1997
      %v2195 = vpop.f32.mrb[0].mxu0
      %v2196 = vadd.f32 0.0, %v2195
      %v2197 = vpop.f32.mrb[0].mxu0
      %2198 = vmatprep.mubr.f32.mxu0 0.0
      %2199 = vmatmul.mubr.f32.gmra.mrb[0].mxu0 %v2000
      %v2200 = vpop.f32.mrb[0].mxu0
      %v2201 = vadd.f32 0.0, %v2200
      %v2202 = vpop.f32.mrb[0].mxu0
      %2203 = vmatprep.mubr.f32.mxu0 0.0
      %2204 = vmatmul.mubr.f32.gmra.mrb[0].mxu0 %v2003
      %v2205 = vpop.f32.mrb[0].mxu0
      %v2206 = vadd.f32 0.0, %v2205
      %v2207 = vpop.f32.mrb[0].mxu0
      %2208 = vmatprep.mubr.f32.mxu0 0.0
      %2209 = vmatmul.mubr.f32.gmra.mrb[0].mxu0 %v2006
      %v2210 = vpop.f32.mrb[0].mxu0
      %v2211 = vadd.f32 0.0, %v2210
      %v2212 = vpop.f32.mrb[0].mxu0
      %2213 = vmatprep.mubr.f32.mxu0 0.0
      %2214 = vmatmul.mubr.f32.gmra.mrb[0].mxu0 %v2009
      %v2215 = vpop.f32.mrb[0].mxu0
      %v2216 = vadd.f32 0.0, %v2215
      %v2217 = vpop.f32.mrb[0].mxu0
      %2218 = vmatprep.mubr.f32.mxu0 0.0
      %2219 = vmatmul.mubr.f32.gmra.mrb[0].mxu0 %v2012
      %v2220 = vpop.f32.mrb[0].mxu0
      %v2221 = vadd.f32 0.0, %v2220
      %v2222 = vpop.f32.mrb[0].mxu0
      %2223 = vmatprep.mubr.f32.mxu0 0.0
      %2224 = vmatmul.mubr.f32.gmra.mrb[0].mxu0 %v2015
      %v2225 = vpop.f32.mrb[0].mxu0
      %v2226 = vadd.f32 0.0, %v2225
      %v2227 = vpop.f32.mrb[0].mxu0
      %2228 = vmatprep.mubr.f32.mxu0 0.0
      %2229 = vmatmul.mubr.f32.gmra.mrb[0].mxu0 %v2018
      %v2230 = vpop.f32.mrb[0].mxu0
      %v2231 = vadd.f32 0.0, %v2230
      %v2232 = vpop.f32.mrb[0].mxu0
      %2233 = vmatprep.mubr.f32.mxu0 0.0
      %2234 = vmatmul.mubr.f32.gmra.mrb[0].mxu0 %v2021
      %v2235 = vpop.f32.mrb[0].mxu0
      %v2236 = vadd.f32 0.0, %v2235
      %v2237 = vpop.f32.mrb[0].mxu0
      %2238 = vmatprep.mubr.f32.mxu0 0.0
      %2239 = vmatmul.mubr.f32.gmra.mrb[0].mxu0 %v2024
      %v2240 = vpop.f32.mrb[0].mxu0
      %v2241 = vadd.f32 0.0, %v2240
      %v2242 = vpop.f32.mrb[0].mxu0
      %2243 = vmatprep.mubr.f32.mxu0 0.0
      %2244 = vmatmul.mubr.f32.gmra.mrb[0].mxu0 %v2027
      %v2245 = vpop.f32.mrb[0].mxu0
      %v2246 = vadd.f32 0.0, %v2245
      %v2247 = vpop.f32.mrb[0].mxu0
      %2248 = vmatprep.mubr.f32.mxu0 0.0
      %2249 = vmatmul.mubr.f32.gmra.mrb[0].mxu0 %v2030
      %v2250 = vpop.f32.mrb[0].mxu0
      %v2251 = vadd.f32 0.0, %v2250
      %v2252 = vpop.f32.mrb[0].mxu0
      %2253 = vmatprep.mubr.f32.mxu0 0.0
      %2254 = vmatmul.mubr.f32.gmra.mrb[0].mxu0 %v2033
      %v2255 = vpop.f32.mrb[0].mxu0
      %v2256 = vadd.f32 0.0, %v2255
      %v2257 = vpop.f32.mrb[0].mxu0
      %2258 = vmatprep.mubr.f32.mxu0 0.0
      %2259 = vmatmul.mubr.f32.gmra.mrb[0].mxu0 %v2036
      %v2260 = vpop.f32.mrb[0].mxu0
      %v2261 = vadd.f32 0.0, %v2260
      %v2262 = vpop.f32.mrb[0].mxu0
      %2263 = vmatprep.mubr.f32.mxu0 0.0
      %2264 = vmatmul.mubr.f32.gmra.mrb[0].mxu0 %v2039
      %v2265 = vpop.f32.mrb[0].mxu0
      %v2266 = vadd.f32 0.0, %v2265
      %v2267 = vpop.f32.mrb[0].mxu0
      %2268 = vdwg.mxu0
      %v2269 = vadd.f32 %v1879, %v2111
      %v2270 = vadd.f32 %v1880, %v2116
      %v2271 = vadd.f32 %v1881, %v2121
      %v2272 = vadd.f32 %v1882, %v2126
      %v2273 = vadd.f32 %v1883, %v2131
      %v2274 = vadd.f32 %v1884, %v2136
      %v2275 = vadd.f32 %v1885, %v2141
      %v2276 = vadd.f32 %v1886, %v2146
      %v2277 = vadd.f32 %v1887, %v2151
      %v2278 = vadd.f32 %v1888, %v2156
      %v2279 = vadd.f32 %v1889, %v2161
      %v2280 = vadd.f32 %v1890, %v2166
      %v2281 = vadd.f32 %v1891, %v2171
      %v2282 = vadd.f32 %v1892, %v2176
      %v2283 = vadd.f32 %v1893, %v2181
      %v2284 = vadd.f32 %v1894, %v2186
      %v2285 = vadd.f32 %v1895, %v2191
      %v2286 = vadd.f32 %v1896, %v2196
      %v2287 = vadd.f32 %v1897, %v2201
      %v2288 = vadd.f32 %v1898, %v2206
      %v2289 = vadd.f32 %v1899, %v2211
      %v2290 = vadd.f32 %v1900, %v2216
      %v2291 = vadd.f32 %v1901, %v2221
      %v2292 = vadd.f32 %v1902, %v2226
      %v2293 = vadd.f32 %v1903, %v2231
      %v2294 = vadd.f32 %v1904, %v2236
      %v2295 = vadd.f32 %v1905, %v2241
      %v2296 = vadd.f32 %v1906, %v2246
      %v2297 = vadd.f32 %v1907, %v2251
      %v2298 = vadd.f32 %v1908, %v2256
      %v2299 = vadd.f32 %v1909, %v2261
      %v2300 = vadd.f32 %v1910, %v2266
      %v2301 = vld [vmem:[%s311 + $0x2] sm:$0xff]
      %v2302 = vld [vmem:[%s311 + $0xa] sm:$0xff]
      %v2303 = vld [vmem:[%s311 + $0x1a] sm:$0xff]
      %v2304 = vld [vmem:[%s311 + $0x22] sm:$0xff]
      %v2305 = vld [vmem:[%s311 + $0x32] sm:$0xff]
      %v2306 = vld [vmem:[%s311 + $0x3a] sm:$0xff]
      %v2307 = vld [vmem:[%s311 + $0x4a] sm:$0xff]
      %v2308 = vld [vmem:[%s311 + $0x52] sm:$0xff]
      %v2309 = vld [vmem:[%s311 + $0x62] sm:$0xff]
      %v2310 = vld [vmem:[%s311 + $0x6a] sm:$0xff]
      %v2311 = vld [vmem:[%s311 + $0x7a] sm:$0xff]
      %v2312 = vld [vmem:[%s311 + $0x82] sm:$0xff]
      %v2313 = vld [vmem:[%s311 + $0x92] sm:$0xff]
      %v2314 = vld [vmem:[%s311 + $0x9a] sm:$0xff]
      %v2315 = vld [vmem:[%s311 + $0xaa] sm:$0xff]
      %v2316 = vld [vmem:[%s311 + $0xb2] sm:$0xff]
      %v2317 = vld [vmem:[%s311 + $0xc2] sm:$0xff]
      %v2318 = vld [vmem:[%s311 + $0xca] sm:$0xff]
      %v2319 = vld [vmem:[%s311 + $0xda] sm:$0xff]
      %v2320 = vld [vmem:[%s311 + $0xe2] sm:$0xff]
      %v2321 = vld [vmem:[%s311 + $0xf2] sm:$0xff]
      %v2322 = vld [vmem:[%s311 + $0xfa] sm:$0xff]
      %v2323 = vld [vmem:[%s311 + $0x10a] sm:$0xff]
      %v2324 = vld [vmem:[%s311 + $0x112] sm:$0xff]
      %v2325 = vld [vmem:[%s311 + $0x122] sm:$0xff]
      %v2326 = vld [vmem:[%s311 + $0x12a] sm:$0xff]
      %v2327 = vld [vmem:[%s311 + $0x13a] sm:$0xff]
      %v2328 = vld [vmem:[%s311 + $0x142] sm:$0xff]
      %v2329 = vld [vmem:[%s311 + $0x152] sm:$0xff]
      %v2330 = vld [vmem:[%s311 + $0x15a] sm:$0xff]
      %v2331 = vld [vmem:[%s311 + $0x16a] sm:$0xff]
      %v2332 = vld [vmem:[%s311 + $0x172] sm:$0xff]
      %s2333 = scalar_lea.vmem %s1, 20
      %v2334 = vld [vmem:[%s2333] sm:$0xf]
      %v2336 = vsel %vm255, %v2301, 0
      %v2339 = vsel %vm255, %v2302, 0
      %v2342 = vsel %vm255, %v2303, 0
      %v2345 = vsel %vm255, %v2304, 0
      %v2348 = vsel %vm255, %v2305, 0
      %v2351 = vsel %vm255, %v2306, 0
      %v2354 = vsel %vm255, %v2307, 0
      %v2357 = vsel %vm255, %v2308, 0
      %v2360 = vsel %vm255, %v2309, 0
      %v2363 = vsel %vm255, %v2310, 0
      %v2366 = vsel %vm255, %v2311, 0
      %v2369 = vsel %vm255, %v2312, 0
      %v2372 = vsel %vm255, %v2313, 0
      %v2375 = vsel %vm255, %v2314, 0
      %v2378 = vsel %vm255, %v2315, 0
      %v2381 = vsel %vm255, %v2316, 0
      %v2384 = vsel %vm255, %v2317, 0
      %v2387 = vsel %vm255, %v2318, 0
      %v2390 = vsel %vm255, %v2319, 0
      %v2393 = vsel %vm255, %v2320, 0
      %v2396 = vsel %vm255, %v2321, 0
      %v2399 = vsel %vm255, %v2322, 0
      %v2402 = vsel %vm255, %v2323, 0
      %v2405 = vsel %vm255, %v2324, 0
      %v2408 = vsel %vm255, %v2325, 0
      %v2411 = vsel %vm255, %v2326, 0
      %v2414 = vsel %vm255, %v2327, 0
      %v2417 = vsel %vm255, %v2328, 0
      %v2420 = vsel %vm255, %v2329, 0
      %v2423 = vsel %vm255, %v2330, 0
      %v2426 = vsel %vm255, %v2331, 0
      %v2429 = vsel %vm255, %v2332, 0
      %v2432 = vsel %vm480, %v2334, 0
      %2434 = vmatprep.subr.mxu0 0.0
      %2435 = vmatpush1.msra.mxu0 %v2432
      %2436 = vmatprep.subr.mxu0 0.0
      %2437 = vmatpush1.msra.mxu0 0.0
      %2438 = vmatprep.subr.mxu0 0.0
      %2439 = vmatpush1.msra.mxu0 0.0
      %2440 = vmatprep.subr.mxu0 0.0
      %2441 = vmatpush1.msra.mxu0 0.0
      %2442 = vmatprep.subr.mxu0 0.0
      %2443 = vmatpush1.msra.mxu0 0.0
      %2444 = vmatprep.subr.mxu0 0.0
      %2445 = vmatpush1.msra.mxu0 0.0
      %2446 = vmatprep.subr.mxu0 0.0
      %2447 = vmatpush1.msra.mxu0 0.0
      %2448 = vmatprep.subr.mxu0 0.0
      %2449 = vmatpush1.msra.mxu0 0.0
      %2450 = vmatprep.subr.mxu0 0.0
      %2451 = vmatpush1.msra.mxu0 0.0
      %2452 = vmatprep.subr.mxu0 0.0
      %2453 = vmatpush1.msra.mxu0 0.0
      %2454 = vmatprep.subr.mxu0 0.0
      %2455 = vmatpush1.msra.mxu0 0.0
      %2456 = vmatprep.subr.mxu0 0.0
      %2457 = vmatpush1.msra.mxu0 0.0
      %2458 = vmatprep.subr.mxu0 0.0
      %2459 = vmatpush1.msra.mxu0 0.0
      %2460 = vmatprep.subr.mxu0 0.0
      %2461 = vmatpush1.msra.mxu0 0.0
      %2462 = vmatprep.subr.mxu0 0.0
      %2463 = vmatpush1.msra.mxu0 0.0
      %2464 = vmatprep.subr.mxu0 0.0
      %2465 = vmatpush1.msra.mxu0 0.0
      %2466 = vmatprep.subr.mxu0 0.0
      %2467 = vmatpush1.msra.mxu0 0.0
      %2468 = vmatprep.subr.mxu0 0.0
      %2469 = vmatpush1.msra.mxu0 0.0
      %2470 = vmatprep.subr.mxu0 0.0
      %2471 = vmatpush1.msra.mxu0 0.0
      %2472 = vmatprep.subr.mxu0 0.0
      %2473 = vmatpush1.msra.mxu0 0.0
      %2474 = vmatprep.subr.mxu0 0.0
      %2475 = vmatpush1.msra.mxu0 0.0
      %2476 = vmatprep.subr.mxu0 0.0
      %2477 = vmatpush1.msra.mxu0 0.0
      %2478 = vmatprep.subr.mxu0 0.0
      %2479 = vmatpush1.msra.mxu0 0.0
      %2480 = vmatprep.subr.mxu0 0.0
      %2481 = vmatpush1.msra.mxu0 0.0
      %2482 = vmatprep.subr.mxu0 0.0
      %2483 = vmatpush1.msra.mxu0 0.0
      %2484 = vmatprep.subr.mxu0 0.0
      %2485 = vmatpush1.msra.mxu0 0.0
      %2486 = vmatprep.subr.mxu0 0.0
      %2487 = vmatpush1.msra.mxu0 0.0
      %2488 = vmatprep.subr.mxu0 0.0
      %2489 = vmatpush1.msra.mxu0 0.0
      %2490 = vmatprep.subr.mxu0 0.0
      %2491 = vmatpush1.msra.mxu0 0.0
      %2492 = vmatprep.subr.mxu0 0.0
      %2493 = vmatpush1.msra.mxu0 0.0
      %2494 = vmatprep.subr.mxu0 0.0
      %2495 = vmatpush1.msra.mxu0 0.0
      %2496 = vmatprep.subr.mxu0 0.0
      %2497 = vmatpush1.msra.mxu0 0.0
      %2498 = vmatprep.mubr.f32.mxu0 0.0
      %2499 = vmatmul.mubr.f32.gmra.mrb[0].mxu0 %v2336
      %v2500 = vpop.f32.mrb[0].mxu0
      %v2501 = vadd.f32 0.0, %v2500
      %v2502 = vpop.f32.mrb[0].mxu0
      %2503 = vmatprep.mubr.f32.mxu0 0.0
      %2504 = vmatmul.mubr.f32.gmra.mrb[0].mxu0 %v2339
      %v2505 = vpop.f32.mrb[0].mxu0
      %v2506 = vadd.f32 0.0, %v2505
      %v2507 = vpop.f32.mrb[0].mxu0
      %2508 = vmatprep.mubr.f32.mxu0 0.0
      %2509 = vmatmul.mubr.f32.gmra.mrb[0].mxu0 %v2342
      %v2510 = vpop.f32.mrb[0].mxu0
      %v2511 = vadd.f32 0.0, %v2510
      %v2512 = vpop.f32.mrb[0].mxu0
      %2513 = vmatprep.mubr.f32.mxu0 0.0
      %2514 = vmatmul.mubr.f32.gmra.mrb[0].mxu0 %v2345
      %v2515 = vpop.f32.mrb[0].mxu0
      %v2516 = vadd.f32 0.0, %v2515
      %v2517 = vpop.f32.mrb[0].mxu0
      %2518 = vmatprep.mubr.f32.mxu0 0.0
      %2519 = vmatmul.mubr.f32.gmra.mrb[0].mxu0 %v2348
      %v2520 = vpop.f32.mrb[0].mxu0
      %v2521 = vadd.f32 0.0, %v2520
      %v2522 = vpop.f32.mrb[0].mxu0
      %2523 = vmatprep.mubr.f32.mxu0 0.0
      %2524 = vmatmul.mubr.f32.gmra.mrb[0].mxu0 %v2351
      %v2525 = vpop.f32.mrb[0].mxu0
      %v2526 = vadd.f32 0.0, %v2525
      %v2527 = vpop.f32.mrb[0].mxu0
      %2528 = vmatprep.mubr.f32.mxu0 0.0
      %2529 = vmatmul.mubr.f32.gmra.mrb[0].mxu0 %v2354
      %v2530 = vpop.f32.mrb[0].mxu0
      %v2531 = vadd.f32 0.0, %v2530
      %v2532 = vpop.f32.mrb[0].mxu0
      %2533 = vmatprep.mubr.f32.mxu0 0.0
      %2534 = vmatmul.mubr.f32.gmra.mrb[0].mxu0 %v2357
      %v2535 = vpop.f32.mrb[0].mxu0
      %v2536 = vadd.f32 0.0, %v2535
      %v2537 = vpop.f32.mrb[0].mxu0
      %2538 = vmatprep.mubr.f32.mxu0 0.0
      %2539 = vmatmul.mubr.f32.gmra.mrb[0].mxu0 %v2360
      %v2540 = vpop.f32.mrb[0].mxu0
      %v2541 = vadd.f32 0.0, %v2540
      %v2542 = vpop.f32.mrb[0].mxu0
      %2543 = vmatprep.mubr.f32.mxu0 0.0
      %2544 = vmatmul.mubr.f32.gmra.mrb[0].mxu0 %v2363
      %v2545 = vpop.f32.mrb[0].mxu0
      %v2546 = vadd.f32 0.0, %v2545
      %v2547 = vpop.f32.mrb[0].mxu0
      %2548 = vmatprep.mubr.f32.mxu0 0.0
      %2549 = vmatmul.mubr.f32.gmra.mrb[0].mxu0 %v2366
      %v2550 = vpop.f32.mrb[0].mxu0
      %v2551 = vadd.f32 0.0, %v2550
      %v2552 = vpop.f32.mrb[0].mxu0
      %2553 = vmatprep.mubr.f32.mxu0 0.0
      %2554 = vmatmul.mubr.f32.gmra.mrb[0].mxu0 %v2369
      %v2555 = vpop.f32.mrb[0].mxu0
      %v2556 = vadd.f32 0.0, %v2555
      %v2557 = vpop.f32.mrb[0].mxu0
      %2558 = vmatprep.mubr.f32.mxu0 0.0
      %2559 = vmatmul.mubr.f32.gmra.mrb[0].mxu0 %v2372
      %v2560 = vpop.f32.mrb[0].mxu0
      %v2561 = vadd.f32 0.0, %v2560
      %v2562 = vpop.f32.mrb[0].mxu0
      %2563 = vmatprep.mubr.f32.mxu0 0.0
      %2564 = vmatmul.mubr.f32.gmra.mrb[0].mxu0 %v2375
      %v2565 = vpop.f32.mrb[0].mxu0
      %v2566 = vadd.f32 0.0, %v2565
      %v2567 = vpop.f32.mrb[0].mxu0
      %2568 = vmatprep.mubr.f32.mxu0 0.0
      %2569 = vmatmul.mubr.f32.gmra.mrb[0].mxu0 %v2378
      %v2570 = vpop.f32.mrb[0].mxu0
      %v2571 = vadd.f32 0.0, %v2570
      %v2572 = vpop.f32.mrb[0].mxu0
      %2573 = vmatprep.mubr.f32.mxu0 0.0
      %2574 = vmatmul.mubr.f32.gmra.mrb[0].mxu0 %v2381
      %v2575 = vpop.f32.mrb[0].mxu0
      %v2576 = vadd.f32 0.0, %v2575
      %v2577 = vpop.f32.mrb[0].mxu0
      %2578 = vmatprep.mubr.f32.mxu0 0.0
      %2579 = vmatmul.mubr.f32.gmra.mrb[0].mxu0 %v2384
      %v2580 = vpop.f32.mrb[0].mxu0
      %v2581 = vadd.f32 0.0, %v2580
      %v2582 = vpop.f32.mrb[0].mxu0
      %2583 = vmatprep.mubr.f32.mxu0 0.0
      %2584 = vmatmul.mubr.f32.gmra.mrb[0].mxu0 %v2387
      %v2585 = vpop.f32.mrb[0].mxu0
      %v2586 = vadd.f32 0.0, %v2585
      %v2587 = vpop.f32.mrb[0].mxu0
      %2588 = vmatprep.mubr.f32.mxu0 0.0
      %2589 = vmatmul.mubr.f32.gmra.mrb[0].mxu0 %v2390
      %v2590 = vpop.f32.mrb[0].mxu0
      %v2591 = vadd.f32 0.0, %v2590
      %v2592 = vpop.f32.mrb[0].mxu0
      %2593 = vmatprep.mubr.f32.mxu0 0.0
      %2594 = vmatmul.mubr.f32.gmra.mrb[0].mxu0 %v2393
      %v2595 = vpop.f32.mrb[0].mxu0
      %v2596 = vadd.f32 0.0, %v2595
      %v2597 = vpop.f32.mrb[0].mxu0
      %2598 = vmatprep.mubr.f32.mxu0 0.0
      %2599 = vmatmul.mubr.f32.gmra.mrb[0].mxu0 %v2396
      %v2600 = vpop.f32.mrb[0].mxu0
      %v2601 = vadd.f32 0.0, %v2600
      %v2602 = vpop.f32.mrb[0].mxu0
      %2603 = vmatprep.mubr.f32.mxu0 0.0
      %2604 = vmatmul.mubr.f32.gmra.mrb[0].mxu0 %v2399
      %v2605 = vpop.f32.mrb[0].mxu0
      %v2606 = vadd.f32 0.0, %v2605
      %v2607 = vpop.f32.mrb[0].mxu0
      %2608 = vmatprep.mubr.f32.mxu0 0.0
      %2609 = vmatmul.mubr.f32.gmra.mrb[0].mxu0 %v2402
      %v2610 = vpop.f32.mrb[0].mxu0
      %v2611 = vadd.f32 0.0, %v2610
      %v2612 = vpop.f32.mrb[0].mxu0
      %2613 = vmatprep.mubr.f32.mxu0 0.0
      %2614 = vmatmul.mubr.f32.gmra.mrb[0].mxu0 %v2405
      %v2615 = vpop.f32.mrb[0].mxu0
      %v2616 = vadd.f32 0.0, %v2615
      %v2617 = vpop.f32.mrb[0].mxu0
      %2618 = vmatprep.mubr.f32.mxu0 0.0
      %2619 = vmatmul.mubr.f32.gmra.mrb[0].mxu0 %v2408
      %v2620 = vpop.f32.mrb[0].mxu0
      %v2621 = vadd.f32 0.0, %v2620
      %v2622 = vpop.f32.mrb[0].mxu0
      %2623 = vmatprep.mubr.f32.mxu0 0.0
      %2624 = vmatmul.mubr.f32.gmra.mrb[0].mxu0 %v2411
      %v2625 = vpop.f32.mrb[0].mxu0
      %v2626 = vadd.f32 0.0, %v2625
      %v2627 = vpop.f32.mrb[0].mxu0
      %2628 = vmatprep.mubr.f32.mxu0 0.0
      %2629 = vmatmul.mubr.f32.gmra.mrb[0].mxu0 %v2414
      %v2630 = vpop.f32.mrb[0].mxu0
      %v2631 = vadd.f32 0.0, %v2630
      %v2632 = vpop.f32.mrb[0].mxu0
      %2633 = vmatprep.mubr.f32.mxu0 0.0
      %2634 = vmatmul.mubr.f32.gmra.mrb[0].mxu0 %v2417
      %v2635 = vpop.f32.mrb[0].mxu0
      %v2636 = vadd.f32 0.0, %v2635
      %v2637 = vpop.f32.mrb[0].mxu0
      %2638 = vmatprep.mubr.f32.mxu0 0.0
      %2639 = vmatmul.mubr.f32.gmra.mrb[0].mxu0 %v2420
      %v2640 = vpop.f32.mrb[0].mxu0
      %v2641 = vadd.f32 0.0, %v2640
      %v2642 = vpop.f32.mrb[0].mxu0
      %2643 = vmatprep.mubr.f32.mxu0 0.0
      %2644 = vmatmul.mubr.f32.gmra.mrb[0].mxu0 %v2423
      %v2645 = vpop.f32.mrb[0].mxu0
      %v2646 = vadd.f32 0.0, %v2645
      %v2647 = vpop.f32.mrb[0].mxu0
      %2648 = vmatprep.mubr.f32.mxu0 0.0
      %2649 = vmatmul.mubr.f32.gmra.mrb[0].mxu0 %v2426
      %v2650 = vpop.f32.mrb[0].mxu0
      %v2651 = vadd.f32 0.0, %v2650
      %v2652 = vpop.f32.mrb[0].mxu0
      %2653 = vmatprep.mubr.f32.mxu0 0.0
      %2654 = vmatmul.mubr.f32.gmra.mrb[0].mxu0 %v2429
      %v2655 = vpop.f32.mrb[0].mxu0
      %v2656 = vadd.f32 0.0, %v2655
      %v2657 = vpop.f32.mrb[0].mxu0
      %2658 = vdwg.mxu0
      %v2659 = vadd.f32 %v2269, %v2501
      %v2660 = vadd.f32 %v2270, %v2506
      %v2661 = vadd.f32 %v2271, %v2511
      %v2662 = vadd.f32 %v2272, %v2516
      %v2663 = vadd.f32 %v2273, %v2521
      %v2664 = vadd.f32 %v2274, %v2526
      %v2665 = vadd.f32 %v2275, %v2531
      %v2666 = vadd.f32 %v2276, %v2536
      %v2667 = vadd.f32 %v2277, %v2541
      %v2668 = vadd.f32 %v2278, %v2546
      %v2669 = vadd.f32 %v2279, %v2551
      %v2670 = vadd.f32 %v2280, %v2556
      %v2671 = vadd.f32 %v2281, %v2561
      %v2672 = vadd.f32 %v2282, %v2566
      %v2673 = vadd.f32 %v2283, %v2571
      %v2674 = vadd.f32 %v2284, %v2576
      %v2675 = vadd.f32 %v2285, %v2581
      %v2676 = vadd.f32 %v2286, %v2586
      %v2677 = vadd.f32 %v2287, %v2591
      %v2678 = vadd.f32 %v2288, %v2596
      %v2679 = vadd.f32 %v2289, %v2601
      %v2680 = vadd.f32 %v2290, %v2606
      %v2681 = vadd.f32 %v2291, %v2611
      %v2682 = vadd.f32 %v2292, %v2616
      %v2683 = vadd.f32 %v2293, %v2621
      %v2684 = vadd.f32 %v2294, %v2626
      %v2685 = vadd.f32 %v2295, %v2631
      %v2686 = vadd.f32 %v2296, %v2636
      %v2687 = vadd.f32 %v2297, %v2641
      %v2688 = vadd.f32 %v2298, %v2646
      %v2689 = vadd.f32 %v2299, %v2651
      %v2690 = vadd.f32 %v2300, %v2656
      %s2691 = scalar_lea.vmem [#allocation2], 48
      %v2692 = vld [vmem:[%s2691] sm:$0xff]
      %v2693 = vld [vmem:[%s2691 + $0x8] sm:$0xff]
      %v2694 = vld [vmem:[%s2691 + $0x18] sm:$0xff]
      %v2695 = vld [vmem:[%s2691 + $0x20] sm:$0xff]
      %v2696 = vld [vmem:[%s2691 + $0x30] sm:$0xff]
      %v2697 = vld [vmem:[%s2691 + $0x38] sm:$0xff]
      %v2698 = vld [vmem:[%s2691 + $0x48] sm:$0xff]
      %v2699 = vld [vmem:[%s2691 + $0x50] sm:$0xff]
      %v2700 = vld [vmem:[%s2691 + $0x60] sm:$0xff]
      %v2701 = vld [vmem:[%s2691 + $0x68] sm:$0xff]
      %v2702 = vld [vmem:[%s2691 + $0x78] sm:$0xff]
      %v2703 = vld [vmem:[%s2691 + $0x80] sm:$0xff]
      %v2704 = vld [vmem:[%s2691 + $0x90] sm:$0xff]
      %v2705 = vld [vmem:[%s2691 + $0x98] sm:$0xff]
      %v2706 = vld [vmem:[%s2691 + $0xa8] sm:$0xff]
      %v2707 = vld [vmem:[%s2691 + $0xb0] sm:$0xff]
      %v2708 = vld [vmem:[%s2691 + $0xc0] sm:$0xff]
      %v2709 = vld [vmem:[%s2691 + $0xc8] sm:$0xff]
      %v2710 = vld [vmem:[%s2691 + $0xd8] sm:$0xff]
      %v2711 = vld [vmem:[%s2691 + $0xe0] sm:$0xff]
      %v2712 = vld [vmem:[%s2691 + $0xf0] sm:$0xff]
      %v2713 = vld [vmem:[%s2691 + $0xf8] sm:$0xff]
      %v2714 = vld [vmem:[%s2691 + $0x108] sm:$0xff]
      %v2715 = vld [vmem:[%s2691 + $0x110] sm:$0xff]
      %v2716 = vld [vmem:[%s2691 + $0x120] sm:$0xff]
      %v2717 = vld [vmem:[%s2691 + $0x128] sm:$0xff]
      %v2718 = vld [vmem:[%s2691 + $0x138] sm:$0xff]
      %v2719 = vld [vmem:[%s2691 + $0x140] sm:$0xff]
      %v2720 = vld [vmem:[%s2691 + $0x150] sm:$0xff]
      %v2721 = vld [vmem:[%s2691 + $0x158] sm:$0xff]
      %v2722 = vld [vmem:[%s2691 + $0x168] sm:$0xff]
      %v2723 = vld [vmem:[%s2691 + $0x170] sm:$0xff]
      %s2724 = scalar_lea.vmem %s1, 24
      %v2725 = vld [vmem:[%s2724] sm:$0xf]
      %v2727 = vsel %vm255, %v2692, 0
      %v2730 = vsel %vm255, %v2693, 0
      %v2733 = vsel %vm255, %v2694, 0
      %v2736 = vsel %vm255, %v2695, 0
      %v2739 = vsel %vm255, %v2696, 0
      %v2742 = vsel %vm255, %v2697, 0
      %v2745 = vsel %vm255, %v2698, 0
      %v2748 = vsel %vm255, %v2699, 0
      %v2751 = vsel %vm255, %v2700, 0
      %v2754 = vsel %vm255, %v2701, 0
      %v2757 = vsel %vm255, %v2702, 0
      %v2760 = vsel %vm255, %v2703, 0
      %v2763 = vsel %vm255, %v2704, 0
      %v2766 = vsel %vm255, %v2705, 0
      %v2769 = vsel %vm255, %v2706, 0
      %v2772 = vsel %vm255, %v2707, 0
      %v2775 = vsel %vm255, %v2708, 0
      %v2778 = vsel %vm255, %v2709, 0
      %v2781 = vsel %vm255, %v2710, 0
      %v2784 = vsel %vm255, %v2711, 0
      %v2787 = vsel %vm255, %v2712, 0
      %v2790 = vsel %vm255, %v2713, 0
      %v2793 = vsel %vm255, %v2714, 0
      %v2796 = vsel %vm255, %v2715, 0
      %v2799 = vsel %vm255, %v2716, 0
      %v2802 = vsel %vm255, %v2717, 0
      %v2805 = vsel %vm255, %v2718, 0
      %v2808 = vsel %vm255, %v2719, 0
      %v2811 = vsel %vm255, %v2720, 0
      %v2814 = vsel %vm255, %v2721, 0
      %v2817 = vsel %vm255, %v2722, 0
      %v2820 = vsel %vm255, %v2723, 0
      %v2823 = vsel %vm480, %v2725, 0
      %2825 = vmatprep.subr.mxu0 0.0
      %2826 = vmatpush1.msra.mxu0 %v2823
      %2827 = vmatprep.subr.mxu0 0.0
      %2828 = vmatpush1.msra.mxu0 0.0
      %2829 = vmatprep.subr.mxu0 0.0
      %2830 = vmatpush1.msra.mxu0 0.0
      %2831 = vmatprep.subr.mxu0 0.0
      %2832 = vmatpush1.msra.mxu0 0.0
      %2833 = vmatprep.subr.mxu0 0.0
      %2834 = vmatpush1.msra.mxu0 0.0
      %2835 = vmatprep.subr.mxu0 0.0
      %2836 = vmatpush1.msra.mxu0 0.0
      %2837 = vmatprep.subr.mxu0 0.0
      %2838 = vmatpush1.msra.mxu0 0.0
      %2839 = vmatprep.subr.mxu0 0.0
      %2840 = vmatpush1.msra.mxu0 0.0
      %2841 = vmatprep.subr.mxu0 0.0
      %2842 = vmatpush1.msra.mxu0 0.0
      %2843 = vmatprep.subr.mxu0 0.0
      %2844 = vmatpush1.msra.mxu0 0.0
      %2845 = vmatprep.subr.mxu0 0.0
      %2846 = vmatpush1.msra.mxu0 0.0
      %2847 = vmatprep.subr.mxu0 0.0
      %2848 = vmatpush1.msra.mxu0 0.0
      %2849 = vmatprep.subr.mxu0 0.0
      %2850 = vmatpush1.msra.mxu0 0.0
      %2851 = vmatprep.subr.mxu0 0.0
      %2852 = vmatpush1.msra.mxu0 0.0
      %2853 = vmatprep.subr.mxu0 0.0
      %2854 = vmatpush1.msra.mxu0 0.0
      %2855 = vmatprep.subr.mxu0 0.0
      %2856 = vmatpush1.msra.mxu0 0.0
      %2857 = vmatprep.subr.mxu0 0.0
      %2858 = vmatpush1.msra.mxu0 0.0
      %2859 = vmatprep.subr.mxu0 0.0
      %2860 = vmatpush1.msra.mxu0 0.0
      %2861 = vmatprep.subr.mxu0 0.0
      %2862 = vmatpush1.msra.mxu0 0.0
      %2863 = vmatprep.subr.mxu0 0.0
      %2864 = vmatpush1.msra.mxu0 0.0
      %2865 = vmatprep.subr.mxu0 0.0
      %2866 = vmatpush1.msra.mxu0 0.0
      %2867 = vmatprep.subr.mxu0 0.0
      %2868 = vmatpush1.msra.mxu0 0.0
      %2869 = vmatprep.subr.mxu0 0.0
      %2870 = vmatpush1.msra.mxu0 0.0
      %2871 = vmatprep.subr.mxu0 0.0
      %2872 = vmatpush1.msra.mxu0 0.0
      %2873 = vmatprep.subr.mxu0 0.0
      %2874 = vmatpush1.msra.mxu0 0.0
      %2875 = vmatprep.subr.mxu0 0.0
      %2876 = vmatpush1.msra.mxu0 0.0
      %2877 = vmatprep.subr.mxu0 0.0
      %2878 = vmatpush1.msra.mxu0 0.0
      %2879 = vmatprep.subr.mxu0 0.0
      %2880 = vmatpush1.msra.mxu0 0.0
      %2881 = vmatprep.subr.mxu0 0.0
      %2882 = vmatpush1.msra.mxu0 0.0
      %2883 = vmatprep.subr.mxu0 0.0
      %2884 = vmatpush1.msra.mxu0 0.0
      %2885 = vmatprep.subr.mxu0 0.0
      %2886 = vmatpush1.msra.mxu0 0.0
      %2887 = vmatprep.subr.mxu0 0.0
      %2888 = vmatpush1.msra.mxu0 0.0
      %2889 = vmatprep.mubr.f32.mxu0 0.0
      %2890 = vmatmul.mubr.f32.gmra.mrb[0].mxu0 %v2727
      %v2891 = vpop.f32.mrb[0].mxu0
      %v2892 = vadd.f32 0.0, %v2891
      %v2893 = vpop.f32.mrb[0].mxu0
      %2894 = vmatprep.mubr.f32.mxu0 0.0
      %2895 = vmatmul.mubr.f32.gmra.mrb[0].mxu0 %v2730
      %v2896 = vpop.f32.mrb[0].mxu0
      %v2897 = vadd.f32 0.0, %v2896
      %v2898 = vpop.f32.mrb[0].mxu0
      %2899 = vmatprep.mubr.f32.mxu0 0.0
      %2900 = vmatmul.mubr.f32.gmra.mrb[0].mxu0 %v2733
      %v2901 = vpop.f32.mrb[0].mxu0
      %v2902 = vadd.f32 0.0, %v2901
      %v2903 = vpop.f32.mrb[0].mxu0
      %2904 = vmatprep.mubr.f32.mxu0 0.0
      %2905 = vmatmul.mubr.f32.gmra.mrb[0].mxu0 %v2736
      %v2906 = vpop.f32.mrb[0].mxu0
      %v2907 = vadd.f32 0.0, %v2906
      %v2908 = vpop.f32.mrb[0].mxu0
      %2909 = vmatprep.mubr.f32.mxu0 0.0
      %2910 = vmatmul.mubr.f32.gmra.mrb[0].mxu0 %v2739
      %v2911 = vpop.f32.mrb[0].mxu0
      %v2912 = vadd.f32 0.0, %v2911
      %v2913 = vpop.f32.mrb[0].mxu0
      %2914 = vmatprep.mubr.f32.mxu0 0.0
      %2915 = vmatmul.mubr.f32.gmra.mrb[0].mxu0 %v2742
      %v2916 = vpop.f32.mrb[0].mxu0
      %v2917 = vadd.f32 0.0, %v2916
      %v2918 = vpop.f32.mrb[0].mxu0
      %2919 = vmatprep.mubr.f32.mxu0 0.0
      %2920 = vmatmul.mubr.f32.gmra.mrb[0].mxu0 %v2745
      %v2921 = vpop.f32.mrb[0].mxu0
      %v2922 = vadd.f32 0.0, %v2921
      %v2923 = vpop.f32.mrb[0].mxu0
      %2924 = vmatprep.mubr.f32.mxu0 0.0
      %2925 = vmatmul.mubr.f32.gmra.mrb[0].mxu0 %v2748
      %v2926 = vpop.f32.mrb[0].mxu0
      %v2927 = vadd.f32 0.0, %v2926
      %v2928 = vpop.f32.mrb[0].mxu0
      %2929 = vmatprep.mubr.f32.mxu0 0.0
      %2930 = vmatmul.mubr.f32.gmra.mrb[0].mxu0 %v2751
      %v2931 = vpop.f32.mrb[0].mxu0
      %v2932 = vadd.f32 0.0, %v2931
      %v2933 = vpop.f32.mrb[0].mxu0
      %2934 = vmatprep.mubr.f32.mxu0 0.0
      %2935 = vmatmul.mubr.f32.gmra.mrb[0].mxu0 %v2754
      %v2936 = vpop.f32.mrb[0].mxu0
      %v2937 = vadd.f32 0.0, %v2936
      %v2938 = vpop.f32.mrb[0].mxu0
      %2939 = vmatprep.mubr.f32.mxu0 0.0
      %2940 = vmatmul.mubr.f32.gmra.mrb[0].mxu0 %v2757
      %v2941 = vpop.f32.mrb[0].mxu0
      %v2942 = vadd.f32 0.0, %v2941
      %v2943 = vpop.f32.mrb[0].mxu0
      %2944 = vmatprep.mubr.f32.mxu0 0.0
      %2945 = vmatmul.mubr.f32.gmra.mrb[0].mxu0 %v2760
      %v2946 = vpop.f32.mrb[0].mxu0
      %v2947 = vadd.f32 0.0, %v2946
      %v2948 = vpop.f32.mrb[0].mxu0
      %2949 = vmatprep.mubr.f32.mxu0 0.0
      %2950 = vmatmul.mubr.f32.gmra.mrb[0].mxu0 %v2763
      %v2951 = vpop.f32.mrb[0].mxu0
      %v2952 = vadd.f32 0.0, %v2951
      %v2953 = vpop.f32.mrb[0].mxu0
      %2954 = vmatprep.mubr.f32.mxu0 0.0
      %2955 = vmatmul.mubr.f32.gmra.mrb[0].mxu0 %v2766
      %v2956 = vpop.f32.mrb[0].mxu0
      %v2957 = vadd.f32 0.0, %v2956
      %v2958 = vpop.f32.mrb[0].mxu0
      %2959 = vmatprep.mubr.f32.mxu0 0.0
      %2960 = vmatmul.mubr.f32.gmra.mrb[0].mxu0 %v2769
      %v2961 = vpop.f32.mrb[0].mxu0
      %v2962 = vadd.f32 0.0, %v2961
      %v2963 = vpop.f32.mrb[0].mxu0
      %2964 = vmatprep.mubr.f32.mxu0 0.0
      %2965 = vmatmul.mubr.f32.gmra.mrb[0].mxu0 %v2772
      %v2966 = vpop.f32.mrb[0].mxu0
      %v2967 = vadd.f32 0.0, %v2966
      %v2968 = vpop.f32.mrb[0].mxu0
      %2969 = vmatprep.mubr.f32.mxu0 0.0
      %2970 = vmatmul.mubr.f32.gmra.mrb[0].mxu0 %v2775
      %v2971 = vpop.f32.mrb[0].mxu0
      %v2972 = vadd.f32 0.0, %v2971
      %v2973 = vpop.f32.mrb[0].mxu0
      %2974 = vmatprep.mubr.f32.mxu0 0.0
      %2975 = vmatmul.mubr.f32.gmra.mrb[0].mxu0 %v2778
      %v2976 = vpop.f32.mrb[0].mxu0
      %v2977 = vadd.f32 0.0, %v2976
      %v2978 = vpop.f32.mrb[0].mxu0
      %2979 = vmatprep.mubr.f32.mxu0 0.0
      %2980 = vmatmul.mubr.f32.gmra.mrb[0].mxu0 %v2781
      %v2981 = vpop.f32.mrb[0].mxu0
      %v2982 = vadd.f32 0.0, %v2981
      %v2983 = vpop.f32.mrb[0].mxu0
      %2984 = vmatprep.mubr.f32.mxu0 0.0
      %2985 = vmatmul.mubr.f32.gmra.mrb[0].mxu0 %v2784
      %v2986 = vpop.f32.mrb[0].mxu0
      %v2987 = vadd.f32 0.0, %v2986
      %v2988 = vpop.f32.mrb[0].mxu0
      %2989 = vmatprep.mubr.f32.mxu0 0.0
      %2990 = vmatmul.mubr.f32.gmra.mrb[0].mxu0 %v2787
      %v2991 = vpop.f32.mrb[0].mxu0
      %v2992 = vadd.f32 0.0, %v2991
      %v2993 = vpop.f32.mrb[0].mxu0
      %2994 = vmatprep.mubr.f32.mxu0 0.0
      %2995 = vmatmul.mubr.f32.gmra.mrb[0].mxu0 %v2790
      %v2996 = vpop.f32.mrb[0].mxu0
      %v2997 = vadd.f32 0.0, %v2996
      %v2998 = vpop.f32.mrb[0].mxu0
      %2999 = vmatprep.mubr.f32.mxu0 0.0
      %3000 = vmatmul.mubr.f32.gmra.mrb[0].mxu0 %v2793
      %v3001 = vpop.f32.mrb[0].mxu0
      %v3002 = vadd.f32 0.0, %v3001
      %v3003 = vpop.f32.mrb[0].mxu0
      %3004 = vmatprep.mubr.f32.mxu0 0.0
      %3005 = vmatmul.mubr.f32.gmra.mrb[0].mxu0 %v2796
      %v3006 = vpop.f32.mrb[0].mxu0
      %v3007 = vadd.f32 0.0, %v3006
      %v3008 = vpop.f32.mrb[0].mxu0
      %3009 = vmatprep.mubr.f32.mxu0 0.0
      %3010 = vmatmul.mubr.f32.gmra.mrb[0].mxu0 %v2799
      %v3011 = vpop.f32.mrb[0].mxu0
      %v3012 = vadd.f32 0.0, %v3011
      %v3013 = vpop.f32.mrb[0].mxu0
      %3014 = vmatprep.mubr.f32.mxu0 0.0
      %3015 = vmatmul.mubr.f32.gmra.mrb[0].mxu0 %v2802
      %v3016 = vpop.f32.mrb[0].mxu0
      %v3017 = vadd.f32 0.0, %v3016
      %v3018 = vpop.f32.mrb[0].mxu0
      %3019 = vmatprep.mubr.f32.mxu0 0.0
      %3020 = vmatmul.mubr.f32.gmra.mrb[0].mxu0 %v2805
      %v3021 = vpop.f32.mrb[0].mxu0
      %v3022 = vadd.f32 0.0, %v3021
      %v3023 = vpop.f32.mrb[0].mxu0
      %3024 = vmatprep.mubr.f32.mxu0 0.0
      %3025 = vmatmul.mubr.f32.gmra.mrb[0].mxu0 %v2808
      %v3026 = vpop.f32.mrb[0].mxu0
      %v3027 = vadd.f32 0.0, %v3026
      %v3028 = vpop.f32.mrb[0].mxu0
      %3029 = vmatprep.mubr.f32.mxu0 0.0
      %3030 = vmatmul.mubr.f32.gmra.mrb[0].mxu0 %v2811
      %v3031 = vpop.f32.mrb[0].mxu0
      %v3032 = vadd.f32 0.0, %v3031
      %v3033 = vpop.f32.mrb[0].mxu0
      %3034 = vmatprep.mubr.f32.mxu0 0.0
      %3035 = vmatmul.mubr.f32.gmra.mrb[0].mxu0 %v2814
      %v3036 = vpop.f32.mrb[0].mxu0
      %v3037 = vadd.f32 0.0, %v3036
      %v3038 = vpop.f32.mrb[0].mxu0
      %3039 = vmatprep.mubr.f32.mxu0 0.0
      %3040 = vmatmul.mubr.f32.gmra.mrb[0].mxu0 %v2817
      %v3041 = vpop.f32.mrb[0].mxu0
      %v3042 = vadd.f32 0.0, %v3041
      %v3043 = vpop.f32.mrb[0].mxu0
      %3044 = vmatprep.mubr.f32.mxu0 0.0
      %3045 = vmatmul.mubr.f32.gmra.mrb[0].mxu0 %v2820
      %v3046 = vpop.f32.mrb[0].mxu0
      %v3047 = vadd.f32 0.0, %v3046
      %v3048 = vpop.f32.mrb[0].mxu0
      %3049 = vdwg.mxu0
      %v3050 = vadd.f32 %v2659, %v2892
      %v3051 = vadd.f32 %v2660, %v2897
      %v3052 = vadd.f32 %v2661, %v2902
      %v3053 = vadd.f32 %v2662, %v2907
      %v3054 = vadd.f32 %v2663, %v2912
      %v3055 = vadd.f32 %v2664, %v2917
      %v3056 = vadd.f32 %v2665, %v2922
      %v3057 = vadd.f32 %v2666, %v2927
      %v3058 = vadd.f32 %v2667, %v2932
      %v3059 = vadd.f32 %v2668, %v2937
      %v3060 = vadd.f32 %v2669, %v2942
      %v3061 = vadd.f32 %v2670, %v2947
      %v3062 = vadd.f32 %v2671, %v2952
      %v3063 = vadd.f32 %v2672, %v2957
      %v3064 = vadd.f32 %v2673, %v2962
      %v3065 = vadd.f32 %v2674, %v2967
      %v3066 = vadd.f32 %v2675, %v2972
      %v3067 = vadd.f32 %v2676, %v2977
      %v3068 = vadd.f32 %v2677, %v2982
      %v3069 = vadd.f32 %v2678, %v2987
      %v3070 = vadd.f32 %v2679, %v2992
      %v3071 = vadd.f32 %v2680, %v2997
      %v3072 = vadd.f32 %v2681, %v3002
      %v3073 = vadd.f32 %v2682, %v3007
      %v3074 = vadd.f32 %v2683, %v3012
      %v3075 = vadd.f32 %v2684, %v3017
      %v3076 = vadd.f32 %v2685, %v3022
      %v3077 = vadd.f32 %v2686, %v3027
      %v3078 = vadd.f32 %v2687, %v3032
      %v3079 = vadd.f32 %v2688, %v3037
      %v3080 = vadd.f32 %v2689, %v3042
      %v3081 = vadd.f32 %v2690, %v3047
      %v3082 = vld [vmem:[%s2691 + $0x1] sm:$0xff]
      %v3083 = vld [vmem:[%s2691 + $0x9] sm:$0xff]
      %v3084 = vld [vmem:[%s2691 + $0x19] sm:$0xff]
      %v3085 = vld [vmem:[%s2691 + $0x21] sm:$0xff]
      %v3086 = vld [vmem:[%s2691 + $0x31] sm:$0xff]
      %v3087 = vld [vmem:[%s2691 + $0x39] sm:$0xff]
      %v3088 = vld [vmem:[%s2691 + $0x49] sm:$0xff]
      %v3089 = vld [vmem:[%s2691 + $0x51] sm:$0xff]
      %v3090 = vld [vmem:[%s2691 + $0x61] sm:$0xff]
      %v3091 = vld [vmem:[%s2691 + $0x69] sm:$0xff]
      %v3092 = vld [vmem:[%s2691 + $0x79] sm:$0xff]
      %v3093 = vld [vmem:[%s2691 + $0x81] sm:$0xff]
      %v3094 = vld [vmem:[%s2691 + $0x91] sm:$0xff]
      %v3095 = vld [vmem:[%s2691 + $0x99] sm:$0xff]
      %v3096 = vld [vmem:[%s2691 + $0xa9] sm:$0xff]
      %v3097 = vld [vmem:[%s2691 + $0xb1] sm:$0xff]
      %v3098 = vld [vmem:[%s2691 + $0xc1] sm:$0xff]
      %v3099 = vld [vmem:[%s2691 + $0xc9] sm:$0xff]
      %v3100 = vld [vmem:[%s2691 + $0xd9] sm:$0xff]
      %v3101 = vld [vmem:[%s2691 + $0xe1] sm:$0xff]
      %v3102 = vld [vmem:[%s2691 + $0xf1] sm:$0xff]
      %v3103 = vld [vmem:[%s2691 + $0xf9] sm:$0xff]
      %v3104 = vld [vmem:[%s2691 + $0x109] sm:$0xff]
      %v3105 = vld [vmem:[%s2691 + $0x111] sm:$0xff]
      %v3106 = vld [vmem:[%s2691 + $0x121] sm:$0xff]
      %v3107 = vld [vmem:[%s2691 + $0x129] sm:$0xff]
      %v3108 = vld [vmem:[%s2691 + $0x139] sm:$0xff]
      %v3109 = vld [vmem:[%s2691 + $0x141] sm:$0xff]
      %v3110 = vld [vmem:[%s2691 + $0x151] sm:$0xff]
      %v3111 = vld [vmem:[%s2691 + $0x159] sm:$0xff]
      %v3112 = vld [vmem:[%s2691 + $0x169] sm:$0xff]
      %v3113 = vld [vmem:[%s2691 + $0x171] sm:$0xff]
      %s3114 = scalar_lea.vmem %s1, 28
      %v3115 = vld [vmem:[%s3114] sm:$0xf]
      %v3117 = vsel %vm255, %v3082, 0
      %v3120 = vsel %vm255, %v3083, 0
      %v3123 = vsel %vm255, %v3084, 0
      %v3126 = vsel %vm255, %v3085, 0
      %v3129 = vsel %vm255, %v3086, 0
      %v3132 = vsel %vm255, %v3087, 0
      %v3135 = vsel %vm255, %v3088, 0
      %v3138 = vsel %vm255, %v3089, 0
      %v3141 = vsel %vm255, %v3090, 0
      %v3144 = vsel %vm255, %v3091, 0
      %v3147 = vsel %vm255, %v3092, 0
      %v3150 = vsel %vm255, %v3093, 0
      %v3153 = vsel %vm255, %v3094, 0
      %v3156 = vsel %vm255, %v3095, 0
      %v3159 = vsel %vm255, %v3096, 0
      %v3162 = vsel %vm255, %v3097, 0
      %v3165 = vsel %vm255, %v3098, 0
      %v3168 = vsel %vm255, %v3099, 0
      %v3171 = vsel %vm255, %v3100, 0
      %v3174 = vsel %vm255, %v3101, 0
      %v3177 = vsel %vm255, %v3102, 0
      %v3180 = vsel %vm255, %v3103, 0
      %v3183 = vsel %vm255, %v3104, 0
      %v3186 = vsel %vm255, %v3105, 0
      %v3189 = vsel %vm255, %v3106, 0
      %v3192 = vsel %vm255, %v3107, 0
      %v3195 = vsel %vm255, %v3108, 0
      %v3198 = vsel %vm255, %v3109, 0
      %v3201 = vsel %vm255, %v3110, 0
      %v3204 = vsel %vm255, %v3111, 0
      %v3207 = vsel %vm255, %v3112, 0
      %v3210 = vsel %vm255, %v3113, 0
      %v3213 = vsel %vm480, %v3115, 0
      %3215 = vmatprep.subr.mxu0 0.0
      %3216 = vmatpush1.msra.mxu0 %v3213
      %3217 = vmatprep.subr.mxu0 0.0
      %3218 = vmatpush1.msra.mxu0 0.0
      %3219 = vmatprep.subr.mxu0 0.0
      %3220 = vmatpush1.msra.mxu0 0.0
      %3221 = vmatprep.subr.mxu0 0.0
      %3222 = vmatpush1.msra.mxu0 0.0
      %3223 = vmatprep.subr.mxu0 0.0
      %3224 = vmatpush1.msra.mxu0 0.0
      %3225 = vmatprep.subr.mxu0 0.0
      %3226 = vmatpush1.msra.mxu0 0.0
      %3227 = vmatprep.subr.mxu0 0.0
      %3228 = vmatpush1.msra.mxu0 0.0
      %3229 = vmatprep.subr.mxu0 0.0
      %3230 = vmatpush1.msra.mxu0 0.0
      %3231 = vmatprep.subr.mxu0 0.0
      %3232 = vmatpush1.msra.mxu0 0.0
      %3233 = vmatprep.subr.mxu0 0.0
      %3234 = vmatpush1.msra.mxu0 0.0
      %3235 = vmatprep.subr.mxu0 0.0
      %3236 = vmatpush1.msra.mxu0 0.0
      %3237 = vmatprep.subr.mxu0 0.0
      %3238 = vmatpush1.msra.mxu0 0.0
      %3239 = vmatprep.subr.mxu0 0.0
      %3240 = vmatpush1.msra.mxu0 0.0
      %3241 = vmatprep.subr.mxu0 0.0
      %3242 = vmatpush1.msra.mxu0 0.0
      %3243 = vmatprep.subr.mxu0 0.0
      %3244 = vmatpush1.msra.mxu0 0.0
      %3245 = vmatprep.subr.mxu0 0.0
      %3246 = vmatpush1.msra.mxu0 0.0
      %3247 = vmatprep.subr.mxu0 0.0
      %3248 = vmatpush1.msra.mxu0 0.0
      %3249 = vmatprep.subr.mxu0 0.0
      %3250 = vmatpush1.msra.mxu0 0.0
      %3251 = vmatprep.subr.mxu0 0.0
      %3252 = vmatpush1.msra.mxu0 0.0
      %3253 = vmatprep.subr.mxu0 0.0
      %3254 = vmatpush1.msra.mxu0 0.0
      %3255 = vmatprep.subr.mxu0 0.0
      %3256 = vmatpush1.msra.mxu0 0.0
      %3257 = vmatprep.subr.mxu0 0.0
      %3258 = vmatpush1.msra.mxu0 0.0
      %3259 = vmatprep.subr.mxu0 0.0
      %3260 = vmatpush1.msra.mxu0 0.0
      %3261 = vmatprep.subr.mxu0 0.0
      %3262 = vmatpush1.msra.mxu0 0.0
      %3263 = vmatprep.subr.mxu0 0.0
      %3264 = vmatpush1.msra.mxu0 0.0
      %3265 = vmatprep.subr.mxu0 0.0
      %3266 = vmatpush1.msra.mxu0 0.0
      %3267 = vmatprep.subr.mxu0 0.0
      %3268 = vmatpush1.msra.mxu0 0.0
      %3269 = vmatprep.subr.mxu0 0.0
      %3270 = vmatpush1.msra.mxu0 0.0
      %3271 = vmatprep.subr.mxu0 0.0
      %3272 = vmatpush1.msra.mxu0 0.0
      %3273 = vmatprep.subr.mxu0 0.0
      %3274 = vmatpush1.msra.mxu0 0.0
      %3275 = vmatprep.subr.mxu0 0.0
      %3276 = vmatpush1.msra.mxu0 0.0
      %3277 = vmatprep.subr.mxu0 0.0
      %3278 = vmatpush1.msra.mxu0 0.0
      %3279 = vmatprep.mubr.f32.mxu0 0.0
      %3280 = vmatmul.mubr.f32.gmra.mrb[0].mxu0 %v3117
      %v3281 = vpop.f32.mrb[0].mxu0
      %v3282 = vadd.f32 0.0, %v3281
      %v3283 = vpop.f32.mrb[0].mxu0
      %3284 = vmatprep.mubr.f32.mxu0 0.0
      %3285 = vmatmul.mubr.f32.gmra.mrb[0].mxu0 %v3120
      %v3286 = vpop.f32.mrb[0].mxu0
      %v3287 = vadd.f32 0.0, %v3286
      %v3288 = vpop.f32.mrb[0].mxu0
      %3289 = vmatprep.mubr.f32.mxu0 0.0
      %3290 = vmatmul.mubr.f32.gmra.mrb[0].mxu0 %v3123
      %v3291 = vpop.f32.mrb[0].mxu0
      %v3292 = vadd.f32 0.0, %v3291
      %v3293 = vpop.f32.mrb[0].mxu0
      %3294 = vmatprep.mubr.f32.mxu0 0.0
      %3295 = vmatmul.mubr.f32.gmra.mrb[0].mxu0 %v3126
      %v3296 = vpop.f32.mrb[0].mxu0
      %v3297 = vadd.f32 0.0, %v3296
      %v3298 = vpop.f32.mrb[0].mxu0
      %3299 = vmatprep.mubr.f32.mxu0 0.0
      %3300 = vmatmul.mubr.f32.gmra.mrb[0].mxu0 %v3129
      %v3301 = vpop.f32.mrb[0].mxu0
      %v3302 = vadd.f32 0.0, %v3301
      %v3303 = vpop.f32.mrb[0].mxu0
      %3304 = vmatprep.mubr.f32.mxu0 0.0
      %3305 = vmatmul.mubr.f32.gmra.mrb[0].mxu0 %v3132
      %v3306 = vpop.f32.mrb[0].mxu0
      %v3307 = vadd.f32 0.0, %v3306
      %v3308 = vpop.f32.mrb[0].mxu0
      %3309 = vmatprep.mubr.f32.mxu0 0.0
      %3310 = vmatmul.mubr.f32.gmra.mrb[0].mxu0 %v3135
      %v3311 = vpop.f32.mrb[0].mxu0
      %v3312 = vadd.f32 0.0, %v3311
      %v3313 = vpop.f32.mrb[0].mxu0
      %3314 = vmatprep.mubr.f32.mxu0 0.0
      %3315 = vmatmul.mubr.f32.gmra.mrb[0].mxu0 %v3138
      %v3316 = vpop.f32.mrb[0].mxu0
      %v3317 = vadd.f32 0.0, %v3316
      %v3318 = vpop.f32.mrb[0].mxu0
      %3319 = vmatprep.mubr.f32.mxu0 0.0
      %3320 = vmatmul.mubr.f32.gmra.mrb[0].mxu0 %v3141
      %v3321 = vpop.f32.mrb[0].mxu0
      %v3322 = vadd.f32 0.0, %v3321
      %v3323 = vpop.f32.mrb[0].mxu0
      %3324 = vmatprep.mubr.f32.mxu0 0.0
      %3325 = vmatmul.mubr.f32.gmra.mrb[0].mxu0 %v3144
      %v3326 = vpop.f32.mrb[0].mxu0
      %v3327 = vadd.f32 0.0, %v3326
      %v3328 = vpop.f32.mrb[0].mxu0
      %3329 = vmatprep.mubr.f32.mxu0 0.0
      %3330 = vmatmul.mubr.f32.gmra.mrb[0].mxu0 %v3147
      %v3331 = vpop.f32.mrb[0].mxu0
      %v3332 = vadd.f32 0.0, %v3331
      %v3333 = vpop.f32.mrb[0].mxu0
      %3334 = vmatprep.mubr.f32.mxu0 0.0
      %3335 = vmatmul.mubr.f32.gmra.mrb[0].mxu0 %v3150
      %v3336 = vpop.f32.mrb[0].mxu0
      %v3337 = vadd.f32 0.0, %v3336
      %v3338 = vpop.f32.mrb[0].mxu0
      %3339 = vmatprep.mubr.f32.mxu0 0.0
      %3340 = vmatmul.mubr.f32.gmra.mrb[0].mxu0 %v3153
      %v3341 = vpop.f32.mrb[0].mxu0
      %v3342 = vadd.f32 0.0, %v3341
      %v3343 = vpop.f32.mrb[0].mxu0
      %3344 = vmatprep.mubr.f32.mxu0 0.0
      %3345 = vmatmul.mubr.f32.gmra.mrb[0].mxu0 %v3156
      %v3346 = vpop.f32.mrb[0].mxu0
      %v3347 = vadd.f32 0.0, %v3346
      %v3348 = vpop.f32.mrb[0].mxu0
      %3349 = vmatprep.mubr.f32.mxu0 0.0
      %3350 = vmatmul.mubr.f32.gmra.mrb[0].mxu0 %v3159
      %v3351 = vpop.f32.mrb[0].mxu0
      %v3352 = vadd.f32 0.0, %v3351
      %v3353 = vpop.f32.mrb[0].mxu0
      %3354 = vmatprep.mubr.f32.mxu0 0.0
      %3355 = vmatmul.mubr.f32.gmra.mrb[0].mxu0 %v3162
      %v3356 = vpop.f32.mrb[0].mxu0
      %v3357 = vadd.f32 0.0, %v3356
      %v3358 = vpop.f32.mrb[0].mxu0
      %3359 = vmatprep.mubr.f32.mxu0 0.0
      %3360 = vmatmul.mubr.f32.gmra.mrb[0].mxu0 %v3165
      %v3361 = vpop.f32.mrb[0].mxu0
      %v3362 = vadd.f32 0.0, %v3361
      %v3363 = vpop.f32.mrb[0].mxu0
      %3364 = vmatprep.mubr.f32.mxu0 0.0
      %3365 = vmatmul.mubr.f32.gmra.mrb[0].mxu0 %v3168
      %v3366 = vpop.f32.mrb[0].mxu0
      %v3367 = vadd.f32 0.0, %v3366
      %v3368 = vpop.f32.mrb[0].mxu0
      %3369 = vmatprep.mubr.f32.mxu0 0.0
      %3370 = vmatmul.mubr.f32.gmra.mrb[0].mxu0 %v3171
      %v3371 = vpop.f32.mrb[0].mxu0
      %v3372 = vadd.f32 0.0, %v3371
      %v3373 = vpop.f32.mrb[0].mxu0
      %3374 = vmatprep.mubr.f32.mxu0 0.0
      %3375 = vmatmul.mubr.f32.gmra.mrb[0].mxu0 %v3174
      %v3376 = vpop.f32.mrb[0].mxu0
      %v3377 = vadd.f32 0.0, %v3376
      %v3378 = vpop.f32.mrb[0].mxu0
      %3379 = vmatprep.mubr.f32.mxu0 0.0
      %3380 = vmatmul.mubr.f32.gmra.mrb[0].mxu0 %v3177
      %v3381 = vpop.f32.mrb[0].mxu0
      %v3382 = vadd.f32 0.0, %v3381
      %v3383 = vpop.f32.mrb[0].mxu0
      %3384 = vmatprep.mubr.f32.mxu0 0.0
      %3385 = vmatmul.mubr.f32.gmra.mrb[0].mxu0 %v3180
      %v3386 = vpop.f32.mrb[0].mxu0
      %v3387 = vadd.f32 0.0, %v3386
      %v3388 = vpop.f32.mrb[0].mxu0
      %3389 = vmatprep.mubr.f32.mxu0 0.0
      %3390 = vmatmul.mubr.f32.gmra.mrb[0].mxu0 %v3183
      %v3391 = vpop.f32.mrb[0].mxu0
      %v3392 = vadd.f32 0.0, %v3391
      %v3393 = vpop.f32.mrb[0].mxu0
      %3394 = vmatprep.mubr.f32.mxu0 0.0
      %3395 = vmatmul.mubr.f32.gmra.mrb[0].mxu0 %v3186
      %v3396 = vpop.f32.mrb[0].mxu0
      %v3397 = vadd.f32 0.0, %v3396
      %v3398 = vpop.f32.mrb[0].mxu0
      %3399 = vmatprep.mubr.f32.mxu0 0.0
      %3400 = vmatmul.mubr.f32.gmra.mrb[0].mxu0 %v3189
      %v3401 = vpop.f32.mrb[0].mxu0
      %v3402 = vadd.f32 0.0, %v3401
      %v3403 = vpop.f32.mrb[0].mxu0
      %3404 = vmatprep.mubr.f32.mxu0 0.0
      %3405 = vmatmul.mubr.f32.gmra.mrb[0].mxu0 %v3192
      %v3406 = vpop.f32.mrb[0].mxu0
      %v3407 = vadd.f32 0.0, %v3406
      %v3408 = vpop.f32.mrb[0].mxu0
      %3409 = vmatprep.mubr.f32.mxu0 0.0
      %3410 = vmatmul.mubr.f32.gmra.mrb[0].mxu0 %v3195
      %v3411 = vpop.f32.mrb[0].mxu0
      %v3412 = vadd.f32 0.0, %v3411
      %v3413 = vpop.f32.mrb[0].mxu0
      %3414 = vmatprep.mubr.f32.mxu0 0.0
      %3415 = vmatmul.mubr.f32.gmra.mrb[0].mxu0 %v3198
      %v3416 = vpop.f32.mrb[0].mxu0
      %v3417 = vadd.f32 0.0, %v3416
      %v3418 = vpop.f32.mrb[0].mxu0
      %3419 = vmatprep.mubr.f32.mxu0 0.0
      %3420 = vmatmul.mubr.f32.gmra.mrb[0].mxu0 %v3201
      %v3421 = vpop.f32.mrb[0].mxu0
      %v3422 = vadd.f32 0.0, %v3421
      %v3423 = vpop.f32.mrb[0].mxu0
      %3424 = vmatprep.mubr.f32.mxu0 0.0
      %3425 = vmatmul.mubr.f32.gmra.mrb[0].mxu0 %v3204
      %v3426 = vpop.f32.mrb[0].mxu0
      %v3427 = vadd.f32 0.0, %v3426
      %v3428 = vpop.f32.mrb[0].mxu0
      %3429 = vmatprep.mubr.f32.mxu0 0.0
      %3430 = vmatmul.mubr.f32.gmra.mrb[0].mxu0 %v3207
      %v3431 = vpop.f32.mrb[0].mxu0
      %v3432 = vadd.f32 0.0, %v3431
      %v3433 = vpop.f32.mrb[0].mxu0
      %3434 = vmatprep.mubr.f32.mxu0 0.0
      %3435 = vmatmul.mubr.f32.gmra.mrb[0].mxu0 %v3210
      %v3436 = vpop.f32.mrb[0].mxu0
      %v3437 = vadd.f32 0.0, %v3436
      %v3438 = vpop.f32.mrb[0].mxu0
      %3439 = vdwg.mxu0
      %v3440 = vadd.f32 %v3050, %v3282
      %v3441 = vadd.f32 %v3051, %v3287
      %v3442 = vadd.f32 %v3052, %v3292
      %v3443 = vadd.f32 %v3053, %v3297
      %v3444 = vadd.f32 %v3054, %v3302
      %v3445 = vadd.f32 %v3055, %v3307
      %v3446 = vadd.f32 %v3056, %v3312
      %v3447 = vadd.f32 %v3057, %v3317
      %v3448 = vadd.f32 %v3058, %v3322
      %v3449 = vadd.f32 %v3059, %v3327
      %v3450 = vadd.f32 %v3060, %v3332
      %v3451 = vadd.f32 %v3061, %v3337
      %v3452 = vadd.f32 %v3062, %v3342
      %v3453 = vadd.f32 %v3063, %v3347
      %v3454 = vadd.f32 %v3064, %v3352
      %v3455 = vadd.f32 %v3065, %v3357
      %v3456 = vadd.f32 %v3066, %v3362
      %v3457 = vadd.f32 %v3067, %v3367
      %v3458 = vadd.f32 %v3068, %v3372
      %v3459 = vadd.f32 %v3069, %v3377
      %v3460 = vadd.f32 %v3070, %v3382
      %v3461 = vadd.f32 %v3071, %v3387
      %v3462 = vadd.f32 %v3072, %v3392
      %v3463 = vadd.f32 %v3073, %v3397
      %v3464 = vadd.f32 %v3074, %v3402
      %v3465 = vadd.f32 %v3075, %v3407
      %v3466 = vadd.f32 %v3076, %v3412
      %v3467 = vadd.f32 %v3077, %v3417
      %v3468 = vadd.f32 %v3078, %v3422
      %v3469 = vadd.f32 %v3079, %v3427
      %v3470 = vadd.f32 %v3080, %v3432
      %v3471 = vadd.f32 %v3081, %v3437
      %v3472 = vld [vmem:[%s2691 + $0x2] sm:$0xff]
      %v3473 = vld [vmem:[%s2691 + $0xa] sm:$0xff]
      %v3474 = vld [vmem:[%s2691 + $0x1a] sm:$0xff]
      %v3475 = vld [vmem:[%s2691 + $0x22] sm:$0xff]
      %v3476 = vld [vmem:[%s2691 + $0x32] sm:$0xff]
      %v3477 = vld [vmem:[%s2691 + $0x3a] sm:$0xff]
      %v3478 = vld [vmem:[%s2691 + $0x4a] sm:$0xff]
      %v3479 = vld [vmem:[%s2691 + $0x52] sm:$0xff]
      %v3480 = vld [vmem:[%s2691 + $0x62] sm:$0xff]
      %v3481 = vld [vmem:[%s2691 + $0x6a] sm:$0xff]
      %v3482 = vld [vmem:[%s2691 + $0x7a] sm:$0xff]
      %v3483 = vld [vmem:[%s2691 + $0x82] sm:$0xff]
      %v3484 = vld [vmem:[%s2691 + $0x92] sm:$0xff]
      %v3485 = vld [vmem:[%s2691 + $0x9a] sm:$0xff]
      %v3486 = vld [vmem:[%s2691 + $0xaa] sm:$0xff]
      %v3487 = vld [vmem:[%s2691 + $0xb2] sm:$0xff]
      %v3488 = vld [vmem:[%s2691 + $0xc2] sm:$0xff]
      %v3489 = vld [vmem:[%s2691 + $0xca] sm:$0xff]
      %v3490 = vld [vmem:[%s2691 + $0xda] sm:$0xff]
      %v3491 = vld [vmem:[%s2691 + $0xe2] sm:$0xff]
      %v3492 = vld [vmem:[%s2691 + $0xf2] sm:$0xff]
      %v3493 = vld [vmem:[%s2691 + $0xfa] sm:$0xff]
      %v3494 = vld [vmem:[%s2691 + $0x10a] sm:$0xff]
      %v3495 = vld [vmem:[%s2691 + $0x112] sm:$0xff]
      %v3496 = vld [vmem:[%s2691 + $0x122] sm:$0xff]
      %v3497 = vld [vmem:[%s2691 + $0x12a] sm:$0xff]
      %v3498 = vld [vmem:[%s2691 + $0x13a] sm:$0xff]
      %v3499 = vld [vmem:[%s2691 + $0x142] sm:$0xff]
      %v3500 = vld [vmem:[%s2691 + $0x152] sm:$0xff]
      %v3501 = vld [vmem:[%s2691 + $0x15a] sm:$0xff]
      %v3502 = vld [vmem:[%s2691 + $0x16a] sm:$0xff]
      %v3503 = vld [vmem:[%s2691 + $0x172] sm:$0xff]
      %s3504 = scalar_lea.vmem %s1, 32
      %v3505 = vld [vmem:[%s3504] sm:$0xf]
      %v3507 = vsel %vm255, %v3472, 0
      %v3510 = vsel %vm255, %v3473, 0
      %v3513 = vsel %vm255, %v3474, 0
      %v3516 = vsel %vm255, %v3475, 0
      %v3519 = vsel %vm255, %v3476, 0
      %v3522 = vsel %vm255, %v3477, 0
      %v3525 = vsel %vm255, %v3478, 0
      %v3528 = vsel %vm255, %v3479, 0
      %v3531 = vsel %vm255, %v3480, 0
      %v3534 = vsel %vm255, %v3481, 0
      %v3537 = vsel %vm255, %v3482, 0
      %v3540 = vsel %vm255, %v3483, 0
      %v3543 = vsel %vm255, %v3484, 0
      %v3546 = vsel %vm255, %v3485, 0
      %v3549 = vsel %vm255, %v3486, 0
      %v3552 = vsel %vm255, %v3487, 0
      %v3555 = vsel %vm255, %v3488, 0
      %v3558 = vsel %vm255, %v3489, 0
      %v3561 = vsel %vm255, %v3490, 0
      %v3564 = vsel %vm255, %v3491, 0
      %v3567 = vsel %vm255, %v3492, 0
      %v3570 = vsel %vm255, %v3493, 0
      %v3573 = vsel %vm255, %v3494, 0
      %v3576 = vsel %vm255, %v3495, 0
      %v3579 = vsel %vm255, %v3496, 0
      %v3582 = vsel %vm255, %v3497, 0
      %v3585 = vsel %vm255, %v3498, 0
      %v3588 = vsel %vm255, %v3499, 0
      %v3591 = vsel %vm255, %v3500, 0
      %v3594 = vsel %vm255, %v3501, 0
      %v3597 = vsel %vm255, %v3502, 0
      %v3600 = vsel %vm255, %v3503, 0
      %v3603 = vsel %vm480, %v3505, 0
      %3605 = vmatprep.subr.mxu0 0.0
      %3606 = vmatpush1.msra.mxu0 %v3603
      %3607 = vmatprep.subr.mxu0 0.0
      %3608 = vmatpush1.msra.mxu0 0.0
      %3609 = vmatprep.subr.mxu0 0.0
      %3610 = vmatpush1.msra.mxu0 0.0
      %3611 = vmatprep.subr.mxu0 0.0
      %3612 = vmatpush1.msra.mxu0 0.0
      %3613 = vmatprep.subr.mxu0 0.0
      %3614 = vmatpush1.msra.mxu0 0.0
      %3615 = vmatprep.subr.mxu0 0.0
      %3616 = vmatpush1.msra.mxu0 0.0
      %3617 = vmatprep.subr.mxu0 0.0
      %3618 = vmatpush1.msra.mxu0 0.0
      %3619 = vmatprep.subr.mxu0 0.0
      %3620 = vmatpush1.msra.mxu0 0.0
      %3621 = vmatprep.subr.mxu0 0.0
      %3622 = vmatpush1.msra.mxu0 0.0
      %3623 = vmatprep.subr.mxu0 0.0
      %3624 = vmatpush1.msra.mxu0 0.0
      %3625 = vmatprep.subr.mxu0 0.0
      %3626 = vmatpush1.msra.mxu0 0.0
      %3627 = vmatprep.subr.mxu0 0.0
      %3628 = vmatpush1.msra.mxu0 0.0
      %3629 = vmatprep.subr.mxu0 0.0
      %3630 = vmatpush1.msra.mxu0 0.0
      %3631 = vmatprep.subr.mxu0 0.0
      %3632 = vmatpush1.msra.mxu0 0.0
      %3633 = vmatprep.subr.mxu0 0.0
      %3634 = vmatpush1.msra.mxu0 0.0
      %3635 = vmatprep.subr.mxu0 0.0
      %3636 = vmatpush1.msra.mxu0 0.0
      %3637 = vmatprep.subr.mxu0 0.0
      %3638 = vmatpush1.msra.mxu0 0.0
      %3639 = vmatprep.subr.mxu0 0.0
      %3640 = vmatpush1.msra.mxu0 0.0
      %3641 = vmatprep.subr.mxu0 0.0
      %3642 = vmatpush1.msra.mxu0 0.0
      %3643 = vmatprep.subr.mxu0 0.0
      %3644 = vmatpush1.msra.mxu0 0.0
      %3645 = vmatprep.subr.mxu0 0.0
      %3646 = vmatpush1.msra.mxu0 0.0
      %3647 = vmatprep.subr.mxu0 0.0
      %3648 = vmatpush1.msra.mxu0 0.0
      %3649 = vmatprep.subr.mxu0 0.0
      %3650 = vmatpush1.msra.mxu0 0.0
      %3651 = vmatprep.subr.mxu0 0.0
      %3652 = vmatpush1.msra.mxu0 0.0
      %3653 = vmatprep.subr.mxu0 0.0
      %3654 = vmatpush1.msra.mxu0 0.0
      %3655 = vmatprep.subr.mxu0 0.0
      %3656 = vmatpush1.msra.mxu0 0.0
      %3657 = vmatprep.subr.mxu0 0.0
      %3658 = vmatpush1.msra.mxu0 0.0
      %3659 = vmatprep.subr.mxu0 0.0
      %3660 = vmatpush1.msra.mxu0 0.0
      %3661 = vmatprep.subr.mxu0 0.0
      %3662 = vmatpush1.msra.mxu0 0.0
      %3663 = vmatprep.subr.mxu0 0.0
      %3664 = vmatpush1.msra.mxu0 0.0
      %3665 = vmatprep.subr.mxu0 0.0
      %3666 = vmatpush1.msra.mxu0 0.0
      %3667 = vmatprep.subr.mxu0 0.0
      %3668 = vmatpush1.msra.mxu0 0.0
      %3669 = vmatprep.mubr.f32.mxu0 0.0
      %3670 = vmatmul.mubr.f32.gmra.mrb[0].mxu0 %v3507
      %v3671 = vpop.f32.mrb[0].mxu0
      %v3672 = vadd.f32 0.0, %v3671
      %v3673 = vpop.f32.mrb[0].mxu0
      %3674 = vmatprep.mubr.f32.mxu0 0.0
      %3675 = vmatmul.mubr.f32.gmra.mrb[0].mxu0 %v3510
      %v3676 = vpop.f32.mrb[0].mxu0
      %v3677 = vadd.f32 0.0, %v3676
      %v3678 = vpop.f32.mrb[0].mxu0
      %3679 = vmatprep.mubr.f32.mxu0 0.0
      %3680 = vmatmul.mubr.f32.gmra.mrb[0].mxu0 %v3513
      %v3681 = vpop.f32.mrb[0].mxu0
      %v3682 = vadd.f32 0.0, %v3681
      %v3683 = vpop.f32.mrb[0].mxu0
      %3684 = vmatprep.mubr.f32.mxu0 0.0
      %3685 = vmatmul.mubr.f32.gmra.mrb[0].mxu0 %v3516
      %v3686 = vpop.f32.mrb[0].mxu0
      %v3687 = vadd.f32 0.0, %v3686
      %v3688 = vpop.f32.mrb[0].mxu0
      %3689 = vmatprep.mubr.f32.mxu0 0.0
      %3690 = vmatmul.mubr.f32.gmra.mrb[0].mxu0 %v3519
      %v3691 = vpop.f32.mrb[0].mxu0
      %v3692 = vadd.f32 0.0, %v3691
      %v3693 = vpop.f32.mrb[0].mxu0
      %3694 = vmatprep.mubr.f32.mxu0 0.0
      %3695 = vmatmul.mubr.f32.gmra.mrb[0].mxu0 %v3522
      %v3696 = vpop.f32.mrb[0].mxu0
      %v3697 = vadd.f32 0.0, %v3696
      %v3698 = vpop.f32.mrb[0].mxu0
      %3699 = vmatprep.mubr.f32.mxu0 0.0
      %3700 = vmatmul.mubr.f32.gmra.mrb[0].mxu0 %v3525
      %v3701 = vpop.f32.mrb[0].mxu0
      %v3702 = vadd.f32 0.0, %v3701
      %v3703 = vpop.f32.mrb[0].mxu0
      %3704 = vmatprep.mubr.f32.mxu0 0.0
      %3705 = vmatmul.mubr.f32.gmra.mrb[0].mxu0 %v3528
      %v3706 = vpop.f32.mrb[0].mxu0
      %v3707 = vadd.f32 0.0, %v3706
      %v3708 = vpop.f32.mrb[0].mxu0
      %3709 = vmatprep.mubr.f32.mxu0 0.0
      %3710 = vmatmul.mubr.f32.gmra.mrb[0].mxu0 %v3531
      %v3711 = vpop.f32.mrb[0].mxu0
      %v3712 = vadd.f32 0.0, %v3711
      %v3713 = vpop.f32.mrb[0].mxu0
      %3714 = vmatprep.mubr.f32.mxu0 0.0
      %3715 = vmatmul.mubr.f32.gmra.mrb[0].mxu0 %v3534
      %v3716 = vpop.f32.mrb[0].mxu0
      %v3717 = vadd.f32 0.0, %v3716
      %v3718 = vpop.f32.mrb[0].mxu0
      %3719 = vmatprep.mubr.f32.mxu0 0.0
      %3720 = vmatmul.mubr.f32.gmra.mrb[0].mxu0 %v3537
      %v3721 = vpop.f32.mrb[0].mxu0
      %v3722 = vadd.f32 0.0, %v3721
      %v3723 = vpop.f32.mrb[0].mxu0
      %3724 = vmatprep.mubr.f32.mxu0 0.0
      %3725 = vmatmul.mubr.f32.gmra.mrb[0].mxu0 %v3540
      %v3726 = vpop.f32.mrb[0].mxu0
      %v3727 = vadd.f32 0.0, %v3726
      %v3728 = vpop.f32.mrb[0].mxu0
      %3729 = vmatprep.mubr.f32.mxu0 0.0
      %3730 = vmatmul.mubr.f32.gmra.mrb[0].mxu0 %v3543
      %v3731 = vpop.f32.mrb[0].mxu0
      %v3732 = vadd.f32 0.0, %v3731
      %v3733 = vpop.f32.mrb[0].mxu0
      %3734 = vmatprep.mubr.f32.mxu0 0.0
      %3735 = vmatmul.mubr.f32.gmra.mrb[0].mxu0 %v3546
      %v3736 = vpop.f32.mrb[0].mxu0
      %v3737 = vadd.f32 0.0, %v3736
      %v3738 = vpop.f32.mrb[0].mxu0
      %3739 = vmatprep.mubr.f32.mxu0 0.0
      %3740 = vmatmul.mubr.f32.gmra.mrb[0].mxu0 %v3549
      %v3741 = vpop.f32.mrb[0].mxu0
      %v3742 = vadd.f32 0.0, %v3741
      %v3743 = vpop.f32.mrb[0].mxu0
      %3744 = vmatprep.mubr.f32.mxu0 0.0
      %3745 = vmatmul.mubr.f32.gmra.mrb[0].mxu0 %v3552
      %v3746 = vpop.f32.mrb[0].mxu0
      %v3747 = vadd.f32 0.0, %v3746
      %v3748 = vpop.f32.mrb[0].mxu0
      %3749 = vmatprep.mubr.f32.mxu0 0.0
      %3750 = vmatmul.mubr.f32.gmra.mrb[0].mxu0 %v3555
      %v3751 = vpop.f32.mrb[0].mxu0
      %v3752 = vadd.f32 0.0, %v3751
      %v3753 = vpop.f32.mrb[0].mxu0
      %3754 = vmatprep.mubr.f32.mxu0 0.0
      %3755 = vmatmul.mubr.f32.gmra.mrb[0].mxu0 %v3558
      %v3756 = vpop.f32.mrb[0].mxu0
      %v3757 = vadd.f32 0.0, %v3756
      %v3758 = vpop.f32.mrb[0].mxu0
      %3759 = vmatprep.mubr.f32.mxu0 0.0
      %3760 = vmatmul.mubr.f32.gmra.mrb[0].mxu0 %v3561
      %v3761 = vpop.f32.mrb[0].mxu0
      %v3762 = vadd.f32 0.0, %v3761
      %v3763 = vpop.f32.mrb[0].mxu0
      %3764 = vmatprep.mubr.f32.mxu0 0.0
      %3765 = vmatmul.mubr.f32.gmra.mrb[0].mxu0 %v3564
      %v3766 = vpop.f32.mrb[0].mxu0
      %v3767 = vadd.f32 0.0, %v3766
      %v3768 = vpop.f32.mrb[0].mxu0
      %3769 = vmatprep.mubr.f32.mxu0 0.0
      %3770 = vmatmul.mubr.f32.gmra.mrb[0].mxu0 %v3567
      %v3771 = vpop.f32.mrb[0].mxu0
      %v3772 = vadd.f32 0.0, %v3771
      %v3773 = vpop.f32.mrb[0].mxu0
      %3774 = vmatprep.mubr.f32.mxu0 0.0
      %3775 = vmatmul.mubr.f32.gmra.mrb[0].mxu0 %v3570
      %v3776 = vpop.f32.mrb[0].mxu0
      %v3777 = vadd.f32 0.0, %v3776
      %v3778 = vpop.f32.mrb[0].mxu0
      %3779 = vmatprep.mubr.f32.mxu0 0.0
      %3780 = vmatmul.mubr.f32.gmra.mrb[0].mxu0 %v3573
      %v3781 = vpop.f32.mrb[0].mxu0
      %v3782 = vadd.f32 0.0, %v3781
      %v3783 = vpop.f32.mrb[0].mxu0
      %3784 = vmatprep.mubr.f32.mxu0 0.0
      %3785 = vmatmul.mubr.f32.gmra.mrb[0].mxu0 %v3576
      %v3786 = vpop.f32.mrb[0].mxu0
      %v3787 = vadd.f32 0.0, %v3786
      %v3788 = vpop.f32.mrb[0].mxu0
      %3789 = vmatprep.mubr.f32.mxu0 0.0
      %3790 = vmatmul.mubr.f32.gmra.mrb[0].mxu0 %v3579
      %v3791 = vpop.f32.mrb[0].mxu0
      %v3792 = vadd.f32 0.0, %v3791
      %v3793 = vpop.f32.mrb[0].mxu0
      %3794 = vmatprep.mubr.f32.mxu0 0.0
      %3795 = vmatmul.mubr.f32.gmra.mrb[0].mxu0 %v3582
      %v3796 = vpop.f32.mrb[0].mxu0
      %v3797 = vadd.f32 0.0, %v3796
      %v3798 = vpop.f32.mrb[0].mxu0
      %3799 = vmatprep.mubr.f32.mxu0 0.0
      %3800 = vmatmul.mubr.f32.gmra.mrb[0].mxu0 %v3585
      %v3801 = vpop.f32.mrb[0].mxu0
      %v3802 = vadd.f32 0.0, %v3801
      %v3803 = vpop.f32.mrb[0].mxu0
      %3804 = vmatprep.mubr.f32.mxu0 0.0
      %3805 = vmatmul.mubr.f32.gmra.mrb[0].mxu0 %v3588
      %v3806 = vpop.f32.mrb[0].mxu0
      %v3807 = vadd.f32 0.0, %v3806
      %v3808 = vpop.f32.mrb[0].mxu0
      %3809 = vmatprep.mubr.f32.mxu0 0.0
      %3810 = vmatmul.mubr.f32.gmra.mrb[0].mxu0 %v3591
      %v3811 = vpop.f32.mrb[0].mxu0
      %v3812 = vadd.f32 0.0, %v3811
      %v3813 = vpop.f32.mrb[0].mxu0
      %3814 = vmatprep.mubr.f32.mxu0 0.0
      %3815 = vmatmul.mubr.f32.gmra.mrb[0].mxu0 %v3594
      %v3816 = vpop.f32.mrb[0].mxu0
      %v3817 = vadd.f32 0.0, %v3816
      %v3818 = vpop.f32.mrb[0].mxu0
      %3819 = vmatprep.mubr.f32.mxu0 0.0
      %3820 = vmatmul.mubr.f32.gmra.mrb[0].mxu0 %v3597
      %v3821 = vpop.f32.mrb[0].mxu0
      %v3822 = vadd.f32 0.0, %v3821
      %v3823 = vpop.f32.mrb[0].mxu0
      %3824 = vmatprep.mubr.f32.mxu0 0.0
      %3825 = vmatmul.mubr.f32.gmra.mrb[0].mxu0 %v3600
      %v3826 = vpop.f32.mrb[0].mxu0
      %v3827 = vadd.f32 0.0, %v3826
      %v3828 = vpop.f32.mrb[0].mxu0
      %3829 = vdwg.mxu0
      %v3830 = vadd.f32 %v3440, %v3672
      %v3831 = vadd.f32 %v3441, %v3677
      %v3832 = vadd.f32 %v3442, %v3682
      %v3833 = vadd.f32 %v3443, %v3687
      %v3834 = vadd.f32 %v3444, %v3692
      %v3835 = vadd.f32 %v3445, %v3697
      %v3836 = vadd.f32 %v3446, %v3702
      %v3837 = vadd.f32 %v3447, %v3707
      %v3838 = vadd.f32 %v3448, %v3712
      %v3839 = vadd.f32 %v3449, %v3717
      %v3840 = vadd.f32 %v3450, %v3722
      %v3841 = vadd.f32 %v3451, %v3727
      %v3842 = vadd.f32 %v3452, %v3732
      %v3843 = vadd.f32 %v3453, %v3737
      %v3844 = vadd.f32 %v3454, %v3742
      %v3845 = vadd.f32 %v3455, %v3747
      %v3846 = vadd.f32 %v3456, %v3752
      %v3847 = vadd.f32 %v3457, %v3757
      %v3848 = vadd.f32 %v3458, %v3762
      %v3849 = vadd.f32 %v3459, %v3767
      %v3850 = vadd.f32 %v3460, %v3772
      %v3851 = vadd.f32 %v3461, %v3777
      %v3852 = vadd.f32 %v3462, %v3782
      %v3853 = vadd.f32 %v3463, %v3787
      %v3854 = vadd.f32 %v3464, %v3792
      %v3855 = vadd.f32 %v3465, %v3797
      %v3856 = vadd.f32 %v3466, %v3802
      %v3857 = vadd.f32 %v3467, %v3807
      %v3858 = vadd.f32 %v3468, %v3812
      %v3859 = vadd.f32 %v3469, %v3817
      %v3860 = vadd.f32 %v3470, %v3822
      %v3861 = vadd.f32 %v3471, %v3827
      %v3894 = vcombine.high %v3830, %v3830
      %v3896 = vunpack.c.l.s4 1983009808
      %v3897 = vunpack.c.0.s8 %v3896
      %v3898 = vlaneseq
      %v3899 = vshrl.u32 %v3898, 7
      %v3900 = vsub.s32 %v3897, %v3899
      %v3901 = vrot.slane %v3830, %v3900
      %v3903 = vunpack.c.l.s4 1983009808
      %v3904 = vunpack.c.0.s8 %v3903
      %v3905 = vlaneseq
      %v3906 = vshrl.u32 %v3905, 7
      %v3907 = vsub.s32 %v3904, %v3906
      %v3908 = vrot.slane %v3894, %v3907
      %v3909 = vcombine.high %v3901, %v3901
      %v3910 = vcombine.high %v3908, %v3908
      %v3911 = vcombine.high %v3831, %v3831
      %v3913 = vunpack.c.l.s4 1983009808
      %v3914 = vunpack.c.0.s8 %v3913
      %v3915 = vlaneseq
      %v3916 = vshrl.u32 %v3915, 7
      %v3917 = vsub.s32 %v3914, %v3916
      %v3918 = vrot.slane %v3831, %v3917
      %v3920 = vunpack.c.l.s4 1983009808
      %v3921 = vunpack.c.0.s8 %v3920
      %v3922 = vlaneseq
      %v3923 = vshrl.u32 %v3922, 7
      %v3924 = vsub.s32 %v3921, %v3923
      %v3925 = vrot.slane %v3911, %v3924
      %v3926 = vcombine.high %v3918, %v3918
      %v3927 = vcombine.high %v3925, %v3925
      %v3928 = vcombine.high %v3832, %v3832
      %v3930 = vunpack.c.l.s4 1983009808
      %v3931 = vunpack.c.0.s8 %v3930
      %v3932 = vlaneseq
      %v3933 = vshrl.u32 %v3932, 7
      %v3934 = vsub.s32 %v3931, %v3933
      %v3935 = vrot.slane %v3832, %v3934
      %v3937 = vunpack.c.l.s4 1983009808
      %v3938 = vunpack.c.0.s8 %v3937
      %v3939 = vlaneseq
      %v3940 = vshrl.u32 %v3939, 7
      %v3941 = vsub.s32 %v3938, %v3940
      %v3942 = vrot.slane %v3928, %v3941
      %v3943 = vcombine.high %v3935, %v3935
      %v3944 = vcombine.high %v3942, %v3942
      %v3945 = vcombine.high %v3833, %v3833
      %v3947 = vunpack.c.l.s4 1983009808
      %v3948 = vunpack.c.0.s8 %v3947
      %v3949 = vlaneseq
      %v3950 = vshrl.u32 %v3949, 7
      %v3951 = vsub.s32 %v3948, %v3950
      %v3952 = vrot.slane %v3833, %v3951
      %v3954 = vunpack.c.l.s4 1983009808
      %v3955 = vunpack.c.0.s8 %v3954
      %v3956 = vlaneseq
      %v3957 = vshrl.u32 %v3956, 7
      %v3958 = vsub.s32 %v3955, %v3957
      %v3959 = vrot.slane %v3945, %v3958
      %v3960 = vcombine.high %v3952, %v3952
      %v3961 = vcombine.high %v3959, %v3959
      %v3962 = vcombine.high %v3834, %v3834
      %v3964 = vunpack.c.l.s4 1983009808
      %v3965 = vunpack.c.0.s8 %v3964
      %v3966 = vlaneseq
      %v3967 = vshrl.u32 %v3966, 7
      %v3968 = vsub.s32 %v3965, %v3967
      %v3969 = vrot.slane %v3834, %v3968
      %v3971 = vunpack.c.l.s4 1983009808
      %v3972 = vunpack.c.0.s8 %v3971
      %v3973 = vlaneseq
      %v3974 = vshrl.u32 %v3973, 7
      %v3975 = vsub.s32 %v3972, %v3974
      %v3976 = vrot.slane %v3962, %v3975
      %v3977 = vcombine.high %v3969, %v3969
      %v3978 = vcombine.high %v3976, %v3976
      %v3979 = vcombine.high %v3835, %v3835
      %v3981 = vunpack.c.l.s4 1983009808
      %v3982 = vunpack.c.0.s8 %v3981
      %v3983 = vlaneseq
      %v3984 = vshrl.u32 %v3983, 7
      %v3985 = vsub.s32 %v3982, %v3984
      %v3986 = vrot.slane %v3835, %v3985
      %v3988 = vunpack.c.l.s4 1983009808
      %v3989 = vunpack.c.0.s8 %v3988
      %v3990 = vlaneseq
      %v3991 = vshrl.u32 %v3990, 7
      %v3992 = vsub.s32 %v3989, %v3991
      %v3993 = vrot.slane %v3979, %v3992
      %v3994 = vcombine.high %v3986, %v3986
      %v3995 = vcombine.high %v3993, %v3993
      %v3996 = vcombine.high %v3836, %v3836
      %v3998 = vunpack.c.l.s4 1983009808
      %v3999 = vunpack.c.0.s8 %v3998
      %v4000 = vlaneseq
      %v4001 = vshrl.u32 %v4000, 7
      %v4002 = vsub.s32 %v3999, %v4001
      %v4003 = vrot.slane %v3836, %v4002
      %v4005 = vunpack.c.l.s4 1983009808
      %v4006 = vunpack.c.0.s8 %v4005
      %v4007 = vlaneseq
      %v4008 = vshrl.u32 %v4007, 7
      %v4009 = vsub.s32 %v4006, %v4008
      %v4010 = vrot.slane %v3996, %v4009
      %v4011 = vcombine.high %v4003, %v4003
      %v4012 = vcombine.high %v4010, %v4010
      %v4013 = vcombine.high %v3837, %v3837
      %v4015 = vunpack.c.l.s4 1983009808
      %v4016 = vunpack.c.0.s8 %v4015
      %v4017 = vlaneseq
      %v4018 = vshrl.u32 %v4017, 7
      %v4019 = vsub.s32 %v4016, %v4018
      %v4020 = vrot.slane %v3837, %v4019
      %v4022 = vunpack.c.l.s4 1983009808
      %v4023 = vunpack.c.0.s8 %v4022
      %v4024 = vlaneseq
      %v4025 = vshrl.u32 %v4024, 7
      %v4026 = vsub.s32 %v4023, %v4025
      %v4027 = vrot.slane %v4013, %v4026
      %v4028 = vcombine.high %v4020, %v4020
      %v4029 = vcombine.high %v4027, %v4027
      %v4030 = vcombine.high %v3838, %v3838
      %v4032 = vunpack.c.l.s4 1983009808
      %v4033 = vunpack.c.0.s8 %v4032
      %v4034 = vlaneseq
      %v4035 = vshrl.u32 %v4034, 7
      %v4036 = vsub.s32 %v4033, %v4035
      %v4037 = vrot.slane %v3838, %v4036
      %v4039 = vunpack.c.l.s4 1983009808
      %v4040 = vunpack.c.0.s8 %v4039
      %v4041 = vlaneseq
      %v4042 = vshrl.u32 %v4041, 7
      %v4043 = vsub.s32 %v4040, %v4042
      %v4044 = vrot.slane %v4030, %v4043
      %v4045 = vcombine.high %v4037, %v4037
      %v4046 = vcombine.high %v4044, %v4044
      %v4047 = vcombine.high %v3839, %v3839
      %v4049 = vunpack.c.l.s4 1983009808
      %v4050 = vunpack.c.0.s8 %v4049
      %v4051 = vlaneseq
      %v4052 = vshrl.u32 %v4051, 7
      %v4053 = vsub.s32 %v4050, %v4052
      %v4054 = vrot.slane %v3839, %v4053
      %v4056 = vunpack.c.l.s4 1983009808
      %v4057 = vunpack.c.0.s8 %v4056
      %v4058 = vlaneseq
      %v4059 = vshrl.u32 %v4058, 7
      %v4060 = vsub.s32 %v4057, %v4059
      %v4061 = vrot.slane %v4047, %v4060
      %v4062 = vcombine.high %v4054, %v4054
      %v4063 = vcombine.high %v4061, %v4061
      %v4064 = vcombine.high %v3840, %v3840
      %v4066 = vunpack.c.l.s4 1983009808
      %v4067 = vunpack.c.0.s8 %v4066
      %v4068 = vlaneseq
      %v4069 = vshrl.u32 %v4068, 7
      %v4070 = vsub.s32 %v4067, %v4069
      %v4071 = vrot.slane %v3840, %v4070
      %v4073 = vunpack.c.l.s4 1983009808
      %v4074 = vunpack.c.0.s8 %v4073
      %v4075 = vlaneseq
      %v4076 = vshrl.u32 %v4075, 7
      %v4077 = vsub.s32 %v4074, %v4076
      %v4078 = vrot.slane %v4064, %v4077
      %v4079 = vcombine.high %v4071, %v4071
      %v4080 = vcombine.high %v4078, %v4078
      %v4081 = vcombine.high %v3841, %v3841
      %v4083 = vunpack.c.l.s4 1983009808
      %v4084 = vunpack.c.0.s8 %v4083
      %v4085 = vlaneseq
      %v4086 = vshrl.u32 %v4085, 7
      %v4087 = vsub.s32 %v4084, %v4086
      %v4088 = vrot.slane %v3841, %v4087
      %v4090 = vunpack.c.l.s4 1983009808
      %v4091 = vunpack.c.0.s8 %v4090
      %v4092 = vlaneseq
      %v4093 = vshrl.u32 %v4092, 7
      %v4094 = vsub.s32 %v4091, %v4093
      %v4095 = vrot.slane %v4081, %v4094
      %v4096 = vcombine.high %v4088, %v4088
      %v4097 = vcombine.high %v4095, %v4095
      %v4098 = vcombine.high %v3842, %v3842
      %v4100 = vunpack.c.l.s4 1983009808
      %v4101 = vunpack.c.0.s8 %v4100
      %v4102 = vlaneseq
      %v4103 = vshrl.u32 %v4102, 7
      %v4104 = vsub.s32 %v4101, %v4103
      %v4105 = vrot.slane %v3842, %v4104
      %v4107 = vunpack.c.l.s4 1983009808
      %v4108 = vunpack.c.0.s8 %v4107
      %v4109 = vlaneseq
      %v4110 = vshrl.u32 %v4109, 7
      %v4111 = vsub.s32 %v4108, %v4110
      %v4112 = vrot.slane %v4098, %v4111
      %v4113 = vcombine.high %v4105, %v4105
      %v4114 = vcombine.high %v4112, %v4112
      %v4115 = vcombine.high %v3843, %v3843
      %v4117 = vunpack.c.l.s4 1983009808
      %v4118 = vunpack.c.0.s8 %v4117
      %v4119 = vlaneseq
      %v4120 = vshrl.u32 %v4119, 7
      %v4121 = vsub.s32 %v4118, %v4120
      %v4122 = vrot.slane %v3843, %v4121
      %v4124 = vunpack.c.l.s4 1983009808
      %v4125 = vunpack.c.0.s8 %v4124
      %v4126 = vlaneseq
      %v4127 = vshrl.u32 %v4126, 7
      %v4128 = vsub.s32 %v4125, %v4127
      %v4129 = vrot.slane %v4115, %v4128
      %v4130 = vcombine.high %v4122, %v4122
      %v4131 = vcombine.high %v4129, %v4129
      %v4132 = vcombine.high %v3844, %v3844
      %v4134 = vunpack.c.l.s4 1983009808
      %v4135 = vunpack.c.0.s8 %v4134
      %v4136 = vlaneseq
      %v4137 = vshrl.u32 %v4136, 7
      %v4138 = vsub.s32 %v4135, %v4137
      %v4139 = vrot.slane %v3844, %v4138
      %v4141 = vunpack.c.l.s4 1983009808
      %v4142 = vunpack.c.0.s8 %v4141
      %v4143 = vlaneseq
      %v4144 = vshrl.u32 %v4143, 7
      %v4145 = vsub.s32 %v4142, %v4144
      %v4146 = vrot.slane %v4132, %v4145
      %v4147 = vcombine.high %v4139, %v4139
      %v4148 = vcombine.high %v4146, %v4146
      %v4149 = vcombine.high %v3845, %v3845
      %v4151 = vunpack.c.l.s4 1983009808
      %v4152 = vunpack.c.0.s8 %v4151
      %v4153 = vlaneseq
      %v4154 = vshrl.u32 %v4153, 7
      %v4155 = vsub.s32 %v4152, %v4154
      %v4156 = vrot.slane %v3845, %v4155
      %v4158 = vunpack.c.l.s4 1983009808
      %v4159 = vunpack.c.0.s8 %v4158
      %v4160 = vlaneseq
      %v4161 = vshrl.u32 %v4160, 7
      %v4162 = vsub.s32 %v4159, %v4161
      %v4163 = vrot.slane %v4149, %v4162
      %v4164 = vcombine.high %v4156, %v4156
      %v4165 = vcombine.high %v4163, %v4163
      %v4166 = vcombine.high %v3846, %v3846
      %v4168 = vunpack.c.l.s4 1983009808
      %v4169 = vunpack.c.0.s8 %v4168
      %v4170 = vlaneseq
      %v4171 = vshrl.u32 %v4170, 7
      %v4172 = vsub.s32 %v4169, %v4171
      %v4173 = vrot.slane %v3846, %v4172
      %v4175 = vunpack.c.l.s4 1983009808
      %v4176 = vunpack.c.0.s8 %v4175
      %v4177 = vlaneseq
      %v4178 = vshrl.u32 %v4177, 7
      %v4179 = vsub.s32 %v4176, %v4178
      %v4180 = vrot.slane %v4166, %v4179
      %v4181 = vcombine.high %v4173, %v4173
      %v4182 = vcombine.high %v4180, %v4180
      %v4183 = vcombine.high %v3847, %v3847
      %v4185 = vunpack.c.l.s4 1983009808
      %v4186 = vunpack.c.0.s8 %v4185
      %v4187 = vlaneseq
      %v4188 = vshrl.u32 %v4187, 7
      %v4189 = vsub.s32 %v4186, %v4188
      %v4190 = vrot.slane %v3847, %v4189
      %v4192 = vunpack.c.l.s4 1983009808
      %v4193 = vunpack.c.0.s8 %v4192
      %v4194 = vlaneseq
      %v4195 = vshrl.u32 %v4194, 7
      %v4196 = vsub.s32 %v4193, %v4195
      %v4197 = vrot.slane %v4183, %v4196
      %v4198 = vcombine.high %v4190, %v4190
      %v4199 = vcombine.high %v4197, %v4197
      %v4200 = vcombine.high %v3848, %v3848
      %v4202 = vunpack.c.l.s4 1983009808
      %v4203 = vunpack.c.0.s8 %v4202
      %v4204 = vlaneseq
      %v4205 = vshrl.u32 %v4204, 7
      %v4206 = vsub.s32 %v4203, %v4205
      %v4207 = vrot.slane %v3848, %v4206
      %v4209 = vunpack.c.l.s4 1983009808
      %v4210 = vunpack.c.0.s8 %v4209
      %v4211 = vlaneseq
      %v4212 = vshrl.u32 %v4211, 7
      %v4213 = vsub.s32 %v4210, %v4212
      %v4214 = vrot.slane %v4200, %v4213
      %v4215 = vcombine.high %v4207, %v4207
      %v4216 = vcombine.high %v4214, %v4214
      %v4217 = vcombine.high %v3849, %v3849
      %v4219 = vunpack.c.l.s4 1983009808
      %v4220 = vunpack.c.0.s8 %v4219
      %v4221 = vlaneseq
      %v4222 = vshrl.u32 %v4221, 7
      %v4223 = vsub.s32 %v4220, %v4222
      %v4224 = vrot.slane %v3849, %v4223
      %v4226 = vunpack.c.l.s4 1983009808
      %v4227 = vunpack.c.0.s8 %v4226
      %v4228 = vlaneseq
      %v4229 = vshrl.u32 %v4228, 7
      %v4230 = vsub.s32 %v4227, %v4229
      %v4231 = vrot.slane %v4217, %v4230
      %v4232 = vcombine.high %v4224, %v4224
      %v4233 = vcombine.high %v4231, %v4231
      %v4234 = vcombine.high %v3850, %v3850
      %v4236 = vunpack.c.l.s4 1983009808
      %v4237 = vunpack.c.0.s8 %v4236
      %v4238 = vlaneseq
      %v4239 = vshrl.u32 %v4238, 7
      %v4240 = vsub.s32 %v4237, %v4239
      %v4241 = vrot.slane %v3850, %v4240
      %v4243 = vunpack.c.l.s4 1983009808
      %v4244 = vunpack.c.0.s8 %v4243
      %v4245 = vlaneseq
      %v4246 = vshrl.u32 %v4245, 7
      %v4247 = vsub.s32 %v4244, %v4246
      %v4248 = vrot.slane %v4234, %v4247
      %v4249 = vcombine.high %v4241, %v4241
      %v4250 = vcombine.high %v4248, %v4248
      %v4251 = vcombine.high %v3851, %v3851
      %v4253 = vunpack.c.l.s4 1983009808
      %v4254 = vunpack.c.0.s8 %v4253
      %v4255 = vlaneseq
      %v4256 = vshrl.u32 %v4255, 7
      %v4257 = vsub.s32 %v4254, %v4256
      %v4258 = vrot.slane %v3851, %v4257
      %v4260 = vunpack.c.l.s4 1983009808
      %v4261 = vunpack.c.0.s8 %v4260
      %v4262 = vlaneseq
      %v4263 = vshrl.u32 %v4262, 7
      %v4264 = vsub.s32 %v4261, %v4263
      %v4265 = vrot.slane %v4251, %v4264
      %v4266 = vcombine.high %v4258, %v4258
      %v4267 = vcombine.high %v4265, %v4265
      %v4268 = vcombine.high %v3852, %v3852
      %v4270 = vunpack.c.l.s4 1983009808
      %v4271 = vunpack.c.0.s8 %v4270
      %v4272 = vlaneseq
      %v4273 = vshrl.u32 %v4272, 7
      %v4274 = vsub.s32 %v4271, %v4273
      %v4275 = vrot.slane %v3852, %v4274
      %v4277 = vunpack.c.l.s4 1983009808
      %v4278 = vunpack.c.0.s8 %v4277
      %v4279 = vlaneseq
      %v4280 = vshrl.u32 %v4279, 7
      %v4281 = vsub.s32 %v4278, %v4280
      %v4282 = vrot.slane %v4268, %v4281
      %v4283 = vcombine.high %v4275, %v4275
      %v4284 = vcombine.high %v4282, %v4282
      %v4285 = vcombine.high %v3853, %v3853
      %v4287 = vunpack.c.l.s4 1983009808
      %v4288 = vunpack.c.0.s8 %v4287
      %v4289 = vlaneseq
      %v4290 = vshrl.u32 %v4289, 7
      %v4291 = vsub.s32 %v4288, %v4290
      %v4292 = vrot.slane %v3853, %v4291
      %v4294 = vunpack.c.l.s4 1983009808
      %v4295 = vunpack.c.0.s8 %v4294
      %v4296 = vlaneseq
      %v4297 = vshrl.u32 %v4296, 7
      %v4298 = vsub.s32 %v4295, %v4297
      %v4299 = vrot.slane %v4285, %v4298
      %v4300 = vcombine.high %v4292, %v4292
      %v4301 = vcombine.high %v4299, %v4299
      %v4302 = vcombine.high %v3854, %v3854
      %v4304 = vunpack.c.l.s4 1983009808
      %v4305 = vunpack.c.0.s8 %v4304
      %v4306 = vlaneseq
      %v4307 = vshrl.u32 %v4306, 7
      %v4308 = vsub.s32 %v4305, %v4307
      %v4309 = vrot.slane %v3854, %v4308
      %v4311 = vunpack.c.l.s4 1983009808
      %v4312 = vunpack.c.0.s8 %v4311
      %v4313 = vlaneseq
      %v4314 = vshrl.u32 %v4313, 7
      %v4315 = vsub.s32 %v4312, %v4314
      %v4316 = vrot.slane %v4302, %v4315
      %v4317 = vcombine.high %v4309, %v4309
      %v4318 = vcombine.high %v4316, %v4316
      %v4319 = vcombine.high %v3855, %v3855
      %v4321 = vunpack.c.l.s4 1983009808
      %v4322 = vunpack.c.0.s8 %v4321
      %v4323 = vlaneseq
      %v4324 = vshrl.u32 %v4323, 7
      %v4325 = vsub.s32 %v4322, %v4324
      %v4326 = vrot.slane %v3855, %v4325
      %v4328 = vunpack.c.l.s4 1983009808
      %v4329 = vunpack.c.0.s8 %v4328
      %v4330 = vlaneseq
      %v4331 = vshrl.u32 %v4330, 7
      %v4332 = vsub.s32 %v4329, %v4331
      %v4333 = vrot.slane %v4319, %v4332
      %v4334 = vcombine.high %v4326, %v4326
      %v4335 = vcombine.high %v4333, %v4333
      %v4336 = vcombine.high %v3856, %v3856
      %v4338 = vunpack.c.l.s4 1983009808
      %v4339 = vunpack.c.0.s8 %v4338
      %v4340 = vlaneseq
      %v4341 = vshrl.u32 %v4340, 7
      %v4342 = vsub.s32 %v4339, %v4341
      %v4343 = vrot.slane %v3856, %v4342
      %v4345 = vunpack.c.l.s4 1983009808
      %v4346 = vunpack.c.0.s8 %v4345
      %v4347 = vlaneseq
      %v4348 = vshrl.u32 %v4347, 7
      %v4349 = vsub.s32 %v4346, %v4348
      %v4350 = vrot.slane %v4336, %v4349
      %v4351 = vcombine.high %v4343, %v4343
      %v4352 = vcombine.high %v4350, %v4350
      %v4353 = vcombine.high %v3857, %v3857
      %v4355 = vunpack.c.l.s4 1983009808
      %v4356 = vunpack.c.0.s8 %v4355
      %v4357 = vlaneseq
      %v4358 = vshrl.u32 %v4357, 7
      %v4359 = vsub.s32 %v4356, %v4358
      %v4360 = vrot.slane %v3857, %v4359
      %v4362 = vunpack.c.l.s4 1983009808
      %v4363 = vunpack.c.0.s8 %v4362
      %v4364 = vlaneseq
      %v4365 = vshrl.u32 %v4364, 7
      %v4366 = vsub.s32 %v4363, %v4365
      %v4367 = vrot.slane %v4353, %v4366
      %v4368 = vcombine.high %v4360, %v4360
      %v4369 = vcombine.high %v4367, %v4367
      %v4370 = vcombine.high %v3858, %v3858
      %v4372 = vunpack.c.l.s4 1983009808
      %v4373 = vunpack.c.0.s8 %v4372
      %v4374 = vlaneseq
      %v4375 = vshrl.u32 %v4374, 7
      %v4376 = vsub.s32 %v4373, %v4375
      %v4377 = vrot.slane %v3858, %v4376
      %v4379 = vunpack.c.l.s4 1983009808
      %v4380 = vunpack.c.0.s8 %v4379
      %v4381 = vlaneseq
      %v4382 = vshrl.u32 %v4381, 7
      %v4383 = vsub.s32 %v4380, %v4382
      %v4384 = vrot.slane %v4370, %v4383
      %v4385 = vcombine.high %v4377, %v4377
      %v4386 = vcombine.high %v4384, %v4384
      %v4387 = vcombine.high %v3859, %v3859
      %v4389 = vunpack.c.l.s4 1983009808
      %v4390 = vunpack.c.0.s8 %v4389
      %v4391 = vlaneseq
      %v4392 = vshrl.u32 %v4391, 7
      %v4393 = vsub.s32 %v4390, %v4392
      %v4394 = vrot.slane %v3859, %v4393
      %v4396 = vunpack.c.l.s4 1983009808
      %v4397 = vunpack.c.0.s8 %v4396
      %v4398 = vlaneseq
      %v4399 = vshrl.u32 %v4398, 7
      %v4400 = vsub.s32 %v4397, %v4399
      %v4401 = vrot.slane %v4387, %v4400
      %v4402 = vcombine.high %v4394, %v4394
      %v4403 = vcombine.high %v4401, %v4401
      %v4404 = vcombine.high %v3860, %v3860
      %v4406 = vunpack.c.l.s4 1983009808
      %v4407 = vunpack.c.0.s8 %v4406
      %v4408 = vlaneseq
      %v4409 = vshrl.u32 %v4408, 7
      %v4410 = vsub.s32 %v4407, %v4409
      %v4411 = vrot.slane %v3860, %v4410
      %v4413 = vunpack.c.l.s4 1983009808
      %v4414 = vunpack.c.0.s8 %v4413
      %v4415 = vlaneseq
      %v4416 = vshrl.u32 %v4415, 7
      %v4417 = vsub.s32 %v4414, %v4416
      %v4418 = vrot.slane %v4404, %v4417
      %v4419 = vcombine.high %v4411, %v4411
      %v4420 = vcombine.high %v4418, %v4418
      %v4421 = vcombine.high %v3861, %v3861
      %v4423 = vunpack.c.l.s4 1983009808
      %v4424 = vunpack.c.0.s8 %v4423
      %v4425 = vlaneseq
      %v4426 = vshrl.u32 %v4425, 7
      %v4427 = vsub.s32 %v4424, %v4426
      %v4428 = vrot.slane %v3861, %v4427
      %v4430 = vunpack.c.l.s4 1983009808
      %v4431 = vunpack.c.0.s8 %v4430
      %v4432 = vlaneseq
      %v4433 = vshrl.u32 %v4432, 7
      %v4434 = vsub.s32 %v4431, %v4433
      %v4435 = vrot.slane %v4421, %v4434
      %v4436 = vcombine.high %v4428, %v4428
      %v4437 = vcombine.high %v4435, %v4435
      %v4566 = vrot.slane %v3901, 7
      %v4567 = vrot.slane %v4566, 2
      %v4568 = vrot.slane %v3909, 7
      %v4569 = vrot.slane %v4568, 2
      %v4570 = vrot.slane %v3908, 7
      %v4571 = vrot.slane %v4570, 2
      %v4572 = vrot.slane %v3910, 7
      %v4573 = vrot.slane %v4572, 2
      %v4574 = vrot.slane %v3918, 7
      %v4575 = vrot.slane %v4574, 2
      %v4576 = vrot.slane %v3926, 7
      %v4577 = vrot.slane %v4576, 2
      %v4578 = vrot.slane %v3925, 7
      %v4579 = vrot.slane %v4578, 2
      %v4580 = vrot.slane %v3927, 7
      %v4581 = vrot.slane %v4580, 2
      %v4582 = vrot.slane %v3935, 7
      %v4583 = vrot.slane %v4582, 2
      %v4584 = vrot.slane %v3943, 7
      %v4585 = vrot.slane %v4584, 2
      %v4586 = vrot.slane %v3942, 7
      %v4587 = vrot.slane %v4586, 2
      %v4588 = vrot.slane %v3944, 7
      %v4589 = vrot.slane %v4588, 2
      %v4590 = vrot.slane %v3952, 7
      %v4591 = vrot.slane %v4590, 2
      %v4592 = vrot.slane %v3960, 7
      %v4593 = vrot.slane %v4592, 2
      %v4594 = vrot.slane %v3959, 7
      %v4595 = vrot.slane %v4594, 2
      %v4596 = vrot.slane %v3961, 7
      %v4597 = vrot.slane %v4596, 2
      %v4598 = vrot.slane %v3969, 7
      %v4599 = vrot.slane %v4598, 2
      %v4600 = vrot.slane %v3977, 7
      %v4601 = vrot.slane %v4600, 2
      %v4602 = vrot.slane %v3976, 7
      %v4603 = vrot.slane %v4602, 2
      %v4604 = vrot.slane %v3978, 7
      %v4605 = vrot.slane %v4604, 2
      %v4606 = vrot.slane %v3986, 7
      %v4607 = vrot.slane %v4606, 2
      %v4608 = vrot.slane %v3994, 7
      %v4609 = vrot.slane %v4608, 2
      %v4610 = vrot.slane %v3993, 7
      %v4611 = vrot.slane %v4610, 2
      %v4612 = vrot.slane %v3995, 7
      %v4613 = vrot.slane %v4612, 2
      %v4614 = vrot.slane %v4003, 7
      %v4615 = vrot.slane %v4614, 2
      %v4616 = vrot.slane %v4011, 7
      %v4617 = vrot.slane %v4616, 2
      %v4618 = vrot.slane %v4010, 7
      %v4619 = vrot.slane %v4618, 2
      %v4620 = vrot.slane %v4012, 7
      %v4621 = vrot.slane %v4620, 2
      %v4622 = vrot.slane %v4020, 7
      %v4623 = vrot.slane %v4622, 2
      %v4624 = vrot.slane %v4028, 7
      %v4625 = vrot.slane %v4624, 2
      %v4626 = vrot.slane %v4027, 7
      %v4627 = vrot.slane %v4626, 2
      %v4628 = vrot.slane %v4029, 7
      %v4629 = vrot.slane %v4628, 2
      %v4630 = vrot.slane %v4037, 7
      %v4631 = vrot.slane %v4630, 2
      %v4632 = vrot.slane %v4045, 7
      %v4633 = vrot.slane %v4632, 2
      %v4634 = vrot.slane %v4044, 7
      %v4635 = vrot.slane %v4634, 2
      %v4636 = vrot.slane %v4046, 7
      %v4637 = vrot.slane %v4636, 2
      %v4638 = vrot.slane %v4054, 7
      %v4639 = vrot.slane %v4638, 2
      %v4640 = vrot.slane %v4062, 7
      %v4641 = vrot.slane %v4640, 2
      %v4642 = vrot.slane %v4061, 7
      %v4643 = vrot.slane %v4642, 2
      %v4644 = vrot.slane %v4063, 7
      %v4645 = vrot.slane %v4644, 2
      %v4646 = vrot.slane %v4071, 7
      %v4647 = vrot.slane %v4646, 2
      %v4648 = vrot.slane %v4079, 7
      %v4649 = vrot.slane %v4648, 2
      %v4650 = vrot.slane %v4078, 7
      %v4651 = vrot.slane %v4650, 2
      %v4652 = vrot.slane %v4080, 7
      %v4653 = vrot.slane %v4652, 2
      %v4654 = vrot.slane %v4088, 7
      %v4655 = vrot.slane %v4654, 2
      %v4656 = vrot.slane %v4096, 7
      %v4657 = vrot.slane %v4656, 2
      %v4658 = vrot.slane %v4095, 7
      %v4659 = vrot.slane %v4658, 2
      %v4660 = vrot.slane %v4097, 7
      %v4661 = vrot.slane %v4660, 2
      %v4662 = vrot.slane %v4105, 7
      %v4663 = vrot.slane %v4662, 2
      %v4664 = vrot.slane %v4113, 7
      %v4665 = vrot.slane %v4664, 2
      %v4666 = vrot.slane %v4112, 7
      %v4667 = vrot.slane %v4666, 2
      %v4668 = vrot.slane %v4114, 7
      %v4669 = vrot.slane %v4668, 2
      %v4670 = vrot.slane %v4122, 7
      %v4671 = vrot.slane %v4670, 2
      %v4672 = vrot.slane %v4130, 7
      %v4673 = vrot.slane %v4672, 2
      %v4674 = vrot.slane %v4129, 7
      %v4675 = vrot.slane %v4674, 2
      %v4676 = vrot.slane %v4131, 7
      %v4677 = vrot.slane %v4676, 2
      %v4678 = vrot.slane %v4139, 7
      %v4679 = vrot.slane %v4678, 2
      %v4680 = vrot.slane %v4147, 7
      %v4681 = vrot.slane %v4680, 2
      %v4682 = vrot.slane %v4146, 7
      %v4683 = vrot.slane %v4682, 2
      %v4684 = vrot.slane %v4148, 7
      %v4685 = vrot.slane %v4684, 2
      %v4686 = vrot.slane %v4156, 7
      %v4687 = vrot.slane %v4686, 2
      %v4688 = vrot.slane %v4164, 7
      %v4689 = vrot.slane %v4688, 2
      %v4690 = vrot.slane %v4163, 7
      %v4691 = vrot.slane %v4690, 2
      %v4692 = vrot.slane %v4165, 7
      %v4693 = vrot.slane %v4692, 2
      %v4694 = vrot.slane %v4173, 7
      %v4695 = vrot.slane %v4694, 2
      %v4696 = vrot.slane %v4181, 7
      %v4697 = vrot.slane %v4696, 2
      %v4698 = vrot.slane %v4180, 7
      %v4699 = vrot.slane %v4698, 2
      %v4700 = vrot.slane %v4182, 7
      %v4701 = vrot.slane %v4700, 2
      %v4702 = vrot.slane %v4190, 7
      %v4703 = vrot.slane %v4702, 2
      %v4704 = vrot.slane %v4198, 7
      %v4705 = vrot.slane %v4704, 2
      %v4706 = vrot.slane %v4197, 7
      %v4707 = vrot.slane %v4706, 2
      %v4708 = vrot.slane %v4199, 7
      %v4709 = vrot.slane %v4708, 2
      %v4710 = vrot.slane %v4207, 7
      %v4711 = vrot.slane %v4710, 2
      %v4712 = vrot.slane %v4215, 7
      %v4713 = vrot.slane %v4712, 2
      %v4714 = vrot.slane %v4214, 7
      %v4715 = vrot.slane %v4714, 2
      %v4716 = vrot.slane %v4216, 7
      %v4717 = vrot.slane %v4716, 2
      %v4718 = vrot.slane %v4224, 7
      %v4719 = vrot.slane %v4718, 2
      %v4720 = vrot.slane %v4232, 7
      %v4721 = vrot.slane %v4720, 2
      %v4722 = vrot.slane %v4231, 7
      %v4723 = vrot.slane %v4722, 2
      %v4724 = vrot.slane %v4233, 7
      %v4725 = vrot.slane %v4724, 2
      %v4726 = vrot.slane %v4241, 7
      %v4727 = vrot.slane %v4726, 2
      %v4728 = vrot.slane %v4249, 7
      %v4729 = vrot.slane %v4728, 2
      %v4730 = vrot.slane %v4248, 7
      %v4731 = vrot.slane %v4730, 2
      %v4732 = vrot.slane %v4250, 7
      %v4733 = vrot.slane %v4732, 2
      %v4734 = vrot.slane %v4258, 7
      %v4735 = vrot.slane %v4734, 2
      %v4736 = vrot.slane %v4266, 7
      %v4737 = vrot.slane %v4736, 2
      %v4738 = vrot.slane %v4265, 7
      %v4739 = vrot.slane %v4738, 2
      %v4740 = vrot.slane %v4267, 7
      %v4741 = vrot.slane %v4740, 2
      %v4742 = vrot.slane %v4275, 7
      %v4743 = vrot.slane %v4742, 2
      %v4744 = vrot.slane %v4283, 7
      %v4745 = vrot.slane %v4744, 2
      %v4746 = vrot.slane %v4282, 7
      %v4747 = vrot.slane %v4746, 2
      %v4748 = vrot.slane %v4284, 7
      %v4749 = vrot.slane %v4748, 2
      %v4750 = vrot.slane %v4292, 7
      %v4751 = vrot.slane %v4750, 2
      %v4752 = vrot.slane %v4300, 7
      %v4753 = vrot.slane %v4752, 2
      %v4754 = vrot.slane %v4299, 7
      %v4755 = vrot.slane %v4754, 2
      %v4756 = vrot.slane %v4301, 7
      %v4757 = vrot.slane %v4756, 2
      %v4758 = vrot.slane %v4309, 7
      %v4759 = vrot.slane %v4758, 2
      %v4760 = vrot.slane %v4317, 7
      %v4761 = vrot.slane %v4760, 2
      %v4762 = vrot.slane %v4316, 7
      %v4763 = vrot.slane %v4762, 2
      %v4764 = vrot.slane %v4318, 7
      %v4765 = vrot.slane %v4764, 2
      %v4766 = vrot.slane %v4326, 7
      %v4767 = vrot.slane %v4766, 2
      %v4768 = vrot.slane %v4334, 7
      %v4769 = vrot.slane %v4768, 2
      %v4770 = vrot.slane %v4333, 7
      %v4771 = vrot.slane %v4770, 2
      %v4772 = vrot.slane %v4335, 7
      %v4773 = vrot.slane %v4772, 2
      %v4774 = vrot.slane %v4343, 7
      %v4775 = vrot.slane %v4774, 2
      %v4776 = vrot.slane %v4351, 7
      %v4777 = vrot.slane %v4776, 2
      %v4778 = vrot.slane %v4350, 7
      %v4779 = vrot.slane %v4778, 2
      %v4780 = vrot.slane %v4352, 7
      %v4781 = vrot.slane %v4780, 2
      %v4782 = vrot.slane %v4360, 7
      %v4783 = vrot.slane %v4782, 2
      %v4784 = vrot.slane %v4368, 7
      %v4785 = vrot.slane %v4784, 2
      %v4786 = vrot.slane %v4367, 7
      %v4787 = vrot.slane %v4786, 2
      %v4788 = vrot.slane %v4369, 7
      %v4789 = vrot.slane %v4788, 2
      %v4790 = vrot.slane %v4377, 7
      %v4791 = vrot.slane %v4790, 2
      %v4792 = vrot.slane %v4385, 7
      %v4793 = vrot.slane %v4792, 2
      %v4794 = vrot.slane %v4384, 7
      %v4795 = vrot.slane %v4794, 2
      %v4796 = vrot.slane %v4386, 7
      %v4797 = vrot.slane %v4796, 2
      %v4798 = vrot.slane %v4394, 7
      %v4799 = vrot.slane %v4798, 2
      %v4800 = vrot.slane %v4402, 7
      %v4801 = vrot.slane %v4800, 2
      %v4802 = vrot.slane %v4401, 7
      %v4803 = vrot.slane %v4802, 2
      %v4804 = vrot.slane %v4403, 7
      %v4805 = vrot.slane %v4804, 2
      %v4806 = vrot.slane %v4411, 7
      %v4807 = vrot.slane %v4806, 2
      %v4808 = vrot.slane %v4419, 7
      %v4809 = vrot.slane %v4808, 2
      %v4810 = vrot.slane %v4418, 7
      %v4811 = vrot.slane %v4810, 2
      %v4812 = vrot.slane %v4420, 7
      %v4813 = vrot.slane %v4812, 2
      %v4814 = vrot.slane %v4428, 7
      %v4815 = vrot.slane %v4814, 2
      %v4816 = vrot.slane %v4436, 7
      %v4817 = vrot.slane %v4816, 2
      %v4818 = vrot.slane %v4435, 7
      %v4819 = vrot.slane %v4818, 2
      %v4820 = vrot.slane %v4437, 7
      %v4821 = vrot.slane %v4820, 2
      %v4950 = vmax.f32 %v3901, %v4567
      %v4951 = vmax.f32 %v3909, %v4569
      %v4952 = vmax.f32 %v3908, %v4571
      %v4953 = vmax.f32 %v3910, %v4573
      %v4954 = vmax.f32 %v3918, %v4575
      %v4955 = vmax.f32 %v3926, %v4577
      %v4956 = vmax.f32 %v3925, %v4579
      %v4957 = vmax.f32 %v3927, %v4581
      %v4958 = vmax.f32 %v3935, %v4583
      %v4959 = vmax.f32 %v3943, %v4585
      %v4960 = vmax.f32 %v3942, %v4587
      %v4961 = vmax.f32 %v3944, %v4589
      %v4962 = vmax.f32 %v3952, %v4591
      %v4963 = vmax.f32 %v3960, %v4593
      %v4964 = vmax.f32 %v3959, %v4595
      %v4965 = vmax.f32 %v3961, %v4597
      %v4966 = vmax.f32 %v3969, %v4599
      %v4967 = vmax.f32 %v3977, %v4601
      %v4968 = vmax.f32 %v3976, %v4603
      %v4969 = vmax.f32 %v3978, %v4605
      %v4970 = vmax.f32 %v3986, %v4607
      %v4971 = vmax.f32 %v3994, %v4609
      %v4972 = vmax.f32 %v3993, %v4611
      %v4973 = vmax.f32 %v3995, %v4613
      %v4974 = vmax.f32 %v4003, %v4615
      %v4975 = vmax.f32 %v4011, %v4617
      %v4976 = vmax.f32 %v4010, %v4619
      %v4977 = vmax.f32 %v4012, %v4621
      %v4978 = vmax.f32 %v4020, %v4623
      %v4979 = vmax.f32 %v4028, %v4625
      %v4980 = vmax.f32 %v4027, %v4627
      %v4981 = vmax.f32 %v4029, %v4629
      %v4982 = vmax.f32 %v4037, %v4631
      %v4983 = vmax.f32 %v4045, %v4633
      %v4984 = vmax.f32 %v4044, %v4635
      %v4985 = vmax.f32 %v4046, %v4637
      %v4986 = vmax.f32 %v4054, %v4639
      %v4987 = vmax.f32 %v4062, %v4641
      %v4988 = vmax.f32 %v4061, %v4643
      %v4989 = vmax.f32 %v4063, %v4645
      %v4990 = vmax.f32 %v4071, %v4647
      %v4991 = vmax.f32 %v4079, %v4649
      %v4992 = vmax.f32 %v4078, %v4651
      %v4993 = vmax.f32 %v4080, %v4653
      %v4994 = vmax.f32 %v4088, %v4655
      %v4995 = vmax.f32 %v4096, %v4657
      %v4996 = vmax.f32 %v4095, %v4659
      %v4997 = vmax.f32 %v4097, %v4661
      %v4998 = vmax.f32 %v4105, %v4663
      %v4999 = vmax.f32 %v4113, %v4665
      %v5000 = vmax.f32 %v4112, %v4667
      %v5001 = vmax.f32 %v4114, %v4669
      %v5002 = vmax.f32 %v4122, %v4671
      %v5003 = vmax.f32 %v4130, %v4673
      %v5004 = vmax.f32 %v4129, %v4675
      %v5005 = vmax.f32 %v4131, %v4677
      %v5006 = vmax.f32 %v4139, %v4679
      %v5007 = vmax.f32 %v4147, %v4681
      %v5008 = vmax.f32 %v4146, %v4683
      %v5009 = vmax.f32 %v4148, %v4685
      %v5010 = vmax.f32 %v4156, %v4687
      %v5011 = vmax.f32 %v4164, %v4689
      %v5012 = vmax.f32 %v4163, %v4691
      %v5013 = vmax.f32 %v4165, %v4693
      %v5014 = vmax.f32 %v4173, %v4695
      %v5015 = vmax.f32 %v4181, %v4697
      %v5016 = vmax.f32 %v4180, %v4699
      %v5017 = vmax.f32 %v4182, %v4701
      %v5018 = vmax.f32 %v4190, %v4703
      %v5019 = vmax.f32 %v4198, %v4705
      %v5020 = vmax.f32 %v4197, %v4707
      %v5021 = vmax.f32 %v4199, %v4709
      %v5022 = vmax.f32 %v4207, %v4711
      %v5023 = vmax.f32 %v4215, %v4713
      %v5024 = vmax.f32 %v4214, %v4715
      %v5025 = vmax.f32 %v4216, %v4717
      %v5026 = vmax.f32 %v4224, %v4719
      %v5027 = vmax.f32 %v4232, %v4721
      %v5028 = vmax.f32 %v4231, %v4723
      %v5029 = vmax.f32 %v4233, %v4725
      %v5030 = vmax.f32 %v4241, %v4727
      %v5031 = vmax.f32 %v4249, %v4729
      %v5032 = vmax.f32 %v4248, %v4731
      %v5033 = vmax.f32 %v4250, %v4733
      %v5034 = vmax.f32 %v4258, %v4735
      %v5035 = vmax.f32 %v4266, %v4737
      %v5036 = vmax.f32 %v4265, %v4739
      %v5037 = vmax.f32 %v4267, %v4741
      %v5038 = vmax.f32 %v4275, %v4743
      %v5039 = vmax.f32 %v4283, %v4745
      %v5040 = vmax.f32 %v4282, %v4747
      %v5041 = vmax.f32 %v4284, %v4749
      %v5042 = vmax.f32 %v4292, %v4751
      %v5043 = vmax.f32 %v4300, %v4753
      %v5044 = vmax.f32 %v4299, %v4755
      %v5045 = vmax.f32 %v4301, %v4757
      %v5046 = vmax.f32 %v4309, %v4759
      %v5047 = vmax.f32 %v4317, %v4761
      %v5048 = vmax.f32 %v4316, %v4763
      %v5049 = vmax.f32 %v4318, %v4765
      %v5050 = vmax.f32 %v4326, %v4767
      %v5051 = vmax.f32 %v4334, %v4769
      %v5052 = vmax.f32 %v4333, %v4771
      %v5053 = vmax.f32 %v4335, %v4773
      %v5054 = vmax.f32 %v4343, %v4775
      %v5055 = vmax.f32 %v4351, %v4777
      %v5056 = vmax.f32 %v4350, %v4779
      %v5057 = vmax.f32 %v4352, %v4781
      %v5058 = vmax.f32 %v4360, %v4783
      %v5059 = vmax.f32 %v4368, %v4785
      %v5060 = vmax.f32 %v4367, %v4787
      %v5061 = vmax.f32 %v4369, %v4789
      %v5062 = vmax.f32 %v4377, %v4791
      %v5063 = vmax.f32 %v4385, %v4793
      %v5064 = vmax.f32 %v4384, %v4795
      %v5065 = vmax.f32 %v4386, %v4797
      %v5066 = vmax.f32 %v4394, %v4799
      %v5067 = vmax.f32 %v4402, %v4801
      %v5068 = vmax.f32 %v4401, %v4803
      %v5069 = vmax.f32 %v4403, %v4805
      %v5070 = vmax.f32 %v4411, %v4807
      %v5071 = vmax.f32 %v4419, %v4809
      %v5072 = vmax.f32 %v4418, %v4811
      %v5073 = vmax.f32 %v4420, %v4813
      %v5074 = vmax.f32 %v4428, %v4815
      %v5075 = vmax.f32 %v4436, %v4817
      %v5076 = vmax.f32 %v4435, %v4819
      %v5077 = vmax.f32 %v4437, %v4821
      %v5078 = vmax.f32 %v4950, %v4958
      %v5079 = vmax.f32 %v4951, %v4959
      %v5080 = vmax.f32 %v4952, %v4960
      %v5081 = vmax.f32 %v4953, %v4961
      %v5082 = vmax.f32 %v4954, %v4962
      %v5083 = vmax.f32 %v4955, %v4963
      %v5084 = vmax.f32 %v4956, %v4964
      %v5085 = vmax.f32 %v4957, %v4965
      %v5086 = vmax.f32 %v4966, %v4974
      %v5087 = vmax.f32 %v4967, %v4975
      %v5088 = vmax.f32 %v4968, %v4976
      %v5089 = vmax.f32 %v4969, %v4977
      %v5090 = vmax.f32 %v4970, %v4978
      %v5091 = vmax.f32 %v4971, %v4979
      %v5092 = vmax.f32 %v4972, %v4980
      %v5093 = vmax.f32 %v4973, %v4981
      %v5094 = vmax.f32 %v4982, %v4990
      %v5095 = vmax.f32 %v4983, %v4991
      %v5096 = vmax.f32 %v4984, %v4992
      %v5097 = vmax.f32 %v4985, %v4993
      %v5098 = vmax.f32 %v4986, %v4994
      %v5099 = vmax.f32 %v4987, %v4995
      %v5100 = vmax.f32 %v4988, %v4996
      %v5101 = vmax.f32 %v4989, %v4997
      %v5102 = vmax.f32 %v4998, %v5006
      %v5103 = vmax.f32 %v4999, %v5007
      %v5104 = vmax.f32 %v5000, %v5008
      %v5105 = vmax.f32 %v5001, %v5009
      %v5106 = vmax.f32 %v5002, %v5010
      %v5107 = vmax.f32 %v5003, %v5011
      %v5108 = vmax.f32 %v5004, %v5012
      %v5109 = vmax.f32 %v5005, %v5013
      %v5110 = vmax.f32 %v5014, %v5022
      %v5111 = vmax.f32 %v5015, %v5023
      %v5112 = vmax.f32 %v5016, %v5024
      %v5113 = vmax.f32 %v5017, %v5025
      %v5114 = vmax.f32 %v5018, %v5026
      %v5115 = vmax.f32 %v5019, %v5027
      %v5116 = vmax.f32 %v5020, %v5028
      %v5117 = vmax.f32 %v5021, %v5029
      %v5118 = vmax.f32 %v5030, %v5038
      %v5119 = vmax.f32 %v5031, %v5039
      %v5120 = vmax.f32 %v5032, %v5040
      %v5121 = vmax.f32 %v5033, %v5041
      %v5122 = vmax.f32 %v5034, %v5042
      %v5123 = vmax.f32 %v5035, %v5043
      %v5124 = vmax.f32 %v5036, %v5044
      %v5125 = vmax.f32 %v5037, %v5045
      %v5126 = vmax.f32 %v5046, %v5054
      %v5127 = vmax.f32 %v5047, %v5055
      %v5128 = vmax.f32 %v5048, %v5056
      %v5129 = vmax.f32 %v5049, %v5057
      %v5130 = vmax.f32 %v5050, %v5058
      %v5131 = vmax.f32 %v5051, %v5059
      %v5132 = vmax.f32 %v5052, %v5060
      %v5133 = vmax.f32 %v5053, %v5061
      %v5134 = vmax.f32 %v5062, %v5070
      %v5135 = vmax.f32 %v5063, %v5071
      %v5136 = vmax.f32 %v5064, %v5072
      %v5137 = vmax.f32 %v5065, %v5073
      %v5138 = vmax.f32 %v5066, %v5074
      %v5139 = vmax.f32 %v5067, %v5075
      %v5140 = vmax.f32 %v5068, %v5076
      %v5141 = vmax.f32 %v5069, %v5077
      %vm5142 = vcmask 64512
      %5143 = vst.msk [vmem:[#allocation3] sm:$0xff] %vm5142, 0.0
      %vm5144 = vcmask 60416
      %5145 = vst.msk [vmem:[#allocation3 + $0x8] sm:$0xf] %vm5144, 0.0
      %5146 = vst.msk [vmem:[#allocation3 + $0x10] sm:$0xff] %vm5142, 0.0
      %5147 = vst.msk [vmem:[#allocation3 + $0x18] sm:$0xf] %vm5144, 0.0
      %5148 = vst.msk [vmem:[#allocation3 + $0x20] sm:$0xff] %vm5142, 0.0
      %5149 = vst.msk [vmem:[#allocation3 + $0x28] sm:$0xf] %vm5144, 0.0
      %5150 = vst.msk [vmem:[#allocation3 + $0x30] sm:$0xff] %vm5142, 0.0
      %5151 = vst.msk [vmem:[#allocation3 + $0x38] sm:$0xf] %vm5144, 0.0
      %5152 = vst.msk [vmem:[#allocation3 + $0x40] sm:$0xff] %vm5142, 0.0
      %5153 = vst.msk [vmem:[#allocation3 + $0x48] sm:$0xf] %vm5144, 0.0
      %5154 = vst.msk [vmem:[#allocation3 + $0x50] sm:$0xff] %vm5142, 0.0
      %5155 = vst.msk [vmem:[#allocation3 + $0x58] sm:$0xf] %vm5144, 0.0
      %5156 = vst.msk [vmem:[#allocation3 + $0x60] sm:$0xff] %vm5142, 0.0
      %5157 = vst.msk [vmem:[#allocation3 + $0x68] sm:$0xf] %vm5144, 0.0
      %5158 = vst.msk [vmem:[#allocation3 + $0x70] sm:$0xff] %vm5142, 0.0
      %5159 = vst.msk [vmem:[#allocation3 + $0x78] sm:$0xf] %vm5144, 0.0
      %5160 = vst.msk [vmem:[#allocation3 + $0x80] sm:$0xff] %vm5142, 0.0
      %5161 = vst.msk [vmem:[#allocation3 + $0x88] sm:$0xf] %vm5144, 0.0
      %5162 = vst.msk [vmem:[#allocation3 + $0x90] sm:$0xff] %vm5142, 0.0
      %5163 = vst.msk [vmem:[#allocation3 + $0x98] sm:$0xf] %vm5144, 0.0
      %5164 = vst.msk [vmem:[#allocation3 + $0xa0] sm:$0xff] %vm5142, 0.0
      %5165 = vst.msk [vmem:[#allocation3 + $0xa8] sm:$0xf] %vm5144, 0.0
      %5166 = vst.msk [vmem:[#allocation3 + $0xb0] sm:$0xff] %vm5142, 0.0
      %5167 = vst.msk [vmem:[#allocation3 + $0xb8] sm:$0xf] %vm5144, 0.0
      %v5232 = vlaneseq
      %v5233 = vshrl.u32 %v5232, 7
      %v5234 = vsub.s32 0, %v5233
      %v5235 = vrot.slane %v5078, %v5234
      %v5236 = vlaneseq
      %v5237 = vshrl.u32 %v5236, 7
      %v5238 = vsub.s32 0, %v5237
      %v5239 = vrot.slane %v5079, %v5238
      %v5240 = vlaneseq
      %v5241 = vshrl.u32 %v5240, 7
      %v5242 = vsub.s32 0, %v5241
      %v5243 = vrot.slane %v5080, %v5242
      %v5244 = vlaneseq
      %v5245 = vshrl.u32 %v5244, 7
      %v5246 = vsub.s32 0, %v5245
      %v5247 = vrot.slane %v5081, %v5246
      %v5248 = vlaneseq
      %v5249 = vshrl.u32 %v5248, 7
      %v5250 = vsub.s32 0, %v5249
      %v5251 = vrot.slane %v5082, %v5250
      %v5252 = vlaneseq
      %v5253 = vshrl.u32 %v5252, 7
      %v5254 = vsub.s32 0, %v5253
      %v5255 = vrot.slane %v5083, %v5254
      %v5256 = vlaneseq
      %v5257 = vshrl.u32 %v5256, 7
      %v5258 = vsub.s32 0, %v5257
      %v5259 = vrot.slane %v5084, %v5258
      %v5260 = vlaneseq
      %v5261 = vshrl.u32 %v5260, 7
      %v5262 = vsub.s32 0, %v5261
      %v5263 = vrot.slane %v5085, %v5262
      %v5264 = vlaneseq
      %v5265 = vshrl.u32 %v5264, 7
      %v5266 = vsub.s32 0, %v5265
      %v5267 = vrot.slane %v5086, %v5266
      %v5268 = vlaneseq
      %v5269 = vshrl.u32 %v5268, 7
      %v5270 = vsub.s32 0, %v5269
      %v5271 = vrot.slane %v5087, %v5270
      %v5272 = vlaneseq
      %v5273 = vshrl.u32 %v5272, 7
      %v5274 = vsub.s32 0, %v5273
      %v5275 = vrot.slane %v5088, %v5274
      %v5276 = vlaneseq
      %v5277 = vshrl.u32 %v5276, 7
      %v5278 = vsub.s32 0, %v5277
      %v5279 = vrot.slane %v5089, %v5278
      %v5280 = vlaneseq
      %v5281 = vshrl.u32 %v5280, 7
      %v5282 = vsub.s32 0, %v5281
      %v5283 = vrot.slane %v5090, %v5282
      %v5284 = vlaneseq
      %v5285 = vshrl.u32 %v5284, 7
      %v5286 = vsub.s32 0, %v5285
      %v5287 = vrot.slane %v5091, %v5286
      %v5288 = vlaneseq
      %v5289 = vshrl.u32 %v5288, 7
      %v5290 = vsub.s32 0, %v5289
      %v5291 = vrot.slane %v5092, %v5290
      %v5292 = vlaneseq
      %v5293 = vshrl.u32 %v5292, 7
      %v5294 = vsub.s32 0, %v5293
      %v5295 = vrot.slane %v5093, %v5294
      %v5296 = vlaneseq
      %v5297 = vshrl.u32 %v5296, 7
      %v5298 = vsub.s32 0, %v5297
      %v5299 = vrot.slane %v5094, %v5298
      %v5300 = vlaneseq
      %v5301 = vshrl.u32 %v5300, 7
      %v5302 = vsub.s32 0, %v5301
      %v5303 = vrot.slane %v5095, %v5302
      %v5304 = vlaneseq
      %v5305 = vshrl.u32 %v5304, 7
      %v5306 = vsub.s32 0, %v5305
      %v5307 = vrot.slane %v5096, %v5306
      %v5308 = vlaneseq
      %v5309 = vshrl.u32 %v5308, 7
      %v5310 = vsub.s32 0, %v5309
      %v5311 = vrot.slane %v5097, %v5310
      %v5312 = vlaneseq
      %v5313 = vshrl.u32 %v5312, 7
      %v5314 = vsub.s32 0, %v5313
      %v5315 = vrot.slane %v5098, %v5314
      %v5316 = vlaneseq
      %v5317 = vshrl.u32 %v5316, 7
      %v5318 = vsub.s32 0, %v5317
      %v5319 = vrot.slane %v5099, %v5318
      %v5320 = vlaneseq
      %v5321 = vshrl.u32 %v5320, 7
      %v5322 = vsub.s32 0, %v5321
      %v5323 = vrot.slane %v5100, %v5322
      %v5324 = vlaneseq
      %v5325 = vshrl.u32 %v5324, 7
      %v5326 = vsub.s32 0, %v5325
      %v5327 = vrot.slane %v5101, %v5326
      %v5328 = vlaneseq
      %v5329 = vshrl.u32 %v5328, 7
      %v5330 = vsub.s32 0, %v5329
      %v5331 = vrot.slane %v5102, %v5330
      %v5332 = vlaneseq
      %v5333 = vshrl.u32 %v5332, 7
      %v5334 = vsub.s32 0, %v5333
      %v5335 = vrot.slane %v5103, %v5334
      %v5336 = vlaneseq
      %v5337 = vshrl.u32 %v5336, 7
      %v5338 = vsub.s32 0, %v5337
      %v5339 = vrot.slane %v5104, %v5338
      %v5340 = vlaneseq
      %v5341 = vshrl.u32 %v5340, 7
      %v5342 = vsub.s32 0, %v5341
      %v5343 = vrot.slane %v5105, %v5342
      %v5344 = vlaneseq
      %v5345 = vshrl.u32 %v5344, 7
      %v5346 = vsub.s32 0, %v5345
      %v5347 = vrot.slane %v5106, %v5346
      %v5348 = vlaneseq
      %v5349 = vshrl.u32 %v5348, 7
      %v5350 = vsub.s32 0, %v5349
      %v5351 = vrot.slane %v5107, %v5350
      %v5352 = vlaneseq
      %v5353 = vshrl.u32 %v5352, 7
      %v5354 = vsub.s32 0, %v5353
      %v5355 = vrot.slane %v5108, %v5354
      %v5356 = vlaneseq
      %v5357 = vshrl.u32 %v5356, 7
      %v5358 = vsub.s32 0, %v5357
      %v5359 = vrot.slane %v5109, %v5358
      %v5360 = vlaneseq
      %v5361 = vshrl.u32 %v5360, 7
      %v5362 = vsub.s32 0, %v5361
      %v5363 = vrot.slane %v5110, %v5362
      %v5364 = vlaneseq
      %v5365 = vshrl.u32 %v5364, 7
      %v5366 = vsub.s32 0, %v5365
      %v5367 = vrot.slane %v5111, %v5366
      %v5368 = vlaneseq
      %v5369 = vshrl.u32 %v5368, 7
      %v5370 = vsub.s32 0, %v5369
      %v5371 = vrot.slane %v5112, %v5370
      %v5372 = vlaneseq
      %v5373 = vshrl.u32 %v5372, 7
      %v5374 = vsub.s32 0, %v5373
      %v5375 = vrot.slane %v5113, %v5374
      %v5376 = vlaneseq
      %v5377 = vshrl.u32 %v5376, 7
      %v5378 = vsub.s32 0, %v5377
      %v5379 = vrot.slane %v5114, %v5378
      %v5380 = vlaneseq
      %v5381 = vshrl.u32 %v5380, 7
      %v5382 = vsub.s32 0, %v5381
      %v5383 = vrot.slane %v5115, %v5382
      %v5384 = vlaneseq
      %v5385 = vshrl.u32 %v5384, 7
      %v5386 = vsub.s32 0, %v5385
      %v5387 = vrot.slane %v5116, %v5386
      %v5388 = vlaneseq
      %v5389 = vshrl.u32 %v5388, 7
      %v5390 = vsub.s32 0, %v5389
      %v5391 = vrot.slane %v5117, %v5390
      %v5392 = vlaneseq
      %v5393 = vshrl.u32 %v5392, 7
      %v5394 = vsub.s32 0, %v5393
      %v5395 = vrot.slane %v5118, %v5394
      %v5396 = vlaneseq
      %v5397 = vshrl.u32 %v5396, 7
      %v5398 = vsub.s32 0, %v5397
      %v5399 = vrot.slane %v5119, %v5398
      %v5400 = vlaneseq
      %v5401 = vshrl.u32 %v5400, 7
      %v5402 = vsub.s32 0, %v5401
      %v5403 = vrot.slane %v5120, %v5402
      %v5404 = vlaneseq
      %v5405 = vshrl.u32 %v5404, 7
      %v5406 = vsub.s32 0, %v5405
      %v5407 = vrot.slane %v5121, %v5406
      %v5408 = vlaneseq
      %v5409 = vshrl.u32 %v5408, 7
      %v5410 = vsub.s32 0, %v5409
      %v5411 = vrot.slane %v5122, %v5410
      %v5412 = vlaneseq
      %v5413 = vshrl.u32 %v5412, 7
      %v5414 = vsub.s32 0, %v5413
      %v5415 = vrot.slane %v5123, %v5414
      %v5416 = vlaneseq
      %v5417 = vshrl.u32 %v5416, 7
      %v5418 = vsub.s32 0, %v5417
      %v5419 = vrot.slane %v5124, %v5418
      %v5420 = vlaneseq
      %v5421 = vshrl.u32 %v5420, 7
      %v5422 = vsub.s32 0, %v5421
      %v5423 = vrot.slane %v5125, %v5422
      %v5424 = vlaneseq
      %v5425 = vshrl.u32 %v5424, 7
      %v5426 = vsub.s32 0, %v5425
      %v5427 = vrot.slane %v5126, %v5426
      %v5428 = vlaneseq
      %v5429 = vshrl.u32 %v5428, 7
      %v5430 = vsub.s32 0, %v5429
      %v5431 = vrot.slane %v5127, %v5430
      %v5432 = vlaneseq
      %v5433 = vshrl.u32 %v5432, 7
      %v5434 = vsub.s32 0, %v5433
      %v5435 = vrot.slane %v5128, %v5434
      %v5436 = vlaneseq
      %v5437 = vshrl.u32 %v5436, 7
      %v5438 = vsub.s32 0, %v5437
      %v5439 = vrot.slane %v5129, %v5438
      %v5440 = vlaneseq
      %v5441 = vshrl.u32 %v5440, 7
      %v5442 = vsub.s32 0, %v5441
      %v5443 = vrot.slane %v5130, %v5442
      %v5444 = vlaneseq
      %v5445 = vshrl.u32 %v5444, 7
      %v5446 = vsub.s32 0, %v5445
      %v5447 = vrot.slane %v5131, %v5446
      %v5448 = vlaneseq
      %v5449 = vshrl.u32 %v5448, 7
      %v5450 = vsub.s32 0, %v5449
      %v5451 = vrot.slane %v5132, %v5450
      %v5452 = vlaneseq
      %v5453 = vshrl.u32 %v5452, 7
      %v5454 = vsub.s32 0, %v5453
      %v5455 = vrot.slane %v5133, %v5454
      %v5456 = vlaneseq
      %v5457 = vshrl.u32 %v5456, 7
      %v5458 = vsub.s32 0, %v5457
      %v5459 = vrot.slane %v5134, %v5458
      %v5460 = vlaneseq
      %v5461 = vshrl.u32 %v5460, 7
      %v5462 = vsub.s32 0, %v5461
      %v5463 = vrot.slane %v5135, %v5462
      %v5464 = vlaneseq
      %v5465 = vshrl.u32 %v5464, 7
      %v5466 = vsub.s32 0, %v5465
      %v5467 = vrot.slane %v5136, %v5466
      %v5468 = vlaneseq
      %v5469 = vshrl.u32 %v5468, 7
      %v5470 = vsub.s32 0, %v5469
      %v5471 = vrot.slane %v5137, %v5470
      %v5472 = vlaneseq
      %v5473 = vshrl.u32 %v5472, 7
      %v5474 = vsub.s32 0, %v5473
      %v5475 = vrot.slane %v5138, %v5474
      %v5476 = vlaneseq
      %v5477 = vshrl.u32 %v5476, 7
      %v5478 = vsub.s32 0, %v5477
      %v5479 = vrot.slane %v5139, %v5478
      %v5480 = vlaneseq
      %v5481 = vshrl.u32 %v5480, 7
      %v5482 = vsub.s32 0, %v5481
      %v5483 = vrot.slane %v5140, %v5482
      %v5484 = vlaneseq
      %v5485 = vshrl.u32 %v5484, 7
      %v5486 = vsub.s32 0, %v5485
      %v5487 = vrot.slane %v5141, %v5486
      %vm5488 = vcmask 1041409
      %v5489 = vsel %vm5488, %v5239, %v5235
      %vm5490 = vcmask 1042434
      %v5491 = vsel %vm5490, %v5243, %v5489
      %vm5492 = vcmask 1043459
      %v5493 = vsel %vm5492, %v5247, %v5491
      %vm5494 = vcmask 1044484
      %v5495 = vsel %vm5494, %v5251, %v5493
      %vm5496 = vcmask 1045509
      %v5497 = vsel %vm5496, %v5255, %v5495
      %vm5498 = vcmask 1046534
      %v5499 = vsel %vm5498, %v5259, %v5497
      %vm5500 = vcmask 1047559
      %v5501 = vsel %vm5500, %v5263, %v5499
      %v5502 = vsel %vm5488, %v5271, %v5267
      %v5503 = vsel %vm5490, %v5275, %v5502
      %v5504 = vsel %vm5492, %v5279, %v5503
      %v5505 = vsel %vm5494, %v5283, %v5504
      %v5506 = vsel %vm5496, %v5287, %v5505
      %v5507 = vsel %vm5498, %v5291, %v5506
      %v5508 = vsel %vm5500, %v5295, %v5507
      %v5509 = vsel %vm5488, %v5303, %v5299
      %v5510 = vsel %vm5490, %v5307, %v5509
      %v5511 = vsel %vm5492, %v5311, %v5510
      %v5512 = vsel %vm5494, %v5315, %v5511
      %v5513 = vsel %vm5496, %v5319, %v5512
      %v5514 = vsel %vm5498, %v5323, %v5513
      %v5515 = vsel %vm5500, %v5327, %v5514
      %v5516 = vsel %vm5488, %v5335, %v5331
      %v5517 = vsel %vm5490, %v5339, %v5516
      %v5518 = vsel %vm5492, %v5343, %v5517
      %v5519 = vsel %vm5494, %v5347, %v5518
      %v5520 = vsel %vm5496, %v5351, %v5519
      %v5521 = vsel %vm5498, %v5355, %v5520
      %v5522 = vsel %vm5500, %v5359, %v5521
      %v5523 = vsel %vm5488, %v5367, %v5363
      %v5524 = vsel %vm5490, %v5371, %v5523
      %v5525 = vsel %vm5492, %v5375, %v5524
      %v5526 = vsel %vm5494, %v5379, %v5525
      %v5527 = vsel %vm5496, %v5383, %v5526
      %v5528 = vsel %vm5498, %v5387, %v5527
      %v5529 = vsel %vm5500, %v5391, %v5528
      %v5530 = vsel %vm5488, %v5399, %v5395
      %v5531 = vsel %vm5490, %v5403, %v5530
      %v5532 = vsel %vm5492, %v5407, %v5531
      %v5533 = vsel %vm5494, %v5411, %v5532
      %v5534 = vsel %vm5496, %v5415, %v5533
      %v5535 = vsel %vm5498, %v5419, %v5534
      %v5536 = vsel %vm5500, %v5423, %v5535
      %v5537 = vsel %vm5488, %v5431, %v5427
      %v5538 = vsel %vm5490, %v5435, %v5537
      %v5539 = vsel %vm5492, %v5439, %v5538
      %v5540 = vsel %vm5494, %v5443, %v5539
      %v5541 = vsel %vm5496, %v5447, %v5540
      %v5542 = vsel %vm5498, %v5451, %v5541
      %v5543 = vsel %vm5500, %v5455, %v5542
      %v5544 = vsel %vm5488, %v5463, %v5459
      %v5545 = vsel %vm5490, %v5467, %v5544
      %v5546 = vsel %vm5492, %v5471, %v5545
      %v5547 = vsel %vm5494, %v5475, %v5546
      %v5548 = vsel %vm5496, %v5479, %v5547
      %v5549 = vsel %vm5498, %v5483, %v5548
      %v5550 = vsel %vm5500, %v5487, %v5549
      %s5559 = scalar_lea.vmem [#allocation3], 32
      %5560 = vst.msk [vmem:[%s5559 + $0x2] sm:$0xff] %vm5142, %v5501
      %5561 = vst.msk [vmem:[%s5559 + $0x12] sm:$0xff] %vm5142, %v5508
      %5562 = vst.msk [vmem:[%s5559 + $0x22] sm:$0xff] %vm5142, %v5515
      %5563 = vst.msk [vmem:[%s5559 + $0x32] sm:$0xff] %vm5142, %v5522
      %5564 = vst.msk [vmem:[%s5559 + $0x42] sm:$0xff] %vm5142, %v5529
      %5565 = vst.msk [vmem:[%s5559 + $0x52] sm:$0xff] %vm5142, %v5536
      %5566 = vst.msk [vmem:[%s5559 + $0x62] sm:$0xff] %vm5142, %v5543
      %5567 = vst.msk [vmem:[%s5559 + $0x72] sm:$0xff] %vm5142, %v5550
      %v5568 = vld [vmem:[%s4] sm:$0x1]
      %v5570 = vlaneseq
      %v5571 = vshrl.u32 %v5570, 7
      %v5572 = vsub.s32 0, %v5571
      %v5573 = vrot.slane %v5568, %v5572
      %v5575 = vld [vmem:[#allocation3] sm:$0xff]
      %v5576 = vld [vmem:[#allocation3 + $0x10] sm:$0xff]
      %v5577 = vld [vmem:[#allocation3 + $0x20] sm:$0xff]
      %v5578 = vld [vmem:[#allocation3 + $0x30] sm:$0xff]
      %v5579 = vld [vmem:[#allocation3 + $0x40] sm:$0xff]
      %v5580 = vld [vmem:[#allocation3 + $0x50] sm:$0xff]
      %v5581 = vld [vmem:[#allocation3 + $0x60] sm:$0xff]
      %v5582 = vld [vmem:[#allocation3 + $0x70] sm:$0xff]
      %v5583 = vld [vmem:[%s3] sm:$0xff]
      %v5585 = vsel %vm5142, %v5575, 0
      %v5588 = vsel %vm5142, %v5576, 0
      %v5591 = vsel %vm5142, %v5577, 0
      %v5594 = vsel %vm5142, %v5578, 0
      %v5597 = vsel %vm5142, %v5579, 0
      %v5600 = vsel %vm5142, %v5580, 0
      %v5603 = vsel %vm5142, %v5581, 0
      %v5606 = vsel %vm5142, %v5582, 0
      %5608 = vmatprep.subr.mxu0 0.0
      %5609 = vmatpush1.msra.mxu0 %v5583
      %5610 = vmatprep.subr.mxu0 0.0
      %5611 = vmatpush1.msra.mxu0 0.0
      %5612 = vmatprep.subr.mxu0 0.0
      %5613 = vmatpush1.msra.mxu0 0.0
      %5614 = vmatprep.subr.mxu0 0.0
      %5615 = vmatpush1.msra.mxu0 0.0
      %5616 = vmatprep.subr.mxu0 0.0
      %5617 = vmatpush1.msra.mxu0 0.0
      %5618 = vmatprep.subr.mxu0 0.0
      %5619 = vmatpush1.msra.mxu0 0.0
      %5620 = vmatprep.subr.mxu0 0.0
      %5621 = vmatpush1.msra.mxu0 0.0
      %5622 = vmatprep.subr.mxu0 0.0
      %5623 = vmatpush1.msra.mxu0 0.0
      %5624 = vmatprep.subr.mxu0 0.0
      %5625 = vmatpush1.msra.mxu0 0.0
      %5626 = vmatprep.subr.mxu0 0.0
      %5627 = vmatpush1.msra.mxu0 0.0
      %5628 = vmatprep.subr.mxu0 0.0
      %5629 = vmatpush1.msra.mxu0 0.0
      %5630 = vmatprep.subr.mxu0 0.0
      %5631 = vmatpush1.msra.mxu0 0.0
      %5632 = vmatprep.subr.mxu0 0.0
      %5633 = vmatpush1.msra.mxu0 0.0
      %5634 = vmatprep.subr.mxu0 0.0
      %5635 = vmatpush1.msra.mxu0 0.0
      %5636 = vmatprep.subr.mxu0 0.0
      %5637 = vmatpush1.msra.mxu0 0.0
      %5638 = vmatprep.subr.mxu0 0.0
      %5639 = vmatpush1.msra.mxu0 0.0
      %5640 = vmatprep.subr.mxu0 0.0
      %5641 = vmatpush1.msra.mxu0 0.0
      %5642 = vmatprep.subr.mxu0 0.0
      %5643 = vmatpush1.msra.mxu0 0.0
      %5644 = vmatprep.subr.mxu0 0.0
      %5645 = vmatpush1.msra.mxu0 0.0
      %5646 = vmatprep.subr.mxu0 0.0
      %5647 = vmatpush1.msra.mxu0 0.0
      %5648 = vmatprep.subr.mxu0 0.0
      %5649 = vmatpush1.msra.mxu0 0.0
      %5650 = vmatprep.subr.mxu0 0.0
      %5651 = vmatpush1.msra.mxu0 0.0
      %5652 = vmatprep.subr.mxu0 0.0
      %5653 = vmatpush1.msra.mxu0 0.0
      %5654 = vmatprep.subr.mxu0 0.0
      %5655 = vmatpush1.msra.mxu0 0.0
      %5656 = vmatprep.subr.mxu0 0.0
      %5657 = vmatpush1.msra.mxu0 0.0
      %5658 = vmatprep.subr.mxu0 0.0
      %5659 = vmatpush1.msra.mxu0 0.0
      %5660 = vmatprep.subr.mxu0 0.0
      %5661 = vmatpush1.msra.mxu0 0.0
      %5662 = vmatprep.subr.mxu0 0.0
      %5663 = vmatpush1.msra.mxu0 0.0
      %5664 = vmatprep.subr.mxu0 0.0
      %5665 = vmatpush1.msra.mxu0 0.0
      %5666 = vmatprep.subr.mxu0 0.0
      %5667 = vmatpush1.msra.mxu0 0.0
      %5668 = vmatprep.subr.mxu0 0.0
      %5669 = vmatpush1.msra.mxu0 0.0
      %5670 = vmatprep.subr.mxu0 0.0
      %5671 = vmatpush1.msra.mxu0 0.0
      %5672 = vmatprep.mubr.f32.mxu0 0.0
      %5673 = vmatmul.mubr.f32.gmra.mrb[0].mxu0 %v5585
      %v5674 = vpop.f32.mrb[0].mxu0
      %v5675 = vadd.f32 0.0, %v5674
      %v5676 = vpop.f32.mrb[0].mxu0
      %5677 = vmatprep.mubr.f32.mxu0 0.0
      %5678 = vmatmul.mubr.f32.gmra.mrb[0].mxu0 %v5588
      %v5679 = vpop.f32.mrb[0].mxu0
      %v5680 = vadd.f32 0.0, %v5679
      %v5681 = vpop.f32.mrb[0].mxu0
      %5682 = vmatprep.mubr.f32.mxu0 0.0
      %5683 = vmatmul.mubr.f32.gmra.mrb[0].mxu0 %v5591
      %v5684 = vpop.f32.mrb[0].mxu0
      %v5685 = vadd.f32 0.0, %v5684
      %v5686 = vpop.f32.mrb[0].mxu0
      %5687 = vmatprep.mubr.f32.mxu0 0.0
      %5688 = vmatmul.mubr.f32.gmra.mrb[0].mxu0 %v5594
      %v5689 = vpop.f32.mrb[0].mxu0
      %v5690 = vadd.f32 0.0, %v5689
      %v5691 = vpop.f32.mrb[0].mxu0
      %5692 = vmatprep.mubr.f32.mxu0 0.0
      %5693 = vmatmul.mubr.f32.gmra.mrb[0].mxu0 %v5597
      %v5694 = vpop.f32.mrb[0].mxu0
      %v5695 = vadd.f32 0.0, %v5694
      %v5696 = vpop.f32.mrb[0].mxu0
      %5697 = vmatprep.mubr.f32.mxu0 0.0
      %5698 = vmatmul.mubr.f32.gmra.mrb[0].mxu0 %v5600
      %v5699 = vpop.f32.mrb[0].mxu0
      %v5700 = vadd.f32 0.0, %v5699
      %v5701 = vpop.f32.mrb[0].mxu0
      %5702 = vmatprep.mubr.f32.mxu0 0.0
      %5703 = vmatmul.mubr.f32.gmra.mrb[0].mxu0 %v5603
      %v5704 = vpop.f32.mrb[0].mxu0
      %v5705 = vadd.f32 0.0, %v5704
      %v5706 = vpop.f32.mrb[0].mxu0
      %5707 = vmatprep.mubr.f32.mxu0 0.0
      %5708 = vmatmul.mubr.f32.gmra.mrb[0].mxu0 %v5606
      %v5709 = vpop.f32.mrb[0].mxu0
      %v5710 = vadd.f32 0.0, %v5709
      %v5711 = vpop.f32.mrb[0].mxu0
      %5712 = vdwg.mxu0
      %v5713 = vadd.f32 %v5573, %v5675
      %v5714 = vadd.f32 %v5573, %v5680
      %v5715 = vadd.f32 %v5573, %v5685
      %v5716 = vadd.f32 %v5573, %v5690
      %v5717 = vadd.f32 %v5573, %v5695
      %v5718 = vadd.f32 %v5573, %v5700
      %v5719 = vadd.f32 %v5573, %v5705
      %v5720 = vadd.f32 %v5573, %v5710
      %v5721 = vld [vmem:[#allocation3 + $0x1] sm:$0xff]
      %v5722 = vld [vmem:[#allocation3 + $0x11] sm:$0xff]
      %v5723 = vld [vmem:[#allocation3 + $0x21] sm:$0xff]
      %v5724 = vld [vmem:[#allocation3 + $0x31] sm:$0xff]
      %v5725 = vld [vmem:[#allocation3 + $0x41] sm:$0xff]
      %v5726 = vld [vmem:[#allocation3 + $0x51] sm:$0xff]
      %v5727 = vld [vmem:[#allocation3 + $0x61] sm:$0xff]
      %v5728 = vld [vmem:[#allocation3 + $0x71] sm:$0xff]
      %s5729 = scalar_lea.vmem %s3, 8
      %v5730 = vld [vmem:[%s5729] sm:$0xff]
      %v5732 = vsel %vm5142, %v5721, 0
      %v5735 = vsel %vm5142, %v5722, 0
      %v5738 = vsel %vm5142, %v5723, 0
      %v5741 = vsel %vm5142, %v5724, 0
      %v5744 = vsel %vm5142, %v5725, 0
      %v5747 = vsel %vm5142, %v5726, 0
      %v5750 = vsel %vm5142, %v5727, 0
      %v5753 = vsel %vm5142, %v5728, 0
      %5755 = vmatprep.subr.mxu0 0.0
      %5756 = vmatpush1.msra.mxu0 %v5730
      %5757 = vmatprep.subr.mxu0 0.0
      %5758 = vmatpush1.msra.mxu0 0.0
      %5759 = vmatprep.subr.mxu0 0.0
      %5760 = vmatpush1.msra.mxu0 0.0
      %5761 = vmatprep.subr.mxu0 0.0
      %5762 = vmatpush1.msra.mxu0 0.0
      %5763 = vmatprep.subr.mxu0 0.0
      %5764 = vmatpush1.msra.mxu0 0.0
      %5765 = vmatprep.subr.mxu0 0.0
      %5766 = vmatpush1.msra.mxu0 0.0
      %5767 = vmatprep.subr.mxu0 0.0
      %5768 = vmatpush1.msra.mxu0 0.0
      %5769 = vmatprep.subr.mxu0 0.0
      %5770 = vmatpush1.msra.mxu0 0.0
      %5771 = vmatprep.subr.mxu0 0.0
      %5772 = vmatpush1.msra.mxu0 0.0
      %5773 = vmatprep.subr.mxu0 0.0
      %5774 = vmatpush1.msra.mxu0 0.0
      %5775 = vmatprep.subr.mxu0 0.0
      %5776 = vmatpush1.msra.mxu0 0.0
      %5777 = vmatprep.subr.mxu0 0.0
      %5778 = vmatpush1.msra.mxu0 0.0
      %5779 = vmatprep.subr.mxu0 0.0
      %5780 = vmatpush1.msra.mxu0 0.0
      %5781 = vmatprep.subr.mxu0 0.0
      %5782 = vmatpush1.msra.mxu0 0.0
      %5783 = vmatprep.subr.mxu0 0.0
      %5784 = vmatpush1.msra.mxu0 0.0
      %5785 = vmatprep.subr.mxu0 0.0
      %5786 = vmatpush1.msra.mxu0 0.0
      %5787 = vmatprep.subr.mxu0 0.0
      %5788 = vmatpush1.msra.mxu0 0.0
      %5789 = vmatprep.subr.mxu0 0.0
      %5790 = vmatpush1.msra.mxu0 0.0
      %5791 = vmatprep.subr.mxu0 0.0
      %5792 = vmatpush1.msra.mxu0 0.0
      %5793 = vmatprep.subr.mxu0 0.0
      %5794 = vmatpush1.msra.mxu0 0.0
      %5795 = vmatprep.subr.mxu0 0.0
      %5796 = vmatpush1.msra.mxu0 0.0
      %5797 = vmatprep.subr.mxu0 0.0
      %5798 = vmatpush1.msra.mxu0 0.0
      %5799 = vmatprep.subr.mxu0 0.0
      %5800 = vmatpush1.msra.mxu0 0.0
      %5801 = vmatprep.subr.mxu0 0.0
      %5802 = vmatpush1.msra.mxu0 0.0
      %5803 = vmatprep.subr.mxu0 0.0
      %5804 = vmatpush1.msra.mxu0 0.0
      %5805 = vmatprep.subr.mxu0 0.0
      %5806 = vmatpush1.msra.mxu0 0.0
      %5807 = vmatprep.subr.mxu0 0.0
      %5808 = vmatpush1.msra.mxu0 0.0
      %5809 = vmatprep.subr.mxu0 0.0
      %5810 = vmatpush1.msra.mxu0 0.0
      %5811 = vmatprep.subr.mxu0 0.0
      %5812 = vmatpush1.msra.mxu0 0.0
      %5813 = vmatprep.subr.mxu0 0.0
      %5814 = vmatpush1.msra.mxu0 0.0
      %5815 = vmatprep.subr.mxu0 0.0
      %5816 = vmatpush1.msra.mxu0 0.0
      %5817 = vmatprep.subr.mxu0 0.0
      %5818 = vmatpush1.msra.mxu0 0.0
      %5819 = vmatprep.mubr.f32.mxu0 0.0
      %5820 = vmatmul.mubr.f32.gmra.mrb[0].mxu0 %v5732
      %v5821 = vpop.f32.mrb[0].mxu0
      %v5822 = vadd.f32 0.0, %v5821
      %v5823 = vpop.f32.mrb[0].mxu0
      %5824 = vmatprep.mubr.f32.mxu0 0.0
      %5825 = vmatmul.mubr.f32.gmra.mrb[0].mxu0 %v5735
      %v5826 = vpop.f32.mrb[0].mxu0
      %v5827 = vadd.f32 0.0, %v5826
      %v5828 = vpop.f32.mrb[0].mxu0
      %5829 = vmatprep.mubr.f32.mxu0 0.0
      %5830 = vmatmul.mubr.f32.gmra.mrb[0].mxu0 %v5738
      %v5831 = vpop.f32.mrb[0].mxu0
      %v5832 = vadd.f32 0.0, %v5831
      %v5833 = vpop.f32.mrb[0].mxu0
      %5834 = vmatprep.mubr.f32.mxu0 0.0
      %5835 = vmatmul.mubr.f32.gmra.mrb[0].mxu0 %v5741
      %v5836 = vpop.f32.mrb[0].mxu0
      %v5837 = vadd.f32 0.0, %v5836
      %v5838 = vpop.f32.mrb[0].mxu0
      %5839 = vmatprep.mubr.f32.mxu0 0.0
      %5840 = vmatmul.mubr.f32.gmra.mrb[0].mxu0 %v5744
      %v5841 = vpop.f32.mrb[0].mxu0
      %v5842 = vadd.f32 0.0, %v5841
      %v5843 = vpop.f32.mrb[0].mxu0
      %5844 = vmatprep.mubr.f32.mxu0 0.0
      %5845 = vmatmul.mubr.f32.gmra.mrb[0].mxu0 %v5747
      %v5846 = vpop.f32.mrb[0].mxu0
      %v5847 = vadd.f32 0.0, %v5846
      %v5848 = vpop.f32.mrb[0].mxu0
      %5849 = vmatprep.mubr.f32.mxu0 0.0
      %5850 = vmatmul.mubr.f32.gmra.mrb[0].mxu0 %v5750
      %v5851 = vpop.f32.mrb[0].mxu0
      %v5852 = vadd.f32 0.0, %v5851
      %v5853 = vpop.f32.mrb[0].mxu0
      %5854 = vmatprep.mubr.f32.mxu0 0.0
      %5855 = vmatmul.mubr.f32.gmra.mrb[0].mxu0 %v5753
      %v5856 = vpop.f32.mrb[0].mxu0
      %v5857 = vadd.f32 0.0, %v5856
      %v5858 = vpop.f32.mrb[0].mxu0
      %5859 = vdwg.mxu0
      %v5860 = vadd.f32 %v5713, %v5822
      %v5861 = vadd.f32 %v5714, %v5827
      %v5862 = vadd.f32 %v5715, %v5832
      %v5863 = vadd.f32 %v5716, %v5837
      %v5864 = vadd.f32 %v5717, %v5842
      %v5865 = vadd.f32 %v5718, %v5847
      %v5866 = vadd.f32 %v5719, %v5852
      %v5867 = vadd.f32 %v5720, %v5857
      %v5868 = vld [vmem:[#allocation3 + $0x2] sm:$0xff]
      %v5869 = vld [vmem:[#allocation3 + $0x12] sm:$0xff]
      %v5870 = vld [vmem:[#allocation3 + $0x22] sm:$0xff]
      %v5871 = vld [vmem:[#allocation3 + $0x32] sm:$0xff]
      %v5872 = vld [vmem:[#allocation3 + $0x42] sm:$0xff]
      %v5873 = vld [vmem:[#allocation3 + $0x52] sm:$0xff]
      %v5874 = vld [vmem:[#allocation3 + $0x62] sm:$0xff]
      %v5875 = vld [vmem:[#allocation3 + $0x72] sm:$0xff]
      %s5876 = scalar_lea.vmem %s3, 16
      %v5877 = vld [vmem:[%s5876] sm:$0xff]
      %v5879 = vsel %vm5142, %v5868, 0
      %v5882 = vsel %vm5142, %v5869, 0
      %v5885 = vsel %vm5142, %v5870, 0
      %v5888 = vsel %vm5142, %v5871, 0
      %v5891 = vsel %vm5142, %v5872, 0
      %v5894 = vsel %vm5142, %v5873, 0
      %v5897 = vsel %vm5142, %v5874, 0
      %v5900 = vsel %vm5142, %v5875, 0
      %5902 = vmatprep.subr.mxu0 0.0
      %5903 = vmatpush1.msra.mxu0 %v5877
      %5904 = vmatprep.subr.mxu0 0.0
      %5905 = vmatpush1.msra.mxu0 0.0
      %5906 = vmatprep.subr.mxu0 0.0
      %5907 = vmatpush1.msra.mxu0 0.0
      %5908 = vmatprep.subr.mxu0 0.0
      %5909 = vmatpush1.msra.mxu0 0.0
      %5910 = vmatprep.subr.mxu0 0.0
      %5911 = vmatpush1.msra.mxu0 0.0
      %5912 = vmatprep.subr.mxu0 0.0
      %5913 = vmatpush1.msra.mxu0 0.0
      %5914 = vmatprep.subr.mxu0 0.0
      %5915 = vmatpush1.msra.mxu0 0.0
      %5916 = vmatprep.subr.mxu0 0.0
      %5917 = vmatpush1.msra.mxu0 0.0
      %5918 = vmatprep.subr.mxu0 0.0
      %5919 = vmatpush1.msra.mxu0 0.0
      %5920 = vmatprep.subr.mxu0 0.0
      %5921 = vmatpush1.msra.mxu0 0.0
      %5922 = vmatprep.subr.mxu0 0.0
      %5923 = vmatpush1.msra.mxu0 0.0
      %5924 = vmatprep.subr.mxu0 0.0
      %5925 = vmatpush1.msra.mxu0 0.0
      %5926 = vmatprep.subr.mxu0 0.0
      %5927 = vmatpush1.msra.mxu0 0.0
      %5928 = vmatprep.subr.mxu0 0.0
      %5929 = vmatpush1.msra.mxu0 0.0
      %5930 = vmatprep.subr.mxu0 0.0
      %5931 = vmatpush1.msra.mxu0 0.0
      %5932 = vmatprep.subr.mxu0 0.0
      %5933 = vmatpush1.msra.mxu0 0.0
      %5934 = vmatprep.subr.mxu0 0.0
      %5935 = vmatpush1.msra.mxu0 0.0
      %5936 = vmatprep.subr.mxu0 0.0
      %5937 = vmatpush1.msra.mxu0 0.0
      %5938 = vmatprep.subr.mxu0 0.0
      %5939 = vmatpush1.msra.mxu0 0.0
      %5940 = vmatprep.subr.mxu0 0.0
      %5941 = vmatpush1.msra.mxu0 0.0
      %5942 = vmatprep.subr.mxu0 0.0
      %5943 = vmatpush1.msra.mxu0 0.0
      %5944 = vmatprep.subr.mxu0 0.0
      %5945 = vmatpush1.msra.mxu0 0.0
      %5946 = vmatprep.subr.mxu0 0.0
      %5947 = vmatpush1.msra.mxu0 0.0
      %5948 = vmatprep.subr.mxu0 0.0
      %5949 = vmatpush1.msra.mxu0 0.0
      %5950 = vmatprep.subr.mxu0 0.0
      %5951 = vmatpush1.msra.mxu0 0.0
      %5952 = vmatprep.subr.mxu0 0.0
      %5953 = vmatpush1.msra.mxu0 0.0
      %5954 = vmatprep.subr.mxu0 0.0
      %5955 = vmatpush1.msra.mxu0 0.0
      %5956 = vmatprep.subr.mxu0 0.0
      %5957 = vmatpush1.msra.mxu0 0.0
      %5958 = vmatprep.subr.mxu0 0.0
      %5959 = vmatpush1.msra.mxu0 0.0
      %5960 = vmatprep.subr.mxu0 0.0
      %5961 = vmatpush1.msra.mxu0 0.0
      %5962 = vmatprep.subr.mxu0 0.0
      %5963 = vmatpush1.msra.mxu0 0.0
      %5964 = vmatprep.subr.mxu0 0.0
      %5965 = vmatpush1.msra.mxu0 0.0
      %5966 = vmatprep.mubr.f32.mxu0 0.0
      %5967 = vmatmul.mubr.f32.gmra.mrb[0].mxu0 %v5879
      %v5968 = vpop.f32.mrb[0].mxu0
      %v5969 = vadd.f32 0.0, %v5968
      %v5970 = vpop.f32.mrb[0].mxu0
      %5971 = vmatprep.mubr.f32.mxu0 0.0
      %5972 = vmatmul.mubr.f32.gmra.mrb[0].mxu0 %v5882
      %v5973 = vpop.f32.mrb[0].mxu0
      %v5974 = vadd.f32 0.0, %v5973
      %v5975 = vpop.f32.mrb[0].mxu0
      %5976 = vmatprep.mubr.f32.mxu0 0.0
      %5977 = vmatmul.mubr.f32.gmra.mrb[0].mxu0 %v5885
      %v5978 = vpop.f32.mrb[0].mxu0
      %v5979 = vadd.f32 0.0, %v5978
      %v5980 = vpop.f32.mrb[0].mxu0
      %5981 = vmatprep.mubr.f32.mxu0 0.0
      %5982 = vmatmul.mubr.f32.gmra.mrb[0].mxu0 %v5888
      %v5983 = vpop.f32.mrb[0].mxu0
      %v5984 = vadd.f32 0.0, %v5983
      %v5985 = vpop.f32.mrb[0].mxu0
      %5986 = vmatprep.mubr.f32.mxu0 0.0
      %5987 = vmatmul.mubr.f32.gmra.mrb[0].mxu0 %v5891
      %v5988 = vpop.f32.mrb[0].mxu0
      %v5989 = vadd.f32 0.0, %v5988
      %v5990 = vpop.f32.mrb[0].mxu0
      %5991 = vmatprep.mubr.f32.mxu0 0.0
      %5992 = vmatmul.mubr.f32.gmra.mrb[0].mxu0 %v5894
      %v5993 = vpop.f32.mrb[0].mxu0
      %v5994 = vadd.f32 0.0, %v5993
      %v5995 = vpop.f32.mrb[0].mxu0
      %5996 = vmatprep.mubr.f32.mxu0 0.0
      %5997 = vmatmul.mubr.f32.gmra.mrb[0].mxu0 %v5897
      %v5998 = vpop.f32.mrb[0].mxu0
      %v5999 = vadd.f32 0.0, %v5998
      %v6000 = vpop.f32.mrb[0].mxu0
      %6001 = vmatprep.mubr.f32.mxu0 0.0
      %6002 = vmatmul.mubr.f32.gmra.mrb[0].mxu0 %v5900
      %v6003 = vpop.f32.mrb[0].mxu0
      %v6004 = vadd.f32 0.0, %v6003
      %v6005 = vpop.f32.mrb[0].mxu0
      %6006 = vdwg.mxu0
      %v6007 = vadd.f32 %v5860, %v5969
      %v6008 = vadd.f32 %v5861, %v5974
      %v6009 = vadd.f32 %v5862, %v5979
      %v6010 = vadd.f32 %v5863, %v5984
      %v6011 = vadd.f32 %v5864, %v5989
      %v6012 = vadd.f32 %v5865, %v5994
      %v6013 = vadd.f32 %v5866, %v5999
      %v6014 = vadd.f32 %v5867, %v6004
      %v6015 = vld [vmem:[#allocation3 + $0x3] sm:$0xff]
      %v6016 = vld [vmem:[#allocation3 + $0x13] sm:$0xff]
      %v6017 = vld [vmem:[#allocation3 + $0x23] sm:$0xff]
      %v6018 = vld [vmem:[#allocation3 + $0x33] sm:$0xff]
      %v6019 = vld [vmem:[#allocation3 + $0x43] sm:$0xff]
      %v6020 = vld [vmem:[#allocation3 + $0x53] sm:$0xff]
      %v6021 = vld [vmem:[#allocation3 + $0x63] sm:$0xff]
      %v6022 = vld [vmem:[#allocation3 + $0x73] sm:$0xff]
      %s6023 = scalar_lea.vmem %s3, 24
      %v6024 = vld [vmem:[%s6023] sm:$0xff]
      %v6026 = vsel %vm5142, %v6015, 0
      %v6029 = vsel %vm5142, %v6016, 0
      %v6032 = vsel %vm5142, %v6017, 0
      %v6035 = vsel %vm5142, %v6018, 0
      %v6038 = vsel %vm5142, %v6019, 0
      %v6041 = vsel %vm5142, %v6020, 0
      %v6044 = vsel %vm5142, %v6021, 0
      %v6047 = vsel %vm5142, %v6022, 0
      %6049 = vmatprep.subr.mxu0 0.0
      %6050 = vmatpush1.msra.mxu0 %v6024
      %6051 = vmatprep.subr.mxu0 0.0
      %6052 = vmatpush1.msra.mxu0 0.0
      %6053 = vmatprep.subr.mxu0 0.0
      %6054 = vmatpush1.msra.mxu0 0.0
      %6055 = vmatprep.subr.mxu0 0.0
      %6056 = vmatpush1.msra.mxu0 0.0
      %6057 = vmatprep.subr.mxu0 0.0
      %6058 = vmatpush1.msra.mxu0 0.0
      %6059 = vmatprep.subr.mxu0 0.0
      %6060 = vmatpush1.msra.mxu0 0.0
      %6061 = vmatprep.subr.mxu0 0.0
      %6062 = vmatpush1.msra.mxu0 0.0
      %6063 = vmatprep.subr.mxu0 0.0
      %6064 = vmatpush1.msra.mxu0 0.0
      %6065 = vmatprep.subr.mxu0 0.0
      %6066 = vmatpush1.msra.mxu0 0.0
      %6067 = vmatprep.subr.mxu0 0.0
      %6068 = vmatpush1.msra.mxu0 0.0
      %6069 = vmatprep.subr.mxu0 0.0
      %6070 = vmatpush1.msra.mxu0 0.0
      %6071 = vmatprep.subr.mxu0 0.0
      %6072 = vmatpush1.msra.mxu0 0.0
      %6073 = vmatprep.subr.mxu0 0.0
      %6074 = vmatpush1.msra.mxu0 0.0
      %6075 = vmatprep.subr.mxu0 0.0
      %6076 = vmatpush1.msra.mxu0 0.0
      %6077 = vmatprep.subr.mxu0 0.0
      %6078 = vmatpush1.msra.mxu0 0.0
      %6079 = vmatprep.subr.mxu0 0.0
      %6080 = vmatpush1.msra.mxu0 0.0
      %6081 = vmatprep.subr.mxu0 0.0
      %6082 = vmatpush1.msra.mxu0 0.0
      %6083 = vmatprep.subr.mxu0 0.0
      %6084 = vmatpush1.msra.mxu0 0.0
      %6085 = vmatprep.subr.mxu0 0.0
      %6086 = vmatpush1.msra.mxu0 0.0
      %6087 = vmatprep.subr.mxu0 0.0
      %6088 = vmatpush1.msra.mxu0 0.0
      %6089 = vmatprep.subr.mxu0 0.0
      %6090 = vmatpush1.msra.mxu0 0.0
      %6091 = vmatprep.subr.mxu0 0.0
      %6092 = vmatpush1.msra.mxu0 0.0
      %6093 = vmatprep.subr.mxu0 0.0
      %6094 = vmatpush1.msra.mxu0 0.0
      %6095 = vmatprep.subr.mxu0 0.0
      %6096 = vmatpush1.msra.mxu0 0.0
      %6097 = vmatprep.subr.mxu0 0.0
      %6098 = vmatpush1.msra.mxu0 0.0
      %6099 = vmatprep.subr.mxu0 0.0
      %6100 = vmatpush1.msra.mxu0 0.0
      %6101 = vmatprep.subr.mxu0 0.0
      %6102 = vmatpush1.msra.mxu0 0.0
      %6103 = vmatprep.subr.mxu0 0.0
      %6104 = vmatpush1.msra.mxu0 0.0
      %6105 = vmatprep.subr.mxu0 0.0
      %6106 = vmatpush1.msra.mxu0 0.0
      %6107 = vmatprep.subr.mxu0 0.0
      %6108 = vmatpush1.msra.mxu0 0.0
      %6109 = vmatprep.subr.mxu0 0.0
      %6110 = vmatpush1.msra.mxu0 0.0
      %6111 = vmatprep.subr.mxu0 0.0
      %6112 = vmatpush1.msra.mxu0 0.0
      %6113 = vmatprep.mubr.f32.mxu0 0.0
      %6114 = vmatmul.mubr.f32.gmra.mrb[0].mxu0 %v6026
      %v6115 = vpop.f32.mrb[0].mxu0
      %v6116 = vadd.f32 0.0, %v6115
      %v6117 = vpop.f32.mrb[0].mxu0
      %6118 = vmatprep.mubr.f32.mxu0 0.0
      %6119 = vmatmul.mubr.f32.gmra.mrb[0].mxu0 %v6029
      %v6120 = vpop.f32.mrb[0].mxu0
      %v6121 = vadd.f32 0.0, %v6120
      %v6122 = vpop.f32.mrb[0].mxu0
      %6123 = vmatprep.mubr.f32.mxu0 0.0
      %6124 = vmatmul.mubr.f32.gmra.mrb[0].mxu0 %v6032
      %v6125 = vpop.f32.mrb[0].mxu0
      %v6126 = vadd.f32 0.0, %v6125
      %v6127 = vpop.f32.mrb[0].mxu0
      %6128 = vmatprep.mubr.f32.mxu0 0.0
      %6129 = vmatmul.mubr.f32.gmra.mrb[0].mxu0 %v6035
      %v6130 = vpop.f32.mrb[0].mxu0
      %v6131 = vadd.f32 0.0, %v6130
      %v6132 = vpop.f32.mrb[0].mxu0
      %6133 = vmatprep.mubr.f32.mxu0 0.0
      %6134 = vmatmul.mubr.f32.gmra.mrb[0].mxu0 %v6038
      %v6135 = vpop.f32.mrb[0].mxu0
      %v6136 = vadd.f32 0.0, %v6135
      %v6137 = vpop.f32.mrb[0].mxu0
      %6138 = vmatprep.mubr.f32.mxu0 0.0
      %6139 = vmatmul.mubr.f32.gmra.mrb[0].mxu0 %v6041
      %v6140 = vpop.f32.mrb[0].mxu0
      %v6141 = vadd.f32 0.0, %v6140
      %v6142 = vpop.f32.mrb[0].mxu0
      %6143 = vmatprep.mubr.f32.mxu0 0.0
      %6144 = vmatmul.mubr.f32.gmra.mrb[0].mxu0 %v6044
      %v6145 = vpop.f32.mrb[0].mxu0
      %v6146 = vadd.f32 0.0, %v6145
      %v6147 = vpop.f32.mrb[0].mxu0
      %6148 = vmatprep.mubr.f32.mxu0 0.0
      %6149 = vmatmul.mubr.f32.gmra.mrb[0].mxu0 %v6047
      %v6150 = vpop.f32.mrb[0].mxu0
      %v6151 = vadd.f32 0.0, %v6150
      %v6152 = vpop.f32.mrb[0].mxu0
      %6153 = vdwg.mxu0
      %v6154 = vadd.f32 %v6007, %v6116
      %v6155 = vadd.f32 %v6008, %v6121
      %v6156 = vadd.f32 %v6009, %v6126
      %v6157 = vadd.f32 %v6010, %v6131
      %v6158 = vadd.f32 %v6011, %v6136
      %v6159 = vadd.f32 %v6012, %v6141
      %v6160 = vadd.f32 %v6013, %v6146
      %v6161 = vadd.f32 %v6014, %v6151
      %v6162 = vld [vmem:[#allocation3 + $0x4] sm:$0xff]
      %v6163 = vld [vmem:[#allocation3 + $0x14] sm:$0xff]
      %v6164 = vld [vmem:[#allocation3 + $0x24] sm:$0xff]
      %v6165 = vld [vmem:[#allocation3 + $0x34] sm:$0xff]
      %v6166 = vld [vmem:[#allocation3 + $0x44] sm:$0xff]
      %v6167 = vld [vmem:[#allocation3 + $0x54] sm:$0xff]
      %v6168 = vld [vmem:[#allocation3 + $0x64] sm:$0xff]
      %v6169 = vld [vmem:[#allocation3 + $0x74] sm:$0xff]
      %s6170 = scalar_lea.vmem %s3, 32
      %v6171 = vld [vmem:[%s6170] sm:$0xff]
      %v6173 = vsel %vm5142, %v6162, 0
      %v6176 = vsel %vm5142, %v6163, 0
      %v6179 = vsel %vm5142, %v6164, 0
      %v6182 = vsel %vm5142, %v6165, 0
      %v6185 = vsel %vm5142, %v6166, 0
      %v6188 = vsel %vm5142, %v6167, 0
      %v6191 = vsel %vm5142, %v6168, 0
      %v6194 = vsel %vm5142, %v6169, 0
      %6196 = vmatprep.subr.mxu0 0.0
      %6197 = vmatpush1.msra.mxu0 %v6171
      %6198 = vmatprep.subr.mxu0 0.0
      %6199 = vmatpush1.msra.mxu0 0.0
      %6200 = vmatprep.subr.mxu0 0.0
      %6201 = vmatpush1.msra.mxu0 0.0
      %6202 = vmatprep.subr.mxu0 0.0
      %6203 = vmatpush1.msra.mxu0 0.0
      %6204 = vmatprep.subr.mxu0 0.0
      %6205 = vmatpush1.msra.mxu0 0.0
      %6206 = vmatprep.subr.mxu0 0.0
      %6207 = vmatpush1.msra.mxu0 0.0
      %6208 = vmatprep.subr.mxu0 0.0
      %6209 = vmatpush1.msra.mxu0 0.0
      %6210 = vmatprep.subr.mxu0 0.0
      %6211 = vmatpush1.msra.mxu0 0.0
      %6212 = vmatprep.subr.mxu0 0.0
      %6213 = vmatpush1.msra.mxu0 0.0
      %6214 = vmatprep.subr.mxu0 0.0
      %6215 = vmatpush1.msra.mxu0 0.0
      %6216 = vmatprep.subr.mxu0 0.0
      %6217 = vmatpush1.msra.mxu0 0.0
      %6218 = vmatprep.subr.mxu0 0.0
      %6219 = vmatpush1.msra.mxu0 0.0
      %6220 = vmatprep.subr.mxu0 0.0
      %6221 = vmatpush1.msra.mxu0 0.0
      %6222 = vmatprep.subr.mxu0 0.0
      %6223 = vmatpush1.msra.mxu0 0.0
      %6224 = vmatprep.subr.mxu0 0.0
      %6225 = vmatpush1.msra.mxu0 0.0
      %6226 = vmatprep.subr.mxu0 0.0
      %6227 = vmatpush1.msra.mxu0 0.0
      %6228 = vmatprep.subr.mxu0 0.0
      %6229 = vmatpush1.msra.mxu0 0.0
      %6230 = vmatprep.subr.mxu0 0.0
      %6231 = vmatpush1.msra.mxu0 0.0
      %6232 = vmatprep.subr.mxu0 0.0
      %6233 = vmatpush1.msra.mxu0 0.0
      %6234 = vmatprep.subr.mxu0 0.0
      %6235 = vmatpush1.msra.mxu0 0.0
      %6236 = vmatprep.subr.mxu0 0.0
      %6237 = vmatpush1.msra.mxu0 0.0
      %6238 = vmatprep.subr.mxu0 0.0
      %6239 = vmatpush1.msra.mxu0 0.0
      %6240 = vmatprep.subr.mxu0 0.0
      %6241 = vmatpush1.msra.mxu0 0.0
      %6242 = vmatprep.subr.mxu0 0.0
      %6243 = vmatpush1.msra.mxu0 0.0
      %6244 = vmatprep.subr.mxu0 0.0
      %6245 = vmatpush1.msra.mxu0 0.0
      %6246 = vmatprep.subr.mxu0 0.0
      %6247 = vmatpush1.msra.mxu0 0.0
      %6248 = vmatprep.subr.mxu0 0.0
      %6249 = vmatpush1.msra.mxu0 0.0
      %6250 = vmatprep.subr.mxu0 0.0
      %6251 = vmatpush1.msra.mxu0 0.0
      %6252 = vmatprep.subr.mxu0 0.0
      %6253 = vmatpush1.msra.mxu0 0.0
      %6254 = vmatprep.subr.mxu0 0.0
      %6255 = vmatpush1.msra.mxu0 0.0
      %6256 = vmatprep.subr.mxu0 0.0
      %6257 = vmatpush1.msra.mxu0 0.0
      %6258 = vmatprep.subr.mxu0 0.0
      %6259 = vmatpush1.msra.mxu0 0.0
      %6260 = vmatprep.mubr.f32.mxu0 0.0
      %6261 = vmatmul.mubr.f32.gmra.mrb[0].mxu0 %v6173
      %v6262 = vpop.f32.mrb[0].mxu0
      %v6263 = vadd.f32 0.0, %v6262
      %v6264 = vpop.f32.mrb[0].mxu0
      %6265 = vmatprep.mubr.f32.mxu0 0.0
      %6266 = vmatmul.mubr.f32.gmra.mrb[0].mxu0 %v6176
      %v6267 = vpop.f32.mrb[0].mxu0
      %v6268 = vadd.f32 0.0, %v6267
      %v6269 = vpop.f32.mrb[0].mxu0
      %6270 = vmatprep.mubr.f32.mxu0 0.0
      %6271 = vmatmul.mubr.f32.gmra.mrb[0].mxu0 %v6179
      %v6272 = vpop.f32.mrb[0].mxu0
      %v6273 = vadd.f32 0.0, %v6272
      %v6274 = vpop.f32.mrb[0].mxu0
      %6275 = vmatprep.mubr.f32.mxu0 0.0
      %6276 = vmatmul.mubr.f32.gmra.mrb[0].mxu0 %v6182
      %v6277 = vpop.f32.mrb[0].mxu0
      %v6278 = vadd.f32 0.0, %v6277
      %v6279 = vpop.f32.mrb[0].mxu0
      %6280 = vmatprep.mubr.f32.mxu0 0.0
      %6281 = vmatmul.mubr.f32.gmra.mrb[0].mxu0 %v6185
      %v6282 = vpop.f32.mrb[0].mxu0
      %v6283 = vadd.f32 0.0, %v6282
      %v6284 = vpop.f32.mrb[0].mxu0
      %6285 = vmatprep.mubr.f32.mxu0 0.0
      %6286 = vmatmul.mubr.f32.gmra.mrb[0].mxu0 %v6188
      %v6287 = vpop.f32.mrb[0].mxu0
      %v6288 = vadd.f32 0.0, %v6287
      %v6289 = vpop.f32.mrb[0].mxu0
      %6290 = vmatprep.mubr.f32.mxu0 0.0
      %6291 = vmatmul.mubr.f32.gmra.mrb[0].mxu0 %v6191
      %v6292 = vpop.f32.mrb[0].mxu0
      %v6293 = vadd.f32 0.0, %v6292
      %v6294 = vpop.f32.mrb[0].mxu0
      %6295 = vmatprep.mubr.f32.mxu0 0.0
      %6296 = vmatmul.mubr.f32.gmra.mrb[0].mxu0 %v6194
      %v6297 = vpop.f32.mrb[0].mxu0
      %v6298 = vadd.f32 0.0, %v6297
      %v6299 = vpop.f32.mrb[0].mxu0
      %6300 = vdwg.mxu0
      %v6301 = vadd.f32 %v6154, %v6263
      %v6302 = vadd.f32 %v6155, %v6268
      %v6303 = vadd.f32 %v6156, %v6273
      %v6304 = vadd.f32 %v6157, %v6278
      %v6305 = vadd.f32 %v6158, %v6283
      %v6306 = vadd.f32 %v6159, %v6288
      %v6307 = vadd.f32 %v6160, %v6293
      %v6308 = vadd.f32 %v6161, %v6298
      %s6309 = scalar_lea.vmem [#allocation3], 16
      %v6310 = vld [vmem:[%s6309] sm:$0xff]
      %v6311 = vld [vmem:[%s6309 + $0x10] sm:$0xff]
      %v6312 = vld [vmem:[%s6309 + $0x20] sm:$0xff]
      %v6313 = vld [vmem:[%s6309 + $0x30] sm:$0xff]
      %v6314 = vld [vmem:[%s6309 + $0x40] sm:$0xff]
      %v6315 = vld [vmem:[%s6309 + $0x50] sm:$0xff]
      %v6316 = vld [vmem:[%s6309 + $0x60] sm:$0xff]
      %v6317 = vld [vmem:[%s6309 + $0x70] sm:$0xff]
      %s6318 = scalar_lea.vmem %s3, 40
      %v6319 = vld [vmem:[%s6318] sm:$0xff]
      %v6321 = vsel %vm5142, %v6310, 0
      %v6324 = vsel %vm5142, %v6311, 0
      %v6327 = vsel %vm5142, %v6312, 0
      %v6330 = vsel %vm5142, %v6313, 0
      %v6333 = vsel %vm5142, %v6314, 0
      %v6336 = vsel %vm5142, %v6315, 0
      %v6339 = vsel %vm5142, %v6316, 0
      %v6342 = vsel %vm5142, %v6317, 0
      %6344 = vmatprep.subr.mxu0 0.0
      %6345 = vmatpush1.msra.mxu0 %v6319
      %6346 = vmatprep.subr.mxu0 0.0
      %6347 = vmatpush1.msra.mxu0 0.0
      %6348 = vmatprep.subr.mxu0 0.0
      %6349 = vmatpush1.msra.mxu0 0.0
      %6350 = vmatprep.subr.mxu0 0.0
      %6351 = vmatpush1.msra.mxu0 0.0
      %6352 = vmatprep.subr.mxu0 0.0
      %6353 = vmatpush1.msra.mxu0 0.0
      %6354 = vmatprep.subr.mxu0 0.0
      %6355 = vmatpush1.msra.mxu0 0.0
      %6356 = vmatprep.subr.mxu0 0.0
      %6357 = vmatpush1.msra.mxu0 0.0
      %6358 = vmatprep.subr.mxu0 0.0
      %6359 = vmatpush1.msra.mxu0 0.0
      %6360 = vmatprep.subr.mxu0 0.0
      %6361 = vmatpush1.msra.mxu0 0.0
      %6362 = vmatprep.subr.mxu0 0.0
      %6363 = vmatpush1.msra.mxu0 0.0
      %6364 = vmatprep.subr.mxu0 0.0
      %6365 = vmatpush1.msra.mxu0 0.0
      %6366 = vmatprep.subr.mxu0 0.0
      %6367 = vmatpush1.msra.mxu0 0.0
      %6368 = vmatprep.subr.mxu0 0.0
      %6369 = vmatpush1.msra.mxu0 0.0
      %6370 = vmatprep.subr.mxu0 0.0
      %6371 = vmatpush1.msra.mxu0 0.0
      %6372 = vmatprep.subr.mxu0 0.0
      %6373 = vmatpush1.msra.mxu0 0.0
      %6374 = vmatprep.subr.mxu0 0.0
      %6375 = vmatpush1.msra.mxu0 0.0
      %6376 = vmatprep.subr.mxu0 0.0
      %6377 = vmatpush1.msra.mxu0 0.0
      %6378 = vmatprep.subr.mxu0 0.0
      %6379 = vmatpush1.msra.mxu0 0.0
      %6380 = vmatprep.subr.mxu0 0.0
      %6381 = vmatpush1.msra.mxu0 0.0
      %6382 = vmatprep.subr.mxu0 0.0
      %6383 = vmatpush1.msra.mxu0 0.0
      %6384 = vmatprep.subr.mxu0 0.0
      %6385 = vmatpush1.msra.mxu0 0.0
      %6386 = vmatprep.subr.mxu0 0.0
      %6387 = vmatpush1.msra.mxu0 0.0
      %6388 = vmatprep.subr.mxu0 0.0
      %6389 = vmatpush1.msra.mxu0 0.0
      %6390 = vmatprep.subr.mxu0 0.0
      %6391 = vmatpush1.msra.mxu0 0.0
      %6392 = vmatprep.subr.mxu0 0.0
      %6393 = vmatpush1.msra.mxu0 0.0
      %6394 = vmatprep.subr.mxu0 0.0
      %6395 = vmatpush1.msra.mxu0 0.0
      %6396 = vmatprep.subr.mxu0 0.0
      %6397 = vmatpush1.msra.mxu0 0.0
      %6398 = vmatprep.subr.mxu0 0.0
      %6399 = vmatpush1.msra.mxu0 0.0
      %6400 = vmatprep.subr.mxu0 0.0
      %6401 = vmatpush1.msra.mxu0 0.0
      %6402 = vmatprep.subr.mxu0 0.0
      %6403 = vmatpush1.msra.mxu0 0.0
      %6404 = vmatprep.subr.mxu0 0.0
      %6405 = vmatpush1.msra.mxu0 0.0
      %6406 = vmatprep.subr.mxu0 0.0
      %6407 = vmatpush1.msra.mxu0 0.0
      %6408 = vmatprep.mubr.f32.mxu0 0.0
      %6409 = vmatmul.mubr.f32.gmra.mrb[0].mxu0 %v6321
      %v6410 = vpop.f32.mrb[0].mxu0
      %v6411 = vadd.f32 0.0, %v6410
      %v6412 = vpop.f32.mrb[0].mxu0
      %6413 = vmatprep.mubr.f32.mxu0 0.0
      %6414 = vmatmul.mubr.f32.gmra.mrb[0].mxu0 %v6324
      %v6415 = vpop.f32.mrb[0].mxu0
      %v6416 = vadd.f32 0.0, %v6415
      %v6417 = vpop.f32.mrb[0].mxu0
      %6418 = vmatprep.mubr.f32.mxu0 0.0
      %6419 = vmatmul.mubr.f32.gmra.mrb[0].mxu0 %v6327
      %v6420 = vpop.f32.mrb[0].mxu0
      %v6421 = vadd.f32 0.0, %v6420
      %v6422 = vpop.f32.mrb[0].mxu0
      %6423 = vmatprep.mubr.f32.mxu0 0.0
      %6424 = vmatmul.mubr.f32.gmra.mrb[0].mxu0 %v6330
      %v6425 = vpop.f32.mrb[0].mxu0
      %v6426 = vadd.f32 0.0, %v6425
      %v6427 = vpop.f32.mrb[0].mxu0
      %6428 = vmatprep.mubr.f32.mxu0 0.0
      %6429 = vmatmul.mubr.f32.gmra.mrb[0].mxu0 %v6333
      %v6430 = vpop.f32.mrb[0].mxu0
      %v6431 = vadd.f32 0.0, %v6430
      %v6432 = vpop.f32.mrb[0].mxu0
      %6433 = vmatprep.mubr.f32.mxu0 0.0
      %6434 = vmatmul.mubr.f32.gmra.mrb[0].mxu0 %v6336
      %v6435 = vpop.f32.mrb[0].mxu0
      %v6436 = vadd.f32 0.0, %v6435
      %v6437 = vpop.f32.mrb[0].mxu0
      %6438 = vmatprep.mubr.f32.mxu0 0.0
      %6439 = vmatmul.mubr.f32.gmra.mrb[0].mxu0 %v6339
      %v6440 = vpop.f32.mrb[0].mxu0
      %v6441 = vadd.f32 0.0, %v6440
      %v6442 = vpop.f32.mrb[0].mxu0
      %6443 = vmatprep.mubr.f32.mxu0 0.0
      %6444 = vmatmul.mubr.f32.gmra.mrb[0].mxu0 %v6342
      %v6445 = vpop.f32.mrb[0].mxu0
      %v6446 = vadd.f32 0.0, %v6445
      %v6447 = vpop.f32.mrb[0].mxu0
      %6448 = vdwg.mxu0
      %v6449 = vadd.f32 %v6301, %v6411
      %v6450 = vadd.f32 %v6302, %v6416
      %v6451 = vadd.f32 %v6303, %v6421
      %v6452 = vadd.f32 %v6304, %v6426
      %v6453 = vadd.f32 %v6305, %v6431
      %v6454 = vadd.f32 %v6306, %v6436
      %v6455 = vadd.f32 %v6307, %v6441
      %v6456 = vadd.f32 %v6308, %v6446
      %v6457 = vld [vmem:[%s6309 + $0x1] sm:$0xff]
      %v6458 = vld [vmem:[%s6309 + $0x11] sm:$0xff]
      %v6459 = vld [vmem:[%s6309 + $0x21] sm:$0xff]
      %v6460 = vld [vmem:[%s6309 + $0x31] sm:$0xff]
      %v6461 = vld [vmem:[%s6309 + $0x41] sm:$0xff]
      %v6462 = vld [vmem:[%s6309 + $0x51] sm:$0xff]
      %v6463 = vld [vmem:[%s6309 + $0x61] sm:$0xff]
      %v6464 = vld [vmem:[%s6309 + $0x71] sm:$0xff]
      %s6465 = scalar_lea.vmem %s3, 48
      %v6466 = vld [vmem:[%s6465] sm:$0xff]
      %v6468 = vsel %vm5142, %v6457, 0
      %v6471 = vsel %vm5142, %v6458, 0
      %v6474 = vsel %vm5142, %v6459, 0
      %v6477 = vsel %vm5142, %v6460, 0
      %v6480 = vsel %vm5142, %v6461, 0
      %v6483 = vsel %vm5142, %v6462, 0
      %v6486 = vsel %vm5142, %v6463, 0
      %v6489 = vsel %vm5142, %v6464, 0
      %6491 = vmatprep.subr.mxu0 0.0
      %6492 = vmatpush1.msra.mxu0 %v6466
      %6493 = vmatprep.subr.mxu0 0.0
      %6494 = vmatpush1.msra.mxu0 0.0
      %6495 = vmatprep.subr.mxu0 0.0
      %6496 = vmatpush1.msra.mxu0 0.0
      %6497 = vmatprep.subr.mxu0 0.0
      %6498 = vmatpush1.msra.mxu0 0.0
      %6499 = vmatprep.subr.mxu0 0.0
      %6500 = vmatpush1.msra.mxu0 0.0
      %6501 = vmatprep.subr.mxu0 0.0
      %6502 = vmatpush1.msra.mxu0 0.0
      %6503 = vmatprep.subr.mxu0 0.0
      %6504 = vmatpush1.msra.mxu0 0.0
      %6505 = vmatprep.subr.mxu0 0.0
      %6506 = vmatpush1.msra.mxu0 0.0
      %6507 = vmatprep.subr.mxu0 0.0
      %6508 = vmatpush1.msra.mxu0 0.0
      %6509 = vmatprep.subr.mxu0 0.0
      %6510 = vmatpush1.msra.mxu0 0.0
      %6511 = vmatprep.subr.mxu0 0.0
      %6512 = vmatpush1.msra.mxu0 0.0
      %6513 = vmatprep.subr.mxu0 0.0
      %6514 = vmatpush1.msra.mxu0 0.0
      %6515 = vmatprep.subr.mxu0 0.0
      %6516 = vmatpush1.msra.mxu0 0.0
      %6517 = vmatprep.subr.mxu0 0.0
      %6518 = vmatpush1.msra.mxu0 0.0
      %6519 = vmatprep.subr.mxu0 0.0
      %6520 = vmatpush1.msra.mxu0 0.0
      %6521 = vmatprep.subr.mxu0 0.0
      %6522 = vmatpush1.msra.mxu0 0.0
      %6523 = vmatprep.subr.mxu0 0.0
      %6524 = vmatpush1.msra.mxu0 0.0
      %6525 = vmatprep.subr.mxu0 0.0
      %6526 = vmatpush1.msra.mxu0 0.0
      %6527 = vmatprep.subr.mxu0 0.0
      %6528 = vmatpush1.msra.mxu0 0.0
      %6529 = vmatprep.subr.mxu0 0.0
      %6530 = vmatpush1.msra.mxu0 0.0
      %6531 = vmatprep.subr.mxu0 0.0
      %6532 = vmatpush1.msra.mxu0 0.0
      %6533 = vmatprep.subr.mxu0 0.0
      %6534 = vmatpush1.msra.mxu0 0.0
      %6535 = vmatprep.subr.mxu0 0.0
      %6536 = vmatpush1.msra.mxu0 0.0
      %6537 = vmatprep.subr.mxu0 0.0
      %6538 = vmatpush1.msra.mxu0 0.0
      %6539 = vmatprep.subr.mxu0 0.0
      %6540 = vmatpush1.msra.mxu0 0.0
      %6541 = vmatprep.subr.mxu0 0.0
      %6542 = vmatpush1.msra.mxu0 0.0
      %6543 = vmatprep.subr.mxu0 0.0
      %6544 = vmatpush1.msra.mxu0 0.0
      %6545 = vmatprep.subr.mxu0 0.0
      %6546 = vmatpush1.msra.mxu0 0.0
      %6547 = vmatprep.subr.mxu0 0.0
      %6548 = vmatpush1.msra.mxu0 0.0
      %6549 = vmatprep.subr.mxu0 0.0
      %6550 = vmatpush1.msra.mxu0 0.0
      %6551 = vmatprep.subr.mxu0 0.0
      %6552 = vmatpush1.msra.mxu0 0.0
      %6553 = vmatprep.subr.mxu0 0.0
      %6554 = vmatpush1.msra.mxu0 0.0
      %6555 = vmatprep.mubr.f32.mxu0 0.0
      %6556 = vmatmul.mubr.f32.gmra.mrb[0].mxu0 %v6468
      %v6557 = vpop.f32.mrb[0].mxu0
      %v6558 = vadd.f32 0.0, %v6557
      %v6559 = vpop.f32.mrb[0].mxu0
      %6560 = vmatprep.mubr.f32.mxu0 0.0
      %6561 = vmatmul.mubr.f32.gmra.mrb[0].mxu0 %v6471
      %v6562 = vpop.f32.mrb[0].mxu0
      %v6563 = vadd.f32 0.0, %v6562
      %v6564 = vpop.f32.mrb[0].mxu0
      %6565 = vmatprep.mubr.f32.mxu0 0.0
      %6566 = vmatmul.mubr.f32.gmra.mrb[0].mxu0 %v6474
      %v6567 = vpop.f32.mrb[0].mxu0
      %v6568 = vadd.f32 0.0, %v6567
      %v6569 = vpop.f32.mrb[0].mxu0
      %6570 = vmatprep.mubr.f32.mxu0 0.0
      %6571 = vmatmul.mubr.f32.gmra.mrb[0].mxu0 %v6477
      %v6572 = vpop.f32.mrb[0].mxu0
      %v6573 = vadd.f32 0.0, %v6572
      %v6574 = vpop.f32.mrb[0].mxu0
      %6575 = vmatprep.mubr.f32.mxu0 0.0
      %6576 = vmatmul.mubr.f32.gmra.mrb[0].mxu0 %v6480
      %v6577 = vpop.f32.mrb[0].mxu0
      %v6578 = vadd.f32 0.0, %v6577
      %v6579 = vpop.f32.mrb[0].mxu0
      %6580 = vmatprep.mubr.f32.mxu0 0.0
      %6581 = vmatmul.mubr.f32.gmra.mrb[0].mxu0 %v6483
      %v6582 = vpop.f32.mrb[0].mxu0
      %v6583 = vadd.f32 0.0, %v6582
      %v6584 = vpop.f32.mrb[0].mxu0
      %6585 = vmatprep.mubr.f32.mxu0 0.0
      %6586 = vmatmul.mubr.f32.gmra.mrb[0].mxu0 %v6486
      %v6587 = vpop.f32.mrb[0].mxu0
      %v6588 = vadd.f32 0.0, %v6587
      %v6589 = vpop.f32.mrb[0].mxu0
      %6590 = vmatprep.mubr.f32.mxu0 0.0
      %6591 = vmatmul.mubr.f32.gmra.mrb[0].mxu0 %v6489
      %v6592 = vpop.f32.mrb[0].mxu0
      %v6593 = vadd.f32 0.0, %v6592
      %v6594 = vpop.f32.mrb[0].mxu0
      %6595 = vdwg.mxu0
      %v6596 = vadd.f32 %v6449, %v6558
      %v6597 = vadd.f32 %v6450, %v6563
      %v6598 = vadd.f32 %v6451, %v6568
      %v6599 = vadd.f32 %v6452, %v6573
      %v6600 = vadd.f32 %v6453, %v6578
      %v6601 = vadd.f32 %v6454, %v6583
      %v6602 = vadd.f32 %v6455, %v6588
      %v6603 = vadd.f32 %v6456, %v6593
      %v6604 = vld [vmem:[%s6309 + $0x2] sm:$0xff]
      %v6605 = vld [vmem:[%s6309 + $0x12] sm:$0xff]
      %v6606 = vld [vmem:[%s6309 + $0x22] sm:$0xff]
      %v6607 = vld [vmem:[%s6309 + $0x32] sm:$0xff]
      %v6608 = vld [vmem:[%s6309 + $0x42] sm:$0xff]
      %v6609 = vld [vmem:[%s6309 + $0x52] sm:$0xff]
      %v6610 = vld [vmem:[%s6309 + $0x62] sm:$0xff]
      %v6611 = vld [vmem:[%s6309 + $0x72] sm:$0xff]
      %s6612 = scalar_lea.vmem %s3, 56
      %v6613 = vld [vmem:[%s6612] sm:$0xff]
      %v6615 = vsel %vm5142, %v6604, 0
      %v6618 = vsel %vm5142, %v6605, 0
      %v6621 = vsel %vm5142, %v6606, 0
      %v6624 = vsel %vm5142, %v6607, 0
      %v6627 = vsel %vm5142, %v6608, 0
      %v6630 = vsel %vm5142, %v6609, 0
      %v6633 = vsel %vm5142, %v6610, 0
      %v6636 = vsel %vm5142, %v6611, 0
      %6638 = vmatprep.subr.mxu0 0.0
      %6639 = vmatpush1.msra.mxu0 %v6613
      %6640 = vmatprep.subr.mxu0 0.0
      %6641 = vmatpush1.msra.mxu0 0.0
      %6642 = vmatprep.subr.mxu0 0.0
      %6643 = vmatpush1.msra.mxu0 0.0
      %6644 = vmatprep.subr.mxu0 0.0
      %6645 = vmatpush1.msra.mxu0 0.0
      %6646 = vmatprep.subr.mxu0 0.0
      %6647 = vmatpush1.msra.mxu0 0.0
      %6648 = vmatprep.subr.mxu0 0.0
      %6649 = vmatpush1.msra.mxu0 0.0
      %6650 = vmatprep.subr.mxu0 0.0
      %6651 = vmatpush1.msra.mxu0 0.0
      %6652 = vmatprep.subr.mxu0 0.0
      %6653 = vmatpush1.msra.mxu0 0.0
      %6654 = vmatprep.subr.mxu0 0.0
      %6655 = vmatpush1.msra.mxu0 0.0
      %6656 = vmatprep.subr.mxu0 0.0
      %6657 = vmatpush1.msra.mxu0 0.0
      %6658 = vmatprep.subr.mxu0 0.0
      %6659 = vmatpush1.msra.mxu0 0.0
      %6660 = vmatprep.subr.mxu0 0.0
      %6661 = vmatpush1.msra.mxu0 0.0
      %6662 = vmatprep.subr.mxu0 0.0
      %6663 = vmatpush1.msra.mxu0 0.0
      %6664 = vmatprep.subr.mxu0 0.0
      %6665 = vmatpush1.msra.mxu0 0.0
      %6666 = vmatprep.subr.mxu0 0.0
      %6667 = vmatpush1.msra.mxu0 0.0
      %6668 = vmatprep.subr.mxu0 0.0
      %6669 = vmatpush1.msra.mxu0 0.0
      %6670 = vmatprep.subr.mxu0 0.0
      %6671 = vmatpush1.msra.mxu0 0.0
      %6672 = vmatprep.subr.mxu0 0.0
      %6673 = vmatpush1.msra.mxu0 0.0
      %6674 = vmatprep.subr.mxu0 0.0
      %6675 = vmatpush1.msra.mxu0 0.0
      %6676 = vmatprep.subr.mxu0 0.0
      %6677 = vmatpush1.msra.mxu0 0.0
      %6678 = vmatprep.subr.mxu0 0.0
      %6679 = vmatpush1.msra.mxu0 0.0
      %6680 = vmatprep.subr.mxu0 0.0
      %6681 = vmatpush1.msra.mxu0 0.0
      %6682 = vmatprep.subr.mxu0 0.0
      %6683 = vmatpush1.msra.mxu0 0.0
      %6684 = vmatprep.subr.mxu0 0.0
      %6685 = vmatpush1.msra.mxu0 0.0
      %6686 = vmatprep.subr.mxu0 0.0
      %6687 = vmatpush1.msra.mxu0 0.0
      %6688 = vmatprep.subr.mxu0 0.0
      %6689 = vmatpush1.msra.mxu0 0.0
      %6690 = vmatprep.subr.mxu0 0.0
      %6691 = vmatpush1.msra.mxu0 0.0
      %6692 = vmatprep.subr.mxu0 0.0
      %6693 = vmatpush1.msra.mxu0 0.0
      %6694 = vmatprep.subr.mxu0 0.0
      %6695 = vmatpush1.msra.mxu0 0.0
      %6696 = vmatprep.subr.mxu0 0.0
      %6697 = vmatpush1.msra.mxu0 0.0
      %6698 = vmatprep.subr.mxu0 0.0
      %6699 = vmatpush1.msra.mxu0 0.0
      %6700 = vmatprep.subr.mxu0 0.0
      %6701 = vmatpush1.msra.mxu0 0.0
      %6702 = vmatprep.mubr.f32.mxu0 0.0
      %6703 = vmatmul.mubr.f32.gmra.mrb[0].mxu0 %v6615
      %v6704 = vpop.f32.mrb[0].mxu0
      %v6705 = vadd.f32 0.0, %v6704
      %v6706 = vpop.f32.mrb[0].mxu0
      %6707 = vmatprep.mubr.f32.mxu0 0.0
      %6708 = vmatmul.mubr.f32.gmra.mrb[0].mxu0 %v6618
      %v6709 = vpop.f32.mrb[0].mxu0
      %v6710 = vadd.f32 0.0, %v6709
      %v6711 = vpop.f32.mrb[0].mxu0
      %6712 = vmatprep.mubr.f32.mxu0 0.0
      %6713 = vmatmul.mubr.f32.gmra.mrb[0].mxu0 %v6621
      %v6714 = vpop.f32.mrb[0].mxu0
      %v6715 = vadd.f32 0.0, %v6714
      %v6716 = vpop.f32.mrb[0].mxu0
      %6717 = vmatprep.mubr.f32.mxu0 0.0
      %6718 = vmatmul.mubr.f32.gmra.mrb[0].mxu0 %v6624
      %v6719 = vpop.f32.mrb[0].mxu0
      %v6720 = vadd.f32 0.0, %v6719
      %v6721 = vpop.f32.mrb[0].mxu0
      %6722 = vmatprep.mubr.f32.mxu0 0.0
      %6723 = vmatmul.mubr.f32.gmra.mrb[0].mxu0 %v6627
      %v6724 = vpop.f32.mrb[0].mxu0
      %v6725 = vadd.f32 0.0, %v6724
      %v6726 = vpop.f32.mrb[0].mxu0
      %6727 = vmatprep.mubr.f32.mxu0 0.0
      %6728 = vmatmul.mubr.f32.gmra.mrb[0].mxu0 %v6630
      %v6729 = vpop.f32.mrb[0].mxu0
      %v6730 = vadd.f32 0.0, %v6729
      %v6731 = vpop.f32.mrb[0].mxu0
      %6732 = vmatprep.mubr.f32.mxu0 0.0
      %6733 = vmatmul.mubr.f32.gmra.mrb[0].mxu0 %v6633
      %v6734 = vpop.f32.mrb[0].mxu0
      %v6735 = vadd.f32 0.0, %v6734
      %v6736 = vpop.f32.mrb[0].mxu0
      %6737 = vmatprep.mubr.f32.mxu0 0.0
      %6738 = vmatmul.mubr.f32.gmra.mrb[0].mxu0 %v6636
      %v6739 = vpop.f32.mrb[0].mxu0
      %v6740 = vadd.f32 0.0, %v6739
      %v6741 = vpop.f32.mrb[0].mxu0
      %6742 = vdwg.mxu0
      %v6743 = vadd.f32 %v6596, %v6705
      %v6744 = vadd.f32 %v6597, %v6710
      %v6745 = vadd.f32 %v6598, %v6715
      %v6746 = vadd.f32 %v6599, %v6720
      %v6747 = vadd.f32 %v6600, %v6725
      %v6748 = vadd.f32 %v6601, %v6730
      %v6749 = vadd.f32 %v6602, %v6735
      %v6750 = vadd.f32 %v6603, %v6740
      %v6751 = vld [vmem:[%s6309 + $0x3] sm:$0xff]
      %v6752 = vld [vmem:[%s6309 + $0x13] sm:$0xff]
      %v6753 = vld [vmem:[%s6309 + $0x23] sm:$0xff]
      %v6754 = vld [vmem:[%s6309 + $0x33] sm:$0xff]
      %v6755 = vld [vmem:[%s6309 + $0x43] sm:$0xff]
      %v6756 = vld [vmem:[%s6309 + $0x53] sm:$0xff]
      %v6757 = vld [vmem:[%s6309 + $0x63] sm:$0xff]
      %v6758 = vld [vmem:[%s6309 + $0x73] sm:$0xff]
      %s6759 = scalar_lea.vmem %s3, 64
      %v6760 = vld [vmem:[%s6759] sm:$0xff]
      %v6762 = vsel %vm5142, %v6751, 0
      %v6765 = vsel %vm5142, %v6752, 0
      %v6768 = vsel %vm5142, %v6753, 0
      %v6771 = vsel %vm5142, %v6754, 0
      %v6774 = vsel %vm5142, %v6755, 0
      %v6777 = vsel %vm5142, %v6756, 0
      %v6780 = vsel %vm5142, %v6757, 0
      %v6783 = vsel %vm5142, %v6758, 0
      %6785 = vmatprep.subr.mxu0 0.0
      %6786 = vmatpush1.msra.mxu0 %v6760
      %6787 = vmatprep.subr.mxu0 0.0
      %6788 = vmatpush1.msra.mxu0 0.0
      %6789 = vmatprep.subr.mxu0 0.0
      %6790 = vmatpush1.msra.mxu0 0.0
      %6791 = vmatprep.subr.mxu0 0.0
      %6792 = vmatpush1.msra.mxu0 0.0
      %6793 = vmatprep.subr.mxu0 0.0
      %6794 = vmatpush1.msra.mxu0 0.0
      %6795 = vmatprep.subr.mxu0 0.0
      %6796 = vmatpush1.msra.mxu0 0.0
      %6797 = vmatprep.subr.mxu0 0.0
      %6798 = vmatpush1.msra.mxu0 0.0
      %6799 = vmatprep.subr.mxu0 0.0
      %6800 = vmatpush1.msra.mxu0 0.0
      %6801 = vmatprep.subr.mxu0 0.0
      %6802 = vmatpush1.msra.mxu0 0.0
      %6803 = vmatprep.subr.mxu0 0.0
      %6804 = vmatpush1.msra.mxu0 0.0
      %6805 = vmatprep.subr.mxu0 0.0
      %6806 = vmatpush1.msra.mxu0 0.0
      %6807 = vmatprep.subr.mxu0 0.0
      %6808 = vmatpush1.msra.mxu0 0.0
      %6809 = vmatprep.subr.mxu0 0.0
      %6810 = vmatpush1.msra.mxu0 0.0
      %6811 = vmatprep.subr.mxu0 0.0
      %6812 = vmatpush1.msra.mxu0 0.0
      %6813 = vmatprep.subr.mxu0 0.0
      %6814 = vmatpush1.msra.mxu0 0.0
      %6815 = vmatprep.subr.mxu0 0.0
      %6816 = vmatpush1.msra.mxu0 0.0
      %6817 = vmatprep.subr.mxu0 0.0
      %6818 = vmatpush1.msra.mxu0 0.0
      %6819 = vmatprep.subr.mxu0 0.0
      %6820 = vmatpush1.msra.mxu0 0.0
      %6821 = vmatprep.subr.mxu0 0.0
      %6822 = vmatpush1.msra.mxu0 0.0
      %6823 = vmatprep.subr.mxu0 0.0
      %6824 = vmatpush1.msra.mxu0 0.0
      %6825 = vmatprep.subr.mxu0 0.0
      %6826 = vmatpush1.msra.mxu0 0.0
      %6827 = vmatprep.subr.mxu0 0.0
      %6828 = vmatpush1.msra.mxu0 0.0
      %6829 = vmatprep.subr.mxu0 0.0
      %6830 = vmatpush1.msra.mxu0 0.0
      %6831 = vmatprep.subr.mxu0 0.0
      %6832 = vmatpush1.msra.mxu0 0.0
      %6833 = vmatprep.subr.mxu0 0.0
      %6834 = vmatpush1.msra.mxu0 0.0
      %6835 = vmatprep.subr.mxu0 0.0
      %6836 = vmatpush1.msra.mxu0 0.0
      %6837 = vmatprep.subr.mxu0 0.0
      %6838 = vmatpush1.msra.mxu0 0.0
      %6839 = vmatprep.subr.mxu0 0.0
      %6840 = vmatpush1.msra.mxu0 0.0
      %6841 = vmatprep.subr.mxu0 0.0
      %6842 = vmatpush1.msra.mxu0 0.0
      %6843 = vmatprep.subr.mxu0 0.0
      %6844 = vmatpush1.msra.mxu0 0.0
      %6845 = vmatprep.subr.mxu0 0.0
      %6846 = vmatpush1.msra.mxu0 0.0
      %6847 = vmatprep.subr.mxu0 0.0
      %6848 = vmatpush1.msra.mxu0 0.0
      %6849 = vmatprep.mubr.f32.mxu0 0.0
      %6850 = vmatmul.mubr.f32.gmra.mrb[0].mxu0 %v6762
      %v6851 = vpop.f32.mrb[0].mxu0
      %v6852 = vadd.f32 0.0, %v6851
      %v6853 = vpop.f32.mrb[0].mxu0
      %6854 = vmatprep.mubr.f32.mxu0 0.0
      %6855 = vmatmul.mubr.f32.gmra.mrb[0].mxu0 %v6765
      %v6856 = vpop.f32.mrb[0].mxu0
      %v6857 = vadd.f32 0.0, %v6856
      %v6858 = vpop.f32.mrb[0].mxu0
      %6859 = vmatprep.mubr.f32.mxu0 0.0
      %6860 = vmatmul.mubr.f32.gmra.mrb[0].mxu0 %v6768
      %v6861 = vpop.f32.mrb[0].mxu0
      %v6862 = vadd.f32 0.0, %v6861
      %v6863 = vpop.f32.mrb[0].mxu0
      %6864 = vmatprep.mubr.f32.mxu0 0.0
      %6865 = vmatmul.mubr.f32.gmra.mrb[0].mxu0 %v6771
      %v6866 = vpop.f32.mrb[0].mxu0
      %v6867 = vadd.f32 0.0, %v6866
      %v6868 = vpop.f32.mrb[0].mxu0
      %6869 = vmatprep.mubr.f32.mxu0 0.0
      %6870 = vmatmul.mubr.f32.gmra.mrb[0].mxu0 %v6774
      %v6871 = vpop.f32.mrb[0].mxu0
      %v6872 = vadd.f32 0.0, %v6871
      %v6873 = vpop.f32.mrb[0].mxu0
      %6874 = vmatprep.mubr.f32.mxu0 0.0
      %6875 = vmatmul.mubr.f32.gmra.mrb[0].mxu0 %v6777
      %v6876 = vpop.f32.mrb[0].mxu0
      %v6877 = vadd.f32 0.0, %v6876
      %v6878 = vpop.f32.mrb[0].mxu0
      %6879 = vmatprep.mubr.f32.mxu0 0.0
      %6880 = vmatmul.mubr.f32.gmra.mrb[0].mxu0 %v6780
      %v6881 = vpop.f32.mrb[0].mxu0
      %v6882 = vadd.f32 0.0, %v6881
      %v6883 = vpop.f32.mrb[0].mxu0
      %6884 = vmatprep.mubr.f32.mxu0 0.0
      %6885 = vmatmul.mubr.f32.gmra.mrb[0].mxu0 %v6783
      %v6886 = vpop.f32.mrb[0].mxu0
      %v6887 = vadd.f32 0.0, %v6886
      %v6888 = vpop.f32.mrb[0].mxu0
      %6889 = vdwg.mxu0
      %v6890 = vadd.f32 %v6743, %v6852
      %v6891 = vadd.f32 %v6744, %v6857
      %v6892 = vadd.f32 %v6745, %v6862
      %v6893 = vadd.f32 %v6746, %v6867
      %v6894 = vadd.f32 %v6747, %v6872
      %v6895 = vadd.f32 %v6748, %v6877
      %v6896 = vadd.f32 %v6749, %v6882
      %v6897 = vadd.f32 %v6750, %v6887
      %v6898 = vld [vmem:[%s6309 + $0x4] sm:$0xff]
      %v6899 = vld [vmem:[%s6309 + $0x14] sm:$0xff]
      %v6900 = vld [vmem:[%s6309 + $0x24] sm:$0xff]
      %v6901 = vld [vmem:[%s6309 + $0x34] sm:$0xff]
      %v6902 = vld [vmem:[%s6309 + $0x44] sm:$0xff]
      %v6903 = vld [vmem:[%s6309 + $0x54] sm:$0xff]
      %v6904 = vld [vmem:[%s6309 + $0x64] sm:$0xff]
      %v6905 = vld [vmem:[%s6309 + $0x74] sm:$0xff]
      %s6906 = scalar_lea.vmem %s3, 72
      %v6907 = vld [vmem:[%s6906] sm:$0xff]
      %v6909 = vsel %vm5142, %v6898, 0
      %v6912 = vsel %vm5142, %v6899, 0
      %v6915 = vsel %vm5142, %v6900, 0
      %v6918 = vsel %vm5142, %v6901, 0
      %v6921 = vsel %vm5142, %v6902, 0
      %v6924 = vsel %vm5142, %v6903, 0
      %v6927 = vsel %vm5142, %v6904, 0
      %v6930 = vsel %vm5142, %v6905, 0
      %6932 = vmatprep.subr.mxu0 0.0
      %6933 = vmatpush1.msra.mxu0 %v6907
      %6934 = vmatprep.subr.mxu0 0.0
      %6935 = vmatpush1.msra.mxu0 0.0
      %6936 = vmatprep.subr.mxu0 0.0
      %6937 = vmatpush1.msra.mxu0 0.0
      %6938 = vmatprep.subr.mxu0 0.0
      %6939 = vmatpush1.msra.mxu0 0.0
      %6940 = vmatprep.subr.mxu0 0.0
      %6941 = vmatpush1.msra.mxu0 0.0
      %6942 = vmatprep.subr.mxu0 0.0
      %6943 = vmatpush1.msra.mxu0 0.0
      %6944 = vmatprep.subr.mxu0 0.0
      %6945 = vmatpush1.msra.mxu0 0.0
      %6946 = vmatprep.subr.mxu0 0.0
      %6947 = vmatpush1.msra.mxu0 0.0
      %6948 = vmatprep.subr.mxu0 0.0
      %6949 = vmatpush1.msra.mxu0 0.0
      %6950 = vmatprep.subr.mxu0 0.0
      %6951 = vmatpush1.msra.mxu0 0.0
      %6952 = vmatprep.subr.mxu0 0.0
      %6953 = vmatpush1.msra.mxu0 0.0
      %6954 = vmatprep.subr.mxu0 0.0
      %6955 = vmatpush1.msra.mxu0 0.0
      %6956 = vmatprep.subr.mxu0 0.0
      %6957 = vmatpush1.msra.mxu0 0.0
      %6958 = vmatprep.subr.mxu0 0.0
      %6959 = vmatpush1.msra.mxu0 0.0
      %6960 = vmatprep.subr.mxu0 0.0
      %6961 = vmatpush1.msra.mxu0 0.0
      %6962 = vmatprep.subr.mxu0 0.0
      %6963 = vmatpush1.msra.mxu0 0.0
      %6964 = vmatprep.subr.mxu0 0.0
      %6965 = vmatpush1.msra.mxu0 0.0
      %6966 = vmatprep.subr.mxu0 0.0
      %6967 = vmatpush1.msra.mxu0 0.0
      %6968 = vmatprep.subr.mxu0 0.0
      %6969 = vmatpush1.msra.mxu0 0.0
      %6970 = vmatprep.subr.mxu0 0.0
      %6971 = vmatpush1.msra.mxu0 0.0
      %6972 = vmatprep.subr.mxu0 0.0
      %6973 = vmatpush1.msra.mxu0 0.0
      %6974 = vmatprep.subr.mxu0 0.0
      %6975 = vmatpush1.msra.mxu0 0.0
      %6976 = vmatprep.subr.mxu0 0.0
      %6977 = vmatpush1.msra.mxu0 0.0
      %6978 = vmatprep.subr.mxu0 0.0
      %6979 = vmatpush1.msra.mxu0 0.0
      %6980 = vmatprep.subr.mxu0 0.0
      %6981 = vmatpush1.msra.mxu0 0.0
      %6982 = vmatprep.subr.mxu0 0.0
      %6983 = vmatpush1.msra.mxu0 0.0
      %6984 = vmatprep.subr.mxu0 0.0
      %6985 = vmatpush1.msra.mxu0 0.0
      %6986 = vmatprep.subr.mxu0 0.0
      %6987 = vmatpush1.msra.mxu0 0.0
      %6988 = vmatprep.subr.mxu0 0.0
      %6989 = vmatpush1.msra.mxu0 0.0
      %6990 = vmatprep.subr.mxu0 0.0
      %6991 = vmatpush1.msra.mxu0 0.0
      %6992 = vmatprep.subr.mxu0 0.0
      %6993 = vmatpush1.msra.mxu0 0.0
      %6994 = vmatprep.subr.mxu0 0.0
      %6995 = vmatpush1.msra.mxu0 0.0
      %6996 = vmatprep.mubr.f32.mxu0 0.0
      %6997 = vmatmul.mubr.f32.gmra.mrb[0].mxu0 %v6909
      %v6998 = vpop.f32.mrb[0].mxu0
      %v6999 = vadd.f32 0.0, %v6998
      %v7000 = vpop.f32.mrb[0].mxu0
      %7001 = vmatprep.mubr.f32.mxu0 0.0
      %7002 = vmatmul.mubr.f32.gmra.mrb[0].mxu0 %v6912
      %v7003 = vpop.f32.mrb[0].mxu0
      %v7004 = vadd.f32 0.0, %v7003
      %v7005 = vpop.f32.mrb[0].mxu0
      %7006 = vmatprep.mubr.f32.mxu0 0.0
      %7007 = vmatmul.mubr.f32.gmra.mrb[0].mxu0 %v6915
      %v7008 = vpop.f32.mrb[0].mxu0
      %v7009 = vadd.f32 0.0, %v7008
      %v7010 = vpop.f32.mrb[0].mxu0
      %7011 = vmatprep.mubr.f32.mxu0 0.0
      %7012 = vmatmul.mubr.f32.gmra.mrb[0].mxu0 %v6918
      %v7013 = vpop.f32.mrb[0].mxu0
      %v7014 = vadd.f32 0.0, %v7013
      %v7015 = vpop.f32.mrb[0].mxu0
      %7016 = vmatprep.mubr.f32.mxu0 0.0
      %7017 = vmatmul.mubr.f32.gmra.mrb[0].mxu0 %v6921
      %v7018 = vpop.f32.mrb[0].mxu0
      %v7019 = vadd.f32 0.0, %v7018
      %v7020 = vpop.f32.mrb[0].mxu0
      %7021 = vmatprep.mubr.f32.mxu0 0.0
      %7022 = vmatmul.mubr.f32.gmra.mrb[0].mxu0 %v6924
      %v7023 = vpop.f32.mrb[0].mxu0
      %v7024 = vadd.f32 0.0, %v7023
      %v7025 = vpop.f32.mrb[0].mxu0
      %7026 = vmatprep.mubr.f32.mxu0 0.0
      %7027 = vmatmul.mubr.f32.gmra.mrb[0].mxu0 %v6927
      %v7028 = vpop.f32.mrb[0].mxu0
      %v7029 = vadd.f32 0.0, %v7028
      %v7030 = vpop.f32.mrb[0].mxu0
      %7031 = vmatprep.mubr.f32.mxu0 0.0
      %7032 = vmatmul.mubr.f32.gmra.mrb[0].mxu0 %v6930
      %v7033 = vpop.f32.mrb[0].mxu0
      %v7034 = vadd.f32 0.0, %v7033
      %v7035 = vpop.f32.mrb[0].mxu0
      %7036 = vdwg.mxu0
      %v7037 = vadd.f32 %v6890, %v6999
      %v7038 = vadd.f32 %v6891, %v7004
      %v7039 = vadd.f32 %v6892, %v7009
      %v7040 = vadd.f32 %v6893, %v7014
      %v7041 = vadd.f32 %v6894, %v7019
      %v7042 = vadd.f32 %v6895, %v7024
      %v7043 = vadd.f32 %v6896, %v7029
      %v7044 = vadd.f32 %v6897, %v7034
      %v7045 = vld [vmem:[%s5559] sm:$0xff]
      %v7046 = vld [vmem:[%s5559 + $0x10] sm:$0xff]
      %v7047 = vld [vmem:[%s5559 + $0x20] sm:$0xff]
      %v7048 = vld [vmem:[%s5559 + $0x30] sm:$0xff]
      %v7049 = vld [vmem:[%s5559 + $0x40] sm:$0xff]
      %v7050 = vld [vmem:[%s5559 + $0x50] sm:$0xff]
      %v7051 = vld [vmem:[%s5559 + $0x60] sm:$0xff]
      %v7052 = vld [vmem:[%s5559 + $0x70] sm:$0xff]
      %s7053 = scalar_lea.vmem %s3, 80
      %v7054 = vld [vmem:[%s7053] sm:$0xff]
      %v7056 = vsel %vm5142, %v7045, 0
      %v7059 = vsel %vm5142, %v7046, 0
      %v7062 = vsel %vm5142, %v7047, 0
      %v7065 = vsel %vm5142, %v7048, 0
      %v7068 = vsel %vm5142, %v7049, 0
      %v7071 = vsel %vm5142, %v7050, 0
      %v7074 = vsel %vm5142, %v7051, 0
      %v7077 = vsel %vm5142, %v7052, 0
      %7079 = vmatprep.subr.mxu0 0.0
      %7080 = vmatpush1.msra.mxu0 %v7054
      %7081 = vmatprep.subr.mxu0 0.0
      %7082 = vmatpush1.msra.mxu0 0.0
      %7083 = vmatprep.subr.mxu0 0.0
      %7084 = vmatpush1.msra.mxu0 0.0
      %7085 = vmatprep.subr.mxu0 0.0
      %7086 = vmatpush1.msra.mxu0 0.0
      %7087 = vmatprep.subr.mxu0 0.0
      %7088 = vmatpush1.msra.mxu0 0.0
      %7089 = vmatprep.subr.mxu0 0.0
      %7090 = vmatpush1.msra.mxu0 0.0
      %7091 = vmatprep.subr.mxu0 0.0
      %7092 = vmatpush1.msra.mxu0 0.0
      %7093 = vmatprep.subr.mxu0 0.0
      %7094 = vmatpush1.msra.mxu0 0.0
      %7095 = vmatprep.subr.mxu0 0.0
      %7096 = vmatpush1.msra.mxu0 0.0
      %7097 = vmatprep.subr.mxu0 0.0
      %7098 = vmatpush1.msra.mxu0 0.0
      %7099 = vmatprep.subr.mxu0 0.0
      %7100 = vmatpush1.msra.mxu0 0.0
      %7101 = vmatprep.subr.mxu0 0.0
      %7102 = vmatpush1.msra.mxu0 0.0
      %7103 = vmatprep.subr.mxu0 0.0
      %7104 = vmatpush1.msra.mxu0 0.0
      %7105 = vmatprep.subr.mxu0 0.0
      %7106 = vmatpush1.msra.mxu0 0.0
      %7107 = vmatprep.subr.mxu0 0.0
      %7108 = vmatpush1.msra.mxu0 0.0
      %7109 = vmatprep.subr.mxu0 0.0
      %7110 = vmatpush1.msra.mxu0 0.0
      %7111 = vmatprep.subr.mxu0 0.0
      %7112 = vmatpush1.msra.mxu0 0.0
      %7113 = vmatprep.subr.mxu0 0.0
      %7114 = vmatpush1.msra.mxu0 0.0
      %7115 = vmatprep.subr.mxu0 0.0
      %7116 = vmatpush1.msra.mxu0 0.0
      %7117 = vmatprep.subr.mxu0 0.0
      %7118 = vmatpush1.msra.mxu0 0.0
      %7119 = vmatprep.subr.mxu0 0.0
      %7120 = vmatpush1.msra.mxu0 0.0
      %7121 = vmatprep.subr.mxu0 0.0
      %7122 = vmatpush1.msra.mxu0 0.0
      %7123 = vmatprep.subr.mxu0 0.0
      %7124 = vmatpush1.msra.mxu0 0.0
      %7125 = vmatprep.subr.mxu0 0.0
      %7126 = vmatpush1.msra.mxu0 0.0
      %7127 = vmatprep.subr.mxu0 0.0
      %7128 = vmatpush1.msra.mxu0 0.0
      %7129 = vmatprep.subr.mxu0 0.0
      %7130 = vmatpush1.msra.mxu0 0.0
      %7131 = vmatprep.subr.mxu0 0.0
      %7132 = vmatpush1.msra.mxu0 0.0
      %7133 = vmatprep.subr.mxu0 0.0
      %7134 = vmatpush1.msra.mxu0 0.0
      %7135 = vmatprep.subr.mxu0 0.0
      %7136 = vmatpush1.msra.mxu0 0.0
      %7137 = vmatprep.subr.mxu0 0.0
      %7138 = vmatpush1.msra.mxu0 0.0
      %7139 = vmatprep.subr.mxu0 0.0
      %7140 = vmatpush1.msra.mxu0 0.0
      %7141 = vmatprep.subr.mxu0 0.0
      %7142 = vmatpush1.msra.mxu0 0.0
      %7143 = vmatprep.mubr.f32.mxu0 0.0
      %7144 = vmatmul.mubr.f32.gmra.mrb[0].mxu0 %v7056
      %v7145 = vpop.f32.mrb[0].mxu0
      %v7146 = vadd.f32 0.0, %v7145
      %v7147 = vpop.f32.mrb[0].mxu0
      %7148 = vmatprep.mubr.f32.mxu0 0.0
      %7149 = vmatmul.mubr.f32.gmra.mrb[0].mxu0 %v7059
      %v7150 = vpop.f32.mrb[0].mxu0
      %v7151 = vadd.f32 0.0, %v7150
      %v7152 = vpop.f32.mrb[0].mxu0
      %7153 = vmatprep.mubr.f32.mxu0 0.0
      %7154 = vmatmul.mubr.f32.gmra.mrb[0].mxu0 %v7062
      %v7155 = vpop.f32.mrb[0].mxu0
      %v7156 = vadd.f32 0.0, %v7155
      %v7157 = vpop.f32.mrb[0].mxu0
      %7158 = vmatprep.mubr.f32.mxu0 0.0
      %7159 = vmatmul.mubr.f32.gmra.mrb[0].mxu0 %v7065
      %v7160 = vpop.f32.mrb[0].mxu0
      %v7161 = vadd.f32 0.0, %v7160
      %v7162 = vpop.f32.mrb[0].mxu0
      %7163 = vmatprep.mubr.f32.mxu0 0.0
      %7164 = vmatmul.mubr.f32.gmra.mrb[0].mxu0 %v7068
      %v7165 = vpop.f32.mrb[0].mxu0
      %v7166 = vadd.f32 0.0, %v7165
      %v7167 = vpop.f32.mrb[0].mxu0
      %7168 = vmatprep.mubr.f32.mxu0 0.0
      %7169 = vmatmul.mubr.f32.gmra.mrb[0].mxu0 %v7071
      %v7170 = vpop.f32.mrb[0].mxu0
      %v7171 = vadd.f32 0.0, %v7170
      %v7172 = vpop.f32.mrb[0].mxu0
      %7173 = vmatprep.mubr.f32.mxu0 0.0
      %7174 = vmatmul.mubr.f32.gmra.mrb[0].mxu0 %v7074
      %v7175 = vpop.f32.mrb[0].mxu0
      %v7176 = vadd.f32 0.0, %v7175
      %v7177 = vpop.f32.mrb[0].mxu0
      %7178 = vmatprep.mubr.f32.mxu0 0.0
      %7179 = vmatmul.mubr.f32.gmra.mrb[0].mxu0 %v7077
      %v7180 = vpop.f32.mrb[0].mxu0
      %v7181 = vadd.f32 0.0, %v7180
      %v7182 = vpop.f32.mrb[0].mxu0
      %7183 = vdwg.mxu0
      %v7184 = vadd.f32 %v7037, %v7146
      %v7185 = vadd.f32 %v7038, %v7151
      %v7186 = vadd.f32 %v7039, %v7156
      %v7187 = vadd.f32 %v7040, %v7161
      %v7188 = vadd.f32 %v7041, %v7166
      %v7189 = vadd.f32 %v7042, %v7171
      %v7190 = vadd.f32 %v7043, %v7176
      %v7191 = vadd.f32 %v7044, %v7181
      %v7192 = vld [vmem:[%s5559 + $0x1] sm:$0xff]
      %v7193 = vld [vmem:[%s5559 + $0x11] sm:$0xff]
      %v7194 = vld [vmem:[%s5559 + $0x21] sm:$0xff]
      %v7195 = vld [vmem:[%s5559 + $0x31] sm:$0xff]
      %v7196 = vld [vmem:[%s5559 + $0x41] sm:$0xff]
      %v7197 = vld [vmem:[%s5559 + $0x51] sm:$0xff]
      %v7198 = vld [vmem:[%s5559 + $0x61] sm:$0xff]
      %v7199 = vld [vmem:[%s5559 + $0x71] sm:$0xff]
      %s7200 = scalar_lea.vmem %s3, 88
      %v7201 = vld [vmem:[%s7200] sm:$0xff]
      %v7203 = vsel %vm5142, %v7192, 0
      %v7206 = vsel %vm5142, %v7193, 0
      %v7209 = vsel %vm5142, %v7194, 0
      %v7212 = vsel %vm5142, %v7195, 0
      %v7215 = vsel %vm5142, %v7196, 0
      %v7218 = vsel %vm5142, %v7197, 0
      %v7221 = vsel %vm5142, %v7198, 0
      %v7224 = vsel %vm5142, %v7199, 0
      %7226 = vmatprep.subr.mxu0 0.0
      %7227 = vmatpush1.msra.mxu0 %v7201
      %7228 = vmatprep.subr.mxu0 0.0
      %7229 = vmatpush1.msra.mxu0 0.0
      %7230 = vmatprep.subr.mxu0 0.0
      %7231 = vmatpush1.msra.mxu0 0.0
      %7232 = vmatprep.subr.mxu0 0.0
      %7233 = vmatpush1.msra.mxu0 0.0
      %7234 = vmatprep.subr.mxu0 0.0
      %7235 = vmatpush1.msra.mxu0 0.0
      %7236 = vmatprep.subr.mxu0 0.0
      %7237 = vmatpush1.msra.mxu0 0.0
      %7238 = vmatprep.subr.mxu0 0.0
      %7239 = vmatpush1.msra.mxu0 0.0
      %7240 = vmatprep.subr.mxu0 0.0
      %7241 = vmatpush1.msra.mxu0 0.0
      %7242 = vmatprep.subr.mxu0 0.0
      %7243 = vmatpush1.msra.mxu0 0.0
      %7244 = vmatprep.subr.mxu0 0.0
      %7245 = vmatpush1.msra.mxu0 0.0
      %7246 = vmatprep.subr.mxu0 0.0
      %7247 = vmatpush1.msra.mxu0 0.0
      %7248 = vmatprep.subr.mxu0 0.0
      %7249 = vmatpush1.msra.mxu0 0.0
      %7250 = vmatprep.subr.mxu0 0.0
      %7251 = vmatpush1.msra.mxu0 0.0
      %7252 = vmatprep.subr.mxu0 0.0
      %7253 = vmatpush1.msra.mxu0 0.0
      %7254 = vmatprep.subr.mxu0 0.0
      %7255 = vmatpush1.msra.mxu0 0.0
      %7256 = vmatprep.subr.mxu0 0.0
      %7257 = vmatpush1.msra.mxu0 0.0
      %7258 = vmatprep.subr.mxu0 0.0
      %7259 = vmatpush1.msra.mxu0 0.0
      %7260 = vmatprep.subr.mxu0 0.0
      %7261 = vmatpush1.msra.mxu0 0.0
      %7262 = vmatprep.subr.mxu0 0.0
      %7263 = vmatpush1.msra.mxu0 0.0
      %7264 = vmatprep.subr.mxu0 0.0
      %7265 = vmatpush1.msra.mxu0 0.0
      %7266 = vmatprep.subr.mxu0 0.0
      %7267 = vmatpush1.msra.mxu0 0.0
      %7268 = vmatprep.subr.mxu0 0.0
      %7269 = vmatpush1.msra.mxu0 0.0
      %7270 = vmatprep.subr.mxu0 0.0
      %7271 = vmatpush1.msra.mxu0 0.0
      %7272 = vmatprep.subr.mxu0 0.0
      %7273 = vmatpush1.msra.mxu0 0.0
      %7274 = vmatprep.subr.mxu0 0.0
      %7275 = vmatpush1.msra.mxu0 0.0
      %7276 = vmatprep.subr.mxu0 0.0
      %7277 = vmatpush1.msra.mxu0 0.0
      %7278 = vmatprep.subr.mxu0 0.0
      %7279 = vmatpush1.msra.mxu0 0.0
      %7280 = vmatprep.subr.mxu0 0.0
      %7281 = vmatpush1.msra.mxu0 0.0
      %7282 = vmatprep.subr.mxu0 0.0
      %7283 = vmatpush1.msra.mxu0 0.0
      %7284 = vmatprep.subr.mxu0 0.0
      %7285 = vmatpush1.msra.mxu0 0.0
      %7286 = vmatprep.subr.mxu0 0.0
      %7287 = vmatpush1.msra.mxu0 0.0
      %7288 = vmatprep.subr.mxu0 0.0
      %7289 = vmatpush1.msra.mxu0 0.0
      %7290 = vmatprep.mubr.f32.mxu0 0.0
      %7291 = vmatmul.mubr.f32.gmra.mrb[0].mxu0 %v7203
      %v7292 = vpop.f32.mrb[0].mxu0
      %v7293 = vadd.f32 0.0, %v7292
      %v7294 = vpop.f32.mrb[0].mxu0
      %7295 = vmatprep.mubr.f32.mxu0 0.0
      %7296 = vmatmul.mubr.f32.gmra.mrb[0].mxu0 %v7206
      %v7297 = vpop.f32.mrb[0].mxu0
      %v7298 = vadd.f32 0.0, %v7297
      %v7299 = vpop.f32.mrb[0].mxu0
      %7300 = vmatprep.mubr.f32.mxu0 0.0
      %7301 = vmatmul.mubr.f32.gmra.mrb[0].mxu0 %v7209
      %v7302 = vpop.f32.mrb[0].mxu0
      %v7303 = vadd.f32 0.0, %v7302
      %v7304 = vpop.f32.mrb[0].mxu0
      %7305 = vmatprep.mubr.f32.mxu0 0.0
      %7306 = vmatmul.mubr.f32.gmra.mrb[0].mxu0 %v7212
      %v7307 = vpop.f32.mrb[0].mxu0
      %v7308 = vadd.f32 0.0, %v7307
      %v7309 = vpop.f32.mrb[0].mxu0
      %7310 = vmatprep.mubr.f32.mxu0 0.0
      %7311 = vmatmul.mubr.f32.gmra.mrb[0].mxu0 %v7215
      %v7312 = vpop.f32.mrb[0].mxu0
      %v7313 = vadd.f32 0.0, %v7312
      %v7314 = vpop.f32.mrb[0].mxu0
      %7315 = vmatprep.mubr.f32.mxu0 0.0
      %7316 = vmatmul.mubr.f32.gmra.mrb[0].mxu0 %v7218
      %v7317 = vpop.f32.mrb[0].mxu0
      %v7318 = vadd.f32 0.0, %v7317
      %v7319 = vpop.f32.mrb[0].mxu0
      %7320 = vmatprep.mubr.f32.mxu0 0.0
      %7321 = vmatmul.mubr.f32.gmra.mrb[0].mxu0 %v7221
      %v7322 = vpop.f32.mrb[0].mxu0
      %v7323 = vadd.f32 0.0, %v7322
      %v7324 = vpop.f32.mrb[0].mxu0
      %7325 = vmatprep.mubr.f32.mxu0 0.0
      %7326 = vmatmul.mubr.f32.gmra.mrb[0].mxu0 %v7224
      %v7327 = vpop.f32.mrb[0].mxu0
      %v7328 = vadd.f32 0.0, %v7327
      %v7329 = vpop.f32.mrb[0].mxu0
      %7330 = vdwg.mxu0
      %v7331 = vadd.f32 %v7184, %v7293
      %v7332 = vadd.f32 %v7185, %v7298
      %v7333 = vadd.f32 %v7186, %v7303
      %v7334 = vadd.f32 %v7187, %v7308
      %v7335 = vadd.f32 %v7188, %v7313
      %v7336 = vadd.f32 %v7189, %v7318
      %v7337 = vadd.f32 %v7190, %v7323
      %v7338 = vadd.f32 %v7191, %v7328
      %v7339 = vld [vmem:[%s5559 + $0x2] sm:$0xff]
      %v7340 = vld [vmem:[%s5559 + $0x12] sm:$0xff]
      %v7341 = vld [vmem:[%s5559 + $0x22] sm:$0xff]
      %v7342 = vld [vmem:[%s5559 + $0x32] sm:$0xff]
      %v7343 = vld [vmem:[%s5559 + $0x42] sm:$0xff]
      %v7344 = vld [vmem:[%s5559 + $0x52] sm:$0xff]
      %v7345 = vld [vmem:[%s5559 + $0x62] sm:$0xff]
      %v7346 = vld [vmem:[%s5559 + $0x72] sm:$0xff]
      %s7347 = scalar_lea.vmem %s3, 96
      %v7348 = vld [vmem:[%s7347] sm:$0xff]
      %v7350 = vsel %vm5142, %v7339, 0
      %v7353 = vsel %vm5142, %v7340, 0
      %v7356 = vsel %vm5142, %v7341, 0
      %v7359 = vsel %vm5142, %v7342, 0
      %v7362 = vsel %vm5142, %v7343, 0
      %v7365 = vsel %vm5142, %v7344, 0
      %v7368 = vsel %vm5142, %v7345, 0
      %v7371 = vsel %vm5142, %v7346, 0
      %7373 = vmatprep.subr.mxu0 0.0
      %7374 = vmatpush1.msra.mxu0 %v7348
      %7375 = vmatprep.subr.mxu0 0.0
      %7376 = vmatpush1.msra.mxu0 0.0
      %7377 = vmatprep.subr.mxu0 0.0
      %7378 = vmatpush1.msra.mxu0 0.0
      %7379 = vmatprep.subr.mxu0 0.0
      %7380 = vmatpush1.msra.mxu0 0.0
      %7381 = vmatprep.subr.mxu0 0.0
      %7382 = vmatpush1.msra.mxu0 0.0
      %7383 = vmatprep.subr.mxu0 0.0
      %7384 = vmatpush1.msra.mxu0 0.0
      %7385 = vmatprep.subr.mxu0 0.0
      %7386 = vmatpush1.msra.mxu0 0.0
      %7387 = vmatprep.subr.mxu0 0.0
      %7388 = vmatpush1.msra.mxu0 0.0
      %7389 = vmatprep.subr.mxu0 0.0
      %7390 = vmatpush1.msra.mxu0 0.0
      %7391 = vmatprep.subr.mxu0 0.0
      %7392 = vmatpush1.msra.mxu0 0.0
      %7393 = vmatprep.subr.mxu0 0.0
      %7394 = vmatpush1.msra.mxu0 0.0
      %7395 = vmatprep.subr.mxu0 0.0
      %7396 = vmatpush1.msra.mxu0 0.0
      %7397 = vmatprep.subr.mxu0 0.0
      %7398 = vmatpush1.msra.mxu0 0.0
      %7399 = vmatprep.subr.mxu0 0.0
      %7400 = vmatpush1.msra.mxu0 0.0
      %7401 = vmatprep.subr.mxu0 0.0
      %7402 = vmatpush1.msra.mxu0 0.0
      %7403 = vmatprep.subr.mxu0 0.0
      %7404 = vmatpush1.msra.mxu0 0.0
      %7405 = vmatprep.subr.mxu0 0.0
      %7406 = vmatpush1.msra.mxu0 0.0
      %7407 = vmatprep.subr.mxu0 0.0
      %7408 = vmatpush1.msra.mxu0 0.0
      %7409 = vmatprep.subr.mxu0 0.0
      %7410 = vmatpush1.msra.mxu0 0.0
      %7411 = vmatprep.subr.mxu0 0.0
      %7412 = vmatpush1.msra.mxu0 0.0
      %7413 = vmatprep.subr.mxu0 0.0
      %7414 = vmatpush1.msra.mxu0 0.0
      %7415 = vmatprep.subr.mxu0 0.0
      %7416 = vmatpush1.msra.mxu0 0.0
      %7417 = vmatprep.subr.mxu0 0.0
      %7418 = vmatpush1.msra.mxu0 0.0
      %7419 = vmatprep.subr.mxu0 0.0
      %7420 = vmatpush1.msra.mxu0 0.0
      %7421 = vmatprep.subr.mxu0 0.0
      %7422 = vmatpush1.msra.mxu0 0.0
      %7423 = vmatprep.subr.mxu0 0.0
      %7424 = vmatpush1.msra.mxu0 0.0
      %7425 = vmatprep.subr.mxu0 0.0
      %7426 = vmatpush1.msra.mxu0 0.0
      %7427 = vmatprep.subr.mxu0 0.0
      %7428 = vmatpush1.msra.mxu0 0.0
      %7429 = vmatprep.subr.mxu0 0.0
      %7430 = vmatpush1.msra.mxu0 0.0
      %7431 = vmatprep.subr.mxu0 0.0
      %7432 = vmatpush1.msra.mxu0 0.0
      %7433 = vmatprep.subr.mxu0 0.0
      %7434 = vmatpush1.msra.mxu0 0.0
      %7435 = vmatprep.subr.mxu0 0.0
      %7436 = vmatpush1.msra.mxu0 0.0
      %7437 = vmatprep.mubr.f32.mxu0 0.0
      %7438 = vmatmul.mubr.f32.gmra.mrb[0].mxu0 %v7350
      %v7439 = vpop.f32.mrb[0].mxu0
      %v7440 = vadd.f32 0.0, %v7439
      %v7441 = vpop.f32.mrb[0].mxu0
      %7442 = vmatprep.mubr.f32.mxu0 0.0
      %7443 = vmatmul.mubr.f32.gmra.mrb[0].mxu0 %v7353
      %v7444 = vpop.f32.mrb[0].mxu0
      %v7445 = vadd.f32 0.0, %v7444
      %v7446 = vpop.f32.mrb[0].mxu0
      %7447 = vmatprep.mubr.f32.mxu0 0.0
      %7448 = vmatmul.mubr.f32.gmra.mrb[0].mxu0 %v7356
      %v7449 = vpop.f32.mrb[0].mxu0
      %v7450 = vadd.f32 0.0, %v7449
      %v7451 = vpop.f32.mrb[0].mxu0
      %7452 = vmatprep.mubr.f32.mxu0 0.0
      %7453 = vmatmul.mubr.f32.gmra.mrb[0].mxu0 %v7359
      %v7454 = vpop.f32.mrb[0].mxu0
      %v7455 = vadd.f32 0.0, %v7454
      %v7456 = vpop.f32.mrb[0].mxu0
      %7457 = vmatprep.mubr.f32.mxu0 0.0
      %7458 = vmatmul.mubr.f32.gmra.mrb[0].mxu0 %v7362
      %v7459 = vpop.f32.mrb[0].mxu0
      %v7460 = vadd.f32 0.0, %v7459
      %v7461 = vpop.f32.mrb[0].mxu0
      %7462 = vmatprep.mubr.f32.mxu0 0.0
      %7463 = vmatmul.mubr.f32.gmra.mrb[0].mxu0 %v7365
      %v7464 = vpop.f32.mrb[0].mxu0
      %v7465 = vadd.f32 0.0, %v7464
      %v7466 = vpop.f32.mrb[0].mxu0
      %7467 = vmatprep.mubr.f32.mxu0 0.0
      %7468 = vmatmul.mubr.f32.gmra.mrb[0].mxu0 %v7368
      %v7469 = vpop.f32.mrb[0].mxu0
      %v7470 = vadd.f32 0.0, %v7469
      %v7471 = vpop.f32.mrb[0].mxu0
      %7472 = vmatprep.mubr.f32.mxu0 0.0
      %7473 = vmatmul.mubr.f32.gmra.mrb[0].mxu0 %v7371
      %v7474 = vpop.f32.mrb[0].mxu0
      %v7475 = vadd.f32 0.0, %v7474
      %v7476 = vpop.f32.mrb[0].mxu0
      %7477 = vdwg.mxu0
      %v7478 = vadd.f32 %v7331, %v7440
      %v7479 = vadd.f32 %v7332, %v7445
      %v7480 = vadd.f32 %v7333, %v7450
      %v7481 = vadd.f32 %v7334, %v7455
      %v7482 = vadd.f32 %v7335, %v7460
      %v7483 = vadd.f32 %v7336, %v7465
      %v7484 = vadd.f32 %v7337, %v7470
      %v7485 = vadd.f32 %v7338, %v7475
      %v7486 = vld [vmem:[%s5559 + $0x3] sm:$0xff]
      %v7487 = vld [vmem:[%s5559 + $0x13] sm:$0xff]
      %v7488 = vld [vmem:[%s5559 + $0x23] sm:$0xff]
      %v7489 = vld [vmem:[%s5559 + $0x33] sm:$0xff]
      %v7490 = vld [vmem:[%s5559 + $0x43] sm:$0xff]
      %v7491 = vld [vmem:[%s5559 + $0x53] sm:$0xff]
      %v7492 = vld [vmem:[%s5559 + $0x63] sm:$0xff]
      %v7493 = vld [vmem:[%s5559 + $0x73] sm:$0xff]
      %s7494 = scalar_lea.vmem %s3, 104
      %v7495 = vld [vmem:[%s7494] sm:$0xff]
      %v7497 = vsel %vm5142, %v7486, 0
      %v7500 = vsel %vm5142, %v7487, 0
      %v7503 = vsel %vm5142, %v7488, 0
      %v7506 = vsel %vm5142, %v7489, 0
      %v7509 = vsel %vm5142, %v7490, 0
      %v7512 = vsel %vm5142, %v7491, 0
      %v7515 = vsel %vm5142, %v7492, 0
      %v7518 = vsel %vm5142, %v7493, 0
      %7520 = vmatprep.subr.mxu0 0.0
      %7521 = vmatpush1.msra.mxu0 %v7495
      %7522 = vmatprep.subr.mxu0 0.0
      %7523 = vmatpush1.msra.mxu0 0.0
      %7524 = vmatprep.subr.mxu0 0.0
      %7525 = vmatpush1.msra.mxu0 0.0
      %7526 = vmatprep.subr.mxu0 0.0
      %7527 = vmatpush1.msra.mxu0 0.0
      %7528 = vmatprep.subr.mxu0 0.0
      %7529 = vmatpush1.msra.mxu0 0.0
      %7530 = vmatprep.subr.mxu0 0.0
      %7531 = vmatpush1.msra.mxu0 0.0
      %7532 = vmatprep.subr.mxu0 0.0
      %7533 = vmatpush1.msra.mxu0 0.0
      %7534 = vmatprep.subr.mxu0 0.0
      %7535 = vmatpush1.msra.mxu0 0.0
      %7536 = vmatprep.subr.mxu0 0.0
      %7537 = vmatpush1.msra.mxu0 0.0
      %7538 = vmatprep.subr.mxu0 0.0
      %7539 = vmatpush1.msra.mxu0 0.0
      %7540 = vmatprep.subr.mxu0 0.0
      %7541 = vmatpush1.msra.mxu0 0.0
      %7542 = vmatprep.subr.mxu0 0.0
      %7543 = vmatpush1.msra.mxu0 0.0
      %7544 = vmatprep.subr.mxu0 0.0
      %7545 = vmatpush1.msra.mxu0 0.0
      %7546 = vmatprep.subr.mxu0 0.0
      %7547 = vmatpush1.msra.mxu0 0.0
      %7548 = vmatprep.subr.mxu0 0.0
      %7549 = vmatpush1.msra.mxu0 0.0
      %7550 = vmatprep.subr.mxu0 0.0
      %7551 = vmatpush1.msra.mxu0 0.0
      %7552 = vmatprep.subr.mxu0 0.0
      %7553 = vmatpush1.msra.mxu0 0.0
      %7554 = vmatprep.subr.mxu0 0.0
      %7555 = vmatpush1.msra.mxu0 0.0
      %7556 = vmatprep.subr.mxu0 0.0
      %7557 = vmatpush1.msra.mxu0 0.0
      %7558 = vmatprep.subr.mxu0 0.0
      %7559 = vmatpush1.msra.mxu0 0.0
      %7560 = vmatprep.subr.mxu0 0.0
      %7561 = vmatpush1.msra.mxu0 0.0
      %7562 = vmatprep.subr.mxu0 0.0
      %7563 = vmatpush1.msra.mxu0 0.0
      %7564 = vmatprep.subr.mxu0 0.0
      %7565 = vmatpush1.msra.mxu0 0.0
      %7566 = vmatprep.subr.mxu0 0.0
      %7567 = vmatpush1.msra.mxu0 0.0
      %7568 = vmatprep.subr.mxu0 0.0
      %7569 = vmatpush1.msra.mxu0 0.0
      %7570 = vmatprep.subr.mxu0 0.0
      %7571 = vmatpush1.msra.mxu0 0.0
      %7572 = vmatprep.subr.mxu0 0.0
      %7573 = vmatpush1.msra.mxu0 0.0
      %7574 = vmatprep.subr.mxu0 0.0
      %7575 = vmatpush1.msra.mxu0 0.0
      %7576 = vmatprep.subr.mxu0 0.0
      %7577 = vmatpush1.msra.mxu0 0.0
      %7578 = vmatprep.subr.mxu0 0.0
      %7579 = vmatpush1.msra.mxu0 0.0
      %7580 = vmatprep.subr.mxu0 0.0
      %7581 = vmatpush1.msra.mxu0 0.0
      %7582 = vmatprep.subr.mxu0 0.0
      %7583 = vmatpush1.msra.mxu0 0.0
      %7584 = vmatprep.mubr.f32.mxu0 0.0
      %7585 = vmatmul.mubr.f32.gmra.mrb[0].mxu0 %v7497
      %v7586 = vpop.f32.mrb[0].mxu0
      %v7587 = vadd.f32 0.0, %v7586
      %v7588 = vpop.f32.mrb[0].mxu0
      %7589 = vmatprep.mubr.f32.mxu0 0.0
      %7590 = vmatmul.mubr.f32.gmra.mrb[0].mxu0 %v7500
      %v7591 = vpop.f32.mrb[0].mxu0
      %v7592 = vadd.f32 0.0, %v7591
      %v7593 = vpop.f32.mrb[0].mxu0
      %7594 = vmatprep.mubr.f32.mxu0 0.0
      %7595 = vmatmul.mubr.f32.gmra.mrb[0].mxu0 %v7503
      %v7596 = vpop.f32.mrb[0].mxu0
      %v7597 = vadd.f32 0.0, %v7596
      %v7598 = vpop.f32.mrb[0].mxu0
      %7599 = vmatprep.mubr.f32.mxu0 0.0
      %7600 = vmatmul.mubr.f32.gmra.mrb[0].mxu0 %v7506
      %v7601 = vpop.f32.mrb[0].mxu0
      %v7602 = vadd.f32 0.0, %v7601
      %v7603 = vpop.f32.mrb[0].mxu0
      %7604 = vmatprep.mubr.f32.mxu0 0.0
      %7605 = vmatmul.mubr.f32.gmra.mrb[0].mxu0 %v7509
      %v7606 = vpop.f32.mrb[0].mxu0
      %v7607 = vadd.f32 0.0, %v7606
      %v7608 = vpop.f32.mrb[0].mxu0
      %7609 = vmatprep.mubr.f32.mxu0 0.0
      %7610 = vmatmul.mubr.f32.gmra.mrb[0].mxu0 %v7512
      %v7611 = vpop.f32.mrb[0].mxu0
      %v7612 = vadd.f32 0.0, %v7611
      %v7613 = vpop.f32.mrb[0].mxu0
      %7614 = vmatprep.mubr.f32.mxu0 0.0
      %7615 = vmatmul.mubr.f32.gmra.mrb[0].mxu0 %v7515
      %v7616 = vpop.f32.mrb[0].mxu0
      %v7617 = vadd.f32 0.0, %v7616
      %v7618 = vpop.f32.mrb[0].mxu0
      %7619 = vmatprep.mubr.f32.mxu0 0.0
      %7620 = vmatmul.mubr.f32.gmra.mrb[0].mxu0 %v7518
      %v7621 = vpop.f32.mrb[0].mxu0
      %v7622 = vadd.f32 0.0, %v7621
      %v7623 = vpop.f32.mrb[0].mxu0
      %7624 = vdwg.mxu0
      %v7625 = vadd.f32 %v7478, %v7587
      %v7626 = vadd.f32 %v7479, %v7592
      %v7627 = vadd.f32 %v7480, %v7597
      %v7628 = vadd.f32 %v7481, %v7602
      %v7629 = vadd.f32 %v7482, %v7607
      %v7630 = vadd.f32 %v7483, %v7612
      %v7631 = vadd.f32 %v7484, %v7617
      %v7632 = vadd.f32 %v7485, %v7622
      %v7633 = vld [vmem:[%s5559 + $0x4] sm:$0xff]
      %v7634 = vld [vmem:[%s5559 + $0x14] sm:$0xff]
      %v7635 = vld [vmem:[%s5559 + $0x24] sm:$0xff]
      %v7636 = vld [vmem:[%s5559 + $0x34] sm:$0xff]
      %v7637 = vld [vmem:[%s5559 + $0x44] sm:$0xff]
      %v7638 = vld [vmem:[%s5559 + $0x54] sm:$0xff]
      %v7639 = vld [vmem:[%s5559 + $0x64] sm:$0xff]
      %v7640 = vld [vmem:[%s5559 + $0x74] sm:$0xff]
      %s7641 = scalar_lea.vmem %s3, 112
      %v7642 = vld [vmem:[%s7641] sm:$0xff]
      %v7644 = vsel %vm5142, %v7633, 0
      %v7647 = vsel %vm5142, %v7634, 0
      %v7650 = vsel %vm5142, %v7635, 0
      %v7653 = vsel %vm5142, %v7636, 0
      %v7656 = vsel %vm5142, %v7637, 0
      %v7659 = vsel %vm5142, %v7638, 0
      %v7662 = vsel %vm5142, %v7639, 0
      %v7665 = vsel %vm5142, %v7640, 0
      %7667 = vmatprep.subr.mxu0 0.0
      %7668 = vmatpush1.msra.mxu0 %v7642
      %7669 = vmatprep.subr.mxu0 0.0
      %7670 = vmatpush1.msra.mxu0 0.0
      %7671 = vmatprep.subr.mxu0 0.0
      %7672 = vmatpush1.msra.mxu0 0.0
      %7673 = vmatprep.subr.mxu0 0.0
      %7674 = vmatpush1.msra.mxu0 0.0
      %7675 = vmatprep.subr.mxu0 0.0
      %7676 = vmatpush1.msra.mxu0 0.0
      %7677 = vmatprep.subr.mxu0 0.0
      %7678 = vmatpush1.msra.mxu0 0.0
      %7679 = vmatprep.subr.mxu0 0.0
      %7680 = vmatpush1.msra.mxu0 0.0
      %7681 = vmatprep.subr.mxu0 0.0
      %7682 = vmatpush1.msra.mxu0 0.0
      %7683 = vmatprep.subr.mxu0 0.0
      %7684 = vmatpush1.msra.mxu0 0.0
      %7685 = vmatprep.subr.mxu0 0.0
      %7686 = vmatpush1.msra.mxu0 0.0
      %7687 = vmatprep.subr.mxu0 0.0
      %7688 = vmatpush1.msra.mxu0 0.0
      %7689 = vmatprep.subr.mxu0 0.0
      %7690 = vmatpush1.msra.mxu0 0.0
      %7691 = vmatprep.subr.mxu0 0.0
      %7692 = vmatpush1.msra.mxu0 0.0
      %7693 = vmatprep.subr.mxu0 0.0
      %7694 = vmatpush1.msra.mxu0 0.0
      %7695 = vmatprep.subr.mxu0 0.0
      %7696 = vmatpush1.msra.mxu0 0.0
      %7697 = vmatprep.subr.mxu0 0.0
      %7698 = vmatpush1.msra.mxu0 0.0
      %7699 = vmatprep.subr.mxu0 0.0
      %7700 = vmatpush1.msra.mxu0 0.0
      %7701 = vmatprep.subr.mxu0 0.0
      %7702 = vmatpush1.msra.mxu0 0.0
      %7703 = vmatprep.subr.mxu0 0.0
      %7704 = vmatpush1.msra.mxu0 0.0
      %7705 = vmatprep.subr.mxu0 0.0
      %7706 = vmatpush1.msra.mxu0 0.0
      %7707 = vmatprep.subr.mxu0 0.0
      %7708 = vmatpush1.msra.mxu0 0.0
      %7709 = vmatprep.subr.mxu0 0.0
      %7710 = vmatpush1.msra.mxu0 0.0
      %7711 = vmatprep.subr.mxu0 0.0
      %7712 = vmatpush1.msra.mxu0 0.0
      %7713 = vmatprep.subr.mxu0 0.0
      %7714 = vmatpush1.msra.mxu0 0.0
      %7715 = vmatprep.subr.mxu0 0.0
      %7716 = vmatpush1.msra.mxu0 0.0
      %7717 = vmatprep.subr.mxu0 0.0
      %7718 = vmatpush1.msra.mxu0 0.0
      %7719 = vmatprep.subr.mxu0 0.0
      %7720 = vmatpush1.msra.mxu0 0.0
      %7721 = vmatprep.subr.mxu0 0.0
      %7722 = vmatpush1.msra.mxu0 0.0
      %7723 = vmatprep.subr.mxu0 0.0
      %7724 = vmatpush1.msra.mxu0 0.0
      %7725 = vmatprep.subr.mxu0 0.0
      %7726 = vmatpush1.msra.mxu0 0.0
      %7727 = vmatprep.subr.mxu0 0.0
      %7728 = vmatpush1.msra.mxu0 0.0
      %7729 = vmatprep.subr.mxu0 0.0
      %7730 = vmatpush1.msra.mxu0 0.0
      %7731 = vmatprep.mubr.f32.mxu0 0.0
      %7732 = vmatmul.mubr.f32.gmra.mrb[0].mxu0 %v7644
      %v7733 = vpop.f32.mrb[0].mxu0
      %v7734 = vadd.f32 0.0, %v7733
      %v7735 = vpop.f32.mrb[0].mxu0
      %7736 = vmatprep.mubr.f32.mxu0 0.0
      %7737 = vmatmul.mubr.f32.gmra.mrb[0].mxu0 %v7647
      %v7738 = vpop.f32.mrb[0].mxu0
      %v7739 = vadd.f32 0.0, %v7738
      %v7740 = vpop.f32.mrb[0].mxu0
      %7741 = vmatprep.mubr.f32.mxu0 0.0
      %7742 = vmatmul.mubr.f32.gmra.mrb[0].mxu0 %v7650
      %v7743 = vpop.f32.mrb[0].mxu0
      %v7744 = vadd.f32 0.0, %v7743
      %v7745 = vpop.f32.mrb[0].mxu0
      %7746 = vmatprep.mubr.f32.mxu0 0.0
      %7747 = vmatmul.mubr.f32.gmra.mrb[0].mxu0 %v7653
      %v7748 = vpop.f32.mrb[0].mxu0
      %v7749 = vadd.f32 0.0, %v7748
      %v7750 = vpop.f32.mrb[0].mxu0
      %7751 = vmatprep.mubr.f32.mxu0 0.0
      %7752 = vmatmul.mubr.f32.gmra.mrb[0].mxu0 %v7656
      %v7753 = vpop.f32.mrb[0].mxu0
      %v7754 = vadd.f32 0.0, %v7753
      %v7755 = vpop.f32.mrb[0].mxu0
      %7756 = vmatprep.mubr.f32.mxu0 0.0
      %7757 = vmatmul.mubr.f32.gmra.mrb[0].mxu0 %v7659
      %v7758 = vpop.f32.mrb[0].mxu0
      %v7759 = vadd.f32 0.0, %v7758
      %v7760 = vpop.f32.mrb[0].mxu0
      %7761 = vmatprep.mubr.f32.mxu0 0.0
      %7762 = vmatmul.mubr.f32.gmra.mrb[0].mxu0 %v7662
      %v7763 = vpop.f32.mrb[0].mxu0
      %v7764 = vadd.f32 0.0, %v7763
      %v7765 = vpop.f32.mrb[0].mxu0
      %7766 = vmatprep.mubr.f32.mxu0 0.0
      %7767 = vmatmul.mubr.f32.gmra.mrb[0].mxu0 %v7665
      %v7768 = vpop.f32.mrb[0].mxu0
      %v7769 = vadd.f32 0.0, %v7768
      %v7770 = vpop.f32.mrb[0].mxu0
      %7771 = vdwg.mxu0
      %v7772 = vadd.f32 %v7625, %v7734
      %v7773 = vadd.f32 %v7626, %v7739
      %v7774 = vadd.f32 %v7627, %v7744
      %v7775 = vadd.f32 %v7628, %v7749
      %v7776 = vadd.f32 %v7629, %v7754
      %v7777 = vadd.f32 %v7630, %v7759
      %v7778 = vadd.f32 %v7631, %v7764
      %v7779 = vadd.f32 %v7632, %v7769
      %s7780 = scalar_lea.vmem [#allocation3], 48
      %v7781 = vld [vmem:[%s7780] sm:$0xff]
      %v7782 = vld [vmem:[%s7780 + $0x10] sm:$0xff]
      %v7783 = vld [vmem:[%s7780 + $0x20] sm:$0xff]
      %v7784 = vld [vmem:[%s7780 + $0x30] sm:$0xff]
      %v7785 = vld [vmem:[%s7780 + $0x40] sm:$0xff]
      %v7786 = vld [vmem:[%s7780 + $0x50] sm:$0xff]
      %v7787 = vld [vmem:[%s7780 + $0x60] sm:$0xff]
      %v7788 = vld [vmem:[%s7780 + $0x70] sm:$0xff]
      %s7789 = scalar_lea.vmem %s3, 120
      %v7790 = vld [vmem:[%s7789] sm:$0xff]
      %v7792 = vsel %vm5142, %v7781, 0
      %v7795 = vsel %vm5142, %v7782, 0
      %v7798 = vsel %vm5142, %v7783, 0
      %v7801 = vsel %vm5142, %v7784, 0
      %v7804 = vsel %vm5142, %v7785, 0
      %v7807 = vsel %vm5142, %v7786, 0
      %v7810 = vsel %vm5142, %v7787, 0
      %v7813 = vsel %vm5142, %v7788, 0
      %7815 = vmatprep.subr.mxu0 0.0
      %7816 = vmatpush1.msra.mxu0 %v7790
      %7817 = vmatprep.subr.mxu0 0.0
      %7818 = vmatpush1.msra.mxu0 0.0
      %7819 = vmatprep.subr.mxu0 0.0
      %7820 = vmatpush1.msra.mxu0 0.0
      %7821 = vmatprep.subr.mxu0 0.0
      %7822 = vmatpush1.msra.mxu0 0.0
      %7823 = vmatprep.subr.mxu0 0.0
      %7824 = vmatpush1.msra.mxu0 0.0
      %7825 = vmatprep.subr.mxu0 0.0
      %7826 = vmatpush1.msra.mxu0 0.0
      %7827 = vmatprep.subr.mxu0 0.0
      %7828 = vmatpush1.msra.mxu0 0.0
      %7829 = vmatprep.subr.mxu0 0.0
      %7830 = vmatpush1.msra.mxu0 0.0
      %7831 = vmatprep.subr.mxu0 0.0
      %7832 = vmatpush1.msra.mxu0 0.0
      %7833 = vmatprep.subr.mxu0 0.0
      %7834 = vmatpush1.msra.mxu0 0.0
      %7835 = vmatprep.subr.mxu0 0.0
      %7836 = vmatpush1.msra.mxu0 0.0
      %7837 = vmatprep.subr.mxu0 0.0
      %7838 = vmatpush1.msra.mxu0 0.0
      %7839 = vmatprep.subr.mxu0 0.0
      %7840 = vmatpush1.msra.mxu0 0.0
      %7841 = vmatprep.subr.mxu0 0.0
      %7842 = vmatpush1.msra.mxu0 0.0
      %7843 = vmatprep.subr.mxu0 0.0
      %7844 = vmatpush1.msra.mxu0 0.0
      %7845 = vmatprep.subr.mxu0 0.0
      %7846 = vmatpush1.msra.mxu0 0.0
      %7847 = vmatprep.subr.mxu0 0.0
      %7848 = vmatpush1.msra.mxu0 0.0
      %7849 = vmatprep.subr.mxu0 0.0
      %7850 = vmatpush1.msra.mxu0 0.0
      %7851 = vmatprep.subr.mxu0 0.0
      %7852 = vmatpush1.msra.mxu0 0.0
      %7853 = vmatprep.subr.mxu0 0.0
      %7854 = vmatpush1.msra.mxu0 0.0
      %7855 = vmatprep.subr.mxu0 0.0
      %7856 = vmatpush1.msra.mxu0 0.0
      %7857 = vmatprep.subr.mxu0 0.0
      %7858 = vmatpush1.msra.mxu0 0.0
      %7859 = vmatprep.subr.mxu0 0.0
      %7860 = vmatpush1.msra.mxu0 0.0
      %7861 = vmatprep.subr.mxu0 0.0
      %7862 = vmatpush1.msra.mxu0 0.0
      %7863 = vmatprep.subr.mxu0 0.0
      %7864 = vmatpush1.msra.mxu0 0.0
      %7865 = vmatprep.subr.mxu0 0.0
      %7866 = vmatpush1.msra.mxu0 0.0
      %7867 = vmatprep.subr.mxu0 0.0
      %7868 = vmatpush1.msra.mxu0 0.0
      %7869 = vmatprep.subr.mxu0 0.0
      %7870 = vmatpush1.msra.mxu0 0.0
      %7871 = vmatprep.subr.mxu0 0.0
      %7872 = vmatpush1.msra.mxu0 0.0
      %7873 = vmatprep.subr.mxu0 0.0
      %7874 = vmatpush1.msra.mxu0 0.0
      %7875 = vmatprep.subr.mxu0 0.0
      %7876 = vmatpush1.msra.mxu0 0.0
      %7877 = vmatprep.subr.mxu0 0.0
      %7878 = vmatpush1.msra.mxu0 0.0
      %7879 = vmatprep.mubr.f32.mxu0 0.0
      %7880 = vmatmul.mubr.f32.gmra.mrb[0].mxu0 %v7792
      %v7881 = vpop.f32.mrb[0].mxu0
      %v7882 = vadd.f32 0.0, %v7881
      %v7883 = vpop.f32.mrb[0].mxu0
      %7884 = vmatprep.mubr.f32.mxu0 0.0
      %7885 = vmatmul.mubr.f32.gmra.mrb[0].mxu0 %v7795
      %v7886 = vpop.f32.mrb[0].mxu0
      %v7887 = vadd.f32 0.0, %v7886
      %v7888 = vpop.f32.mrb[0].mxu0
      %7889 = vmatprep.mubr.f32.mxu0 0.0
      %7890 = vmatmul.mubr.f32.gmra.mrb[0].mxu0 %v7798
      %v7891 = vpop.f32.mrb[0].mxu0
      %v7892 = vadd.f32 0.0, %v7891
      %v7893 = vpop.f32.mrb[0].mxu0
      %7894 = vmatprep.mubr.f32.mxu0 0.0
      %7895 = vmatmul.mubr.f32.gmra.mrb[0].mxu0 %v7801
      %v7896 = vpop.f32.mrb[0].mxu0
      %v7897 = vadd.f32 0.0, %v7896
      %v7898 = vpop.f32.mrb[0].mxu0
      %7899 = vmatprep.mubr.f32.mxu0 0.0
      %7900 = vmatmul.mubr.f32.gmra.mrb[0].mxu0 %v7804
      %v7901 = vpop.f32.mrb[0].mxu0
      %v7902 = vadd.f32 0.0, %v7901
      %v7903 = vpop.f32.mrb[0].mxu0
      %7904 = vmatprep.mubr.f32.mxu0 0.0
      %7905 = vmatmul.mubr.f32.gmra.mrb[0].mxu0 %v7807
      %v7906 = vpop.f32.mrb[0].mxu0
      %v7907 = vadd.f32 0.0, %v7906
      %v7908 = vpop.f32.mrb[0].mxu0
      %7909 = vmatprep.mubr.f32.mxu0 0.0
      %7910 = vmatmul.mubr.f32.gmra.mrb[0].mxu0 %v7810
      %v7911 = vpop.f32.mrb[0].mxu0
      %v7912 = vadd.f32 0.0, %v7911
      %v7913 = vpop.f32.mrb[0].mxu0
      %7914 = vmatprep.mubr.f32.mxu0 0.0
      %7915 = vmatmul.mubr.f32.gmra.mrb[0].mxu0 %v7813
      %v7916 = vpop.f32.mrb[0].mxu0
      %v7917 = vadd.f32 0.0, %v7916
      %v7918 = vpop.f32.mrb[0].mxu0
      %7919 = vdwg.mxu0
      %v7920 = vadd.f32 %v7772, %v7882
      %v7921 = vadd.f32 %v7773, %v7887
      %v7922 = vadd.f32 %v7774, %v7892
      %v7923 = vadd.f32 %v7775, %v7897
      %v7924 = vadd.f32 %v7776, %v7902
      %v7925 = vadd.f32 %v7777, %v7907
      %v7926 = vadd.f32 %v7778, %v7912
      %v7927 = vadd.f32 %v7779, %v7917
      %v7928 = vld [vmem:[%s7780 + $0x1] sm:$0xff]
      %v7929 = vld [vmem:[%s7780 + $0x11] sm:$0xff]
      %v7930 = vld [vmem:[%s7780 + $0x21] sm:$0xff]
      %v7931 = vld [vmem:[%s7780 + $0x31] sm:$0xff]
      %v7932 = vld [vmem:[%s7780 + $0x41] sm:$0xff]
      %v7933 = vld [vmem:[%s7780 + $0x51] sm:$0xff]
      %v7934 = vld [vmem:[%s7780 + $0x61] sm:$0xff]
      %v7935 = vld [vmem:[%s7780 + $0x71] sm:$0xff]
      %s7936 = scalar_lea.vmem %s3, 128
      %v7937 = vld [vmem:[%s7936] sm:$0xff]
      %v7939 = vsel %vm5142, %v7928, 0
      %v7942 = vsel %vm5142, %v7929, 0
      %v7945 = vsel %vm5142, %v7930, 0
      %v7948 = vsel %vm5142, %v7931, 0
      %v7951 = vsel %vm5142, %v7932, 0
      %v7954 = vsel %vm5142, %v7933, 0
      %v7957 = vsel %vm5142, %v7934, 0
      %v7960 = vsel %vm5142, %v7935, 0
      %7962 = vmatprep.subr.mxu0 0.0
      %7963 = vmatpush1.msra.mxu0 %v7937
      %7964 = vmatprep.subr.mxu0 0.0
      %7965 = vmatpush1.msra.mxu0 0.0
      %7966 = vmatprep.subr.mxu0 0.0
      %7967 = vmatpush1.msra.mxu0 0.0
      %7968 = vmatprep.subr.mxu0 0.0
      %7969 = vmatpush1.msra.mxu0 0.0
      %7970 = vmatprep.subr.mxu0 0.0
      %7971 = vmatpush1.msra.mxu0 0.0
      %7972 = vmatprep.subr.mxu0 0.0
      %7973 = vmatpush1.msra.mxu0 0.0
      %7974 = vmatprep.subr.mxu0 0.0
      %7975 = vmatpush1.msra.mxu0 0.0
      %7976 = vmatprep.subr.mxu0 0.0
      %7977 = vmatpush1.msra.mxu0 0.0
      %7978 = vmatprep.subr.mxu0 0.0
      %7979 = vmatpush1.msra.mxu0 0.0
      %7980 = vmatprep.subr.mxu0 0.0
      %7981 = vmatpush1.msra.mxu0 0.0
      %7982 = vmatprep.subr.mxu0 0.0
      %7983 = vmatpush1.msra.mxu0 0.0
      %7984 = vmatprep.subr.mxu0 0.0
      %7985 = vmatpush1.msra.mxu0 0.0
      %7986 = vmatprep.subr.mxu0 0.0
      %7987 = vmatpush1.msra.mxu0 0.0
      %7988 = vmatprep.subr.mxu0 0.0
      %7989 = vmatpush1.msra.mxu0 0.0
      %7990 = vmatprep.subr.mxu0 0.0
      %7991 = vmatpush1.msra.mxu0 0.0
      %7992 = vmatprep.subr.mxu0 0.0
      %7993 = vmatpush1.msra.mxu0 0.0
      %7994 = vmatprep.subr.mxu0 0.0
      %7995 = vmatpush1.msra.mxu0 0.0
      %7996 = vmatprep.subr.mxu0 0.0
      %7997 = vmatpush1.msra.mxu0 0.0
      %7998 = vmatprep.subr.mxu0 0.0
      %7999 = vmatpush1.msra.mxu0 0.0
      %8000 = vmatprep.subr.mxu0 0.0
      %8001 = vmatpush1.msra.mxu0 0.0
      %8002 = vmatprep.subr.mxu0 0.0
      %8003 = vmatpush1.msra.mxu0 0.0
      %8004 = vmatprep.subr.mxu0 0.0
      %8005 = vmatpush1.msra.mxu0 0.0
      %8006 = vmatprep.subr.mxu0 0.0
      %8007 = vmatpush1.msra.mxu0 0.0
      %8008 = vmatprep.subr.mxu0 0.0
      %8009 = vmatpush1.msra.mxu0 0.0
      %8010 = vmatprep.subr.mxu0 0.0
      %8011 = vmatpush1.msra.mxu0 0.0
      %8012 = vmatprep.subr.mxu0 0.0
      %8013 = vmatpush1.msra.mxu0 0.0
      %8014 = vmatprep.subr.mxu0 0.0
      %8015 = vmatpush1.msra.mxu0 0.0
      %8016 = vmatprep.subr.mxu0 0.0
      %8017 = vmatpush1.msra.mxu0 0.0
      %8018 = vmatprep.subr.mxu0 0.0
      %8019 = vmatpush1.msra.mxu0 0.0
      %8020 = vmatprep.subr.mxu0 0.0
      %8021 = vmatpush1.msra.mxu0 0.0
      %8022 = vmatprep.subr.mxu0 0.0
      %8023 = vmatpush1.msra.mxu0 0.0
      %8024 = vmatprep.subr.mxu0 0.0
      %8025 = vmatpush1.msra.mxu0 0.0
      %8026 = vmatprep.mubr.f32.mxu0 0.0
      %8027 = vmatmul.mubr.f32.gmra.mrb[0].mxu0 %v7939
      %v8028 = vpop.f32.mrb[0].mxu0
      %v8029 = vadd.f32 0.0, %v8028
      %v8030 = vpop.f32.mrb[0].mxu0
      %8031 = vmatprep.mubr.f32.mxu0 0.0
      %8032 = vmatmul.mubr.f32.gmra.mrb[0].mxu0 %v7942
      %v8033 = vpop.f32.mrb[0].mxu0
      %v8034 = vadd.f32 0.0, %v8033
      %v8035 = vpop.f32.mrb[0].mxu0
      %8036 = vmatprep.mubr.f32.mxu0 0.0
      %8037 = vmatmul.mubr.f32.gmra.mrb[0].mxu0 %v7945
      %v8038 = vpop.f32.mrb[0].mxu0
      %v8039 = vadd.f32 0.0, %v8038
      %v8040 = vpop.f32.mrb[0].mxu0
      %8041 = vmatprep.mubr.f32.mxu0 0.0
      %8042 = vmatmul.mubr.f32.gmra.mrb[0].mxu0 %v7948
      %v8043 = vpop.f32.mrb[0].mxu0
      %v8044 = vadd.f32 0.0, %v8043
      %v8045 = vpop.f32.mrb[0].mxu0
      %8046 = vmatprep.mubr.f32.mxu0 0.0
      %8047 = vmatmul.mubr.f32.gmra.mrb[0].mxu0 %v7951
      %v8048 = vpop.f32.mrb[0].mxu0
      %v8049 = vadd.f32 0.0, %v8048
      %v8050 = vpop.f32.mrb[0].mxu0
      %8051 = vmatprep.mubr.f32.mxu0 0.0
      %8052 = vmatmul.mubr.f32.gmra.mrb[0].mxu0 %v7954
      %v8053 = vpop.f32.mrb[0].mxu0
      %v8054 = vadd.f32 0.0, %v8053
      %v8055 = vpop.f32.mrb[0].mxu0
      %8056 = vmatprep.mubr.f32.mxu0 0.0
      %8057 = vmatmul.mubr.f32.gmra.mrb[0].mxu0 %v7957
      %v8058 = vpop.f32.mrb[0].mxu0
      %v8059 = vadd.f32 0.0, %v8058
      %v8060 = vpop.f32.mrb[0].mxu0
      %8061 = vmatprep.mubr.f32.mxu0 0.0
      %8062 = vmatmul.mubr.f32.gmra.mrb[0].mxu0 %v7960
      %v8063 = vpop.f32.mrb[0].mxu0
      %v8064 = vadd.f32 0.0, %v8063
      %v8065 = vpop.f32.mrb[0].mxu0
      %8066 = vdwg.mxu0
      %v8067 = vadd.f32 %v7920, %v8029
      %v8068 = vadd.f32 %v7921, %v8034
      %v8069 = vadd.f32 %v7922, %v8039
      %v8070 = vadd.f32 %v7923, %v8044
      %v8071 = vadd.f32 %v7924, %v8049
      %v8072 = vadd.f32 %v7925, %v8054
      %v8073 = vadd.f32 %v7926, %v8059
      %v8074 = vadd.f32 %v7927, %v8064
      %v8075 = vld [vmem:[%s7780 + $0x2] sm:$0xff]
      %v8076 = vld [vmem:[%s7780 + $0x12] sm:$0xff]
      %v8077 = vld [vmem:[%s7780 + $0x22] sm:$0xff]
      %v8078 = vld [vmem:[%s7780 + $0x32] sm:$0xff]
      %v8079 = vld [vmem:[%s7780 + $0x42] sm:$0xff]
      %v8080 = vld [vmem:[%s7780 + $0x52] sm:$0xff]
      %v8081 = vld [vmem:[%s7780 + $0x62] sm:$0xff]
      %v8082 = vld [vmem:[%s7780 + $0x72] sm:$0xff]
      %s8083 = scalar_lea.vmem %s3, 136
      %v8084 = vld [vmem:[%s8083] sm:$0xff]
      %v8086 = vsel %vm5142, %v8075, 0
      %v8089 = vsel %vm5142, %v8076, 0
      %v8092 = vsel %vm5142, %v8077, 0
      %v8095 = vsel %vm5142, %v8078, 0
      %v8098 = vsel %vm5142, %v8079, 0
      %v8101 = vsel %vm5142, %v8080, 0
      %v8104 = vsel %vm5142, %v8081, 0
      %v8107 = vsel %vm5142, %v8082, 0
      %8109 = vmatprep.subr.mxu0 0.0
      %8110 = vmatpush1.msra.mxu0 %v8084
      %8111 = vmatprep.subr.mxu0 0.0
      %8112 = vmatpush1.msra.mxu0 0.0
      %8113 = vmatprep.subr.mxu0 0.0
      %8114 = vmatpush1.msra.mxu0 0.0
      %8115 = vmatprep.subr.mxu0 0.0
      %8116 = vmatpush1.msra.mxu0 0.0
      %8117 = vmatprep.subr.mxu0 0.0
      %8118 = vmatpush1.msra.mxu0 0.0
      %8119 = vmatprep.subr.mxu0 0.0
      %8120 = vmatpush1.msra.mxu0 0.0
      %8121 = vmatprep.subr.mxu0 0.0
      %8122 = vmatpush1.msra.mxu0 0.0
      %8123 = vmatprep.subr.mxu0 0.0
      %8124 = vmatpush1.msra.mxu0 0.0
      %8125 = vmatprep.subr.mxu0 0.0
      %8126 = vmatpush1.msra.mxu0 0.0
      %8127 = vmatprep.subr.mxu0 0.0
      %8128 = vmatpush1.msra.mxu0 0.0
      %8129 = vmatprep.subr.mxu0 0.0
      %8130 = vmatpush1.msra.mxu0 0.0
      %8131 = vmatprep.subr.mxu0 0.0
      %8132 = vmatpush1.msra.mxu0 0.0
      %8133 = vmatprep.subr.mxu0 0.0
      %8134 = vmatpush1.msra.mxu0 0.0
      %8135 = vmatprep.subr.mxu0 0.0
      %8136 = vmatpush1.msra.mxu0 0.0
      %8137 = vmatprep.subr.mxu0 0.0
      %8138 = vmatpush1.msra.mxu0 0.0
      %8139 = vmatprep.subr.mxu0 0.0
      %8140 = vmatpush1.msra.mxu0 0.0
      %8141 = vmatprep.subr.mxu0 0.0
      %8142 = vmatpush1.msra.mxu0 0.0
      %8143 = vmatprep.subr.mxu0 0.0
      %8144 = vmatpush1.msra.mxu0 0.0
      %8145 = vmatprep.subr.mxu0 0.0
      %8146 = vmatpush1.msra.mxu0 0.0
      %8147 = vmatprep.subr.mxu0 0.0
      %8148 = vmatpush1.msra.mxu0 0.0
      %8149 = vmatprep.subr.mxu0 0.0
      %8150 = vmatpush1.msra.mxu0 0.0
      %8151 = vmatprep.subr.mxu0 0.0
      %8152 = vmatpush1.msra.mxu0 0.0
      %8153 = vmatprep.subr.mxu0 0.0
      %8154 = vmatpush1.msra.mxu0 0.0
      %8155 = vmatprep.subr.mxu0 0.0
      %8156 = vmatpush1.msra.mxu0 0.0
      %8157 = vmatprep.subr.mxu0 0.0
      %8158 = vmatpush1.msra.mxu0 0.0
      %8159 = vmatprep.subr.mxu0 0.0
      %8160 = vmatpush1.msra.mxu0 0.0
      %8161 = vmatprep.subr.mxu0 0.0
      %8162 = vmatpush1.msra.mxu0 0.0
      %8163 = vmatprep.subr.mxu0 0.0
      %8164 = vmatpush1.msra.mxu0 0.0
      %8165 = vmatprep.subr.mxu0 0.0
      %8166 = vmatpush1.msra.mxu0 0.0
      %8167 = vmatprep.subr.mxu0 0.0
      %8168 = vmatpush1.msra.mxu0 0.0
      %8169 = vmatprep.subr.mxu0 0.0
      %8170 = vmatpush1.msra.mxu0 0.0
      %8171 = vmatprep.subr.mxu0 0.0
      %8172 = vmatpush1.msra.mxu0 0.0
      %8173 = vmatprep.mubr.f32.mxu0 0.0
      %8174 = vmatmul.mubr.f32.gmra.mrb[0].mxu0 %v8086
      %v8175 = vpop.f32.mrb[0].mxu0
      %v8176 = vadd.f32 0.0, %v8175
      %v8177 = vpop.f32.mrb[0].mxu0
      %8178 = vmatprep.mubr.f32.mxu0 0.0
      %8179 = vmatmul.mubr.f32.gmra.mrb[0].mxu0 %v8089
      %v8180 = vpop.f32.mrb[0].mxu0
      %v8181 = vadd.f32 0.0, %v8180
      %v8182 = vpop.f32.mrb[0].mxu0
      %8183 = vmatprep.mubr.f32.mxu0 0.0
      %8184 = vmatmul.mubr.f32.gmra.mrb[0].mxu0 %v8092
      %v8185 = vpop.f32.mrb[0].mxu0
      %v8186 = vadd.f32 0.0, %v8185
      %v8187 = vpop.f32.mrb[0].mxu0
      %8188 = vmatprep.mubr.f32.mxu0 0.0
      %8189 = vmatmul.mubr.f32.gmra.mrb[0].mxu0 %v8095
      %v8190 = vpop.f32.mrb[0].mxu0
      %v8191 = vadd.f32 0.0, %v8190
      %v8192 = vpop.f32.mrb[0].mxu0
      %8193 = vmatprep.mubr.f32.mxu0 0.0
      %8194 = vmatmul.mubr.f32.gmra.mrb[0].mxu0 %v8098
      %v8195 = vpop.f32.mrb[0].mxu0
      %v8196 = vadd.f32 0.0, %v8195
      %v8197 = vpop.f32.mrb[0].mxu0
      %8198 = vmatprep.mubr.f32.mxu0 0.0
      %8199 = vmatmul.mubr.f32.gmra.mrb[0].mxu0 %v8101
      %v8200 = vpop.f32.mrb[0].mxu0
      %v8201 = vadd.f32 0.0, %v8200
      %v8202 = vpop.f32.mrb[0].mxu0
      %8203 = vmatprep.mubr.f32.mxu0 0.0
      %8204 = vmatmul.mubr.f32.gmra.mrb[0].mxu0 %v8104
      %v8205 = vpop.f32.mrb[0].mxu0
      %v8206 = vadd.f32 0.0, %v8205
      %v8207 = vpop.f32.mrb[0].mxu0
      %8208 = vmatprep.mubr.f32.mxu0 0.0
      %8209 = vmatmul.mubr.f32.gmra.mrb[0].mxu0 %v8107
      %v8210 = vpop.f32.mrb[0].mxu0
      %v8211 = vadd.f32 0.0, %v8210
      %v8212 = vpop.f32.mrb[0].mxu0
      %8213 = vdwg.mxu0
      %v8214 = vadd.f32 %v8067, %v8176
      %v8215 = vadd.f32 %v8068, %v8181
      %v8216 = vadd.f32 %v8069, %v8186
      %v8217 = vadd.f32 %v8070, %v8191
      %v8218 = vadd.f32 %v8071, %v8196
      %v8219 = vadd.f32 %v8072, %v8201
      %v8220 = vadd.f32 %v8073, %v8206
      %v8221 = vadd.f32 %v8074, %v8211
      %v8222 = vld [vmem:[%s7780 + $0x3] sm:$0xff]
      %v8223 = vld [vmem:[%s7780 + $0x13] sm:$0xff]
      %v8224 = vld [vmem:[%s7780 + $0x23] sm:$0xff]
      %v8225 = vld [vmem:[%s7780 + $0x33] sm:$0xff]
      %v8226 = vld [vmem:[%s7780 + $0x43] sm:$0xff]
      %v8227 = vld [vmem:[%s7780 + $0x53] sm:$0xff]
      %v8228 = vld [vmem:[%s7780 + $0x63] sm:$0xff]
      %v8229 = vld [vmem:[%s7780 + $0x73] sm:$0xff]
      %s8230 = scalar_lea.vmem %s3, 144
      %v8231 = vld [vmem:[%s8230] sm:$0xff]
      %v8233 = vsel %vm5142, %v8222, 0
      %v8236 = vsel %vm5142, %v8223, 0
      %v8239 = vsel %vm5142, %v8224, 0
      %v8242 = vsel %vm5142, %v8225, 0
      %v8245 = vsel %vm5142, %v8226, 0
      %v8248 = vsel %vm5142, %v8227, 0
      %v8251 = vsel %vm5142, %v8228, 0
      %v8254 = vsel %vm5142, %v8229, 0
      %8256 = vmatprep.subr.mxu0 0.0
      %8257 = vmatpush1.msra.mxu0 %v8231
      %8258 = vmatprep.subr.mxu0 0.0
      %8259 = vmatpush1.msra.mxu0 0.0
      %8260 = vmatprep.subr.mxu0 0.0
      %8261 = vmatpush1.msra.mxu0 0.0
      %8262 = vmatprep.subr.mxu0 0.0
      %8263 = vmatpush1.msra.mxu0 0.0
      %8264 = vmatprep.subr.mxu0 0.0
      %8265 = vmatpush1.msra.mxu0 0.0
      %8266 = vmatprep.subr.mxu0 0.0
      %8267 = vmatpush1.msra.mxu0 0.0
      %8268 = vmatprep.subr.mxu0 0.0
      %8269 = vmatpush1.msra.mxu0 0.0
      %8270 = vmatprep.subr.mxu0 0.0
      %8271 = vmatpush1.msra.mxu0 0.0
      %8272 = vmatprep.subr.mxu0 0.0
      %8273 = vmatpush1.msra.mxu0 0.0
      %8274 = vmatprep.subr.mxu0 0.0
      %8275 = vmatpush1.msra.mxu0 0.0
      %8276 = vmatprep.subr.mxu0 0.0
      %8277 = vmatpush1.msra.mxu0 0.0
      %8278 = vmatprep.subr.mxu0 0.0
      %8279 = vmatpush1.msra.mxu0 0.0
      %8280 = vmatprep.subr.mxu0 0.0
      %8281 = vmatpush1.msra.mxu0 0.0
      %8282 = vmatprep.subr.mxu0 0.0
      %8283 = vmatpush1.msra.mxu0 0.0
      %8284 = vmatprep.subr.mxu0 0.0
      %8285 = vmatpush1.msra.mxu0 0.0
      %8286 = vmatprep.subr.mxu0 0.0
      %8287 = vmatpush1.msra.mxu0 0.0
      %8288 = vmatprep.subr.mxu0 0.0
      %8289 = vmatpush1.msra.mxu0 0.0
      %8290 = vmatprep.subr.mxu0 0.0
      %8291 = vmatpush1.msra.mxu0 0.0
      %8292 = vmatprep.subr.mxu0 0.0
      %8293 = vmatpush1.msra.mxu0 0.0
      %8294 = vmatprep.subr.mxu0 0.0
      %8295 = vmatpush1.msra.mxu0 0.0
      %8296 = vmatprep.subr.mxu0 0.0
      %8297 = vmatpush1.msra.mxu0 0.0
      %8298 = vmatprep.subr.mxu0 0.0
      %8299 = vmatpush1.msra.mxu0 0.0
      %8300 = vmatprep.subr.mxu0 0.0
      %8301 = vmatpush1.msra.mxu0 0.0
      %8302 = vmatprep.subr.mxu0 0.0
      %8303 = vmatpush1.msra.mxu0 0.0
      %8304 = vmatprep.subr.mxu0 0.0
      %8305 = vmatpush1.msra.mxu0 0.0
      %8306 = vmatprep.subr.mxu0 0.0
      %8307 = vmatpush1.msra.mxu0 0.0
      %8308 = vmatprep.subr.mxu0 0.0
      %8309 = vmatpush1.msra.mxu0 0.0
      %8310 = vmatprep.subr.mxu0 0.0
      %8311 = vmatpush1.msra.mxu0 0.0
      %8312 = vmatprep.subr.mxu0 0.0
      %8313 = vmatpush1.msra.mxu0 0.0
      %8314 = vmatprep.subr.mxu0 0.0
      %8315 = vmatpush1.msra.mxu0 0.0
      %8316 = vmatprep.subr.mxu0 0.0
      %8317 = vmatpush1.msra.mxu0 0.0
      %8318 = vmatprep.subr.mxu0 0.0
      %8319 = vmatpush1.msra.mxu0 0.0
      %8320 = vmatprep.mubr.f32.mxu0 0.0
      %8321 = vmatmul.mubr.f32.gmra.mrb[0].mxu0 %v8233
      %v8322 = vpop.f32.mrb[0].mxu0
      %v8323 = vadd.f32 0.0, %v8322
      %v8324 = vpop.f32.mrb[0].mxu0
      %8325 = vmatprep.mubr.f32.mxu0 0.0
      %8326 = vmatmul.mubr.f32.gmra.mrb[0].mxu0 %v8236
      %v8327 = vpop.f32.mrb[0].mxu0
      %v8328 = vadd.f32 0.0, %v8327
      %v8329 = vpop.f32.mrb[0].mxu0
      %8330 = vmatprep.mubr.f32.mxu0 0.0
      %8331 = vmatmul.mubr.f32.gmra.mrb[0].mxu0 %v8239
      %v8332 = vpop.f32.mrb[0].mxu0
      %v8333 = vadd.f32 0.0, %v8332
      %v8334 = vpop.f32.mrb[0].mxu0
      %8335 = vmatprep.mubr.f32.mxu0 0.0
      %8336 = vmatmul.mubr.f32.gmra.mrb[0].mxu0 %v8242
      %v8337 = vpop.f32.mrb[0].mxu0
      %v8338 = vadd.f32 0.0, %v8337
      %v8339 = vpop.f32.mrb[0].mxu0
      %8340 = vmatprep.mubr.f32.mxu0 0.0
      %8341 = vmatmul.mubr.f32.gmra.mrb[0].mxu0 %v8245
      %v8342 = vpop.f32.mrb[0].mxu0
      %v8343 = vadd.f32 0.0, %v8342
      %v8344 = vpop.f32.mrb[0].mxu0
      %8345 = vmatprep.mubr.f32.mxu0 0.0
      %8346 = vmatmul.mubr.f32.gmra.mrb[0].mxu0 %v8248
      %v8347 = vpop.f32.mrb[0].mxu0
      %v8348 = vadd.f32 0.0, %v8347
      %v8349 = vpop.f32.mrb[0].mxu0
      %8350 = vmatprep.mubr.f32.mxu0 0.0
      %8351 = vmatmul.mubr.f32.gmra.mrb[0].mxu0 %v8251
      %v8352 = vpop.f32.mrb[0].mxu0
      %v8353 = vadd.f32 0.0, %v8352
      %v8354 = vpop.f32.mrb[0].mxu0
      %8355 = vmatprep.mubr.f32.mxu0 0.0
      %8356 = vmatmul.mubr.f32.gmra.mrb[0].mxu0 %v8254
      %v8357 = vpop.f32.mrb[0].mxu0
      %v8358 = vadd.f32 0.0, %v8357
      %v8359 = vpop.f32.mrb[0].mxu0
      %8360 = vdwg.mxu0
      %v8361 = vadd.f32 %v8214, %v8323
      %v8362 = vadd.f32 %v8215, %v8328
      %v8363 = vadd.f32 %v8216, %v8333
      %v8364 = vadd.f32 %v8217, %v8338
      %v8365 = vadd.f32 %v8218, %v8343
      %v8366 = vadd.f32 %v8219, %v8348
      %v8367 = vadd.f32 %v8220, %v8353
      %v8368 = vadd.f32 %v8221, %v8358
      %v8369 = vld [vmem:[%s7780 + $0x4] sm:$0xff]
      %v8370 = vld [vmem:[%s7780 + $0x14] sm:$0xff]
      %v8371 = vld [vmem:[%s7780 + $0x24] sm:$0xff]
      %v8372 = vld [vmem:[%s7780 + $0x34] sm:$0xff]
      %v8373 = vld [vmem:[%s7780 + $0x44] sm:$0xff]
      %v8374 = vld [vmem:[%s7780 + $0x54] sm:$0xff]
      %v8375 = vld [vmem:[%s7780 + $0x64] sm:$0xff]
      %v8376 = vld [vmem:[%s7780 + $0x74] sm:$0xff]
      %s8377 = scalar_lea.vmem %s3, 152
      %v8378 = vld [vmem:[%s8377] sm:$0xff]
      %v8380 = vsel %vm5142, %v8369, 0
      %v8383 = vsel %vm5142, %v8370, 0
      %v8386 = vsel %vm5142, %v8371, 0
      %v8389 = vsel %vm5142, %v8372, 0
      %v8392 = vsel %vm5142, %v8373, 0
      %v8395 = vsel %vm5142, %v8374, 0
      %v8398 = vsel %vm5142, %v8375, 0
      %v8401 = vsel %vm5142, %v8376, 0
      %8403 = vmatprep.subr.mxu0 0.0
      %8404 = vmatpush1.msra.mxu0 %v8378
      %8405 = vmatprep.subr.mxu0 0.0
      %8406 = vmatpush1.msra.mxu0 0.0
      %8407 = vmatprep.subr.mxu0 0.0
      %8408 = vmatpush1.msra.mxu0 0.0
      %8409 = vmatprep.subr.mxu0 0.0
      %8410 = vmatpush1.msra.mxu0 0.0
      %8411 = vmatprep.subr.mxu0 0.0
      %8412 = vmatpush1.msra.mxu0 0.0
      %8413 = vmatprep.subr.mxu0 0.0
      %8414 = vmatpush1.msra.mxu0 0.0
      %8415 = vmatprep.subr.mxu0 0.0
      %8416 = vmatpush1.msra.mxu0 0.0
      %8417 = vmatprep.subr.mxu0 0.0
      %8418 = vmatpush1.msra.mxu0 0.0
      %8419 = vmatprep.subr.mxu0 0.0
      %8420 = vmatpush1.msra.mxu0 0.0
      %8421 = vmatprep.subr.mxu0 0.0
      %8422 = vmatpush1.msra.mxu0 0.0
      %8423 = vmatprep.subr.mxu0 0.0
      %8424 = vmatpush1.msra.mxu0 0.0
      %8425 = vmatprep.subr.mxu0 0.0
      %8426 = vmatpush1.msra.mxu0 0.0
      %8427 = vmatprep.subr.mxu0 0.0
      %8428 = vmatpush1.msra.mxu0 0.0
      %8429 = vmatprep.subr.mxu0 0.0
      %8430 = vmatpush1.msra.mxu0 0.0
      %8431 = vmatprep.subr.mxu0 0.0
      %8432 = vmatpush1.msra.mxu0 0.0
      %8433 = vmatprep.subr.mxu0 0.0
      %8434 = vmatpush1.msra.mxu0 0.0
      %8435 = vmatprep.subr.mxu0 0.0
      %8436 = vmatpush1.msra.mxu0 0.0
      %8437 = vmatprep.subr.mxu0 0.0
      %8438 = vmatpush1.msra.mxu0 0.0
      %8439 = vmatprep.subr.mxu0 0.0
      %8440 = vmatpush1.msra.mxu0 0.0
      %8441 = vmatprep.subr.mxu0 0.0
      %8442 = vmatpush1.msra.mxu0 0.0
      %8443 = vmatprep.subr.mxu0 0.0
      %8444 = vmatpush1.msra.mxu0 0.0
      %8445 = vmatprep.subr.mxu0 0.0
      %8446 = vmatpush1.msra.mxu0 0.0
      %8447 = vmatprep.subr.mxu0 0.0
      %8448 = vmatpush1.msra.mxu0 0.0
      %8449 = vmatprep.subr.mxu0 0.0
      %8450 = vmatpush1.msra.mxu0 0.0
      %8451 = vmatprep.subr.mxu0 0.0
      %8452 = vmatpush1.msra.mxu0 0.0
      %8453 = vmatprep.subr.mxu0 0.0
      %8454 = vmatpush1.msra.mxu0 0.0
      %8455 = vmatprep.subr.mxu0 0.0
      %8456 = vmatpush1.msra.mxu0 0.0
      %8457 = vmatprep.subr.mxu0 0.0
      %8458 = vmatpush1.msra.mxu0 0.0
      %8459 = vmatprep.subr.mxu0 0.0
      %8460 = vmatpush1.msra.mxu0 0.0
      %8461 = vmatprep.subr.mxu0 0.0
      %8462 = vmatpush1.msra.mxu0 0.0
      %8463 = vmatprep.subr.mxu0 0.0
      %8464 = vmatpush1.msra.mxu0 0.0
      %8465 = vmatprep.subr.mxu0 0.0
      %8466 = vmatpush1.msra.mxu0 0.0
      %8467 = vmatprep.mubr.f32.mxu0 0.0
      %8468 = vmatmul.mubr.f32.gmra.mrb[0].mxu0 %v8380
      %v8469 = vpop.f32.mrb[0].mxu0
      %v8470 = vadd.f32 0.0, %v8469
      %v8471 = vpop.f32.mrb[0].mxu0
      %8472 = vmatprep.mubr.f32.mxu0 0.0
      %8473 = vmatmul.mubr.f32.gmra.mrb[0].mxu0 %v8383
      %v8474 = vpop.f32.mrb[0].mxu0
      %v8475 = vadd.f32 0.0, %v8474
      %v8476 = vpop.f32.mrb[0].mxu0
      %8477 = vmatprep.mubr.f32.mxu0 0.0
      %8478 = vmatmul.mubr.f32.gmra.mrb[0].mxu0 %v8386
      %v8479 = vpop.f32.mrb[0].mxu0
      %v8480 = vadd.f32 0.0, %v8479
      %v8481 = vpop.f32.mrb[0].mxu0
      %8482 = vmatprep.mubr.f32.mxu0 0.0
      %8483 = vmatmul.mubr.f32.gmra.mrb[0].mxu0 %v8389
      %v8484 = vpop.f32.mrb[0].mxu0
      %v8485 = vadd.f32 0.0, %v8484
      %v8486 = vpop.f32.mrb[0].mxu0
      %8487 = vmatprep.mubr.f32.mxu0 0.0
      %8488 = vmatmul.mubr.f32.gmra.mrb[0].mxu0 %v8392
      %v8489 = vpop.f32.mrb[0].mxu0
      %v8490 = vadd.f32 0.0, %v8489
      %v8491 = vpop.f32.mrb[0].mxu0
      %8492 = vmatprep.mubr.f32.mxu0 0.0
      %8493 = vmatmul.mubr.f32.gmra.mrb[0].mxu0 %v8395
      %v8494 = vpop.f32.mrb[0].mxu0
      %v8495 = vadd.f32 0.0, %v8494
      %v8496 = vpop.f32.mrb[0].mxu0
      %8497 = vmatprep.mubr.f32.mxu0 0.0
      %8498 = vmatmul.mubr.f32.gmra.mrb[0].mxu0 %v8398
      %v8499 = vpop.f32.mrb[0].mxu0
      %v8500 = vadd.f32 0.0, %v8499
      %v8501 = vpop.f32.mrb[0].mxu0
      %8502 = vmatprep.mubr.f32.mxu0 0.0
      %8503 = vmatmul.mubr.f32.gmra.mrb[0].mxu0 %v8401
      %v8504 = vpop.f32.mrb[0].mxu0
      %v8505 = vadd.f32 0.0, %v8504
      %v8506 = vpop.f32.mrb[0].mxu0
      %8507 = vdwg.mxu0
      %v8508 = vadd.f32 %v8361, %v8470
      %v8509 = vadd.f32 %v8362, %v8475
      %v8510 = vadd.f32 %v8363, %v8480
      %v8511 = vadd.f32 %v8364, %v8485
      %v8512 = vadd.f32 %v8365, %v8490
      %v8513 = vadd.f32 %v8366, %v8495
      %v8514 = vadd.f32 %v8367, %v8500
      %v8515 = vadd.f32 %v8368, %v8505
      %s8516 = scalar_lea.vmem [#allocation3], 64
      %v8517 = vld [vmem:[%s8516] sm:$0xff]
      %v8518 = vld [vmem:[%s8516 + $0x10] sm:$0xff]
      %v8519 = vld [vmem:[%s8516 + $0x20] sm:$0xff]
      %v8520 = vld [vmem:[%s8516 + $0x30] sm:$0xff]
      %v8521 = vld [vmem:[%s8516 + $0x40] sm:$0xff]
      %v8522 = vld [vmem:[%s8516 + $0x50] sm:$0xff]
      %v8523 = vld [vmem:[%s8516 + $0x60] sm:$0xff]
      %v8524 = vld [vmem:[%s8516 + $0x70] sm:$0xff]
      %s8525 = scalar_lea.vmem %s3, 160
      %v8526 = vld [vmem:[%s8525] sm:$0xff]
      %v8528 = vsel %vm5142, %v8517, 0
      %v8531 = vsel %vm5142, %v8518, 0
      %v8534 = vsel %vm5142, %v8519, 0
      %v8537 = vsel %vm5142, %v8520, 0
      %v8540 = vsel %vm5142, %v8521, 0
      %v8543 = vsel %vm5142, %v8522, 0
      %v8546 = vsel %vm5142, %v8523, 0
      %v8549 = vsel %vm5142, %v8524, 0
      %8551 = vmatprep.subr.mxu0 0.0
      %8552 = vmatpush1.msra.mxu0 %v8526
      %8553 = vmatprep.subr.mxu0 0.0
      %8554 = vmatpush1.msra.mxu0 0.0
      %8555 = vmatprep.subr.mxu0 0.0
      %8556 = vmatpush1.msra.mxu0 0.0
      %8557 = vmatprep.subr.mxu0 0.0
      %8558 = vmatpush1.msra.mxu0 0.0
      %8559 = vmatprep.subr.mxu0 0.0
      %8560 = vmatpush1.msra.mxu0 0.0
      %8561 = vmatprep.subr.mxu0 0.0
      %8562 = vmatpush1.msra.mxu0 0.0
      %8563 = vmatprep.subr.mxu0 0.0
      %8564 = vmatpush1.msra.mxu0 0.0
      %8565 = vmatprep.subr.mxu0 0.0
      %8566 = vmatpush1.msra.mxu0 0.0
      %8567 = vmatprep.subr.mxu0 0.0
      %8568 = vmatpush1.msra.mxu0 0.0
      %8569 = vmatprep.subr.mxu0 0.0
      %8570 = vmatpush1.msra.mxu0 0.0
      %8571 = vmatprep.subr.mxu0 0.0
      %8572 = vmatpush1.msra.mxu0 0.0
      %8573 = vmatprep.subr.mxu0 0.0
      %8574 = vmatpush1.msra.mxu0 0.0
      %8575 = vmatprep.subr.mxu0 0.0
      %8576 = vmatpush1.msra.mxu0 0.0
      %8577 = vmatprep.subr.mxu0 0.0
      %8578 = vmatpush1.msra.mxu0 0.0
      %8579 = vmatprep.subr.mxu0 0.0
      %8580 = vmatpush1.msra.mxu0 0.0
      %8581 = vmatprep.subr.mxu0 0.0
      %8582 = vmatpush1.msra.mxu0 0.0
      %8583 = vmatprep.subr.mxu0 0.0
      %8584 = vmatpush1.msra.mxu0 0.0
      %8585 = vmatprep.subr.mxu0 0.0
      %8586 = vmatpush1.msra.mxu0 0.0
      %8587 = vmatprep.subr.mxu0 0.0
      %8588 = vmatpush1.msra.mxu0 0.0
      %8589 = vmatprep.subr.mxu0 0.0
      %8590 = vmatpush1.msra.mxu0 0.0
      %8591 = vmatprep.subr.mxu0 0.0
      %8592 = vmatpush1.msra.mxu0 0.0
      %8593 = vmatprep.subr.mxu0 0.0
      %8594 = vmatpush1.msra.mxu0 0.0
      %8595 = vmatprep.subr.mxu0 0.0
      %8596 = vmatpush1.msra.mxu0 0.0
      %8597 = vmatprep.subr.mxu0 0.0
      %8598 = vmatpush1.msra.mxu0 0.0
      %8599 = vmatprep.subr.mxu0 0.0
      %8600 = vmatpush1.msra.mxu0 0.0
      %8601 = vmatprep.subr.mxu0 0.0
      %8602 = vmatpush1.msra.mxu0 0.0
      %8603 = vmatprep.subr.mxu0 0.0
      %8604 = vmatpush1.msra.mxu0 0.0
      %8605 = vmatprep.subr.mxu0 0.0
      %8606 = vmatpush1.msra.mxu0 0.0
      %8607 = vmatprep.subr.mxu0 0.0
      %8608 = vmatpush1.msra.mxu0 0.0
      %8609 = vmatprep.subr.mxu0 0.0
      %8610 = vmatpush1.msra.mxu0 0.0
      %8611 = vmatprep.subr.mxu0 0.0
      %8612 = vmatpush1.msra.mxu0 0.0
      %8613 = vmatprep.subr.mxu0 0.0
      %8614 = vmatpush1.msra.mxu0 0.0
      %8615 = vmatprep.mubr.f32.mxu0 0.0
      %8616 = vmatmul.mubr.f32.gmra.mrb[0].mxu0 %v8528
      %v8617 = vpop.f32.mrb[0].mxu0
      %v8618 = vadd.f32 0.0, %v8617
      %v8619 = vpop.f32.mrb[0].mxu0
      %8620 = vmatprep.mubr.f32.mxu0 0.0
      %8621 = vmatmul.mubr.f32.gmra.mrb[0].mxu0 %v8531
      %v8622 = vpop.f32.mrb[0].mxu0
      %v8623 = vadd.f32 0.0, %v8622
      %v8624 = vpop.f32.mrb[0].mxu0
      %8625 = vmatprep.mubr.f32.mxu0 0.0
      %8626 = vmatmul.mubr.f32.gmra.mrb[0].mxu0 %v8534
      %v8627 = vpop.f32.mrb[0].mxu0
      %v8628 = vadd.f32 0.0, %v8627
      %v8629 = vpop.f32.mrb[0].mxu0
      %8630 = vmatprep.mubr.f32.mxu0 0.0
      %8631 = vmatmul.mubr.f32.gmra.mrb[0].mxu0 %v8537
      %v8632 = vpop.f32.mrb[0].mxu0
      %v8633 = vadd.f32 0.0, %v8632
      %v8634 = vpop.f32.mrb[0].mxu0
      %8635 = vmatprep.mubr.f32.mxu0 0.0
      %8636 = vmatmul.mubr.f32.gmra.mrb[0].mxu0 %v8540
      %v8637 = vpop.f32.mrb[0].mxu0
      %v8638 = vadd.f32 0.0, %v8637
      %v8639 = vpop.f32.mrb[0].mxu0
      %8640 = vmatprep.mubr.f32.mxu0 0.0
      %8641 = vmatmul.mubr.f32.gmra.mrb[0].mxu0 %v8543
      %v8642 = vpop.f32.mrb[0].mxu0
      %v8643 = vadd.f32 0.0, %v8642
      %v8644 = vpop.f32.mrb[0].mxu0
      %8645 = vmatprep.mubr.f32.mxu0 0.0
      %8646 = vmatmul.mubr.f32.gmra.mrb[0].mxu0 %v8546
      %v8647 = vpop.f32.mrb[0].mxu0
      %v8648 = vadd.f32 0.0, %v8647
      %v8649 = vpop.f32.mrb[0].mxu0
      %8650 = vmatprep.mubr.f32.mxu0 0.0
      %8651 = vmatmul.mubr.f32.gmra.mrb[0].mxu0 %v8549
      %v8652 = vpop.f32.mrb[0].mxu0
      %v8653 = vadd.f32 0.0, %v8652
      %v8654 = vpop.f32.mrb[0].mxu0
      %8655 = vdwg.mxu0
      %v8656 = vadd.f32 %v8508, %v8618
      %v8657 = vadd.f32 %v8509, %v8623
      %v8658 = vadd.f32 %v8510, %v8628
      %v8659 = vadd.f32 %v8511, %v8633
      %v8660 = vadd.f32 %v8512, %v8638
      %v8661 = vadd.f32 %v8513, %v8643
      %v8662 = vadd.f32 %v8514, %v8648
      %v8663 = vadd.f32 %v8515, %v8653
      %v8664 = vld [vmem:[%s8516 + $0x1] sm:$0xff]
      %v8665 = vld [vmem:[%s8516 + $0x11] sm:$0xff]
      %v8666 = vld [vmem:[%s8516 + $0x21] sm:$0xff]
      %v8667 = vld [vmem:[%s8516 + $0x31] sm:$0xff]
      %v8668 = vld [vmem:[%s8516 + $0x41] sm:$0xff]
      %v8669 = vld [vmem:[%s8516 + $0x51] sm:$0xff]
      %v8670 = vld [vmem:[%s8516 + $0x61] sm:$0xff]
      %v8671 = vld [vmem:[%s8516 + $0x71] sm:$0xff]
      %s8672 = scalar_lea.vmem %s3, 168
      %v8673 = vld [vmem:[%s8672] sm:$0xff]
      %v8675 = vsel %vm5142, %v8664, 0
      %v8678 = vsel %vm5142, %v8665, 0
      %v8681 = vsel %vm5142, %v8666, 0
      %v8684 = vsel %vm5142, %v8667, 0
      %v8687 = vsel %vm5142, %v8668, 0
      %v8690 = vsel %vm5142, %v8669, 0
      %v8693 = vsel %vm5142, %v8670, 0
      %v8696 = vsel %vm5142, %v8671, 0
      %8698 = vmatprep.subr.mxu0 0.0
      %8699 = vmatpush1.msra.mxu0 %v8673
      %8700 = vmatprep.subr.mxu0 0.0
      %8701 = vmatpush1.msra.mxu0 0.0
      %8702 = vmatprep.subr.mxu0 0.0
      %8703 = vmatpush1.msra.mxu0 0.0
      %8704 = vmatprep.subr.mxu0 0.0
      %8705 = vmatpush1.msra.mxu0 0.0
      %8706 = vmatprep.subr.mxu0 0.0
      %8707 = vmatpush1.msra.mxu0 0.0
      %8708 = vmatprep.subr.mxu0 0.0
      %8709 = vmatpush1.msra.mxu0 0.0
      %8710 = vmatprep.subr.mxu0 0.0
      %8711 = vmatpush1.msra.mxu0 0.0
      %8712 = vmatprep.subr.mxu0 0.0
      %8713 = vmatpush1.msra.mxu0 0.0
      %8714 = vmatprep.subr.mxu0 0.0
      %8715 = vmatpush1.msra.mxu0 0.0
      %8716 = vmatprep.subr.mxu0 0.0
      %8717 = vmatpush1.msra.mxu0 0.0
      %8718 = vmatprep.subr.mxu0 0.0
      %8719 = vmatpush1.msra.mxu0 0.0
      %8720 = vmatprep.subr.mxu0 0.0
      %8721 = vmatpush1.msra.mxu0 0.0
      %8722 = vmatprep.subr.mxu0 0.0
      %8723 = vmatpush1.msra.mxu0 0.0
      %8724 = vmatprep.subr.mxu0 0.0
      %8725 = vmatpush1.msra.mxu0 0.0
      %8726 = vmatprep.subr.mxu0 0.0
      %8727 = vmatpush1.msra.mxu0 0.0
      %8728 = vmatprep.subr.mxu0 0.0
      %8729 = vmatpush1.msra.mxu0 0.0
      %8730 = vmatprep.subr.mxu0 0.0
      %8731 = vmatpush1.msra.mxu0 0.0
      %8732 = vmatprep.subr.mxu0 0.0
      %8733 = vmatpush1.msra.mxu0 0.0
      %8734 = vmatprep.subr.mxu0 0.0
      %8735 = vmatpush1.msra.mxu0 0.0
      %8736 = vmatprep.subr.mxu0 0.0
      %8737 = vmatpush1.msra.mxu0 0.0
      %8738 = vmatprep.subr.mxu0 0.0
      %8739 = vmatpush1.msra.mxu0 0.0
      %8740 = vmatprep.subr.mxu0 0.0
      %8741 = vmatpush1.msra.mxu0 0.0
      %8742 = vmatprep.subr.mxu0 0.0
      %8743 = vmatpush1.msra.mxu0 0.0
      %8744 = vmatprep.subr.mxu0 0.0
      %8745 = vmatpush1.msra.mxu0 0.0
      %8746 = vmatprep.subr.mxu0 0.0
      %8747 = vmatpush1.msra.mxu0 0.0
      %8748 = vmatprep.subr.mxu0 0.0
      %8749 = vmatpush1.msra.mxu0 0.0
      %8750 = vmatprep.subr.mxu0 0.0
      %8751 = vmatpush1.msra.mxu0 0.0
      %8752 = vmatprep.subr.mxu0 0.0
      %8753 = vmatpush1.msra.mxu0 0.0
      %8754 = vmatprep.subr.mxu0 0.0
      %8755 = vmatpush1.msra.mxu0 0.0
      %8756 = vmatprep.subr.mxu0 0.0
      %8757 = vmatpush1.msra.mxu0 0.0
      %8758 = vmatprep.subr.mxu0 0.0
      %8759 = vmatpush1.msra.mxu0 0.0
      %8760 = vmatprep.subr.mxu0 0.0
      %8761 = vmatpush1.msra.mxu0 0.0
      %8762 = vmatprep.mubr.f32.mxu0 0.0
      %8763 = vmatmul.mubr.f32.gmra.mrb[0].mxu0 %v8675
      %v8764 = vpop.f32.mrb[0].mxu0
      %v8765 = vadd.f32 0.0, %v8764
      %v8766 = vpop.f32.mrb[0].mxu0
      %8767 = vmatprep.mubr.f32.mxu0 0.0
      %8768 = vmatmul.mubr.f32.gmra.mrb[0].mxu0 %v8678
      %v8769 = vpop.f32.mrb[0].mxu0
      %v8770 = vadd.f32 0.0, %v8769
      %v8771 = vpop.f32.mrb[0].mxu0
      %8772 = vmatprep.mubr.f32.mxu0 0.0
      %8773 = vmatmul.mubr.f32.gmra.mrb[0].mxu0 %v8681
      %v8774 = vpop.f32.mrb[0].mxu0
      %v8775 = vadd.f32 0.0, %v8774
      %v8776 = vpop.f32.mrb[0].mxu0
      %8777 = vmatprep.mubr.f32.mxu0 0.0
      %8778 = vmatmul.mubr.f32.gmra.mrb[0].mxu0 %v8684
      %v8779 = vpop.f32.mrb[0].mxu0
      %v8780 = vadd.f32 0.0, %v8779
      %v8781 = vpop.f32.mrb[0].mxu0
      %8782 = vmatprep.mubr.f32.mxu0 0.0
      %8783 = vmatmul.mubr.f32.gmra.mrb[0].mxu0 %v8687
      %v8784 = vpop.f32.mrb[0].mxu0
      %v8785 = vadd.f32 0.0, %v8784
      %v8786 = vpop.f32.mrb[0].mxu0
      %8787 = vmatprep.mubr.f32.mxu0 0.0
      %8788 = vmatmul.mubr.f32.gmra.mrb[0].mxu0 %v8690
      %v8789 = vpop.f32.mrb[0].mxu0
      %v8790 = vadd.f32 0.0, %v8789
      %v8791 = vpop.f32.mrb[0].mxu0
      %8792 = vmatprep.mubr.f32.mxu0 0.0
      %8793 = vmatmul.mubr.f32.gmra.mrb[0].mxu0 %v8693
      %v8794 = vpop.f32.mrb[0].mxu0
      %v8795 = vadd.f32 0.0, %v8794
      %v8796 = vpop.f32.mrb[0].mxu0
      %8797 = vmatprep.mubr.f32.mxu0 0.0
      %8798 = vmatmul.mubr.f32.gmra.mrb[0].mxu0 %v8696
      %v8799 = vpop.f32.mrb[0].mxu0
      %v8800 = vadd.f32 0.0, %v8799
      %v8801 = vpop.f32.mrb[0].mxu0
      %8802 = vdwg.mxu0
      %v8803 = vadd.f32 %v8656, %v8765
      %v8804 = vadd.f32 %v8657, %v8770
      %v8805 = vadd.f32 %v8658, %v8775
      %v8806 = vadd.f32 %v8659, %v8780
      %v8807 = vadd.f32 %v8660, %v8785
      %v8808 = vadd.f32 %v8661, %v8790
      %v8809 = vadd.f32 %v8662, %v8795
      %v8810 = vadd.f32 %v8663, %v8800
      %v8811 = vld [vmem:[%s8516 + $0x2] sm:$0xff]
      %v8812 = vld [vmem:[%s8516 + $0x12] sm:$0xff]
      %v8813 = vld [vmem:[%s8516 + $0x22] sm:$0xff]
      %v8814 = vld [vmem:[%s8516 + $0x32] sm:$0xff]
      %v8815 = vld [vmem:[%s8516 + $0x42] sm:$0xff]
      %v8816 = vld [vmem:[%s8516 + $0x52] sm:$0xff]
      %v8817 = vld [vmem:[%s8516 + $0x62] sm:$0xff]
      %v8818 = vld [vmem:[%s8516 + $0x72] sm:$0xff]
      %s8819 = scalar_lea.vmem %s3, 176
      %v8820 = vld [vmem:[%s8819] sm:$0xff]
      %v8822 = vsel %vm5142, %v8811, 0
      %v8825 = vsel %vm5142, %v8812, 0
      %v8828 = vsel %vm5142, %v8813, 0
      %v8831 = vsel %vm5142, %v8814, 0
      %v8834 = vsel %vm5142, %v8815, 0
      %v8837 = vsel %vm5142, %v8816, 0
      %v8840 = vsel %vm5142, %v8817, 0
      %v8843 = vsel %vm5142, %v8818, 0
      %8845 = vmatprep.subr.mxu0 0.0
      %8846 = vmatpush1.msra.mxu0 %v8820
      %8847 = vmatprep.subr.mxu0 0.0
      %8848 = vmatpush1.msra.mxu0 0.0
      %8849 = vmatprep.subr.mxu0 0.0
      %8850 = vmatpush1.msra.mxu0 0.0
      %8851 = vmatprep.subr.mxu0 0.0
      %8852 = vmatpush1.msra.mxu0 0.0
      %8853 = vmatprep.subr.mxu0 0.0
      %8854 = vmatpush1.msra.mxu0 0.0
      %8855 = vmatprep.subr.mxu0 0.0
      %8856 = vmatpush1.msra.mxu0 0.0
      %8857 = vmatprep.subr.mxu0 0.0
      %8858 = vmatpush1.msra.mxu0 0.0
      %8859 = vmatprep.subr.mxu0 0.0
      %8860 = vmatpush1.msra.mxu0 0.0
      %8861 = vmatprep.subr.mxu0 0.0
      %8862 = vmatpush1.msra.mxu0 0.0
      %8863 = vmatprep.subr.mxu0 0.0
      %8864 = vmatpush1.msra.mxu0 0.0
      %8865 = vmatprep.subr.mxu0 0.0
      %8866 = vmatpush1.msra.mxu0 0.0
      %8867 = vmatprep.subr.mxu0 0.0
      %8868 = vmatpush1.msra.mxu0 0.0
      %8869 = vmatprep.subr.mxu0 0.0
      %8870 = vmatpush1.msra.mxu0 0.0
      %8871 = vmatprep.subr.mxu0 0.0
      %8872 = vmatpush1.msra.mxu0 0.0
      %8873 = vmatprep.subr.mxu0 0.0
      %8874 = vmatpush1.msra.mxu0 0.0
      %8875 = vmatprep.subr.mxu0 0.0
      %8876 = vmatpush1.msra.mxu0 0.0
      %8877 = vmatprep.subr.mxu0 0.0
      %8878 = vmatpush1.msra.mxu0 0.0
      %8879 = vmatprep.subr.mxu0 0.0
      %8880 = vmatpush1.msra.mxu0 0.0
      %8881 = vmatprep.subr.mxu0 0.0
      %8882 = vmatpush1.msra.mxu0 0.0
      %8883 = vmatprep.subr.mxu0 0.0
      %8884 = vmatpush1.msra.mxu0 0.0
      %8885 = vmatprep.subr.mxu0 0.0
      %8886 = vmatpush1.msra.mxu0 0.0
      %8887 = vmatprep.subr.mxu0 0.0
      %8888 = vmatpush1.msra.mxu0 0.0
      %8889 = vmatprep.subr.mxu0 0.0
      %8890 = vmatpush1.msra.mxu0 0.0
      %8891 = vmatprep.subr.mxu0 0.0
      %8892 = vmatpush1.msra.mxu0 0.0
      %8893 = vmatprep.subr.mxu0 0.0
      %8894 = vmatpush1.msra.mxu0 0.0
      %8895 = vmatprep.subr.mxu0 0.0
      %8896 = vmatpush1.msra.mxu0 0.0
      %8897 = vmatprep.subr.mxu0 0.0
      %8898 = vmatpush1.msra.mxu0 0.0
      %8899 = vmatprep.subr.mxu0 0.0
      %8900 = vmatpush1.msra.mxu0 0.0
      %8901 = vmatprep.subr.mxu0 0.0
      %8902 = vmatpush1.msra.mxu0 0.0
      %8903 = vmatprep.subr.mxu0 0.0
      %8904 = vmatpush1.msra.mxu0 0.0
      %8905 = vmatprep.subr.mxu0 0.0
      %8906 = vmatpush1.msra.mxu0 0.0
      %8907 = vmatprep.subr.mxu0 0.0
      %8908 = vmatpush1.msra.mxu0 0.0
      %8909 = vmatprep.mubr.f32.mxu0 0.0
      %8910 = vmatmul.mubr.f32.gmra.mrb[0].mxu0 %v8822
      %v8911 = vpop.f32.mrb[0].mxu0
      %v8912 = vadd.f32 0.0, %v8911
      %v8913 = vpop.f32.mrb[0].mxu0
      %8914 = vmatprep.mubr.f32.mxu0 0.0
      %8915 = vmatmul.mubr.f32.gmra.mrb[0].mxu0 %v8825
      %v8916 = vpop.f32.mrb[0].mxu0
      %v8917 = vadd.f32 0.0, %v8916
      %v8918 = vpop.f32.mrb[0].mxu0
      %8919 = vmatprep.mubr.f32.mxu0 0.0
      %8920 = vmatmul.mubr.f32.gmra.mrb[0].mxu0 %v8828
      %v8921 = vpop.f32.mrb[0].mxu0
      %v8922 = vadd.f32 0.0, %v8921
      %v8923 = vpop.f32.mrb[0].mxu0
      %8924 = vmatprep.mubr.f32.mxu0 0.0
      %8925 = vmatmul.mubr.f32.gmra.mrb[0].mxu0 %v8831
      %v8926 = vpop.f32.mrb[0].mxu0
      %v8927 = vadd.f32 0.0, %v8926
      %v8928 = vpop.f32.mrb[0].mxu0
      %8929 = vmatprep.mubr.f32.mxu0 0.0
      %8930 = vmatmul.mubr.f32.gmra.mrb[0].mxu0 %v8834
      %v8931 = vpop.f32.mrb[0].mxu0
      %v8932 = vadd.f32 0.0, %v8931
      %v8933 = vpop.f32.mrb[0].mxu0
      %8934 = vmatprep.mubr.f32.mxu0 0.0
      %8935 = vmatmul.mubr.f32.gmra.mrb[0].mxu0 %v8837
      %v8936 = vpop.f32.mrb[0].mxu0
      %v8937 = vadd.f32 0.0, %v8936
      %v8938 = vpop.f32.mrb[0].mxu0
      %8939 = vmatprep.mubr.f32.mxu0 0.0
      %8940 = vmatmul.mubr.f32.gmra.mrb[0].mxu0 %v8840
      %v8941 = vpop.f32.mrb[0].mxu0
      %v8942 = vadd.f32 0.0, %v8941
      %v8943 = vpop.f32.mrb[0].mxu0
      %8944 = vmatprep.mubr.f32.mxu0 0.0
      %8945 = vmatmul.mubr.f32.gmra.mrb[0].mxu0 %v8843
      %v8946 = vpop.f32.mrb[0].mxu0
      %v8947 = vadd.f32 0.0, %v8946
      %v8948 = vpop.f32.mrb[0].mxu0
      %8949 = vdwg.mxu0
      %v8950 = vadd.f32 %v8803, %v8912
      %v8951 = vadd.f32 %v8804, %v8917
      %v8952 = vadd.f32 %v8805, %v8922
      %v8953 = vadd.f32 %v8806, %v8927
      %v8954 = vadd.f32 %v8807, %v8932
      %v8955 = vadd.f32 %v8808, %v8937
      %v8956 = vadd.f32 %v8809, %v8942
      %v8957 = vadd.f32 %v8810, %v8947
      %v8958 = vld [vmem:[%s8516 + $0x3] sm:$0xff]
      %v8959 = vld [vmem:[%s8516 + $0x13] sm:$0xff]
      %v8960 = vld [vmem:[%s8516 + $0x23] sm:$0xff]
      %v8961 = vld [vmem:[%s8516 + $0x33] sm:$0xff]
      %v8962 = vld [vmem:[%s8516 + $0x43] sm:$0xff]
      %v8963 = vld [vmem:[%s8516 + $0x53] sm:$0xff]
      %v8964 = vld [vmem:[%s8516 + $0x63] sm:$0xff]
      %v8965 = vld [vmem:[%s8516 + $0x73] sm:$0xff]
      %s8966 = scalar_lea.vmem %s3, 184
      %v8967 = vld [vmem:[%s8966] sm:$0xff]
      %v8969 = vsel %vm5142, %v8958, 0
      %v8972 = vsel %vm5142, %v8959, 0
      %v8975 = vsel %vm5142, %v8960, 0
      %v8978 = vsel %vm5142, %v8961, 0
      %v8981 = vsel %vm5142, %v8962, 0
      %v8984 = vsel %vm5142, %v8963, 0
      %v8987 = vsel %vm5142, %v8964, 0
      %v8990 = vsel %vm5142, %v8965, 0
      %8992 = vmatprep.subr.mxu0 0.0
      %8993 = vmatpush1.msra.mxu0 %v8967
      %8994 = vmatprep.subr.mxu0 0.0
      %8995 = vmatpush1.msra.mxu0 0.0
      %8996 = vmatprep.subr.mxu0 0.0
      %8997 = vmatpush1.msra.mxu0 0.0
      %8998 = vmatprep.subr.mxu0 0.0
      %8999 = vmatpush1.msra.mxu0 0.0
      %9000 = vmatprep.subr.mxu0 0.0
      %9001 = vmatpush1.msra.mxu0 0.0
      %9002 = vmatprep.subr.mxu0 0.0
      %9003 = vmatpush1.msra.mxu0 0.0
      %9004 = vmatprep.subr.mxu0 0.0
      %9005 = vmatpush1.msra.mxu0 0.0
      %9006 = vmatprep.subr.mxu0 0.0
      %9007 = vmatpush1.msra.mxu0 0.0
      %9008 = vmatprep.subr.mxu0 0.0
      %9009 = vmatpush1.msra.mxu0 0.0
      %9010 = vmatprep.subr.mxu0 0.0
      %9011 = vmatpush1.msra.mxu0 0.0
      %9012 = vmatprep.subr.mxu0 0.0
      %9013 = vmatpush1.msra.mxu0 0.0
      %9014 = vmatprep.subr.mxu0 0.0
      %9015 = vmatpush1.msra.mxu0 0.0
      %9016 = vmatprep.subr.mxu0 0.0
      %9017 = vmatpush1.msra.mxu0 0.0
      %9018 = vmatprep.subr.mxu0 0.0
      %9019 = vmatpush1.msra.mxu0 0.0
      %9020 = vmatprep.subr.mxu0 0.0
      %9021 = vmatpush1.msra.mxu0 0.0
      %9022 = vmatprep.subr.mxu0 0.0
      %9023 = vmatpush1.msra.mxu0 0.0
      %9024 = vmatprep.subr.mxu0 0.0
      %9025 = vmatpush1.msra.mxu0 0.0
      %9026 = vmatprep.subr.mxu0 0.0
      %9027 = vmatpush1.msra.mxu0 0.0
      %9028 = vmatprep.subr.mxu0 0.0
      %9029 = vmatpush1.msra.mxu0 0.0
      %9030 = vmatprep.subr.mxu0 0.0
      %9031 = vmatpush1.msra.mxu0 0.0
      %9032 = vmatprep.subr.mxu0 0.0
      %9033 = vmatpush1.msra.mxu0 0.0
      %9034 = vmatprep.subr.mxu0 0.0
      %9035 = vmatpush1.msra.mxu0 0.0
      %9036 = vmatprep.subr.mxu0 0.0
      %9037 = vmatpush1.msra.mxu0 0.0
      %9038 = vmatprep.subr.mxu0 0.0
      %9039 = vmatpush1.msra.mxu0 0.0
      %9040 = vmatprep.subr.mxu0 0.0
      %9041 = vmatpush1.msra.mxu0 0.0
      %9042 = vmatprep.subr.mxu0 0.0
      %9043 = vmatpush1.msra.mxu0 0.0
      %9044 = vmatprep.subr.mxu0 0.0
      %9045 = vmatpush1.msra.mxu0 0.0
      %9046 = vmatprep.subr.mxu0 0.0
      %9047 = vmatpush1.msra.mxu0 0.0
      %9048 = vmatprep.subr.mxu0 0.0
      %9049 = vmatpush1.msra.mxu0 0.0
      %9050 = vmatprep.subr.mxu0 0.0
      %9051 = vmatpush1.msra.mxu0 0.0
      %9052 = vmatprep.subr.mxu0 0.0
      %9053 = vmatpush1.msra.mxu0 0.0
      %9054 = vmatprep.subr.mxu0 0.0
      %9055 = vmatpush1.msra.mxu0 0.0
      %9056 = vmatprep.mubr.f32.mxu0 0.0
      %9057 = vmatmul.mubr.f32.gmra.mrb[0].mxu0 %v8969
      %v9058 = vpop.f32.mrb[0].mxu0
      %v9059 = vadd.f32 0.0, %v9058
      %v9060 = vpop.f32.mrb[0].mxu0
      %9061 = vmatprep.mubr.f32.mxu0 0.0
      %9062 = vmatmul.mubr.f32.gmra.mrb[0].mxu0 %v8972
      %v9063 = vpop.f32.mrb[0].mxu0
      %v9064 = vadd.f32 0.0, %v9063
      %v9065 = vpop.f32.mrb[0].mxu0
      %9066 = vmatprep.mubr.f32.mxu0 0.0
      %9067 = vmatmul.mubr.f32.gmra.mrb[0].mxu0 %v8975
      %v9068 = vpop.f32.mrb[0].mxu0
      %v9069 = vadd.f32 0.0, %v9068
      %v9070 = vpop.f32.mrb[0].mxu0
      %9071 = vmatprep.mubr.f32.mxu0 0.0
      %9072 = vmatmul.mubr.f32.gmra.mrb[0].mxu0 %v8978
      %v9073 = vpop.f32.mrb[0].mxu0
      %v9074 = vadd.f32 0.0, %v9073
      %v9075 = vpop.f32.mrb[0].mxu0
      %9076 = vmatprep.mubr.f32.mxu0 0.0
      %9077 = vmatmul.mubr.f32.gmra.mrb[0].mxu0 %v8981
      %v9078 = vpop.f32.mrb[0].mxu0
      %v9079 = vadd.f32 0.0, %v9078
      %v9080 = vpop.f32.mrb[0].mxu0
      %9081 = vmatprep.mubr.f32.mxu0 0.0
      %9082 = vmatmul.mubr.f32.gmra.mrb[0].mxu0 %v8984
      %v9083 = vpop.f32.mrb[0].mxu0
      %v9084 = vadd.f32 0.0, %v9083
      %v9085 = vpop.f32.mrb[0].mxu0
      %9086 = vmatprep.mubr.f32.mxu0 0.0
      %9087 = vmatmul.mubr.f32.gmra.mrb[0].mxu0 %v8987
      %v9088 = vpop.f32.mrb[0].mxu0
      %v9089 = vadd.f32 0.0, %v9088
      %v9090 = vpop.f32.mrb[0].mxu0
      %9091 = vmatprep.mubr.f32.mxu0 0.0
      %9092 = vmatmul.mubr.f32.gmra.mrb[0].mxu0 %v8990
      %v9093 = vpop.f32.mrb[0].mxu0
      %v9094 = vadd.f32 0.0, %v9093
      %v9095 = vpop.f32.mrb[0].mxu0
      %9096 = vdwg.mxu0
      %v9097 = vadd.f32 %v8950, %v9059
      %v9098 = vadd.f32 %v8951, %v9064
      %v9099 = vadd.f32 %v8952, %v9069
      %v9100 = vadd.f32 %v8953, %v9074
      %v9101 = vadd.f32 %v8954, %v9079
      %v9102 = vadd.f32 %v8955, %v9084
      %v9103 = vadd.f32 %v8956, %v9089
      %v9104 = vadd.f32 %v8957, %v9094
      %v9105 = vld [vmem:[%s8516 + $0x4] sm:$0xff]
      %v9106 = vld [vmem:[%s8516 + $0x14] sm:$0xff]
      %v9107 = vld [vmem:[%s8516 + $0x24] sm:$0xff]
      %v9108 = vld [vmem:[%s8516 + $0x34] sm:$0xff]
      %v9109 = vld [vmem:[%s8516 + $0x44] sm:$0xff]
      %v9110 = vld [vmem:[%s8516 + $0x54] sm:$0xff]
      %v9111 = vld [vmem:[%s8516 + $0x64] sm:$0xff]
      %v9112 = vld [vmem:[%s8516 + $0x74] sm:$0xff]
      %s9113 = scalar_lea.vmem %s3, 192
      %v9114 = vld [vmem:[%s9113] sm:$0xff]
      %v9116 = vsel %vm5142, %v9105, 0
      %v9119 = vsel %vm5142, %v9106, 0
      %v9122 = vsel %vm5142, %v9107, 0
      %v9125 = vsel %vm5142, %v9108, 0
      %v9128 = vsel %vm5142, %v9109, 0
      %v9131 = vsel %vm5142, %v9110, 0
      %v9134 = vsel %vm5142, %v9111, 0
      %v9137 = vsel %vm5142, %v9112, 0
      %9139 = vmatprep.subr.mxu0 0.0
      %9140 = vmatpush1.msra.mxu0 %v9114
      %9141 = vmatprep.subr.mxu0 0.0
      %9142 = vmatpush1.msra.mxu0 0.0
      %9143 = vmatprep.subr.mxu0 0.0
      %9144 = vmatpush1.msra.mxu0 0.0
      %9145 = vmatprep.subr.mxu0 0.0
      %9146 = vmatpush1.msra.mxu0 0.0
      %9147 = vmatprep.subr.mxu0 0.0
      %9148 = vmatpush1.msra.mxu0 0.0
      %9149 = vmatprep.subr.mxu0 0.0
      %9150 = vmatpush1.msra.mxu0 0.0
      %9151 = vmatprep.subr.mxu0 0.0
      %9152 = vmatpush1.msra.mxu0 0.0
      %9153 = vmatprep.subr.mxu0 0.0
      %9154 = vmatpush1.msra.mxu0 0.0
      %9155 = vmatprep.subr.mxu0 0.0
      %9156 = vmatpush1.msra.mxu0 0.0
      %9157 = vmatprep.subr.mxu0 0.0
      %9158 = vmatpush1.msra.mxu0 0.0
      %9159 = vmatprep.subr.mxu0 0.0
      %9160 = vmatpush1.msra.mxu0 0.0
      %9161 = vmatprep.subr.mxu0 0.0
      %9162 = vmatpush1.msra.mxu0 0.0
      %9163 = vmatprep.subr.mxu0 0.0
      %9164 = vmatpush1.msra.mxu0 0.0
      %9165 = vmatprep.subr.mxu0 0.0
      %9166 = vmatpush1.msra.mxu0 0.0
      %9167 = vmatprep.subr.mxu0 0.0
      %9168 = vmatpush1.msra.mxu0 0.0
      %9169 = vmatprep.subr.mxu0 0.0
      %9170 = vmatpush1.msra.mxu0 0.0
      %9171 = vmatprep.subr.mxu0 0.0
      %9172 = vmatpush1.msra.mxu0 0.0
      %9173 = vmatprep.subr.mxu0 0.0
      %9174 = vmatpush1.msra.mxu0 0.0
      %9175 = vmatprep.subr.mxu0 0.0
      %9176 = vmatpush1.msra.mxu0 0.0
      %9177 = vmatprep.subr.mxu0 0.0
      %9178 = vmatpush1.msra.mxu0 0.0
      %9179 = vmatprep.subr.mxu0 0.0
      %9180 = vmatpush1.msra.mxu0 0.0
      %9181 = vmatprep.subr.mxu0 0.0
      %9182 = vmatpush1.msra.mxu0 0.0
      %9183 = vmatprep.subr.mxu0 0.0
      %9184 = vmatpush1.msra.mxu0 0.0
      %9185 = vmatprep.subr.mxu0 0.0
      %9186 = vmatpush1.msra.mxu0 0.0
      %9187 = vmatprep.subr.mxu0 0.0
      %9188 = vmatpush1.msra.mxu0 0.0
      %9189 = vmatprep.subr.mxu0 0.0
      %9190 = vmatpush1.msra.mxu0 0.0
      %9191 = vmatprep.subr.mxu0 0.0
      %9192 = vmatpush1.msra.mxu0 0.0
      %9193 = vmatprep.subr.mxu0 0.0
      %9194 = vmatpush1.msra.mxu0 0.0
      %9195 = vmatprep.subr.mxu0 0.0
      %9196 = vmatpush1.msra.mxu0 0.0
      %9197 = vmatprep.subr.mxu0 0.0
      %9198 = vmatpush1.msra.mxu0 0.0
      %9199 = vmatprep.subr.mxu0 0.0
      %9200 = vmatpush1.msra.mxu0 0.0
      %9201 = vmatprep.subr.mxu0 0.0
      %9202 = vmatpush1.msra.mxu0 0.0
      %9203 = vmatprep.mubr.f32.mxu0 0.0
      %9204 = vmatmul.mubr.f32.gmra.mrb[0].mxu0 %v9116
      %v9205 = vpop.f32.mrb[0].mxu0
      %v9206 = vadd.f32 0.0, %v9205
      %v9207 = vpop.f32.mrb[0].mxu0
      %9208 = vmatprep.mubr.f32.mxu0 0.0
      %9209 = vmatmul.mubr.f32.gmra.mrb[0].mxu0 %v9119
      %v9210 = vpop.f32.mrb[0].mxu0
      %v9211 = vadd.f32 0.0, %v9210
      %v9212 = vpop.f32.mrb[0].mxu0
      %9213 = vmatprep.mubr.f32.mxu0 0.0
      %9214 = vmatmul.mubr.f32.gmra.mrb[0].mxu0 %v9122
      %v9215 = vpop.f32.mrb[0].mxu0
      %v9216 = vadd.f32 0.0, %v9215
      %v9217 = vpop.f32.mrb[0].mxu0
      %9218 = vmatprep.mubr.f32.mxu0 0.0
      %9219 = vmatmul.mubr.f32.gmra.mrb[0].mxu0 %v9125
      %v9220 = vpop.f32.mrb[0].mxu0
      %v9221 = vadd.f32 0.0, %v9220
      %v9222 = vpop.f32.mrb[0].mxu0
      %9223 = vmatprep.mubr.f32.mxu0 0.0
      %9224 = vmatmul.mubr.f32.gmra.mrb[0].mxu0 %v9128
      %v9225 = vpop.f32.mrb[0].mxu0
      %v9226 = vadd.f32 0.0, %v9225
      %v9227 = vpop.f32.mrb[0].mxu0
      %9228 = vmatprep.mubr.f32.mxu0 0.0
      %9229 = vmatmul.mubr.f32.gmra.mrb[0].mxu0 %v9131
      %v9230 = vpop.f32.mrb[0].mxu0
      %v9231 = vadd.f32 0.0, %v9230
      %v9232 = vpop.f32.mrb[0].mxu0
      %9233 = vmatprep.mubr.f32.mxu0 0.0
      %9234 = vmatmul.mubr.f32.gmra.mrb[0].mxu0 %v9134
      %v9235 = vpop.f32.mrb[0].mxu0
      %v9236 = vadd.f32 0.0, %v9235
      %v9237 = vpop.f32.mrb[0].mxu0
      %9238 = vmatprep.mubr.f32.mxu0 0.0
      %9239 = vmatmul.mubr.f32.gmra.mrb[0].mxu0 %v9137
      %v9240 = vpop.f32.mrb[0].mxu0
      %v9241 = vadd.f32 0.0, %v9240
      %v9242 = vpop.f32.mrb[0].mxu0
      %9243 = vdwg.mxu0
      %v9244 = vadd.f32 %v9097, %v9206
      %v9245 = vadd.f32 %v9098, %v9211
      %v9246 = vadd.f32 %v9099, %v9216
      %v9247 = vadd.f32 %v9100, %v9221
      %v9248 = vadd.f32 %v9101, %v9226
      %v9249 = vadd.f32 %v9102, %v9231
      %v9250 = vadd.f32 %v9103, %v9236
      %v9251 = vadd.f32 %v9104, %v9241
      %9252 = vxpose.xlu0.b32.start [1/16] %v9244, 128
      %9253 = vxpose.xlu0.b32.cont [2/16] %v9245, 128
      %9254 = vxpose.xlu0.b32.cont [3/16] %v9246, 128
      %9255 = vxpose.xlu0.b32.cont [4/16] %v9247, 128
      %9256 = vxpose.xlu0.b32.cont [5/16] %v9248, 128
      %9257 = vxpose.xlu0.b32.cont [6/16] %v9249, 128
      %9258 = vxpose.xlu0.b32.cont [7/16] %v9250, 128
      %9259 = vxpose.xlu0.b32.cont [8/16] %v9251, 128
      %9260 = vxpose.xlu0.b32.cont [9/16] 0.0, 128
      %9261 = vxpose.xlu0.b32.cont [10/16] 0.0, 128
      %9262 = vxpose.xlu0.b32.cont [11/16] 0.0, 128
      %9263 = vxpose.xlu0.b32.cont [12/16] 0.0, 128
      %9264 = vxpose.xlu0.b32.cont [13/16] 0.0, 128
      %9265 = vxpose.xlu0.b32.cont [14/16] 0.0, 128
      %9266 = vxpose.xlu0.b32.cont [15/16] 0.0, 128
      %9267 = vxpose.xlu0.b32.end [16/16] 0.0, 128
      %v9268 = vpop.trf.xlu0
      %v9269 = vpop.trf.xlu0
      %v9270 = vpop.trf.xlu0
      %v9271 = vpop.trf.xlu0
      %v9272 = vpop.trf.xlu0
      %v9273 = vpop.trf.xlu0
      %v9274 = vpop.trf.xlu0
      %v9275 = vpop.trf.xlu0
      %v9276 = vpop.trf.xlu0
      %v9277 = vpop.trf.xlu0
      %v9278 = vpop.trf.xlu0
      %v9279 = vpop.trf.xlu0
      %v9280 = vpop.trf.xlu0
      %v9281 = vpop.trf.xlu0
      %v9282 = vpop.trf.xlu0
      %v9283 = vpop.trf.xlu0
      %vm9284 = vcmask 523264
      %9285 = vst.msk [vmem:[%s222] sm:$0xff] %vm9284, %v9268
      %p9286 = scmp.lt.s32.totalorder %s16, 1
      %s9287 = scalar_select %p9286, %s16, 1
      %s9288 = smul.addr %s9287, 8
      %s9289 = scalar_lea.vmem %s5, %s9288
      // Predicated region
      $region41: #{forward.1} parent=39 // pred_check
        %p9290 = pneg %p144
      $region42: #{forward.1} parent=39 // pred_check_branch
        %9292 = sbr.rel (%p9290) target = $region44
      $region43: #{forward.1} parent=39 // pred_region
        _
      $region44: #{forward.1} parent=39 // pred_fallthru
        _
    $region40: #{forward.1} parent=5 // pred_fallthru
      _
    %p9293 = scmp.le.s32.totalorder 2, %s11
    // Predicated region
    $region45: #{forward.1} parent=5 // pred_check
      %p9294 = pneg %p9293
    $region46: #{forward.1} parent=5 // pred_check_branch
      %9296 = sbr.rel (%p9294) target = $region48
    $region47: #{forward.1} parent=5 // pred_region
      %s9297 = ssub.s32 %s11, 2
      // Predicated region
      $region49: #{forward.1} parent=47 // pred_check
        %p9298 = pneg %p150
      $region50: #{forward.1} parent=47 // pred_check_branch
        %9300 = sbr.rel (%p9298) target = $region52
      $region51: #{forward.1} parent=47 // pred_region
        %p9301 = scmp.lt.s32.totalorder %s17, 1
        %s9302 = scalar_select %p9301, %s17, 1
        %s9303 = smul.addr %s9302, 8
        %s9304 = scalar_lea.vmem %s5, %s9303
      $region52: #{forward.1} parent=47 // pred_fallthru
        _
    $region48: #{forward.1} parent=5 // pred_fallthru
      _
  $region6: #{forward.1} parent=0 // loop_footer
    %s15 = sadd.s32 1, %s11
  $region7: #{forward.1} parent=0 // loop_footer_branch
    %10 = sbr.rel target = $region3
  $region8: #{forward.1} parent=0 // loop_exit
    _

</llo_original>
